<compile_context>
chip_gen: v7x
topology: tpu7x:2x2x1
jax: 0.10.0
libtpu: 0.0.40
codegen_flags: <defaults>
</compile_context>

<pallas_src>
import functools

import jax
import jax.numpy as jnp
from jax import lax
from jax.experimental import pallas as pl
from jax.experimental.pallas import tpu as pltpu


def gnn_kernel(
    edge_ref,                                       # [TE, 2] int32 (col 0 = target i, col 1 = source j)
    x_ref, invdeg_ref, mask_ref,                    # node-level inputs
    w1p_ref, w1q_ref, b1a_ref, w1b_ref, b1b_ref,    # conv1 params (hoisted form)
    w2p_ref, w2q_ref, b2a_ref, w2b_ref, b2b_ref,    # conv2 params (hoisted form)
    wl_ref, bl_ref,                                 # final linear
    out_ref,                                        # [N_pad, O_pad] output (resident)
    p_sc, q_sc, acc_sc,                             # [N_pad, H_pad] scratch (P/Q bf16, acc f32)
):
    layer = pl.program_id(0)
    t = pl.program_id(1)
    last_t = pl.num_programs(1) - 1
    f32 = jnp.float32
    bf16 = jnp.bfloat16
    hi = lax.Precision.HIGHEST

    # ---- init at the first edge tile of each layer -------------------------------------
    @pl.when((layer == 0) & (t == 0))
    def _():
        feat = x_ref[...]
        p = jnp.dot(feat, w1p_ref[...], precision=hi, preferred_element_type=f32) + b1a_ref[...]
        q = jnp.dot(feat, w1q_ref[...], precision=hi, preferred_element_type=f32)
        p_sc[...] = p.astype(bf16)
        q_sc[...] = q.astype(bf16)
        acc_sc[...] = jnp.zeros_like(acc_sc)

    @pl.when((layer == 1) & (t == 0))
    def _():
        # P/Q for layer 2 were written by layer-1's finalize; just reset the accumulator.
        acc_sc[...] = jnp.zeros_like(acc_sc)

    # ---- per-edge-tile gather -> ReLU(Linear1) -> scatter-add (bf16 x bf16 -> f32) ------
    n_pad = acc_sc.shape[0]
    te = edge_ref.shape[0]

    idx = edge_ref[...]                              # [TE, 2] int32
    tgt_col = idx[:, 0:1]                            # [TE, 1] target node i
    src_col = idx[:, 1:2]                            # [TE, 1] source node j

    iota_en = lax.broadcasted_iota(jnp.int32, (te, n_pad), 1)   # node ids along lanes
    # Padded edges carry index -1 -> all-zero one-hot row -> exact zero contribution.
    oh_tgt = (iota_en == tgt_col).astype(bf16)       # [TE, N_pad] gather x_i / scatter to i
    oh_src = (iota_en == src_col).astype(bf16)       # [TE, N_pad] gather x_j

    xi = jnp.dot(oh_tgt, p_sc[...], preferred_element_type=f32)   # P[tgt] (bias folded in)
    xj = jnp.dot(oh_src, q_sc[...], preferred_element_type=f32)   # Q[src]
    h = jnp.maximum(xi + xj, 0.0).astype(bf16)                     # ReLU(Linear1(x_i, x_j - x_i))
    # Scatter-add to target nodes, reusing oh_tgt (contraction over the edge axis).
    acc_sc[...] += lax.dot_general(
        oh_tgt, h, (((0,), (0,)), ((), ())), preferred_element_type=f32)

    # ---- finalize layer 1: mean, Linear2, outer ReLU, set up layer-2 P/Q ----------------
    @pl.when((layer == 0) & (t == last_t))
    def _():
        agg = acc_sc[...] * invdeg_ref[...]
        conv1 = (jnp.dot(agg, w1b_ref[...], precision=hi, preferred_element_type=f32)
                 + b1b_ref[...]) * mask_ref[...]
        n1 = jnp.maximum(conv1, 0.0)
        p2 = jnp.dot(n1, w2p_ref[...], precision=hi, preferred_element_type=f32) + b2a_ref[...]
        q2 = jnp.dot(n1, w2q_ref[...], precision=hi, preferred_element_type=f32)
        p_sc[...] = p2.astype(bf16)
        q_sc[...] = q2.astype(bf16)

    # ---- finalize layer 2: mean, Linear2, outer ReLU, output linear ---------------------
    @pl.when((layer == 1) & (t == last_t))
    def _():
        agg = acc_sc[...] * invdeg_ref[...]
        conv2 = (jnp.dot(agg, w2b_ref[...], precision=hi, preferred_element_type=f32)
                 + b2b_ref[...]) * mask_ref[...]
        n2 = jnp.maximum(conv2, 0.0)
        out_ref[...] = (jnp.dot(n2, wl_ref[...], precision=hi, preferred_element_type=f32)
                        + bl_ref[...])


def _round_up(v, m):
    return ((v + m - 1) // m) * m


def _pad2(a, rows, cols):
    return jnp.pad(a, ((0, rows - a.shape[0]), (0, cols - a.shape[1])))


def _vmem_limit_bytes():
    cap = None
    try:
        cap = getattr(pltpu.get_tpu_info(), "vmem_capacity_bytes", None)
    except Exception:
        cap = None
    if not cap:
        cap = 64 * 1024 * 1024  # conservative fallback (v7x-sized)
    # Leave ~25% headroom for Mosaic-internal scratch / double buffers.
    return int(min(cap - cap // 4, 100 * 1024 * 1024))


@functools.partial(jax.jit, static_argnames=("num_nodes", "edge_tile"))
def gnn_forward(x, edge_index, params, num_nodes, edge_tile=256):
    """x: [N, F] f32; edge_index: [2, E] int32 (row 0 = source j, row 1 = target i)."""
    (w1a_i, w1a_d, b1a, w1b, b1b,
     w2a_i, w2a_d, b2a, w2b, b2b, wl, bl) = params

    n = num_nodes
    f = x.shape[1]
    hdim = w1b.shape[0]
    odim = wl.shape[1]
    e = edge_index.shape[1]

    n_pad = max(_round_up(n, 16), 16)          # 16-sublane alignment for the bf16 P/Q scratch
    f_pad = _round_up(f, 128)
    h_pad = _round_up(hdim, 128)
    o_pad = _round_up(odim, 128)
    te = edge_tile
    e_pad = max(_round_up(e, te), te)
    num_tiles = e_pad // te

    src = edge_index[0].astype(jnp.int32)
    tgt = edge_index[1].astype(jnp.int32)

    # in-degree (mean normalization) + mask of nodes that receive at least one edge
    deg = jnp.zeros((n,), jnp.float32).at[tgt].add(1.0)
    inv_deg = 1.0 / jnp.maximum(deg, 1.0)
    has_edge = (deg > 0).astype(jnp.float32)
    invdeg_p = jnp.zeros((n_pad, 1), jnp.float32).at[:n, 0].set(inv_deg)
    mask_p = jnp.zeros((n_pad, 1), jnp.float32).at[:n, 0].set(has_edge)

    # pad edge list with -1 (matches no node id -> exact zero contribution in the kernel),
    # pack (target, source) into one int32 array -> a single small DMA per grid step
    pad_e = e_pad - e
    fill = -jnp.ones((pad_e,), jnp.int32)
    tgt_p = jnp.concatenate([tgt, fill])
    src_p = jnp.concatenate([src, fill])
    edges = jnp.stack([tgt_p, src_p], axis=-1)          # [E_pad, 2]: col0 = target, col1 = source

    x_p = _pad2(x.astype(jnp.float32), n_pad, f_pad)

    # EdgeConv Linear1 hoist: h_e = x_i @ (Wi - Wd) + x_j @ Wd + b
    w1p = _pad2(w1a_i - w1a_d, f_pad, h_pad)
    w1q = _pad2(w1a_d, f_pad, h_pad)
    w2p = _pad2(w2a_i - w2a_d, h_pad, h_pad)
    w2q = _pad2(w2a_d, h_pad, h_pad)
    b1a_p = _pad2(b1a, 1, h_pad)
    b2a_p = _pad2(b2a, 1, h_pad)
    w1b_p = _pad2(w1b, h_pad, h_pad)
    b1b_p = _pad2(b1b, 1, h_pad)
    w2b_p = _pad2(w2b, h_pad, h_pad)
    b2b_p = _pad2(b2b, 1, h_pad)
    wl_p = _pad2(wl, h_pad, o_pad)
    bl_p = _pad2(bl, 1, o_pad)

    edge_spec = pl.BlockSpec((te, 2), lambda l, t: (t, 0))

    node_consts = [x_p, invdeg_p, mask_p,
                   w1p, w1q, b1a_p, w1b_p, b1b_p,
                   w2p, w2q, b2a_p, w2b_p, b2b_p,
                   wl_p, bl_p]
    const_specs = [pl.BlockSpec(a.shape, lambda l, t: (0, 0)) for a in node_consts]

    inputs = [edges] + node_consts
    in_specs = [edge_spec] + const_specs

    flops = (12 * e_pad * n_pad * h_pad            # per-edge gather/gather/scatter, both layers
             + 4 * n_pad * f_pad * h_pad           # layer-1 P, Q
             + 8 * n_pad * h_pad * h_pad           # layer-2 P, Q + second linears of both layers
             + 2 * n_pad * h_pad * o_pad)          # output linear
    bytes_accessed = (sum(int(a.size) * a.dtype.itemsize for a in inputs)
                      + n_pad * o_pad * 4)

    out_pad = pl.pallas_call(
        gnn_kernel,
        out_shape=jax.ShapeDtypeStruct((n_pad, o_pad), jnp.float32),
        grid_spec=pltpu.PrefetchScalarGridSpec(
            num_scalar_prefetch=0,
            grid=(2, num_tiles),                               # (layer, edge tile)
            in_specs=in_specs,
            out_specs=pl.BlockSpec((n_pad, o_pad), lambda l, t: (0, 0)),
            scratch_shapes=[
                pltpu.VMEM((n_pad, h_pad), jnp.bfloat16),      # P (node-level, bias folded)
                pltpu.VMEM((n_pad, h_pad), jnp.bfloat16),      # Q
                pltpu.VMEM((n_pad, h_pad), jnp.float32),       # scatter accumulator
            ],
        ),
        compiler_params=pltpu.CompilerParams(
            dimension_semantics=("arbitrary", "arbitrary"),
            vmem_limit_bytes=_vmem_limit_bytes(),
        ),
        cost_estimate=pl.CostEstimate(
            flops=int(flops), transcendentals=0, bytes_accessed=int(bytes_accessed)),
    )(*inputs)

    return out_pad[:n, :odim]


def make_params(key, input_dim, hidden_dim, output_dim):
    """Deterministic synthetic parameters matching GNNModel's __init__ shapes."""
    ks = jax.random.split(key, 5)
    scale = 0.1

    def lin(k, fan_in, fan_out):
        kw, kb = jax.random.split(k)
        w = scale * jax.random.normal(kw, (fan_in, fan_out), jnp.float32)
        b = scale * jax.random.normal(kb, (1, fan_out), jnp.float32)
        return w, b

    # conv1.nn: Linear(2*F -> H), ReLU, Linear(H -> H)
    w1a, b1a = lin(ks[0], 2 * input_dim, hidden_dim)
    w1b, b1b = lin(ks[1], hidden_dim, hidden_dim)
    # conv2.nn: Linear(2*H -> H), ReLU, Linear(H -> H)
    w2a, b2a = lin(ks[2], 2 * hidden_dim, hidden_dim)
    w2b, b2b = lin(ks[3], hidden_dim, hidden_dim)
    # lin: Linear(H -> output_dim)
    wl, bl = lin(ks[4], hidden_dim, output_dim)

    # split first-linear weights into the x_i half and the (x_j - x_i) half
    w1a_i, w1a_d = w1a[:input_dim], w1a[input_dim:]
    w2a_i, w2a_d = w2a[:hidden_dim], w2a[hidden_dim:]

    return (w1a_i, w1a_d, b1a, w1b, b1b,
            w2a_i, w2a_d, b2a, w2b, b2b,
            wl, bl)


def reference_forward(x, edge_index, params):
    """Pure-JAX f32 reference mirroring the PyTorch/PyG EdgeConv(mean) semantics."""
    (w1a_i, w1a_d, b1a, w1b, b1b,
     w2a_i, w2a_d, b2a, w2b, b2b, wl, bl) = params
    src, tgt = edge_index[0], edge_index[1]
    n = x.shape[0]

    with jax.default_matmul_precision("highest"):   # scoped, not process-global

        def edge_conv(feat, wa_i, wa_d, ba, wb, bb):
            xi = feat[tgt]
            xj = feat[src]
            h = xi @ wa_i + (xj - xi) @ wa_d + ba
            h = jnp.maximum(h, 0.0)
            h = h @ wb + bb
            summed = jnp.zeros((n, h.shape[-1]), jnp.float32).at[tgt].add(h)
            deg = jnp.maximum(jnp.zeros((n,), jnp.float32).at[tgt].add(1.0), 1.0)
            return summed / deg[:, None]

        n1 = jnp.maximum(edge_conv(x, w1a_i, w1a_d, b1a, w1b, b1b), 0.0)
        n2 = jnp.maximum(edge_conv(n1, w2a_i, w2a_d, b2a, w2b, b2b), 0.0)
        return n2 @ wl + bl


if __name__ == "__main__":
    key = jax.random.PRNGKey(0)
    k_x, k_p = jax.random.split(key)

    num_nodes = 32
    input_dim = 4
    hidden_dim = 32
    output_dim = 2

    # node features
    x = jax.random.normal(k_x, (num_nodes, input_dim), jnp.float32)

    # small graph: bidirectional rings with offsets 1..5 -> E = 32*10 = 320 edges
    # (in-degree 10 everywhere; 2 edge tiles of 256, so cross-tile accumulation is exercised)
    idx = jnp.arange(num_nodes)
    srcs, tgts = [], []
    for off in (1, 2, 3, 4, 5):
        for d in (off, -off):
            srcs.append(idx)
            tgts.append((idx + d) % num_nodes)
    src = jnp.concatenate(srcs)
    tgt = jnp.concatenate(tgts)
    edge_index = jnp.stack([src, tgt]).astype(jnp.int32)   # [2, 320]; row0=source, row1=target

    params = make_params(k_p, input_dim, hidden_dim, output_dim)

    out = gnn_forward(x, edge_index, params, num_nodes=num_nodes)
    out = jax.block_until_ready(out)

    ref = reference_forward(x, edge_index, params)
    assert out.shape == (num_nodes, output_dim)
    max_err = float(jnp.max(jnp.abs(out - ref)))
    # bf16 gather/scatter path -> compare against the f32 reference at bf16-level tolerance
    assert jnp.allclose(out, ref, atol=3e-3, rtol=3e-3), (max_err, out, ref)

    print("KERNEL_OK")
</pallas_src>

<mosaic_0001>
module attributes {stable_mosaic.version = 11 : i64} {
  func.func private @main(%arg0: i32) attributes {dimension_semantics = [#tpu.dimension_semantics<core_parallel>], iteration_bounds = array<i64: 2>, tpu.core_type = #tpu.core_type<sc_scalar_subcore>, window_params = []} {
    return
  }
}

module attributes {stable_mosaic.version = 11 : i64} {
  func.func private @main(%arg0: i32) attributes {dimension_semantics = [#tpu.dimension_semantics<core_parallel>], iteration_bounds = array<i64: 2>, tpu.core_type = #tpu.core_type<sc_scalar_subcore>, window_params = []} {
    return
  }
}

module attributes {stable_mosaic.version = 11 : i64} {
  func.func @gnn_kernel(%arg0: i32, %arg1: i32, %arg2: memref<256x2xi32, #tpu.memory_space<vmem>>, %arg3: memref<32x128xf32, #tpu.memory_space<vmem>>, %arg4: memref<32x1xf32, #tpu.memory_space<vmem>>, %arg5: memref<32x1xf32, #tpu.memory_space<vmem>>, %arg6: memref<128x128xf32, #tpu.memory_space<vmem>>, %arg7: memref<128x128xf32, #tpu.memory_space<vmem>>, %arg8: memref<1x128xf32, #tpu.memory_space<vmem>>, %arg9: memref<128x128xf32, #tpu.memory_space<vmem>>, %arg10: memref<1x128xf32, #tpu.memory_space<vmem>>, %arg11: memref<128x128xf32, #tpu.memory_space<vmem>>, %arg12: memref<128x128xf32, #tpu.memory_space<vmem>>, %arg13: memref<1x128xf32, #tpu.memory_space<vmem>>, %arg14: memref<128x128xf32, #tpu.memory_space<vmem>>, %arg15: memref<1x128xf32, #tpu.memory_space<vmem>>, %arg16: memref<128x128xf32, #tpu.memory_space<vmem>>, %arg17: memref<1x128xf32, #tpu.memory_space<vmem>>, %arg18: memref<32x128xf32, #tpu.memory_space<vmem>>, %arg19: memref<32x128xbf16, #tpu.memory_space<vmem>>, %arg20: memref<32x128xbf16, #tpu.memory_space<vmem>>, %arg21: memref<32x128xf32, #tpu.memory_space<vmem>>) attributes {dimension_semantics = [#tpu.dimension_semantics<arbitrary>, #tpu.dimension_semantics<arbitrary>], iteration_bounds = array<i64: 2, 2>, scalar_prefetch = 0 : i64, scratch_operands = 3 : i64, tpu.core_type = #tpu.core_type<tc>, window_params = [{transform_indices = @transform_0, window_bounds = array<i64: 256, 2>}, {pipeline_mode = #tpu.pipeline_mode<synchronous>, transform_indices = @transform_1, window_bounds = array<i64: 32, 128>}, {pipeline_mode = #tpu.pipeline_mode<synchronous>, transform_indices = @transform_2, window_bounds = array<i64: 32, 1>}, {pipeline_mode = #tpu.pipeline_mode<synchronous>, transform_indices = @transform_3, window_bounds = array<i64: 32, 1>}, {pipeline_mode = #tpu.pipeline_mode<synchronous>, transform_indices = @transform_4, window_bounds = array<i64: 128, 128>}, {pipeline_mode = #tpu.pipeline_mode<synchronous>, transform_indices = @transform_5, window_bounds = array<i64: 128, 128>}, {pipeline_mode = #tpu.pipeline_mode<synchronous>, transform_indices = @transform_6, window_bounds = array<i64: 1, 128>}, {pipeline_mode = #tpu.pipeline_mode<synchronous>, transform_indices = @transform_7, window_bounds = array<i64: 128, 128>}, {pipeline_mode = #tpu.pipeline_mode<synchronous>, transform_indices = @transform_8, window_bounds = array<i64: 1, 128>}, {pipeline_mode = #tpu.pipeline_mode<synchronous>, transform_indices = @transform_9, window_bounds = array<i64: 128, 128>}, {pipeline_mode = #tpu.pipeline_mode<synchronous>, transform_indices = @transform_10, window_bounds = array<i64: 128, 128>}, {pipeline_mode = #tpu.pipeline_mode<synchronous>, transform_indices = @transform_11, window_bounds = array<i64: 1, 128>}, {pipeline_mode = #tpu.pipeline_mode<synchronous>, transform_indices = @transform_12, window_bounds = array<i64: 128, 128>}, {pipeline_mode = #tpu.pipeline_mode<synchronous>, transform_indices = @transform_13, window_bounds = array<i64: 1, 128>}, {pipeline_mode = #tpu.pipeline_mode<synchronous>, transform_indices = @transform_14, window_bounds = array<i64: 128, 128>}, {pipeline_mode = #tpu.pipeline_mode<synchronous>, transform_indices = @transform_15, window_bounds = array<i64: 1, 128>}, {pipeline_mode = #tpu.pipeline_mode<synchronous>, transform_indices = @transform_16, window_bounds = array<i64: 32, 128>}]} {
    %c0_i32 = arith.constant 0 : i32
    %0 = arith.cmpi eq, %arg0, %c0_i32 : i32
    %c0_i32_0 = arith.constant 0 : i32
    %1 = arith.cmpi eq, %arg1, %c0_i32_0 : i32
    %2 = arith.andi %0, %1 : i1
    %3 = arith.extui %2 : i1 to i32
    %c0_i32_1 = arith.constant 0 : i32
    %4 = arith.cmpi ne, %3, %c0_i32_1 : i32
    scf.if %4 {
      %c0_22 = arith.constant 0 : index
      %c0_23 = arith.constant 0 : index
      %46 = vector.load %arg3[%c0_22, %c0_23] : memref<32x128xf32, #tpu.memory_space<vmem>>, vector<32x128xf32>
      %c0_24 = arith.constant 0 : index
      %c0_25 = arith.constant 0 : index
      %47 = vector.load %arg6[%c0_24, %c0_25] : memref<128x128xf32, #tpu.memory_space<vmem>>, vector<128x128xf32>
      %cst_26 = arith.constant dense<0.000000e+00> : vector<32x128xf32>
      %48 = tpu.matmul %46, %47, %cst_26 {dimension_numbers = #tpu.dot_dimension_numbers<[1], [0], [0], [1], [0, 0, 1, 1], [], []>, precision = #tpu.contract_precision<fp32>} : vector<32x128xf32>, vector<128x128xf32>, vector<32x128xf32> -> vector<32x128xf32>
      %c0_27 = arith.constant 0 : index
      %c0_28 = arith.constant 0 : index
      %49 = vector.load %arg8[%c0_27, %c0_28] : memref<1x128xf32, #tpu.memory_space<vmem>>, vector<1x128xf32>
      %50 = vector.broadcast %49 : vector<1x128xf32> to vector<32x128xf32>
      %51 = arith.addf %48, %50 : vector<32x128xf32>
      %c0_29 = arith.constant 0 : index
      %c0_30 = arith.constant 0 : index
      %52 = vector.load %arg7[%c0_29, %c0_30] : memref<128x128xf32, #tpu.memory_space<vmem>>, vector<128x128xf32>
      %cst_31 = arith.constant dense<0.000000e+00> : vector<32x128xf32>
      %53 = tpu.matmul %46, %52, %cst_31 {dimension_numbers = #tpu.dot_dimension_numbers<[1], [0], [0], [1], [0, 0, 1, 1], [], []>, precision = #tpu.contract_precision<fp32>} : vector<32x128xf32>, vector<128x128xf32>, vector<32x128xf32> -> vector<32x128xf32>
      %54 = arith.truncf %51 : vector<32x128xf32> to vector<32x128xbf16>
      %c0_32 = arith.constant 0 : index
      %c0_33 = arith.constant 0 : index
      %55 = vector.load %arg19[%c0_32, %c0_33] : memref<32x128xbf16, #tpu.memory_space<vmem>>, vector<32x128xbf16>
      tpu.vector_store %arg19[%c0_32, %c0_33], %54 {strides = array<i32>} : memref<32x128xbf16, #tpu.memory_space<vmem>>, vector<32x128xbf16>,
      %56 = arith.truncf %53 : vector<32x128xf32> to vector<32x128xbf16>
      %c0_34 = arith.constant 0 : index
      %c0_35 = arith.constant 0 : index
      %57 = vector.load %arg20[%c0_34, %c0_35] : memref<32x128xbf16, #tpu.memory_space<vmem>>, vector<32x128xbf16>
      tpu.vector_store %arg20[%c0_34, %c0_35], %56 {strides = array<i32>} : memref<32x128xbf16, #tpu.memory_space<vmem>>, vector<32x128xbf16>,
      %cst_36 = arith.constant 0.000000e+00 : f32
      %58 = vector.broadcast %cst_36 : f32 to vector<32x128xf32>
      %c0_37 = arith.constant 0 : index
      %c0_38 = arith.constant 0 : index
      %59 = vector.load %arg21[%c0_37, %c0_38] : memref<32x128xf32, #tpu.memory_space<vmem>>, vector<32x128xf32>
      tpu.vector_store %arg21[%c0_37, %c0_38], %58 {strides = array<i32>} : memref<32x128xf32, #tpu.memory_space<vmem>>, vector<32x128xf32>,
    } else {
    }
    %c1_i32 = arith.constant 1 : i32
    %5 = arith.cmpi eq, %arg0, %c1_i32 : i32
    %c0_i32_2 = arith.constant 0 : i32
    %6 = arith.cmpi eq, %arg1, %c0_i32_2 : i32
    %7 = arith.andi %5, %6 : i1
    %8 = arith.extui %7 : i1 to i32
    %c0_i32_3 = arith.constant 0 : i32
    %9 = arith.cmpi ne, %8, %c0_i32_3 : i32
    scf.if %9 {
      %cst_22 = arith.constant 0.000000e+00 : f32
      %46 = vector.broadcast %cst_22 : f32 to vector<32x128xf32>
      %c0_23 = arith.constant 0 : index
      %c0_24 = arith.constant 0 : index
      %47 = vector.load %arg21[%c0_23, %c0_24] : memref<32x128xf32, #tpu.memory_space<vmem>>, vector<32x128xf32>
      tpu.vector_store %arg21[%c0_23, %c0_24], %46 {strides = array<i32>} : memref<32x128xf32, #tpu.memory_space<vmem>>, vector<32x128xf32>,
    } else {
    }
    %c0 = arith.constant 0 : index
    %c0_4 = arith.constant 0 : index
    %10 = vector.load %arg2[%c0, %c0_4] : memref<256x2xi32, #tpu.memory_space<vmem>>, vector<256x2xi32>
    %11 = vector.extract_strided_slice %10 {offsets = [0, 0], sizes = [256, 1], strides = [1, 1]} : vector<256x2xi32> to vector<256x1xi32>
    %12 = vector.extract_strided_slice %10 {offsets = [0, 1], sizes = [256, 1], strides = [1, 1]} : vector<256x2xi32> to vector<256x1xi32>
    %13 = tpu.iota {dimensions = array<i32: 1>} : vector<256x32xi32>
    %14 = vector.broadcast %11 : vector<256x1xi32> to vector<256x32xi32>
    %15 = arith.cmpi eq, %13, %14 : vector<256x32xi32>
    %16 = arith.extui %15 : vector<256x32xi1> to vector<256x32xi32>
    %17 = arith.sitofp %16 : vector<256x32xi32> to vector<256x32xf32>
    %18 = arith.truncf %17 : vector<256x32xf32> to vector<256x32xbf16>
    %19 = vector.broadcast %12 : vector<256x1xi32> to vector<256x32xi32>
    %20 = arith.cmpi eq, %13, %19 : vector<256x32xi32>
    %21 = arith.extui %20 : vector<256x32xi1> to vector<256x32xi32>
    %22 = arith.sitofp %21 : vector<256x32xi32> to vector<256x32xf32>
    %23 = arith.truncf %22 : vector<256x32xf32> to vector<256x32xbf16>
    %c0_5 = arith.constant 0 : index
    %c0_6 = arith.constant 0 : index
    %24 = vector.load %arg19[%c0_5, %c0_6] : memref<32x128xbf16, #tpu.memory_space<vmem>>, vector<32x128xbf16>
    %cst = arith.constant dense<0.000000e+00> : vector<256x128xf32>
    %25 = tpu.matmul %18, %24, %cst {dimension_numbers = #tpu.dot_dimension_numbers<[1], [0], [0], [1], [0, 0, 1, 1], [], []>} : vector<256x32xbf16>, vector<32x128xbf16>, vector<256x128xf32> -> vector<256x128xf32>
    %c0_7 = arith.constant 0 : index
    %c0_8 = arith.constant 0 : index
    %26 = vector.load %arg20[%c0_7, %c0_8] : memref<32x128xbf16, #tpu.memory_space<vmem>>, vector<32x128xbf16>
    %cst_9 = arith.constant dense<0.000000e+00> : vector<256x128xf32>
    %27 = tpu.matmul %23, %26, %cst_9 {dimension_numbers = #tpu.dot_dimension_numbers<[1], [0], [0], [1], [0, 0, 1, 1], [], []>} : vector<256x32xbf16>, vector<32x128xbf16>, vector<256x128xf32> -> vector<256x128xf32>
    %28 = arith.addf %25, %27 : vector<256x128xf32>
    %cst_10 = arith.constant 0.000000e+00 : f32
    %29 = vector.broadcast %cst_10 : f32 to vector<256x128xf32>
    %30 = arith.maximumf %28, %29 : vector<256x128xf32>
    %31 = arith.truncf %30 : vector<256x128xf32> to vector<256x128xbf16>
    %c0_11 = arith.constant 0 : index
    %c0_12 = arith.constant 0 : index
    %32 = vector.load %arg21[%c0_11, %c0_12] : memref<32x128xf32, #tpu.memory_space<vmem>>, vector<32x128xf32>
    %cst_13 = arith.constant dense<0.000000e+00> : vector<32x128xf32>
    %33 = tpu.matmul %18, %31, %cst_13 {dimension_numbers = #tpu.dot_dimension_numbers<[0], [0], [1], [1], [0, 1, 1, 1], [], []>} : vector<256x32xbf16>, vector<256x128xbf16>, vector<32x128xf32> -> vector<32x128xf32>
    %34 = arith.addf %32, %33 : vector<32x128xf32>
    %c0_14 = arith.constant 0 : index
    %c0_15 = arith.constant 0 : index
    %35 = vector.load %arg21[%c0_14, %c0_15] : memref<32x128xf32, #tpu.memory_space<vmem>>, vector<32x128xf32>
    tpu.vector_store %arg21[%c0_14, %c0_15], %34 {strides = array<i32>} : memref<32x128xf32, #tpu.memory_space<vmem>>, vector<32x128xf32>,
    %c0_i32_16 = arith.constant 0 : i32
    %36 = arith.cmpi eq, %arg0, %c0_i32_16 : i32
    %c1_i32_17 = arith.constant 1 : i32
    %37 = arith.cmpi eq, %arg1, %c1_i32_17 : i32
    %38 = arith.andi %36, %37 : i1
    %39 = arith.extui %38 : i1 to i32
    %c0_i32_18 = arith.constant 0 : i32
    %40 = arith.cmpi ne, %39, %c0_i32_18 : i32
    scf.if %40 {
      %c0_22 = arith.constant 0 : index
      %c0_23 = arith.constant 0 : index
      %46 = vector.load %arg21[%c0_22, %c0_23] : memref<32x128xf32, #tpu.memory_space<vmem>>, vector<32x128xf32>
      %c0_24 = arith.constant 0 : index
      %c0_25 = arith.constant 0 : index
      %47 = vector.load %arg4[%c0_24, %c0_25] : memref<32x1xf32, #tpu.memory_space<vmem>>, vector<32x1xf32>
      %48 = vector.broadcast %47 : vector<32x1xf32> to vector<32x128xf32>
      %49 = arith.mulf %46, %48 : vector<32x128xf32>
      %c0_26 = arith.constant 0 : index
      %c0_27 = arith.constant 0 : index
      %50 = vector.load %arg9[%c0_26, %c0_27] : memref<128x128xf32, #tpu.memory_space<vmem>>, vector<128x128xf32>
      %cst_28 = arith.constant dense<0.000000e+00> : vector<32x128xf32>
      %51 = tpu.matmul %49, %50, %cst_28 {dimension_numbers = #tpu.dot_dimension_numbers<[1], [0], [0], [1], [0, 0, 1, 1], [], []>, precision = #tpu.contract_precision<fp32>} : vector<32x128xf32>, vector<128x128xf32>, vector<32x128xf32> -> vector<32x128xf32>
      %c0_29 = arith.constant 0 : index
      %c0_30 = arith.constant 0 : index
      %52 = vector.load %arg10[%c0_29, %c0_30] : memref<1x128xf32, #tpu.memory_space<vmem>>, vector<1x128xf32>
      %53 = vector.broadcast %52 : vector<1x128xf32> to vector<32x128xf32>
      %54 = arith.addf %51, %53 : vector<32x128xf32>
      %c0_31 = arith.constant 0 : index
      %c0_32 = arith.constant 0 : index
      %55 = vector.load %arg5[%c0_31, %c0_32] : memref<32x1xf32, #tpu.memory_space<vmem>>, vector<32x1xf32>
      %56 = vector.broadcast %55 : vector<32x1xf32> to vector<32x128xf32>
      %57 = arith.mulf %54, %56 : vector<32x128xf32>
      %cst_33 = arith.constant 0.000000e+00 : f32
      %58 = vector.broadcast %cst_33 : f32 to vector<32x128xf32>
      %59 = arith.maximumf %57, %58 : vector<32x128xf32>
      %c0_34 = arith.constant 0 : index
      %c0_35 = arith.constant 0 : index
      %60 = vector.load %arg11[%c0_34, %c0_35] : memref<128x128xf32, #tpu.memory_space<vmem>>, vector<128x128xf32>
      %cst_36 = arith.constant dense<0.000000e+00> : vector<32x128xf32>
      %61 = tpu.matmul %59, %60, %cst_36 {dimension_numbers = #tpu.dot_dimension_numbers<[1], [0], [0], [1], [0, 0, 1, 1], [], []>, precision = #tpu.contract_precision<fp32>} : vector<32x128xf32>, vector<128x128xf32>, vector<32x128xf32> -> vector<32x128xf32>
      %c0_37 = arith.constant 0 : index
      %c0_38 = arith.constant 0 : index
      %62 = vector.load %arg13[%c0_37, %c0_38] : memref<1x128xf32, #tpu.memory_space<vmem>>, vector<1x128xf32>
      %63 = vector.broadcast %62 : vector<1x128xf32> to vector<32x128xf32>
      %64 = arith.addf %61, %63 : vector<32x128xf32>
      %c0_39 = arith.constant 0 : index
      %c0_40 = arith.constant 0 : index
      %65 = vector.load %arg12[%c0_39, %c0_40] : memref<128x128xf32, #tpu.memory_space<vmem>>, vector<128x128xf32>
      %cst_41 = arith.constant dense<0.000000e+00> : vector<32x128xf32>
      %66 = tpu.matmul %59, %65, %cst_41 {dimension_numbers = #tpu.dot_dimension_numbers<[1], [0], [0], [1], [0, 0, 1, 1], [], []>, precision = #tpu.contract_precision<fp32>} : vector<32x128xf32>, vector<128x128xf32>, vector<32x128xf32> -> vector<32x128xf32>
      %67 = arith.truncf %64 : vector<32x128xf32> to vector<32x128xbf16>
      %c0_42 = arith.constant 0 : index
      %c0_43 = arith.constant 0 : index
      %68 = vector.load %arg19[%c0_42, %c0_43] : memref<32x128xbf16, #tpu.memory_space<vmem>>, vector<32x128xbf16>
      tpu.vector_store %arg19[%c0_42, %c0_43], %67 {strides = array<i32>} : memref<32x128xbf16, #tpu.memory_space<vmem>>, vector<32x128xbf16>,
      %69 = arith.truncf %66 : vector<32x128xf32> to vector<32x128xbf16>
      %c0_44 = arith.constant 0 : index
      %c0_45 = arith.constant 0 : index
      %70 = vector.load %arg20[%c0_44, %c0_45] : memref<32x128xbf16, #tpu.memory_space<vmem>>, vector<32x128xbf16>
      tpu.vector_store %arg20[%c0_44, %c0_45], %69 {strides = array<i32>} : memref<32x128xbf16, #tpu.memory_space<vmem>>, vector<32x128xbf16>,
    } else {
    }
    %c1_i32_19 = arith.constant 1 : i32
    %41 = arith.cmpi eq, %arg0, %c1_i32_19 : i32
    %c1_i32_20 = arith.constant 1 : i32
    %42 = arith.cmpi eq, %arg1, %c1_i32_20 : i32
    %43 = arith.andi %41, %42 : i1
    %44 = arith.extui %43 : i1 to i32
    %c0_i32_21 = arith.constant 0 : i32
    %45 = arith.cmpi ne, %44, %c0_i32_21 : i32
    scf.if %45 {
      %c0_22 = arith.constant 0 : index
      %c0_23 = arith.constant 0 : index
      %46 = vector.load %arg21[%c0_22, %c0_23] : memref<32x128xf32, #tpu.memory_space<vmem>>, vector<32x128xf32>
      %c0_24 = arith.constant 0 : index
      %c0_25 = arith.constant 0 : index
      %47 = vector.load %arg4[%c0_24, %c0_25] : memref<32x1xf32, #tpu.memory_space<vmem>>, vector<32x1xf32>
      %48 = vector.broadcast %47 : vector<32x1xf32> to vector<32x128xf32>
      %49 = arith.mulf %46, %48 : vector<32x128xf32>
      %c0_26 = arith.constant 0 : index
      %c0_27 = arith.constant 0 : index
      %50 = vector.load %arg14[%c0_26, %c0_27] : memref<128x128xf32, #tpu.memory_space<vmem>>, vector<128x128xf32>
      %cst_28 = arith.constant dense<0.000000e+00> : vector<32x128xf32>
      %51 = tpu.matmul %49, %50, %cst_28 {dimension_numbers = #tpu.dot_dimension_numbers<[1], [0], [0], [1], [0, 0, 1, 1], [], []>, precision = #tpu.contract_precision<fp32>} : vector<32x128xf32>, vector<128x128xf32>, vector<32x128xf32> -> vector<32x128xf32>
      %c0_29 = arith.constant 0 : index
      %c0_30 = arith.constant 0 : index
      %52 = vector.load %arg15[%c0_29, %c0_30] : memref<1x128xf32, #tpu.memory_space<vmem>>, vector<1x128xf32>
      %53 = vector.broadcast %52 : vector<1x128xf32> to vector<32x128xf32>
      %54 = arith.addf %51, %53 : vector<32x128xf32>
      %c0_31 = arith.constant 0 : index
      %c0_32 = arith.constant 0 : index
      %55 = vector.load %arg5[%c0_31, %c0_32] : memref<32x1xf32, #tpu.memory_space<vmem>>, vector<32x1xf32>
      %56 = vector.broadcast %55 : vector<32x1xf32> to vector<32x128xf32>
      %57 = arith.mulf %54, %56 : vector<32x128xf32>
      %cst_33 = arith.constant 0.000000e+00 : f32
      %58 = vector.broadcast %cst_33 : f32 to vector<32x128xf32>
      %59 = arith.maximumf %57, %58 : vector<32x128xf32>
      %c0_34 = arith.constant 0 : index
      %c0_35 = arith.constant 0 : index
      %60 = vector.load %arg16[%c0_34, %c0_35] : memref<128x128xf32, #tpu.memory_space<vmem>>, vector<128x128xf32>
      %cst_36 = arith.constant dense<0.000000e+00> : vector<32x128xf32>
      %61 = tpu.matmul %59, %60, %cst_36 {dimension_numbers = #tpu.dot_dimension_numbers<[1], [0], [0], [1], [0, 0, 1, 1], [], []>, precision = #tpu.contract_precision<fp32>} : vector<32x128xf32>, vector<128x128xf32>, vector<32x128xf32> -> vector<32x128xf32>
      %c0_37 = arith.constant 0 : index
      %c0_38 = arith.constant 0 : index
      %62 = vector.load %arg17[%c0_37, %c0_38] : memref<1x128xf32, #tpu.memory_space<vmem>>, vector<1x128xf32>
      %63 = vector.broadcast %62 : vector<1x128xf32> to vector<32x128xf32>
      %64 = arith.addf %61, %63 : vector<32x128xf32>
      %c0_39 = arith.constant 0 : index
      %c0_40 = arith.constant 0 : index
      %65 = vector.load %arg18[%c0_39, %c0_40] : memref<32x128xf32, #tpu.memory_space<vmem>>, vector<32x128xf32>
      tpu.vector_store %arg18[%c0_39, %c0_40], %64 {strides = array<i32>} : memref<32x128xf32, #tpu.memory_space<vmem>>, vector<32x128xf32>,
    } else {
    }
    return
  }
  func.func @transform_0(%arg0: i32, %arg1: i32) -> (i32, i32) {
    %c0_i32 = arith.constant 0 : i32
    %c0_i32_0 = arith.constant 0 : i32
    return %arg1, %c0_i32 : i32, i32
  }
  func.func @transform_1(%arg0: i32, %arg1: i32) -> (i32, i32) {
    %c0_i32 = arith.constant 0 : i32
    %c0_i32_0 = arith.constant 0 : i32
    %c0_i32_1 = arith.constant 0 : i32
    return %c0_i32, %c0_i32_0 : i32, i32
  }
  func.func @transform_2(%arg0: i32, %arg1: i32) -> (i32, i32) {
    %c0_i32 = arith.constant 0 : i32
    %c0_i32_0 = arith.constant 0 : i32
    %c0_i32_1 = arith.constant 0 : i32
    return %c0_i32, %c0_i32_0 : i32, i32
  }
  func.func @transform_3(%arg0: i32, %arg1: i32) -> (i32, i32) {
    %c0_i32 = arith.constant 0 : i32
    %c0_i32_0 = arith.constant 0 : i32
    %c0_i32_1 = arith.constant 0 : i32
    return %c0_i32, %c0_i32_0 : i32, i32
  }
  func.func @transform_4(%arg0: i32, %arg1: i32) -> (i32, i32) {
    %c0_i32 = arith.constant 0 : i32
    %c0_i32_0 = arith.constant 0 : i32
    %c0_i32_1 = arith.constant 0 : i32
    return %c0_i32, %c0_i32_0 : i32, i32
  }
  func.func @transform_5(%arg0: i32, %arg1: i32) -> (i32, i32) {
    %c0_i32 = arith.constant 0 : i32
    %c0_i32_0 = arith.constant 0 : i32
    %c0_i32_1 = arith.constant 0 : i32
    return %c0_i32, %c0_i32_0 : i32, i32
  }
  func.func @transform_6(%arg0: i32, %arg1: i32) -> (i32, i32) {
    %c0_i32 = arith.constant 0 : i32
    %c0_i32_0 = arith.constant 0 : i32
    %c0_i32_1 = arith.constant 0 : i32
    return %c0_i32, %c0_i32_0 : i32, i32
  }
  func.func @transform_7(%arg0: i32, %arg1: i32) -> (i32, i32) {
    %c0_i32 = arith.constant 0 : i32
    %c0_i32_0 = arith.constant 0 : i32
    %c0_i32_1 = arith.constant 0 : i32
    return %c0_i32, %c0_i32_0 : i32, i32
  }
  func.func @transform_8(%arg0: i32, %arg1: i32) -> (i32, i32) {
    %c0_i32 = arith.constant 0 : i32
    %c0_i32_0 = arith.constant 0 : i32
    %c0_i32_1 = arith.constant 0 : i32
    return %c0_i32, %c0_i32_0 : i32, i32
  }
  func.func @transform_9(%arg0: i32, %arg1: i32) -> (i32, i32) {
    %c0_i32 = arith.constant 0 : i32
    %c0_i32_0 = arith.constant 0 : i32
    %c0_i32_1 = arith.constant 0 : i32
    return %c0_i32, %c0_i32_0 : i32, i32
  }
  func.func @transform_10(%arg0: i32, %arg1: i32) -> (i32, i32) {
    %c0_i32 = arith.constant 0 : i32
    %c0_i32_0 = arith.constant 0 : i32
    %c0_i32_1 = arith.constant 0 : i32
    return %c0_i32, %c0_i32_0 : i32, i32
  }
  func.func @transform_11(%arg0: i32, %arg1: i32) -> (i32, i32) {
    %c0_i32 = arith.constant 0 : i32
    %c0_i32_0 = arith.constant 0 : i32
    %c0_i32_1 = arith.constant 0 : i32
    return %c0_i32, %c0_i32_0 : i32, i32
  }
  func.func @transform_12(%arg0: i32, %arg1: i32) -> (i32, i32) {
    %c0_i32 = arith.constant 0 : i32
    %c0_i32_0 = arith.constant 0 : i32
    %c0_i32_1 = arith.constant 0 : i32
    return %c0_i32, %c0_i32_0 : i32, i32
  }
  func.func @transform_13(%arg0: i32, %arg1: i32) -> (i32, i32) {
    %c0_i32 = arith.constant 0 : i32
    %c0_i32_0 = arith.constant 0 : i32
    %c0_i32_1 = arith.constant 0 : i32
    return %c0_i32, %c0_i32_0 : i32, i32
  }
  func.func @transform_14(%arg0: i32, %arg1: i32) -> (i32, i32) {
    %c0_i32 = arith.constant 0 : i32
    %c0_i32_0 = arith.constant 0 : i32
    %c0_i32_1 = arith.constant 0 : i32
    return %c0_i32, %c0_i32_0 : i32, i32
  }
  func.func @transform_15(%arg0: i32, %arg1: i32) -> (i32, i32) {
    %c0_i32 = arith.constant 0 : i32
    %c0_i32_0 = arith.constant 0 : i32
    %c0_i32_1 = arith.constant 0 : i32
    return %c0_i32, %c0_i32_0 : i32, i32
  }
  func.func @transform_16(%arg0: i32, %arg1: i32) -> (i32, i32) {
    %c0_i32 = arith.constant 0 : i32
    %c0_i32_0 = arith.constant 0 : i32
    %c0_i32_1 = arith.constant 0 : i32
    return %c0_i32, %c0_i32_0 : i32, i32
  }
}

</mosaic_0001>

<llo_original>
// kernel: sub.2
$region0: #{sub.2}
  #allocation0 [shape = 's32[1]{0}', space=sflag, size = 0x4, scoped, tag = 'scoped memory for sub.2']
  %s0 = inlined_call_operand.vmem [shape: f32[4,32], index: 0, kind: input, shape index: {}]
  %s1 = inlined_call_operand.vmem [shape: f32[4,32], index: 1, kind: input, shape index: {}]
  %s2 = inlined_call_operand.vmem [shape: f32[4,32], index: 2, kind: output, shape index: {}]
  %v3 = vld [vmem:[%s0] sm:$0xf]
  %v4 = vld [vmem:[%s1] sm:$0xf]
  %5 = xla_tuple %v3, %v4
  %6 = xla_tuple %5
  %v7 = vsub.f32 %v3, %v4
  %8 = xla_tuple %v7
  %9 = vst [vmem:[%s2] sm:$0xf] %v7

// kernel: sub.3
$region0: #{sub.3}
  #allocation0 [shape = 's32[1]{0}', space=sflag, size = 0x4, scoped, tag = 'scoped memory for sub.3']
  %s0 = inlined_call_operand.vmem [shape: f32[32,32], index: 0, kind: input, shape index: {}]
  %s1 = inlined_call_operand.vmem [shape: f32[32,32], index: 1, kind: input, shape index: {}]
  %s2 = inlined_call_operand.vmem [shape: f32[32,32], index: 2, kind: output, shape index: {}]
  %v3 = vld [vmem:[%s0] sm:$0xff]
  %v4 = vld [vmem:[%s1] sm:$0xff]
  %5 = xla_tuple %v3, %v4
  %6 = xla_tuple %5
  %v7 = vsub.f32 %v3, %v4
  %8 = xla_tuple %v7
  %9 = vst [vmem:[%s2] sm:$0xff] %v7
  %s10 = scalar_lea.vmem %s0, 8
  %v11 = vld [vmem:[%s10] sm:$0xff]
  %s12 = scalar_lea.vmem %s1, 8
  %v13 = vld [vmem:[%s12] sm:$0xff]
  %14 = xla_tuple %v11, %v13
  %15 = xla_tuple %14
  %v16 = vsub.f32 %v11, %v13
  %17 = xla_tuple %v16
  %s18 = scalar_lea.vmem %s2, 8
  %19 = vst [vmem:[%s18] sm:$0xff] %v16
  %s20 = scalar_lea.vmem %s0, 16
  %v21 = vld [vmem:[%s20] sm:$0xff]
  %s22 = scalar_lea.vmem %s1, 16
  %v23 = vld [vmem:[%s22] sm:$0xff]
  %24 = xla_tuple %v21, %v23
  %25 = xla_tuple %24
  %v26 = vsub.f32 %v21, %v23
  %27 = xla_tuple %v26
  %s28 = scalar_lea.vmem %s2, 16
  %29 = vst [vmem:[%s28] sm:$0xff] %v26
  %s30 = scalar_lea.vmem %s0, 24
  %v31 = vld [vmem:[%s30] sm:$0xff]
  %s32 = scalar_lea.vmem %s1, 24
  %v33 = vld [vmem:[%s32] sm:$0xff]
  %34 = xla_tuple %v31, %v33
  %35 = xla_tuple %34
  %v36 = vsub.f32 %v31, %v33
  %37 = xla_tuple %v36
  %s38 = scalar_lea.vmem %s2, 24
  %39 = vst [vmem:[%s38] sm:$0xff] %v36

// kernel: gnn_forward.1
$region0: #{gnn_forward.1}
  #allocation0 [shape = 'u32[]', space=smem, size = 0x4, offset = 0x4, fixed_abs, tag = 'smem constant byte address 0x4 - core index']
  #allocation1 [shape = 'u32[144,128]{1,0:T(1,128)}', space=vmem, size = 0x12000, scoped, tag = 'internal scratch']
  #allocation2 [shape = 'bf16[32,128]{1,0:T(16,128)(2,1)}', space=vmem, size = 0x2000, scoped, tag = 'scratch operand']
  #allocation3 [shape = 'bf16[32,128]{1,0:T(16,128)(2,1)}', space=vmem, size = 0x2000, scoped, tag = 'scratch operand']
  #allocation4 [shape = 'f32[32,128]{1,0:T(8,128)}', space=vmem, size = 0x4000, scoped, tag = 'scratch operand']
  %s0 = inlined_call_operand.vmem [shape: s32[512,2], index: 0, kind: input, shape index: {}]
  %s1 = inlined_call_operand.vmem [shape: f32[32,128], index: 1, kind: input, shape index: {}]
  %s2 = inlined_call_operand.vmem [shape: f32[32,1], index: 2, kind: input, shape index: {}]
  %s3 = inlined_call_operand.vmem [shape: f32[32,1], index: 3, kind: input, shape index: {}]
  %s4 = inlined_call_operand.vmem [shape: f32[128,128], index: 4, kind: input, shape index: {}]
  %s5 = inlined_call_operand.vmem [shape: f32[128,128], index: 5, kind: input, shape index: {}]
  %s6 = inlined_call_operand.vmem [shape: f32[1,128], index: 6, kind: input, shape index: {}]
  %s7 = inlined_call_operand.vmem [shape: f32[128,128], index: 7, kind: input, shape index: {}]
  %s8 = inlined_call_operand.vmem [shape: f32[1,128], index: 8, kind: input, shape index: {}]
  %s9 = inlined_call_operand.vmem [shape: f32[128,128], index: 9, kind: input, shape index: {}]
  %s10 = inlined_call_operand.vmem [shape: f32[128,128], index: 10, kind: input, shape index: {}]
  %s11 = inlined_call_operand.vmem [shape: f32[1,128], index: 11, kind: input, shape index: {}]
  %s12 = inlined_call_operand.vmem [shape: f32[128,128], index: 12, kind: input, shape index: {}]
  %s13 = inlined_call_operand.vmem [shape: f32[1,128], index: 13, kind: input, shape index: {}]
  %s14 = inlined_call_operand.vmem [shape: f32[128,128], index: 14, kind: input, shape index: {}]
  %s15 = inlined_call_operand.vmem [shape: f32[1,128], index: 15, kind: input, shape index: {}]
  %s16 = inlined_call_operand.vmem [shape: f32[32,128], index: 16, kind: output, shape index: {}]
  %s17 = sld [smem:[#allocation0]]
  $region113: #{gnn_forward.1} parent=0
    _
  %s19 = ssub.s32 1, %s17
  %s20 = scalar_select 0, %s19, %s17
  loop: start=0, step=1, limit=6
  $region2: #{gnn_forward.1} parent=0 // loop_pre_header
    _
  $region3: #{gnn_forward.1} parent=0 // loop_header
    %s22 = sphi 0, %s26
    %p23 = scmp.ge.s32.totalorder %s22, 6
    %s29 = sphi 0, %s41
    %s30 = sphi 0, %s37
    %s31 = sphi 0, %s29
    %s32 = sphi 0, %s30
    %s33 = sphi 0, %s31
    %s34 = sphi 0, %s32
    %s44 = sphi 0, %s46
    %s47 = sphi 0, %s44
    %s48 = sphi 0, %s47
    %s64 = sphi 0, %s48
    %s68 = sphi 0, %s68
    %s70 = sphi 0, %s68
    %s71 = sphi 0, %s70
    %s85 = sphi 0, %s71
    %s89 = sphi 0, %s89
    %s91 = sphi 0, %s89
    %s92 = sphi 0, %s91
    %s106 = sphi 0, %s92
    %s110 = sphi 0, %s110
    %s112 = sphi 0, %s110
    %s113 = sphi 0, %s112
    %s127 = sphi 0, %s113
    %s131 = sphi 0, %s131
    %s133 = sphi 0, %s131
    %s134 = sphi 0, %s133
    %s148 = sphi 0, %s134
    %s152 = sphi 0, %s152
    %s154 = sphi 0, %s152
    %s155 = sphi 0, %s154
    %s169 = sphi 0, %s155
    %s173 = sphi 0, %s173
    %s175 = sphi 0, %s173
    %s176 = sphi 0, %s175
    %s190 = sphi 0, %s176
    %s194 = sphi 0, %s194
    %s196 = sphi 0, %s194
    %s197 = sphi 0, %s196
    %s211 = sphi 0, %s197
    %s215 = sphi 0, %s215
    %s217 = sphi 0, %s215
    %s218 = sphi 0, %s217
    %s232 = sphi 0, %s218
    %s236 = sphi 0, %s236
    %s238 = sphi 0, %s236
    %s239 = sphi 0, %s238
    %s253 = sphi 0, %s239
    %s257 = sphi 0, %s257
    %s259 = sphi 0, %s257
    %s260 = sphi 0, %s259
    %s274 = sphi 0, %s260
    %s278 = sphi 0, %s278
    %s280 = sphi 0, %s278
    %s281 = sphi 0, %s280
    %s295 = sphi 0, %s281
    %s299 = sphi 0, %s299
    %s301 = sphi 0, %s299
    %s302 = sphi 0, %s301
    %s316 = sphi 0, %s302
    %s320 = sphi 0, %s320
    %s322 = sphi 0, %s320
    %s323 = sphi 0, %s322
    %s337 = sphi 0, %s323
    %s341 = sphi 0, %s341
    %s343 = sphi 0, %s341
    %s344 = sphi 0, %s343
    %s358 = sphi 0, %s344
    %s362 = sphi 0, %s362
    %s364 = sphi 0, %s362
    %s365 = sphi 0, %s364
    %s379 = sphi 0, %s365
    %s383 = sphi 0, %s383
    %s385 = sphi 0, %s383
    %s386 = sphi 0, %s385
    %s400 = sphi 0, %s386
  $region4: #{gnn_forward.1} parent=0 // loop_header_branch
    %25 = sbr.rel (%p23) target = $region8
  $region5: #{gnn_forward.1} parent=0 // loop_body
    %s27 = ssub.s32 %s22, 1
    %s28 = ssub.s32 %s22, 2
    %s35 = sadd.s32 1, %s30
    %p36 = scmp.ge.s32.totalorder %s35, 2
    %s37 = scalar_select %p36, 0, %s35
    %s38 = sadd.s32 1, %s29
    %s39 = scalar_select %p36, %s38, %s29
    %p40 = scmp.ge.s32.totalorder %s39, 2
    %s41 = scalar_select %p40, 0, %s39
    %s42 = ssub.s32 %s30, %s37
    %p43 = scmp.eq.s32.totalorder %s42, 0
    %s45 = sadd.s32 %s44, 1
    %s46 = scalar_select %p43, %s44, %s45
    %p49 = pneg %p43
    %p50 = scmp.eq.s32.totalorder %s22, 3
    %p51 = por %p49, %p50
    %p52 = scmp.ne.s32.totalorder %s44, %s47
    %p53 = scmp.eq.s32.totalorder %s22, 0
    %p54 = por %p52, %p53
    %p55 = scmp.ne.s32.totalorder %s44, %s47
    %p56 = scmp.eq.s32.totalorder %s27, 3
    %p57 = por %p55, %p56
    %p58 = scmp.ne.s32.totalorder %s47, %s48
    %p59 = scmp.eq.s32.totalorder %s27, 0
    %p60 = por %p58, %p59
    %p61 = scmp.ne.s32.totalorder %s47, %s48
    %p62 = scmp.eq.s32.totalorder %s28, 3
    %p63 = por %p61, %p62
    %p65 = scmp.ne.s32.totalorder %s48, %s64
    %p66 = scmp.eq.s32.totalorder %s28, 0
    %p67 = por %p65, %p66
    %s69 = sadd.s32 %s68, 1
    %p72 = scmp.eq.s32.totalorder %s22, 3
    %p73 = scmp.ne.s32.totalorder %s68, %s70
    %p74 = scmp.eq.s32.totalorder %s22, 0
    %p75 = por %p73, %p74
    %p76 = scmp.ne.s32.totalorder %s68, %s70
    %p77 = scmp.eq.s32.totalorder %s27, 3
    %p78 = por %p76, %p77
    %p79 = scmp.ne.s32.totalorder %s70, %s71
    %p80 = scmp.eq.s32.totalorder %s27, 0
    %p81 = por %p79, %p80
    %p82 = scmp.ne.s32.totalorder %s70, %s71
    %p83 = scmp.eq.s32.totalorder %s28, 3
    %p84 = por %p82, %p83
    %p86 = scmp.ne.s32.totalorder %s71, %s85
    %p87 = scmp.eq.s32.totalorder %s28, 0
    %p88 = por %p86, %p87
    %s90 = sadd.s32 %s89, 1
    %p93 = scmp.eq.s32.totalorder %s22, 3
    %p94 = scmp.ne.s32.totalorder %s89, %s91
    %p95 = scmp.eq.s32.totalorder %s22, 0
    %p96 = por %p94, %p95
    %p97 = scmp.ne.s32.totalorder %s89, %s91
    %p98 = scmp.eq.s32.totalorder %s27, 3
    %p99 = por %p97, %p98
    %p100 = scmp.ne.s32.totalorder %s91, %s92
    %p101 = scmp.eq.s32.totalorder %s27, 0
    %p102 = por %p100, %p101
    %p103 = scmp.ne.s32.totalorder %s91, %s92
    %p104 = scmp.eq.s32.totalorder %s28, 3
    %p105 = por %p103, %p104
    %p107 = scmp.ne.s32.totalorder %s92, %s106
    %p108 = scmp.eq.s32.totalorder %s28, 0
    %p109 = por %p107, %p108
    %s111 = sadd.s32 %s110, 1
    %p114 = scmp.eq.s32.totalorder %s22, 3
    %p115 = scmp.ne.s32.totalorder %s110, %s112
    %p116 = scmp.eq.s32.totalorder %s22, 0
    %p117 = por %p115, %p116
    %p118 = scmp.ne.s32.totalorder %s110, %s112
    %p119 = scmp.eq.s32.totalorder %s27, 3
    %p120 = por %p118, %p119
    %p121 = scmp.ne.s32.totalorder %s112, %s113
    %p122 = scmp.eq.s32.totalorder %s27, 0
    %p123 = por %p121, %p122
    %p124 = scmp.ne.s32.totalorder %s112, %s113
    %p125 = scmp.eq.s32.totalorder %s28, 3
    %p126 = por %p124, %p125
    %p128 = scmp.ne.s32.totalorder %s113, %s127
    %p129 = scmp.eq.s32.totalorder %s28, 0
    %p130 = por %p128, %p129
    %s132 = sadd.s32 %s131, 1
    %p135 = scmp.eq.s32.totalorder %s22, 3
    %p136 = scmp.ne.s32.totalorder %s131, %s133
    %p137 = scmp.eq.s32.totalorder %s22, 0
    %p138 = por %p136, %p137
    %p139 = scmp.ne.s32.totalorder %s131, %s133
    %p140 = scmp.eq.s32.totalorder %s27, 3
    %p141 = por %p139, %p140
    %p142 = scmp.ne.s32.totalorder %s133, %s134
    %p143 = scmp.eq.s32.totalorder %s27, 0
    %p144 = por %p142, %p143
    %p145 = scmp.ne.s32.totalorder %s133, %s134
    %p146 = scmp.eq.s32.totalorder %s28, 3
    %p147 = por %p145, %p146
    %p149 = scmp.ne.s32.totalorder %s134, %s148
    %p150 = scmp.eq.s32.totalorder %s28, 0
    %p151 = por %p149, %p150
    %s153 = sadd.s32 %s152, 1
    %p156 = scmp.eq.s32.totalorder %s22, 3
    %p157 = scmp.ne.s32.totalorder %s152, %s154
    %p158 = scmp.eq.s32.totalorder %s22, 0
    %p159 = por %p157, %p158
    %p160 = scmp.ne.s32.totalorder %s152, %s154
    %p161 = scmp.eq.s32.totalorder %s27, 3
    %p162 = por %p160, %p161
    %p163 = scmp.ne.s32.totalorder %s154, %s155
    %p164 = scmp.eq.s32.totalorder %s27, 0
    %p165 = por %p163, %p164
    %p166 = scmp.ne.s32.totalorder %s154, %s155
    %p167 = scmp.eq.s32.totalorder %s28, 3
    %p168 = por %p166, %p167
    %p170 = scmp.ne.s32.totalorder %s155, %s169
    %p171 = scmp.eq.s32.totalorder %s28, 0
    %p172 = por %p170, %p171
    %s174 = sadd.s32 %s173, 1
    %p177 = scmp.eq.s32.totalorder %s22, 3
    %p178 = scmp.ne.s32.totalorder %s173, %s175
    %p179 = scmp.eq.s32.totalorder %s22, 0
    %p180 = por %p178, %p179
    %p181 = scmp.ne.s32.totalorder %s173, %s175
    %p182 = scmp.eq.s32.totalorder %s27, 3
    %p183 = por %p181, %p182
    %p184 = scmp.ne.s32.totalorder %s175, %s176
    %p185 = scmp.eq.s32.totalorder %s27, 0
    %p186 = por %p184, %p185
    %p187 = scmp.ne.s32.totalorder %s175, %s176
    %p188 = scmp.eq.s32.totalorder %s28, 3
    %p189 = por %p187, %p188
    %p191 = scmp.ne.s32.totalorder %s176, %s190
    %p192 = scmp.eq.s32.totalorder %s28, 0
    %p193 = por %p191, %p192
    %s195 = sadd.s32 %s194, 1
    %p198 = scmp.eq.s32.totalorder %s22, 3
    %p199 = scmp.ne.s32.totalorder %s194, %s196
    %p200 = scmp.eq.s32.totalorder %s22, 0
    %p201 = por %p199, %p200
    %p202 = scmp.ne.s32.totalorder %s194, %s196
    %p203 = scmp.eq.s32.totalorder %s27, 3
    %p204 = por %p202, %p203
    %p205 = scmp.ne.s32.totalorder %s196, %s197
    %p206 = scmp.eq.s32.totalorder %s27, 0
    %p207 = por %p205, %p206
    %p208 = scmp.ne.s32.totalorder %s196, %s197
    %p209 = scmp.eq.s32.totalorder %s28, 3
    %p210 = por %p208, %p209
    %p212 = scmp.ne.s32.totalorder %s197, %s211
    %p213 = scmp.eq.s32.totalorder %s28, 0
    %p214 = por %p212, %p213
    %s216 = sadd.s32 %s215, 1
    %p219 = scmp.eq.s32.totalorder %s22, 3
    %p220 = scmp.ne.s32.totalorder %s215, %s217
    %p221 = scmp.eq.s32.totalorder %s22, 0
    %p222 = por %p220, %p221
    %p223 = scmp.ne.s32.totalorder %s215, %s217
    %p224 = scmp.eq.s32.totalorder %s27, 3
    %p225 = por %p223, %p224
    %p226 = scmp.ne.s32.totalorder %s217, %s218
    %p227 = scmp.eq.s32.totalorder %s27, 0
    %p228 = por %p226, %p227
    %p229 = scmp.ne.s32.totalorder %s217, %s218
    %p230 = scmp.eq.s32.totalorder %s28, 3
    %p231 = por %p229, %p230
    %p233 = scmp.ne.s32.totalorder %s218, %s232
    %p234 = scmp.eq.s32.totalorder %s28, 0
    %p235 = por %p233, %p234
    %s237 = sadd.s32 %s236, 1
    %p240 = scmp.eq.s32.totalorder %s22, 3
    %p241 = scmp.ne.s32.totalorder %s236, %s238
    %p242 = scmp.eq.s32.totalorder %s22, 0
    %p243 = por %p241, %p242
    %p244 = scmp.ne.s32.totalorder %s236, %s238
    %p245 = scmp.eq.s32.totalorder %s27, 3
    %p246 = por %p244, %p245
    %p247 = scmp.ne.s32.totalorder %s238, %s239
    %p248 = scmp.eq.s32.totalorder %s27, 0
    %p249 = por %p247, %p248
    %p250 = scmp.ne.s32.totalorder %s238, %s239
    %p251 = scmp.eq.s32.totalorder %s28, 3
    %p252 = por %p250, %p251
    %p254 = scmp.ne.s32.totalorder %s239, %s253
    %p255 = scmp.eq.s32.totalorder %s28, 0
    %p256 = por %p254, %p255
    %s258 = sadd.s32 %s257, 1
    %p261 = scmp.eq.s32.totalorder %s22, 3
    %p262 = scmp.ne.s32.totalorder %s257, %s259
    %p263 = scmp.eq.s32.totalorder %s22, 0
    %p264 = por %p262, %p263
    %p265 = scmp.ne.s32.totalorder %s257, %s259
    %p266 = scmp.eq.s32.totalorder %s27, 3
    %p267 = por %p265, %p266
    %p268 = scmp.ne.s32.totalorder %s259, %s260
    %p269 = scmp.eq.s32.totalorder %s27, 0
    %p270 = por %p268, %p269
    %p271 = scmp.ne.s32.totalorder %s259, %s260
    %p272 = scmp.eq.s32.totalorder %s28, 3
    %p273 = por %p271, %p272
    %p275 = scmp.ne.s32.totalorder %s260, %s274
    %p276 = scmp.eq.s32.totalorder %s28, 0
    %p277 = por %p275, %p276
    %s279 = sadd.s32 %s278, 1
    %p282 = scmp.eq.s32.totalorder %s22, 3
    %p283 = scmp.ne.s32.totalorder %s278, %s280
    %p284 = scmp.eq.s32.totalorder %s22, 0
    %p285 = por %p283, %p284
    %p286 = scmp.ne.s32.totalorder %s278, %s280
    %p287 = scmp.eq.s32.totalorder %s27, 3
    %p288 = por %p286, %p287
    %p289 = scmp.ne.s32.totalorder %s280, %s281
    %p290 = scmp.eq.s32.totalorder %s27, 0
    %p291 = por %p289, %p290
    %p292 = scmp.ne.s32.totalorder %s280, %s281
    %p293 = scmp.eq.s32.totalorder %s28, 3
    %p294 = por %p292, %p293
    %p296 = scmp.ne.s32.totalorder %s281, %s295
    %p297 = scmp.eq.s32.totalorder %s28, 0
    %p298 = por %p296, %p297
    %s300 = sadd.s32 %s299, 1
    %p303 = scmp.eq.s32.totalorder %s22, 3
    %p304 = scmp.ne.s32.totalorder %s299, %s301
    %p305 = scmp.eq.s32.totalorder %s22, 0
    %p306 = por %p304, %p305
    %p307 = scmp.ne.s32.totalorder %s299, %s301
    %p308 = scmp.eq.s32.totalorder %s27, 3
    %p309 = por %p307, %p308
    %p310 = scmp.ne.s32.totalorder %s301, %s302
    %p311 = scmp.eq.s32.totalorder %s27, 0
    %p312 = por %p310, %p311
    %p313 = scmp.ne.s32.totalorder %s301, %s302
    %p314 = scmp.eq.s32.totalorder %s28, 3
    %p315 = por %p313, %p314
    %p317 = scmp.ne.s32.totalorder %s302, %s316
    %p318 = scmp.eq.s32.totalorder %s28, 0
    %p319 = por %p317, %p318
    %s321 = sadd.s32 %s320, 1
    %p324 = scmp.eq.s32.totalorder %s22, 3
    %p325 = scmp.ne.s32.totalorder %s320, %s322
    %p326 = scmp.eq.s32.totalorder %s22, 0
    %p327 = por %p325, %p326
    %p328 = scmp.ne.s32.totalorder %s320, %s322
    %p329 = scmp.eq.s32.totalorder %s27, 3
    %p330 = por %p328, %p329
    %p331 = scmp.ne.s32.totalorder %s322, %s323
    %p332 = scmp.eq.s32.totalorder %s27, 0
    %p333 = por %p331, %p332
    %p334 = scmp.ne.s32.totalorder %s322, %s323
    %p335 = scmp.eq.s32.totalorder %s28, 3
    %p336 = por %p334, %p335
    %p338 = scmp.ne.s32.totalorder %s323, %s337
    %p339 = scmp.eq.s32.totalorder %s28, 0
    %p340 = por %p338, %p339
    %s342 = sadd.s32 %s341, 1
    %p345 = scmp.eq.s32.totalorder %s22, 3
    %p346 = scmp.ne.s32.totalorder %s341, %s343
    %p347 = scmp.eq.s32.totalorder %s22, 0
    %p348 = por %p346, %p347
    %p349 = scmp.ne.s32.totalorder %s341, %s343
    %p350 = scmp.eq.s32.totalorder %s27, 3
    %p351 = por %p349, %p350
    %p352 = scmp.ne.s32.totalorder %s343, %s344
    %p353 = scmp.eq.s32.totalorder %s27, 0
    %p354 = por %p352, %p353
    %p355 = scmp.ne.s32.totalorder %s343, %s344
    %p356 = scmp.eq.s32.totalorder %s28, 3
    %p357 = por %p355, %p356
    %p359 = scmp.ne.s32.totalorder %s344, %s358
    %p360 = scmp.eq.s32.totalorder %s28, 0
    %p361 = por %p359, %p360
    %s363 = sadd.s32 %s362, 1
    %p366 = scmp.eq.s32.totalorder %s22, 3
    %p367 = scmp.ne.s32.totalorder %s362, %s364
    %p368 = scmp.eq.s32.totalorder %s22, 0
    %p369 = por %p367, %p368
    %p370 = scmp.ne.s32.totalorder %s362, %s364
    %p371 = scmp.eq.s32.totalorder %s27, 3
    %p372 = por %p370, %p371
    %p373 = scmp.ne.s32.totalorder %s364, %s365
    %p374 = scmp.eq.s32.totalorder %s27, 0
    %p375 = por %p373, %p374
    %p376 = scmp.ne.s32.totalorder %s364, %s365
    %p377 = scmp.eq.s32.totalorder %s28, 3
    %p378 = por %p376, %p377
    %p380 = scmp.ne.s32.totalorder %s365, %s379
    %p381 = scmp.eq.s32.totalorder %s28, 0
    %p382 = por %p380, %p381
    %s384 = sadd.s32 %s383, 1
    %p387 = scmp.eq.s32.totalorder %s22, 3
    %p388 = scmp.ne.s32.totalorder %s383, %s385
    %p389 = scmp.eq.s32.totalorder %s22, 0
    %p390 = por %p388, %p389
    %p391 = scmp.ne.s32.totalorder %s383, %s385
    %p392 = scmp.eq.s32.totalorder %s27, 3
    %p393 = por %p391, %p392
    %p394 = scmp.ne.s32.totalorder %s385, %s386
    %p395 = scmp.eq.s32.totalorder %s27, 0
    %p396 = por %p394, %p395
    %p397 = scmp.ne.s32.totalorder %s385, %s386
    %p398 = scmp.eq.s32.totalorder %s28, 3
    %p399 = por %p397, %p398
    %p401 = scmp.ne.s32.totalorder %s386, %s400
    %p402 = scmp.eq.s32.totalorder %s28, 0
    %p403 = por %p401, %p402
    %p404 = scmp.le.s32.totalorder 1, %s22
    %p405 = scmp.lt.s32.totalorder %s22, 5
    %p406 = pnand %p404, %p405
    %p407 = pneg %p406
    // Predicated region
    $region9: #{gnn_forward.1} parent=5 // pred_check
      _
    $region10: #{gnn_forward.1} parent=5 // pred_check_branch
      %409 = sbr.rel (%p406) target = $region12
    $region11: #{gnn_forward.1} parent=5 // pred_region
      %s410 = ssub.s32 %s22, 1
      // Predicated region
      $region13: #{gnn_forward.1} parent=11 // pred_check
        %p411 = pneg %p81
      $region14: #{gnn_forward.1} parent=11 // pred_check_branch
        %413 = sbr.rel (%p411) target = $region16
      $region15: #{gnn_forward.1} parent=11 // pred_region
        _
      $region16: #{gnn_forward.1} parent=11 // pred_fallthru
        _
      // Predicated region
      $region17: #{gnn_forward.1} parent=11 // pred_check
        %p414 = pneg %p102
      $region18: #{gnn_forward.1} parent=11 // pred_check_branch
        %416 = sbr.rel (%p414) target = $region20
      $region19: #{gnn_forward.1} parent=11 // pred_region
        _
      $region20: #{gnn_forward.1} parent=11 // pred_fallthru
        _
      // Predicated region
      $region21: #{gnn_forward.1} parent=11 // pred_check
        %p417 = pneg %p123
      $region22: #{gnn_forward.1} parent=11 // pred_check_branch
        %419 = sbr.rel (%p417) target = $region24
      $region23: #{gnn_forward.1} parent=11 // pred_region
        _
      $region24: #{gnn_forward.1} parent=11 // pred_fallthru
        _
      // Predicated region
      $region25: #{gnn_forward.1} parent=11 // pred_check
        %p420 = pneg %p144
      $region26: #{gnn_forward.1} parent=11 // pred_check_branch
        %422 = sbr.rel (%p420) target = $region28
      $region27: #{gnn_forward.1} parent=11 // pred_region
        _
      $region28: #{gnn_forward.1} parent=11 // pred_fallthru
        _
      // Predicated region
      $region29: #{gnn_forward.1} parent=11 // pred_check
        %p423 = pneg %p165
      $region30: #{gnn_forward.1} parent=11 // pred_check_branch
        %425 = sbr.rel (%p423) target = $region32
      $region31: #{gnn_forward.1} parent=11 // pred_region
        _
      $region32: #{gnn_forward.1} parent=11 // pred_fallthru
        _
      // Predicated region
      $region33: #{gnn_forward.1} parent=11 // pred_check
        %p426 = pneg %p186
      $region34: #{gnn_forward.1} parent=11 // pred_check_branch
        %428 = sbr.rel (%p426) target = $region36
      $region35: #{gnn_forward.1} parent=11 // pred_region
        _
      $region36: #{gnn_forward.1} parent=11 // pred_fallthru
        _
      // Predicated region
      $region37: #{gnn_forward.1} parent=11 // pred_check
        %p429 = pneg %p207
      $region38: #{gnn_forward.1} parent=11 // pred_check_branch
        %431 = sbr.rel (%p429) target = $region40
      $region39: #{gnn_forward.1} parent=11 // pred_region
        _
      $region40: #{gnn_forward.1} parent=11 // pred_fallthru
        _
      // Predicated region
      $region41: #{gnn_forward.1} parent=11 // pred_check
        %p432 = pneg %p228
      $region42: #{gnn_forward.1} parent=11 // pred_check_branch
        %434 = sbr.rel (%p432) target = $region44
      $region43: #{gnn_forward.1} parent=11 // pred_region
        _
      $region44: #{gnn_forward.1} parent=11 // pred_fallthru
        _
      // Predicated region
      $region45: #{gnn_forward.1} parent=11 // pred_check
        %p435 = pneg %p249
      $region46: #{gnn_forward.1} parent=11 // pred_check_branch
        %437 = sbr.rel (%p435) target = $region48
      $region47: #{gnn_forward.1} parent=11 // pred_region
        _
      $region48: #{gnn_forward.1} parent=11 // pred_fallthru
        _
      // Predicated region
      $region49: #{gnn_forward.1} parent=11 // pred_check
        %p438 = pneg %p270
      $region50: #{gnn_forward.1} parent=11 // pred_check_branch
        %440 = sbr.rel (%p438) target = $region52
      $region51: #{gnn_forward.1} parent=11 // pred_region
        _
      $region52: #{gnn_forward.1} parent=11 // pred_fallthru
        _
      // Predicated region
      $region53: #{gnn_forward.1} parent=11 // pred_check
        %p441 = pneg %p291
      $region54: #{gnn_forward.1} parent=11 // pred_check_branch
        %443 = sbr.rel (%p441) target = $region56
      $region55: #{gnn_forward.1} parent=11 // pred_region
        _
      $region56: #{gnn_forward.1} parent=11 // pred_fallthru
        _
      // Predicated region
      $region57: #{gnn_forward.1} parent=11 // pred_check
        %p444 = pneg %p312
      $region58: #{gnn_forward.1} parent=11 // pred_check_branch
        %446 = sbr.rel (%p444) target = $region60
      $region59: #{gnn_forward.1} parent=11 // pred_region
        _
      $region60: #{gnn_forward.1} parent=11 // pred_fallthru
        _
      // Predicated region
      $region61: #{gnn_forward.1} parent=11 // pred_check
        %p447 = pneg %p333
      $region62: #{gnn_forward.1} parent=11 // pred_check_branch
        %449 = sbr.rel (%p447) target = $region64
      $region63: #{gnn_forward.1} parent=11 // pred_region
        _
      $region64: #{gnn_forward.1} parent=11 // pred_fallthru
        _
      // Predicated region
      $region65: #{gnn_forward.1} parent=11 // pred_check
        %p450 = pneg %p354
      $region66: #{gnn_forward.1} parent=11 // pred_check_branch
        %452 = sbr.rel (%p450) target = $region68
      $region67: #{gnn_forward.1} parent=11 // pred_region
        _
      $region68: #{gnn_forward.1} parent=11 // pred_fallthru
        _
      // Predicated region
      $region69: #{gnn_forward.1} parent=11 // pred_check
        %p453 = pneg %p375
      $region70: #{gnn_forward.1} parent=11 // pred_check_branch
        %455 = sbr.rel (%p453) target = $region72
      $region71: #{gnn_forward.1} parent=11 // pred_region
        _
      $region72: #{gnn_forward.1} parent=11 // pred_fallthru
        _
    $region12: #{gnn_forward.1} parent=5 // pred_fallthru
      _
    %p456 = scmp.lt.s32.totalorder %s22, 4
    // Predicated region
    $region73: #{gnn_forward.1} parent=5 // pred_check
      %p457 = pneg %p456
    $region74: #{gnn_forward.1} parent=5 // pred_check_branch
      %459 = sbr.rel (%p457) target = $region76
    $region75: #{gnn_forward.1} parent=5 // pred_region
      // Predicated region
      $region77: #{gnn_forward.1} parent=75 // pred_check
        %p460 = pneg %p54
      $region78: #{gnn_forward.1} parent=75 // pred_check_branch
        %462 = sbr.rel (%p460) target = $region80
      $region79: #{gnn_forward.1} parent=75 // pred_region
        %s463 = smul.u32 32, %s30
        %p464 = scmp.lt.s32.totalorder %s463, 63
        %s465 = scalar_select %p464, %s463, 63
        %s466 = smul.addr %s465, 8
        %s467 = scalar_lea.vmem %s0, %s466
        %s468 = smul.u32 32, %s30
      $region80: #{gnn_forward.1} parent=75 // pred_fallthru
        _
    $region76: #{gnn_forward.1} parent=5 // pred_fallthru
      _
    %p469 = scmp.le.s32.totalorder 1, %s22
    %p470 = scmp.lt.s32.totalorder %s22, 5
    %p471 = pnand %p469, %p470
    %p472 = pneg %p471
    // Predicated region
    $region81: #{gnn_forward.1} parent=5 // pred_check
      _
    $region82: #{gnn_forward.1} parent=5 // pred_check_branch
      %474 = sbr.rel (%p471) target = $region84
    $region83: #{gnn_forward.1} parent=5 // pred_region
      %s475 = ssub.s32 %s22, 1
      %s476 = smul.u32 32, %s32
      %p477 = scmp.lt.s32.totalorder %s476, 63
      %s478 = scalar_select %p477, %s476, 63
      %s479 = smul.addr %s478, 8
      %s480 = scalar_lea.vmem %s0, %s479
      %p481 = pneg %p60
      %p482 = pneg %p57
      %p483 = pneg %p81
      %p484 = pneg %p78
      %p485 = pneg %p102
      %p486 = pneg %p99
      %p487 = pneg %p123
      %p488 = pneg %p120
      %p489 = pneg %p144
      %p490 = pneg %p141
      %p491 = pneg %p165
      %p492 = pneg %p162
      %p493 = pneg %p186
      %p494 = pneg %p183
      %p495 = pneg %p207
      %p496 = pneg %p204
      %p497 = pneg %p228
      %p498 = pneg %p225
      %p499 = pneg %p249
      %p500 = pneg %p246
      %p501 = pneg %p270
      %p502 = pneg %p267
      %p503 = pneg %p291
      %p504 = pneg %p288
      %p505 = pneg %p312
      %p506 = pneg %p309
      %p507 = pneg %p333
      %p508 = pneg %p330
      %p509 = pneg %p354
      %p510 = pneg %p351
      %p511 = pneg %p375
      %p512 = pneg %p372
      %p513 = pneg %p396
      %p514 = pneg %p393
      %s515 = smul.u32 32, %s32
      %p516 = scmp.lt.s32.totalorder %s515, 63
      %s517 = scalar_select %p516, %s515, 63
      %s518 = smul.addr %s517, 8
      %s519 = scalar_lea.vmem %s0, %s518
      %s520 = smul.u32 32, %s32
      %p522 = scmp.eq.s32.totalorder %s31, 0
      %p523 = scmp.eq.s32.totalorder %s32, 0
      %p524 = pnand %p522, %p523
      %p525 = pneg %p524
      // Predicated region
      $region85: #{gnn_forward.1} parent=83 // pred_check
        _
      $region86: #{gnn_forward.1} parent=83 // pred_check_branch
        %527 = sbr.rel (%p524) target = $region88
      $region87: #{gnn_forward.1} parent=83 // pred_region
        %v528 = vld [vmem:[%s1] sm:$0xff]
        %v529 = vld [vmem:[%s1 + $0x8] sm:$0xff]
        %v530 = vld [vmem:[%s1 + $0x10] sm:$0xff]
        %v531 = vld [vmem:[%s1 + $0x18] sm:$0xff]
        %v532 = vld [vmem:[%s4] sm:$0xff]
        %v533 = vld [vmem:[%s4 + $0x8] sm:$0xff]
        %v534 = vld [vmem:[%s4 + $0x10] sm:$0xff]
        %v535 = vld [vmem:[%s4 + $0x18] sm:$0xff]
        %v536 = vld [vmem:[%s4 + $0x20] sm:$0xff]
        %v537 = vld [vmem:[%s4 + $0x28] sm:$0xff]
        %v538 = vld [vmem:[%s4 + $0x30] sm:$0xff]
        %v539 = vld [vmem:[%s4 + $0x38] sm:$0xff]
        %v540 = vld [vmem:[%s4 + $0x40] sm:$0xff]
        %v541 = vld [vmem:[%s4 + $0x48] sm:$0xff]
        %v542 = vld [vmem:[%s4 + $0x50] sm:$0xff]
        %v543 = vld [vmem:[%s4 + $0x58] sm:$0xff]
        %v544 = vld [vmem:[%s4 + $0x60] sm:$0xff]
        %v545 = vld [vmem:[%s4 + $0x68] sm:$0xff]
        %v546 = vld [vmem:[%s4 + $0x70] sm:$0xff]
        %v547 = vld [vmem:[%s4 + $0x78] sm:$0xff]
        %v548 = vld [vmem:[%s6] sm:$0x1]
        %v550 = vlaneseq
        %v551 = vshrl.u32 %v550, 7
        %v552 = vsub.s32 0, %v551
        %v553 = vrot.slane %v548, %v552
        %555 = vmatprep.subr.mxu0 0.0
        %v556 = vand.u32 %v532, 4294901760
        %557 = vmatpush1.msra.mxu0 %v556
        %558 = vmatprep.subr.mxu0 0.0
        %v559 = vand.u32 %v533, 4294901760
        %560 = vmatpush1.msra.mxu0 %v559
        %561 = vmatprep.subr.mxu0 0.0
        %v562 = vand.u32 %v534, 4294901760
        %563 = vmatpush1.msra.mxu0 %v562
        %564 = vmatprep.subr.mxu0 0.0
        %v565 = vand.u32 %v535, 4294901760
        %566 = vmatpush1.msra.mxu0 %v565
        %567 = vmatprep.subr.mxu0 0.0
        %v568 = vand.u32 %v536, 4294901760
        %569 = vmatpush1.msra.mxu0 %v568
        %570 = vmatprep.subr.mxu0 0.0
        %v571 = vand.u32 %v537, 4294901760
        %572 = vmatpush1.msra.mxu0 %v571
        %573 = vmatprep.subr.mxu0 0.0
        %v574 = vand.u32 %v538, 4294901760
        %575 = vmatpush1.msra.mxu0 %v574
        %576 = vmatprep.subr.mxu0 0.0
        %v577 = vand.u32 %v539, 4294901760
        %578 = vmatpush1.msra.mxu0 %v577
        %579 = vmatprep.subr.mxu0 0.0
        %v580 = vand.u32 %v540, 4294901760
        %581 = vmatpush1.msra.mxu0 %v580
        %582 = vmatprep.subr.mxu0 0.0
        %v583 = vand.u32 %v541, 4294901760
        %584 = vmatpush1.msra.mxu0 %v583
        %585 = vmatprep.subr.mxu0 0.0
        %v586 = vand.u32 %v542, 4294901760
        %587 = vmatpush1.msra.mxu0 %v586
        %588 = vmatprep.subr.mxu0 0.0
        %v589 = vand.u32 %v543, 4294901760
        %590 = vmatpush1.msra.mxu0 %v589
        %591 = vmatprep.subr.mxu0 0.0
        %v592 = vand.u32 %v544, 4294901760
        %593 = vmatpush1.msra.mxu0 %v592
        %594 = vmatprep.subr.mxu0 0.0
        %v595 = vand.u32 %v545, 4294901760
        %596 = vmatpush1.msra.mxu0 %v595
        %597 = vmatprep.subr.mxu0 0.0
        %v598 = vand.u32 %v546, 4294901760
        %599 = vmatpush1.msra.mxu0 %v598
        %600 = vmatprep.subr.mxu0 0.0
        %v601 = vand.u32 %v547, 4294901760
        %602 = vmatpush1.msra.mxu0 %v601
        %603 = vmatprep.subr.mxu0 0.0
        %604 = vmatpush1.msra.mxu0 0.0
        %605 = vmatprep.subr.mxu0 0.0
        %606 = vmatpush1.msra.mxu0 0.0
        %607 = vmatprep.subr.mxu0 0.0
        %608 = vmatpush1.msra.mxu0 0.0
        %609 = vmatprep.subr.mxu0 0.0
        %610 = vmatpush1.msra.mxu0 0.0
        %611 = vmatprep.subr.mxu0 0.0
        %612 = vmatpush1.msra.mxu0 0.0
        %613 = vmatprep.subr.mxu0 0.0
        %614 = vmatpush1.msra.mxu0 0.0
        %615 = vmatprep.subr.mxu0 0.0
        %616 = vmatpush1.msra.mxu0 0.0
        %617 = vmatprep.subr.mxu0 0.0
        %618 = vmatpush1.msra.mxu0 0.0
        %619 = vmatprep.subr.mxu0 0.0
        %620 = vmatpush1.msra.mxu0 0.0
        %621 = vmatprep.subr.mxu0 0.0
        %622 = vmatpush1.msra.mxu0 0.0
        %623 = vmatprep.subr.mxu0 0.0
        %624 = vmatpush1.msra.mxu0 0.0
        %625 = vmatprep.subr.mxu0 0.0
        %626 = vmatpush1.msra.mxu0 0.0
        %627 = vmatprep.subr.mxu0 0.0
        %628 = vmatpush1.msra.mxu0 0.0
        %629 = vmatprep.subr.mxu0 0.0
        %630 = vmatpush1.msra.mxu0 0.0
        %631 = vmatprep.subr.mxu0 0.0
        %632 = vmatpush1.msra.mxu0 0.0
        %633 = vmatprep.subr.mxu0 0.0
        %634 = vmatpush1.msra.mxu0 0.0
        %635 = vmatprep.mubr.f32.mxu0 0.0
        %v636 = vand.u32 %v528, 4294901760
        %v637 = vsub.f32 %v528, %v636
        %v638 = vand.u32 %v637, 4294901760
        %v639 = vsub.f32 %v637, %v638
        %v640 = vand.u32 %v639, 4294901760
        %641 = vmatmul.mubr.f32.gmra.mrb[0].mxu0 %v640
        %v642 = vpop.f32.mrb[0].mxu0
        %v643 = vadd.f32 %v553, %v642
        %v644 = vpop.f32.mrb[0].mxu0
        %645 = vmatprep.mubr.f32.mxu0 0.0
        %v646 = vand.u32 %v529, 4294901760
        %v647 = vsub.f32 %v529, %v646
        %v648 = vand.u32 %v647, 4294901760
        %v649 = vsub.f32 %v647, %v648
        %v650 = vand.u32 %v649, 4294901760
        %651 = vmatmul.mubr.f32.gmra.mrb[0].mxu0 %v650
        %v652 = vpop.f32.mrb[0].mxu0
        %v653 = vadd.f32 %v553, %v652
        %v654 = vpop.f32.mrb[0].mxu0
        %655 = vmatprep.mubr.f32.mxu0 0.0
        %v656 = vand.u32 %v530, 4294901760
        %v657 = vsub.f32 %v530, %v656
        %v658 = vand.u32 %v657, 4294901760
        %v659 = vsub.f32 %v657, %v658
        %v660 = vand.u32 %v659, 4294901760
        %661 = vmatmul.mubr.f32.gmra.mrb[0].mxu0 %v660
        %v662 = vpop.f32.mrb[0].mxu0
        %v663 = vadd.f32 %v553, %v662
        %v664 = vpop.f32.mrb[0].mxu0
        %665 = vmatprep.mubr.f32.mxu0 0.0
        %v666 = vand.u32 %v531, 4294901760
        %v667 = vsub.f32 %v531, %v666
        %v668 = vand.u32 %v667, 4294901760
        %v669 = vsub.f32 %v667, %v668
        %v670 = vand.u32 %v669, 4294901760
        %671 = vmatmul.mubr.f32.gmra.mrb[0].mxu0 %v670
        %v672 = vpop.f32.mrb[0].mxu0
        %v673 = vadd.f32 %v553, %v672
        %v674 = vpop.f32.mrb[0].mxu0
        %675 = vdwg.mxu0
        %676 = vmatprep.subr.mxu0 0.0
        %v677 = vand.u32 %v532, 4294901760
        %v678 = vsub.f32 %v532, %v677
        %v679 = vand.u32 %v678, 4294901760
        %v680 = vsub.f32 %v678, %v679
        %v681 = vand.u32 %v680, 4294901760
        %682 = vmatpush1.msra.mxu0 %v681
        %683 = vmatprep.subr.mxu0 0.0
        %v684 = vand.u32 %v533, 4294901760
        %v685 = vsub.f32 %v533, %v684
        %v686 = vand.u32 %v685, 4294901760
        %v687 = vsub.f32 %v685, %v686
        %v688 = vand.u32 %v687, 4294901760
        %689 = vmatpush1.msra.mxu0 %v688
        %690 = vmatprep.subr.mxu0 0.0
        %v691 = vand.u32 %v534, 4294901760
        %v692 = vsub.f32 %v534, %v691
        %v693 = vand.u32 %v692, 4294901760
        %v694 = vsub.f32 %v692, %v693
        %v695 = vand.u32 %v694, 4294901760
        %696 = vmatpush1.msra.mxu0 %v695
        %697 = vmatprep.subr.mxu0 0.0
        %v698 = vand.u32 %v535, 4294901760
        %v699 = vsub.f32 %v535, %v698
        %v700 = vand.u32 %v699, 4294901760
        %v701 = vsub.f32 %v699, %v700
        %v702 = vand.u32 %v701, 4294901760
        %703 = vmatpush1.msra.mxu0 %v702
        %704 = vmatprep.subr.mxu0 0.0
        %v705 = vand.u32 %v536, 4294901760
        %v706 = vsub.f32 %v536, %v705
        %v707 = vand.u32 %v706, 4294901760
        %v708 = vsub.f32 %v706, %v707
        %v709 = vand.u32 %v708, 4294901760
        %710 = vmatpush1.msra.mxu0 %v709
        %711 = vmatprep.subr.mxu0 0.0
        %v712 = vand.u32 %v537, 4294901760
        %v713 = vsub.f32 %v537, %v712
        %v714 = vand.u32 %v713, 4294901760
        %v715 = vsub.f32 %v713, %v714
        %v716 = vand.u32 %v715, 4294901760
        %717 = vmatpush1.msra.mxu0 %v716
        %718 = vmatprep.subr.mxu0 0.0
        %v719 = vand.u32 %v538, 4294901760
        %v720 = vsub.f32 %v538, %v719
        %v721 = vand.u32 %v720, 4294901760
        %v722 = vsub.f32 %v720, %v721
        %v723 = vand.u32 %v722, 4294901760
        %724 = vmatpush1.msra.mxu0 %v723
        %725 = vmatprep.subr.mxu0 0.0
        %v726 = vand.u32 %v539, 4294901760
        %v727 = vsub.f32 %v539, %v726
        %v728 = vand.u32 %v727, 4294901760
        %v729 = vsub.f32 %v727, %v728
        %v730 = vand.u32 %v729, 4294901760
        %731 = vmatpush1.msra.mxu0 %v730
        %732 = vmatprep.subr.mxu0 0.0
        %v733 = vand.u32 %v540, 4294901760
        %v734 = vsub.f32 %v540, %v733
        %v735 = vand.u32 %v734, 4294901760
        %v736 = vsub.f32 %v734, %v735
        %v737 = vand.u32 %v736, 4294901760
        %738 = vmatpush1.msra.mxu0 %v737
        %739 = vmatprep.subr.mxu0 0.0
        %v740 = vand.u32 %v541, 4294901760
        %v741 = vsub.f32 %v541, %v740
        %v742 = vand.u32 %v741, 4294901760
        %v743 = vsub.f32 %v741, %v742
        %v744 = vand.u32 %v743, 4294901760
        %745 = vmatpush1.msra.mxu0 %v744
        %746 = vmatprep.subr.mxu0 0.0
        %v747 = vand.u32 %v542, 4294901760
        %v748 = vsub.f32 %v542, %v747
        %v749 = vand.u32 %v748, 4294901760
        %v750 = vsub.f32 %v748, %v749
        %v751 = vand.u32 %v750, 4294901760
        %752 = vmatpush1.msra.mxu0 %v751
        %753 = vmatprep.subr.mxu0 0.0
        %v754 = vand.u32 %v543, 4294901760
        %v755 = vsub.f32 %v543, %v754
        %v756 = vand.u32 %v755, 4294901760
        %v757 = vsub.f32 %v755, %v756
        %v758 = vand.u32 %v757, 4294901760
        %759 = vmatpush1.msra.mxu0 %v758
        %760 = vmatprep.subr.mxu0 0.0
        %v761 = vand.u32 %v544, 4294901760
        %v762 = vsub.f32 %v544, %v761
        %v763 = vand.u32 %v762, 4294901760
        %v764 = vsub.f32 %v762, %v763
        %v765 = vand.u32 %v764, 4294901760
        %766 = vmatpush1.msra.mxu0 %v765
        %767 = vmatprep.subr.mxu0 0.0
        %v768 = vand.u32 %v545, 4294901760
        %v769 = vsub.f32 %v545, %v768
        %v770 = vand.u32 %v769, 4294901760
        %v771 = vsub.f32 %v769, %v770
        %v772 = vand.u32 %v771, 4294901760
        %773 = vmatpush1.msra.mxu0 %v772
        %774 = vmatprep.subr.mxu0 0.0
        %v775 = vand.u32 %v546, 4294901760
        %v776 = vsub.f32 %v546, %v775
        %v777 = vand.u32 %v776, 4294901760
        %v778 = vsub.f32 %v776, %v777
        %v779 = vand.u32 %v778, 4294901760
        %780 = vmatpush1.msra.mxu0 %v779
        %781 = vmatprep.subr.mxu0 0.0
        %v782 = vand.u32 %v547, 4294901760
        %v783 = vsub.f32 %v547, %v782
        %v784 = vand.u32 %v783, 4294901760
        %v785 = vsub.f32 %v783, %v784
        %v786 = vand.u32 %v785, 4294901760
        %787 = vmatpush1.msra.mxu0 %v786
        %788 = vmatprep.subr.mxu0 0.0
        %789 = vmatpush1.msra.mxu0 0.0
        %790 = vmatprep.subr.mxu0 0.0
        %791 = vmatpush1.msra.mxu0 0.0
        %792 = vmatprep.subr.mxu0 0.0
        %793 = vmatpush1.msra.mxu0 0.0
        %794 = vmatprep.subr.mxu0 0.0
        %795 = vmatpush1.msra.mxu0 0.0
        %796 = vmatprep.subr.mxu0 0.0
        %797 = vmatpush1.msra.mxu0 0.0
        %798 = vmatprep.subr.mxu0 0.0
        %799 = vmatpush1.msra.mxu0 0.0
        %800 = vmatprep.subr.mxu0 0.0
        %801 = vmatpush1.msra.mxu0 0.0
        %802 = vmatprep.subr.mxu0 0.0
        %803 = vmatpush1.msra.mxu0 0.0
        %804 = vmatprep.subr.mxu0 0.0
        %805 = vmatpush1.msra.mxu0 0.0
        %806 = vmatprep.subr.mxu0 0.0
        %807 = vmatpush1.msra.mxu0 0.0
        %808 = vmatprep.subr.mxu0 0.0
        %809 = vmatpush1.msra.mxu0 0.0
        %810 = vmatprep.subr.mxu0 0.0
        %811 = vmatpush1.msra.mxu0 0.0
        %812 = vmatprep.subr.mxu0 0.0
        %813 = vmatpush1.msra.mxu0 0.0
        %814 = vmatprep.subr.mxu0 0.0
        %815 = vmatpush1.msra.mxu0 0.0
        %816 = vmatprep.subr.mxu0 0.0
        %817 = vmatpush1.msra.mxu0 0.0
        %818 = vmatprep.subr.mxu0 0.0
        %819 = vmatpush1.msra.mxu0 0.0
        %820 = vmatprep.mubr.f32.mxu0 0.0
        %v821 = vand.u32 %v528, 4294901760
        %822 = vmatmul.mubr.f32.gmra.mrb[0].mxu0 %v821
        %v823 = vpop.f32.mrb[0].mxu0
        %v824 = vadd.f32 %v643, %v823
        %v825 = vpop.f32.mrb[0].mxu0
        %826 = vmatprep.mubr.f32.mxu0 0.0
        %v827 = vand.u32 %v529, 4294901760
        %828 = vmatmul.mubr.f32.gmra.mrb[0].mxu0 %v827
        %v829 = vpop.f32.mrb[0].mxu0
        %v830 = vadd.f32 %v653, %v829
        %v831 = vpop.f32.mrb[0].mxu0
        %832 = vmatprep.mubr.f32.mxu0 0.0
        %v833 = vand.u32 %v530, 4294901760
        %834 = vmatmul.mubr.f32.gmra.mrb[0].mxu0 %v833
        %v835 = vpop.f32.mrb[0].mxu0
        %v836 = vadd.f32 %v663, %v835
        %v837 = vpop.f32.mrb[0].mxu0
        %838 = vmatprep.mubr.f32.mxu0 0.0
        %v839 = vand.u32 %v531, 4294901760
        %840 = vmatmul.mubr.f32.gmra.mrb[0].mxu0 %v839
        %v841 = vpop.f32.mrb[0].mxu0
        %v842 = vadd.f32 %v673, %v841
        %v843 = vpop.f32.mrb[0].mxu0
        %844 = vdwg.mxu0
        %845 = vmatprep.subr.mxu0 0.0
        %v846 = vand.u32 %v532, 4294901760
        %v847 = vsub.f32 %v532, %v846
        %848 = vmatpush1.msra.mxu0 %v847
        %849 = vmatprep.subr.mxu0 0.0
        %v850 = vand.u32 %v533, 4294901760
        %v851 = vsub.f32 %v533, %v850
        %852 = vmatpush1.msra.mxu0 %v851
        %853 = vmatprep.subr.mxu0 0.0
        %v854 = vand.u32 %v534, 4294901760
        %v855 = vsub.f32 %v534, %v854
        %856 = vmatpush1.msra.mxu0 %v855
        %857 = vmatprep.subr.mxu0 0.0
        %v858 = vand.u32 %v535, 4294901760
        %v859 = vsub.f32 %v535, %v858
        %860 = vmatpush1.msra.mxu0 %v859
        %861 = vmatprep.subr.mxu0 0.0
        %v862 = vand.u32 %v536, 4294901760
        %v863 = vsub.f32 %v536, %v862
        %864 = vmatpush1.msra.mxu0 %v863
        %865 = vmatprep.subr.mxu0 0.0
        %v866 = vand.u32 %v537, 4294901760
        %v867 = vsub.f32 %v537, %v866
        %868 = vmatpush1.msra.mxu0 %v867
        %869 = vmatprep.subr.mxu0 0.0
        %v870 = vand.u32 %v538, 4294901760
        %v871 = vsub.f32 %v538, %v870
        %872 = vmatpush1.msra.mxu0 %v871
        %873 = vmatprep.subr.mxu0 0.0
        %v874 = vand.u32 %v539, 4294901760
        %v875 = vsub.f32 %v539, %v874
        %876 = vmatpush1.msra.mxu0 %v875
        %877 = vmatprep.subr.mxu0 0.0
        %v878 = vand.u32 %v540, 4294901760
        %v879 = vsub.f32 %v540, %v878
        %880 = vmatpush1.msra.mxu0 %v879
        %881 = vmatprep.subr.mxu0 0.0
        %v882 = vand.u32 %v541, 4294901760
        %v883 = vsub.f32 %v541, %v882
        %884 = vmatpush1.msra.mxu0 %v883
        %885 = vmatprep.subr.mxu0 0.0
        %v886 = vand.u32 %v542, 4294901760
        %v887 = vsub.f32 %v542, %v886
        %888 = vmatpush1.msra.mxu0 %v887
        %889 = vmatprep.subr.mxu0 0.0
        %v890 = vand.u32 %v543, 4294901760
        %v891 = vsub.f32 %v543, %v890
        %892 = vmatpush1.msra.mxu0 %v891
        %893 = vmatprep.subr.mxu0 0.0
        %v894 = vand.u32 %v544, 4294901760
        %v895 = vsub.f32 %v544, %v894
        %896 = vmatpush1.msra.mxu0 %v895
        %897 = vmatprep.subr.mxu0 0.0
        %v898 = vand.u32 %v545, 4294901760
        %v899 = vsub.f32 %v545, %v898
        %900 = vmatpush1.msra.mxu0 %v899
        %901 = vmatprep.subr.mxu0 0.0
        %v902 = vand.u32 %v546, 4294901760
        %v903 = vsub.f32 %v546, %v902
        %904 = vmatpush1.msra.mxu0 %v903
        %905 = vmatprep.subr.mxu0 0.0
        %v906 = vand.u32 %v547, 4294901760
        %v907 = vsub.f32 %v547, %v906
        %908 = vmatpush1.msra.mxu0 %v907
        %909 = vmatprep.subr.mxu0 0.0
        %910 = vmatpush1.msra.mxu0 0.0
        %911 = vmatprep.subr.mxu0 0.0
        %912 = vmatpush1.msra.mxu0 0.0
        %913 = vmatprep.subr.mxu0 0.0
        %914 = vmatpush1.msra.mxu0 0.0
        %915 = vmatprep.subr.mxu0 0.0
        %916 = vmatpush1.msra.mxu0 0.0
        %917 = vmatprep.subr.mxu0 0.0
        %918 = vmatpush1.msra.mxu0 0.0
        %919 = vmatprep.subr.mxu0 0.0
        %920 = vmatpush1.msra.mxu0 0.0
        %921 = vmatprep.subr.mxu0 0.0
        %922 = vmatpush1.msra.mxu0 0.0
        %923 = vmatprep.subr.mxu0 0.0
        %924 = vmatpush1.msra.mxu0 0.0
        %925 = vmatprep.subr.mxu0 0.0
        %926 = vmatpush1.msra.mxu0 0.0
        %927 = vmatprep.subr.mxu0 0.0
        %928 = vmatpush1.msra.mxu0 0.0
        %929 = vmatprep.subr.mxu0 0.0
        %930 = vmatpush1.msra.mxu0 0.0
        %931 = vmatprep.subr.mxu0 0.0
        %932 = vmatpush1.msra.mxu0 0.0
        %933 = vmatprep.subr.mxu0 0.0
        %934 = vmatpush1.msra.mxu0 0.0
        %935 = vmatprep.subr.mxu0 0.0
        %936 = vmatpush1.msra.mxu0 0.0
        %937 = vmatprep.subr.mxu0 0.0
        %938 = vmatpush1.msra.mxu0 0.0
        %939 = vmatprep.subr.mxu0 0.0
        %940 = vmatpush1.msra.mxu0 0.0
        %941 = vmatprep.mubr.f32.mxu0 0.0
        %v942 = vand.u32 %v528, 4294901760
        %v943 = vsub.f32 %v528, %v942
        %944 = vmatmul.mubr.f32.gmra.mrb[0].mxu0 %v943
        %v945 = vpop.f32.mrb[0].mxu0
        %v946 = vadd.f32 %v824, %v945
        %v947 = vpop.f32.mrb[0].mxu0
        %948 = vmatprep.mubr.f32.mxu0 0.0
        %v949 = vand.u32 %v529, 4294901760
        %v950 = vsub.f32 %v529, %v949
        %951 = vmatmul.mubr.f32.gmra.mrb[0].mxu0 %v950
        %v952 = vpop.f32.mrb[0].mxu0
        %v953 = vadd.f32 %v830, %v952
        %v954 = vpop.f32.mrb[0].mxu0
        %955 = vmatprep.mubr.f32.mxu0 0.0
        %v956 = vand.u32 %v530, 4294901760
        %v957 = vsub.f32 %v530, %v956
        %958 = vmatmul.mubr.f32.gmra.mrb[0].mxu0 %v957
        %v959 = vpop.f32.mrb[0].mxu0
        %v960 = vadd.f32 %v836, %v959
        %v961 = vpop.f32.mrb[0].mxu0
        %962 = vmatprep.mubr.f32.mxu0 0.0
        %v963 = vand.u32 %v531, 4294901760
        %v964 = vsub.f32 %v531, %v963
        %965 = vmatmul.mubr.f32.gmra.mrb[0].mxu0 %v964
        %v966 = vpop.f32.mrb[0].mxu0
        %v967 = vadd.f32 %v842, %v966
        %v968 = vpop.f32.mrb[0].mxu0
        %969 = vdwg.mxu0
        %970 = vmatprep.subr.mxu0 0.0
        %v971 = vand.u32 %v532, 4294901760
        %972 = vmatpush1.msra.mxu0 %v971
        %973 = vmatprep.subr.mxu0 0.0
        %v974 = vand.u32 %v533, 4294901760
        %975 = vmatpush1.msra.mxu0 %v974
        %976 = vmatprep.subr.mxu0 0.0
        %v977 = vand.u32 %v534, 4294901760
        %978 = vmatpush1.msra.mxu0 %v977
        %979 = vmatprep.subr.mxu0 0.0
        %v980 = vand.u32 %v535, 4294901760
        %981 = vmatpush1.msra.mxu0 %v980
        %982 = vmatprep.subr.mxu0 0.0
        %v983 = vand.u32 %v536, 4294901760
        %984 = vmatpush1.msra.mxu0 %v983
        %985 = vmatprep.subr.mxu0 0.0
        %v986 = vand.u32 %v537, 4294901760
        %987 = vmatpush1.msra.mxu0 %v986
        %988 = vmatprep.subr.mxu0 0.0
        %v989 = vand.u32 %v538, 4294901760
        %990 = vmatpush1.msra.mxu0 %v989
        %991 = vmatprep.subr.mxu0 0.0
        %v992 = vand.u32 %v539, 4294901760
        %993 = vmatpush1.msra.mxu0 %v992
        %994 = vmatprep.subr.mxu0 0.0
        %v995 = vand.u32 %v540, 4294901760
        %996 = vmatpush1.msra.mxu0 %v995
        %997 = vmatprep.subr.mxu0 0.0
        %v998 = vand.u32 %v541, 4294901760
        %999 = vmatpush1.msra.mxu0 %v998
        %1000 = vmatprep.subr.mxu0 0.0
        %v1001 = vand.u32 %v542, 4294901760
        %1002 = vmatpush1.msra.mxu0 %v1001
        %1003 = vmatprep.subr.mxu0 0.0
        %v1004 = vand.u32 %v543, 4294901760
        %1005 = vmatpush1.msra.mxu0 %v1004
        %1006 = vmatprep.subr.mxu0 0.0
        %v1007 = vand.u32 %v544, 4294901760
        %1008 = vmatpush1.msra.mxu0 %v1007
        %1009 = vmatprep.subr.mxu0 0.0
        %v1010 = vand.u32 %v545, 4294901760
        %1011 = vmatpush1.msra.mxu0 %v1010
        %1012 = vmatprep.subr.mxu0 0.0
        %v1013 = vand.u32 %v546, 4294901760
        %1014 = vmatpush1.msra.mxu0 %v1013
        %1015 = vmatprep.subr.mxu0 0.0
        %v1016 = vand.u32 %v547, 4294901760
        %1017 = vmatpush1.msra.mxu0 %v1016
        %1018 = vmatprep.subr.mxu0 0.0
        %1019 = vmatpush1.msra.mxu0 0.0
        %1020 = vmatprep.subr.mxu0 0.0
        %1021 = vmatpush1.msra.mxu0 0.0
        %1022 = vmatprep.subr.mxu0 0.0
        %1023 = vmatpush1.msra.mxu0 0.0
        %1024 = vmatprep.subr.mxu0 0.0
        %1025 = vmatpush1.msra.mxu0 0.0
        %1026 = vmatprep.subr.mxu0 0.0
        %1027 = vmatpush1.msra.mxu0 0.0
        %1028 = vmatprep.subr.mxu0 0.0
        %1029 = vmatpush1.msra.mxu0 0.0
        %1030 = vmatprep.subr.mxu0 0.0
        %1031 = vmatpush1.msra.mxu0 0.0
        %1032 = vmatprep.subr.mxu0 0.0
        %1033 = vmatpush1.msra.mxu0 0.0
        %1034 = vmatprep.subr.mxu0 0.0
        %1035 = vmatpush1.msra.mxu0 0.0
        %1036 = vmatprep.subr.mxu0 0.0
        %1037 = vmatpush1.msra.mxu0 0.0
        %1038 = vmatprep.subr.mxu0 0.0
        %1039 = vmatpush1.msra.mxu0 0.0
        %1040 = vmatprep.subr.mxu0 0.0
        %1041 = vmatpush1.msra.mxu0 0.0
        %1042 = vmatprep.subr.mxu0 0.0
        %1043 = vmatpush1.msra.mxu0 0.0
        %1044 = vmatprep.subr.mxu0 0.0
        %1045 = vmatpush1.msra.mxu0 0.0
        %1046 = vmatprep.subr.mxu0 0.0
        %1047 = vmatpush1.msra.mxu0 0.0
        %1048 = vmatprep.subr.mxu0 0.0
        %1049 = vmatpush1.msra.mxu0 0.0
        %1050 = vmatprep.mubr.f32.mxu0 0.0
        %v1051 = vand.u32 %v528, 4294901760
        %v1052 = vsub.f32 %v528, %v1051
        %v1053 = vand.u32 %v1052, 4294901760
        %1054 = vmatmul.mubr.f32.gmra.mrb[0].mxu0 %v1053
        %v1055 = vpop.f32.mrb[0].mxu0
        %v1056 = vadd.f32 %v946, %v1055
        %v1057 = vpop.f32.mrb[0].mxu0
        %1058 = vmatprep.mubr.f32.mxu0 0.0
        %v1059 = vand.u32 %v529, 4294901760
        %v1060 = vsub.f32 %v529, %v1059
        %v1061 = vand.u32 %v1060, 4294901760
        %1062 = vmatmul.mubr.f32.gmra.mrb[0].mxu0 %v1061
        %v1063 = vpop.f32.mrb[0].mxu0
        %v1064 = vadd.f32 %v953, %v1063
        %v1065 = vpop.f32.mrb[0].mxu0
        %1066 = vmatprep.mubr.f32.mxu0 0.0
        %v1067 = vand.u32 %v530, 4294901760
        %v1068 = vsub.f32 %v530, %v1067
        %v1069 = vand.u32 %v1068, 4294901760
        %1070 = vmatmul.mubr.f32.gmra.mrb[0].mxu0 %v1069
        %v1071 = vpop.f32.mrb[0].mxu0
        %v1072 = vadd.f32 %v960, %v1071
        %v1073 = vpop.f32.mrb[0].mxu0
        %1074 = vmatprep.mubr.f32.mxu0 0.0
        %v1075 = vand.u32 %v531, 4294901760
        %v1076 = vsub.f32 %v531, %v1075
        %v1077 = vand.u32 %v1076, 4294901760
        %1078 = vmatmul.mubr.f32.gmra.mrb[0].mxu0 %v1077
        %v1079 = vpop.f32.mrb[0].mxu0
        %v1080 = vadd.f32 %v967, %v1079
        %v1081 = vpop.f32.mrb[0].mxu0
        %1082 = vdwg.mxu0
        %1083 = vmatprep.subr.mxu0 0.0
        %v1084 = vand.u32 %v532, 4294901760
        %v1085 = vsub.f32 %v532, %v1084
        %v1086 = vand.u32 %v1085, 4294901760
        %1087 = vmatpush1.msra.mxu0 %v1086
        %1088 = vmatprep.subr.mxu0 0.0
        %v1089 = vand.u32 %v533, 4294901760
        %v1090 = vsub.f32 %v533, %v1089
        %v1091 = vand.u32 %v1090, 4294901760
        %1092 = vmatpush1.msra.mxu0 %v1091
        %1093 = vmatprep.subr.mxu0 0.0
        %v1094 = vand.u32 %v534, 4294901760
        %v1095 = vsub.f32 %v534, %v1094
        %v1096 = vand.u32 %v1095, 4294901760
        %1097 = vmatpush1.msra.mxu0 %v1096
        %1098 = vmatprep.subr.mxu0 0.0
        %v1099 = vand.u32 %v535, 4294901760
        %v1100 = vsub.f32 %v535, %v1099
        %v1101 = vand.u32 %v1100, 4294901760
        %1102 = vmatpush1.msra.mxu0 %v1101
        %1103 = vmatprep.subr.mxu0 0.0
        %v1104 = vand.u32 %v536, 4294901760
        %v1105 = vsub.f32 %v536, %v1104
        %v1106 = vand.u32 %v1105, 4294901760
        %1107 = vmatpush1.msra.mxu0 %v1106
        %1108 = vmatprep.subr.mxu0 0.0
        %v1109 = vand.u32 %v537, 4294901760
        %v1110 = vsub.f32 %v537, %v1109
        %v1111 = vand.u32 %v1110, 4294901760
        %1112 = vmatpush1.msra.mxu0 %v1111
        %1113 = vmatprep.subr.mxu0 0.0
        %v1114 = vand.u32 %v538, 4294901760
        %v1115 = vsub.f32 %v538, %v1114
        %v1116 = vand.u32 %v1115, 4294901760
        %1117 = vmatpush1.msra.mxu0 %v1116
        %1118 = vmatprep.subr.mxu0 0.0
        %v1119 = vand.u32 %v539, 4294901760
        %v1120 = vsub.f32 %v539, %v1119
        %v1121 = vand.u32 %v1120, 4294901760
        %1122 = vmatpush1.msra.mxu0 %v1121
        %1123 = vmatprep.subr.mxu0 0.0
        %v1124 = vand.u32 %v540, 4294901760
        %v1125 = vsub.f32 %v540, %v1124
        %v1126 = vand.u32 %v1125, 4294901760
        %1127 = vmatpush1.msra.mxu0 %v1126
        %1128 = vmatprep.subr.mxu0 0.0
        %v1129 = vand.u32 %v541, 4294901760
        %v1130 = vsub.f32 %v541, %v1129
        %v1131 = vand.u32 %v1130, 4294901760
        %1132 = vmatpush1.msra.mxu0 %v1131
        %1133 = vmatprep.subr.mxu0 0.0
        %v1134 = vand.u32 %v542, 4294901760
        %v1135 = vsub.f32 %v542, %v1134
        %v1136 = vand.u32 %v1135, 4294901760
        %1137 = vmatpush1.msra.mxu0 %v1136
        %1138 = vmatprep.subr.mxu0 0.0
        %v1139 = vand.u32 %v543, 4294901760
        %v1140 = vsub.f32 %v543, %v1139
        %v1141 = vand.u32 %v1140, 4294901760
        %1142 = vmatpush1.msra.mxu0 %v1141
        %1143 = vmatprep.subr.mxu0 0.0
        %v1144 = vand.u32 %v544, 4294901760
        %v1145 = vsub.f32 %v544, %v1144
        %v1146 = vand.u32 %v1145, 4294901760
        %1147 = vmatpush1.msra.mxu0 %v1146
        %1148 = vmatprep.subr.mxu0 0.0
        %v1149 = vand.u32 %v545, 4294901760
        %v1150 = vsub.f32 %v545, %v1149
        %v1151 = vand.u32 %v1150, 4294901760
        %1152 = vmatpush1.msra.mxu0 %v1151
        %1153 = vmatprep.subr.mxu0 0.0
        %v1154 = vand.u32 %v546, 4294901760
        %v1155 = vsub.f32 %v546, %v1154
        %v1156 = vand.u32 %v1155, 4294901760
        %1157 = vmatpush1.msra.mxu0 %v1156
        %1158 = vmatprep.subr.mxu0 0.0
        %v1159 = vand.u32 %v547, 4294901760
        %v1160 = vsub.f32 %v547, %v1159
        %v1161 = vand.u32 %v1160, 4294901760
        %1162 = vmatpush1.msra.mxu0 %v1161
        %1163 = vmatprep.subr.mxu0 0.0
        %1164 = vmatpush1.msra.mxu0 0.0
        %1165 = vmatprep.subr.mxu0 0.0
        %1166 = vmatpush1.msra.mxu0 0.0
        %1167 = vmatprep.subr.mxu0 0.0
        %1168 = vmatpush1.msra.mxu0 0.0
        %1169 = vmatprep.subr.mxu0 0.0
        %1170 = vmatpush1.msra.mxu0 0.0
        %1171 = vmatprep.subr.mxu0 0.0
        %1172 = vmatpush1.msra.mxu0 0.0
        %1173 = vmatprep.subr.mxu0 0.0
        %1174 = vmatpush1.msra.mxu0 0.0
        %1175 = vmatprep.subr.mxu0 0.0
        %1176 = vmatpush1.msra.mxu0 0.0
        %1177 = vmatprep.subr.mxu0 0.0
        %1178 = vmatpush1.msra.mxu0 0.0
        %1179 = vmatprep.subr.mxu0 0.0
        %1180 = vmatpush1.msra.mxu0 0.0
        %1181 = vmatprep.subr.mxu0 0.0
        %1182 = vmatpush1.msra.mxu0 0.0
        %1183 = vmatprep.subr.mxu0 0.0
        %1184 = vmatpush1.msra.mxu0 0.0
        %1185 = vmatprep.subr.mxu0 0.0
        %1186 = vmatpush1.msra.mxu0 0.0
        %1187 = vmatprep.subr.mxu0 0.0
        %1188 = vmatpush1.msra.mxu0 0.0
        %1189 = vmatprep.subr.mxu0 0.0
        %1190 = vmatpush1.msra.mxu0 0.0
        %1191 = vmatprep.subr.mxu0 0.0
        %1192 = vmatpush1.msra.mxu0 0.0
        %1193 = vmatprep.subr.mxu0 0.0
        %1194 = vmatpush1.msra.mxu0 0.0
        %1195 = vmatprep.mubr.f32.mxu0 0.0
        %v1196 = vand.u32 %v528, 4294901760
        %1197 = vmatmul.mubr.f32.gmra.mrb[0].mxu0 %v1196
        %v1198 = vpop.f32.mrb[0].mxu0
        %v1199 = vadd.f32 %v1056, %v1198
        %v1200 = vpop.f32.mrb[0].mxu0
        %1201 = vmatprep.mubr.f32.mxu0 0.0
        %v1202 = vand.u32 %v529, 4294901760
        %1203 = vmatmul.mubr.f32.gmra.mrb[0].mxu0 %v1202
        %v1204 = vpop.f32.mrb[0].mxu0
        %v1205 = vadd.f32 %v1064, %v1204
        %v1206 = vpop.f32.mrb[0].mxu0
        %1207 = vmatprep.mubr.f32.mxu0 0.0
        %v1208 = vand.u32 %v530, 4294901760
        %1209 = vmatmul.mubr.f32.gmra.mrb[0].mxu0 %v1208
        %v1210 = vpop.f32.mrb[0].mxu0
        %v1211 = vadd.f32 %v1072, %v1210
        %v1212 = vpop.f32.mrb[0].mxu0
        %1213 = vmatprep.mubr.f32.mxu0 0.0
        %v1214 = vand.u32 %v531, 4294901760
        %1215 = vmatmul.mubr.f32.gmra.mrb[0].mxu0 %v1214
        %v1216 = vpop.f32.mrb[0].mxu0
        %v1217 = vadd.f32 %v1080, %v1216
        %v1218 = vpop.f32.mrb[0].mxu0
        %1219 = vdwg.mxu0
        %1220 = vmatprep.subr.mxu0 0.0
        %v1221 = vand.u32 %v532, 4294901760
        %1222 = vmatpush1.msra.mxu0 %v1221
        %1223 = vmatprep.subr.mxu0 0.0
        %v1224 = vand.u32 %v533, 4294901760
        %1225 = vmatpush1.msra.mxu0 %v1224
        %1226 = vmatprep.subr.mxu0 0.0
        %v1227 = vand.u32 %v534, 4294901760
        %1228 = vmatpush1.msra.mxu0 %v1227
        %1229 = vmatprep.subr.mxu0 0.0
        %v1230 = vand.u32 %v535, 4294901760
        %1231 = vmatpush1.msra.mxu0 %v1230
        %1232 = vmatprep.subr.mxu0 0.0
        %v1233 = vand.u32 %v536, 4294901760
        %1234 = vmatpush1.msra.mxu0 %v1233
        %1235 = vmatprep.subr.mxu0 0.0
        %v1236 = vand.u32 %v537, 4294901760
        %1237 = vmatpush1.msra.mxu0 %v1236
        %1238 = vmatprep.subr.mxu0 0.0
        %v1239 = vand.u32 %v538, 4294901760
        %1240 = vmatpush1.msra.mxu0 %v1239
        %1241 = vmatprep.subr.mxu0 0.0
        %v1242 = vand.u32 %v539, 4294901760
        %1243 = vmatpush1.msra.mxu0 %v1242
        %1244 = vmatprep.subr.mxu0 0.0
        %v1245 = vand.u32 %v540, 4294901760
        %1246 = vmatpush1.msra.mxu0 %v1245
        %1247 = vmatprep.subr.mxu0 0.0
        %v1248 = vand.u32 %v541, 4294901760
        %1249 = vmatpush1.msra.mxu0 %v1248
        %1250 = vmatprep.subr.mxu0 0.0
        %v1251 = vand.u32 %v542, 4294901760
        %1252 = vmatpush1.msra.mxu0 %v1251
        %1253 = vmatprep.subr.mxu0 0.0
        %v1254 = vand.u32 %v543, 4294901760
        %1255 = vmatpush1.msra.mxu0 %v1254
        %1256 = vmatprep.subr.mxu0 0.0
        %v1257 = vand.u32 %v544, 4294901760
        %1258 = vmatpush1.msra.mxu0 %v1257
        %1259 = vmatprep.subr.mxu0 0.0
        %v1260 = vand.u32 %v545, 4294901760
        %1261 = vmatpush1.msra.mxu0 %v1260
        %1262 = vmatprep.subr.mxu0 0.0
        %v1263 = vand.u32 %v546, 4294901760
        %1264 = vmatpush1.msra.mxu0 %v1263
        %1265 = vmatprep.subr.mxu0 0.0
        %v1266 = vand.u32 %v547, 4294901760
        %1267 = vmatpush1.msra.mxu0 %v1266
        %1268 = vmatprep.subr.mxu0 0.0
        %1269 = vmatpush1.msra.mxu0 0.0
        %1270 = vmatprep.subr.mxu0 0.0
        %1271 = vmatpush1.msra.mxu0 0.0
        %1272 = vmatprep.subr.mxu0 0.0
        %1273 = vmatpush1.msra.mxu0 0.0
        %1274 = vmatprep.subr.mxu0 0.0
        %1275 = vmatpush1.msra.mxu0 0.0
        %1276 = vmatprep.subr.mxu0 0.0
        %1277 = vmatpush1.msra.mxu0 0.0
        %1278 = vmatprep.subr.mxu0 0.0
        %1279 = vmatpush1.msra.mxu0 0.0
        %1280 = vmatprep.subr.mxu0 0.0
        %1281 = vmatpush1.msra.mxu0 0.0
        %1282 = vmatprep.subr.mxu0 0.0
        %1283 = vmatpush1.msra.mxu0 0.0
        %1284 = vmatprep.subr.mxu0 0.0
        %1285 = vmatpush1.msra.mxu0 0.0
        %1286 = vmatprep.subr.mxu0 0.0
        %1287 = vmatpush1.msra.mxu0 0.0
        %1288 = vmatprep.subr.mxu0 0.0
        %1289 = vmatpush1.msra.mxu0 0.0
        %1290 = vmatprep.subr.mxu0 0.0
        %1291 = vmatpush1.msra.mxu0 0.0
        %1292 = vmatprep.subr.mxu0 0.0
        %1293 = vmatpush1.msra.mxu0 0.0
        %1294 = vmatprep.subr.mxu0 0.0
        %1295 = vmatpush1.msra.mxu0 0.0
        %1296 = vmatprep.subr.mxu0 0.0
        %1297 = vmatpush1.msra.mxu0 0.0
        %1298 = vmatprep.subr.mxu0 0.0
        %1299 = vmatpush1.msra.mxu0 0.0
        %1300 = vmatprep.mubr.f32.mxu0 0.0
        %v1301 = vand.u32 %v528, 4294901760
        %1302 = vmatmul.mubr.f32.gmra.mrb[0].mxu0 %v1301
        %v1303 = vpop.f32.mrb[0].mxu0
        %v1304 = vadd.f32 %v1199, %v1303
        %v1305 = vpop.f32.mrb[0].mxu0
        %1306 = vmatprep.mubr.f32.mxu0 0.0
        %v1307 = vand.u32 %v529, 4294901760
        %1308 = vmatmul.mubr.f32.gmra.mrb[0].mxu0 %v1307
        %v1309 = vpop.f32.mrb[0].mxu0
        %v1310 = vadd.f32 %v1205, %v1309
        %v1311 = vpop.f32.mrb[0].mxu0
        %1312 = vmatprep.mubr.f32.mxu0 0.0
        %v1313 = vand.u32 %v530, 4294901760
        %1314 = vmatmul.mubr.f32.gmra.mrb[0].mxu0 %v1313
        %v1315 = vpop.f32.mrb[0].mxu0
        %v1316 = vadd.f32 %v1211, %v1315
        %v1317 = vpop.f32.mrb[0].mxu0
        %1318 = vmatprep.mubr.f32.mxu0 0.0
        %v1319 = vand.u32 %v531, 4294901760
        %1320 = vmatmul.mubr.f32.gmra.mrb[0].mxu0 %v1319
        %v1321 = vpop.f32.mrb[0].mxu0
        %v1322 = vadd.f32 %v1217, %v1321
        %v1323 = vpop.f32.mrb[0].mxu0
        %1324 = vdwg.mxu0
        %v1325 = vld [vmem:[%s5] sm:$0xff]
        %v1326 = vld [vmem:[%s5 + $0x8] sm:$0xff]
        %v1327 = vld [vmem:[%s5 + $0x10] sm:$0xff]
        %v1328 = vld [vmem:[%s5 + $0x18] sm:$0xff]
        %v1329 = vld [vmem:[%s5 + $0x20] sm:$0xff]
        %v1330 = vld [vmem:[%s5 + $0x28] sm:$0xff]
        %v1331 = vld [vmem:[%s5 + $0x30] sm:$0xff]
        %v1332 = vld [vmem:[%s5 + $0x38] sm:$0xff]
        %v1333 = vld [vmem:[%s5 + $0x40] sm:$0xff]
        %v1334 = vld [vmem:[%s5 + $0x48] sm:$0xff]
        %v1335 = vld [vmem:[%s5 + $0x50] sm:$0xff]
        %v1336 = vld [vmem:[%s5 + $0x58] sm:$0xff]
        %v1337 = vld [vmem:[%s5 + $0x60] sm:$0xff]
        %v1338 = vld [vmem:[%s5 + $0x68] sm:$0xff]
        %v1339 = vld [vmem:[%s5 + $0x70] sm:$0xff]
        %v1340 = vld [vmem:[%s5 + $0x78] sm:$0xff]
        %1341 = vmatprep.subr.mxu0 0.0
        %v1342 = vand.u32 %v1325, 4294901760
        %1343 = vmatpush1.msra.mxu0 %v1342
        %1344 = vmatprep.subr.mxu0 0.0
        %v1345 = vand.u32 %v1326, 4294901760
        %1346 = vmatpush1.msra.mxu0 %v1345
        %1347 = vmatprep.subr.mxu0 0.0
        %v1348 = vand.u32 %v1327, 4294901760
        %1349 = vmatpush1.msra.mxu0 %v1348
        %1350 = vmatprep.subr.mxu0 0.0
        %v1351 = vand.u32 %v1328, 4294901760
        %1352 = vmatpush1.msra.mxu0 %v1351
        %1353 = vmatprep.subr.mxu0 0.0
        %v1354 = vand.u32 %v1329, 4294901760
        %1355 = vmatpush1.msra.mxu0 %v1354
        %1356 = vmatprep.subr.mxu0 0.0
        %v1357 = vand.u32 %v1330, 4294901760
        %1358 = vmatpush1.msra.mxu0 %v1357
        %1359 = vmatprep.subr.mxu0 0.0
        %v1360 = vand.u32 %v1331, 4294901760
        %1361 = vmatpush1.msra.mxu0 %v1360
        %1362 = vmatprep.subr.mxu0 0.0
        %v1363 = vand.u32 %v1332, 4294901760
        %1364 = vmatpush1.msra.mxu0 %v1363
        %1365 = vmatprep.subr.mxu0 0.0
        %v1366 = vand.u32 %v1333, 4294901760
        %1367 = vmatpush1.msra.mxu0 %v1366
        %1368 = vmatprep.subr.mxu0 0.0
        %v1369 = vand.u32 %v1334, 4294901760
        %1370 = vmatpush1.msra.mxu0 %v1369
        %1371 = vmatprep.subr.mxu0 0.0
        %v1372 = vand.u32 %v1335, 4294901760
        %1373 = vmatpush1.msra.mxu0 %v1372
        %1374 = vmatprep.subr.mxu0 0.0
        %v1375 = vand.u32 %v1336, 4294901760
        %1376 = vmatpush1.msra.mxu0 %v1375
        %1377 = vmatprep.subr.mxu0 0.0
        %v1378 = vand.u32 %v1337, 4294901760
        %1379 = vmatpush1.msra.mxu0 %v1378
        %1380 = vmatprep.subr.mxu0 0.0
        %v1381 = vand.u32 %v1338, 4294901760
        %1382 = vmatpush1.msra.mxu0 %v1381
        %1383 = vmatprep.subr.mxu0 0.0
        %v1384 = vand.u32 %v1339, 4294901760
        %1385 = vmatpush1.msra.mxu0 %v1384
        %1386 = vmatprep.subr.mxu0 0.0
        %v1387 = vand.u32 %v1340, 4294901760
        %1388 = vmatpush1.msra.mxu0 %v1387
        %1389 = vmatprep.subr.mxu0 0.0
        %1390 = vmatpush1.msra.mxu0 0.0
        %1391 = vmatprep.subr.mxu0 0.0
        %1392 = vmatpush1.msra.mxu0 0.0
        %1393 = vmatprep.subr.mxu0 0.0
        %1394 = vmatpush1.msra.mxu0 0.0
        %1395 = vmatprep.subr.mxu0 0.0
        %1396 = vmatpush1.msra.mxu0 0.0
        %1397 = vmatprep.subr.mxu0 0.0
        %1398 = vmatpush1.msra.mxu0 0.0
        %1399 = vmatprep.subr.mxu0 0.0
        %1400 = vmatpush1.msra.mxu0 0.0
        %1401 = vmatprep.subr.mxu0 0.0
        %1402 = vmatpush1.msra.mxu0 0.0
        %1403 = vmatprep.subr.mxu0 0.0
        %1404 = vmatpush1.msra.mxu0 0.0
        %1405 = vmatprep.subr.mxu0 0.0
        %1406 = vmatpush1.msra.mxu0 0.0
        %1407 = vmatprep.subr.mxu0 0.0
        %1408 = vmatpush1.msra.mxu0 0.0
        %1409 = vmatprep.subr.mxu0 0.0
        %1410 = vmatpush1.msra.mxu0 0.0
        %1411 = vmatprep.subr.mxu0 0.0
        %1412 = vmatpush1.msra.mxu0 0.0
        %1413 = vmatprep.subr.mxu0 0.0
        %1414 = vmatpush1.msra.mxu0 0.0
        %1415 = vmatprep.subr.mxu0 0.0
        %1416 = vmatpush1.msra.mxu0 0.0
        %1417 = vmatprep.subr.mxu0 0.0
        %1418 = vmatpush1.msra.mxu0 0.0
        %1419 = vmatprep.subr.mxu0 0.0
        %1420 = vmatpush1.msra.mxu0 0.0
        %1421 = vmatprep.mubr.f32.mxu0 0.0
        %v1422 = vand.u32 %v528, 4294901760
        %v1423 = vsub.f32 %v528, %v1422
        %v1424 = vand.u32 %v1423, 4294901760
        %v1425 = vsub.f32 %v1423, %v1424
        %v1426 = vand.u32 %v1425, 4294901760
        %1427 = vmatmul.mubr.f32.gmra.mrb[0].mxu0 %v1426
        %v1428 = vpop.f32.mrb[0].mxu0
        %v1429 = vadd.f32 0.0, %v1428
        %v1430 = vpop.f32.mrb[0].mxu0
        %1431 = vmatprep.mubr.f32.mxu0 0.0
        %v1432 = vand.u32 %v529, 4294901760
        %v1433 = vsub.f32 %v529, %v1432
        %v1434 = vand.u32 %v1433, 4294901760
        %v1435 = vsub.f32 %v1433, %v1434
        %v1436 = vand.u32 %v1435, 4294901760
        %1437 = vmatmul.mubr.f32.gmra.mrb[0].mxu0 %v1436
        %v1438 = vpop.f32.mrb[0].mxu0
        %v1439 = vadd.f32 0.0, %v1438
        %v1440 = vpop.f32.mrb[0].mxu0
        %1441 = vmatprep.mubr.f32.mxu0 0.0
        %v1442 = vand.u32 %v530, 4294901760
        %v1443 = vsub.f32 %v530, %v1442
        %v1444 = vand.u32 %v1443, 4294901760
        %v1445 = vsub.f32 %v1443, %v1444
        %v1446 = vand.u32 %v1445, 4294901760
        %1447 = vmatmul.mubr.f32.gmra.mrb[0].mxu0 %v1446
        %v1448 = vpop.f32.mrb[0].mxu0
        %v1449 = vadd.f32 0.0, %v1448
        %v1450 = vpop.f32.mrb[0].mxu0
        %1451 = vmatprep.mubr.f32.mxu0 0.0
        %v1452 = vand.u32 %v531, 4294901760
        %v1453 = vsub.f32 %v531, %v1452
        %v1454 = vand.u32 %v1453, 4294901760
        %v1455 = vsub.f32 %v1453, %v1454
        %v1456 = vand.u32 %v1455, 4294901760
        %1457 = vmatmul.mubr.f32.gmra.mrb[0].mxu0 %v1456
        %v1458 = vpop.f32.mrb[0].mxu0
        %v1459 = vadd.f32 0.0, %v1458
        %v1460 = vpop.f32.mrb[0].mxu0
        %1461 = vdwg.mxu0
        %1462 = vmatprep.subr.mxu0 0.0
        %v1463 = vand.u32 %v1325, 4294901760
        %v1464 = vsub.f32 %v1325, %v1463
        %v1465 = vand.u32 %v1464, 4294901760
        %v1466 = vsub.f32 %v1464, %v1465
        %v1467 = vand.u32 %v1466, 4294901760
        %1468 = vmatpush1.msra.mxu0 %v1467
        %1469 = vmatprep.subr.mxu0 0.0
        %v1470 = vand.u32 %v1326, 4294901760
        %v1471 = vsub.f32 %v1326, %v1470
        %v1472 = vand.u32 %v1471, 4294901760
        %v1473 = vsub.f32 %v1471, %v1472
        %v1474 = vand.u32 %v1473, 4294901760
        %1475 = vmatpush1.msra.mxu0 %v1474
        %1476 = vmatprep.subr.mxu0 0.0
        %v1477 = vand.u32 %v1327, 4294901760
        %v1478 = vsub.f32 %v1327, %v1477
        %v1479 = vand.u32 %v1478, 4294901760
        %v1480 = vsub.f32 %v1478, %v1479
        %v1481 = vand.u32 %v1480, 4294901760
        %1482 = vmatpush1.msra.mxu0 %v1481
        %1483 = vmatprep.subr.mxu0 0.0
        %v1484 = vand.u32 %v1328, 4294901760
        %v1485 = vsub.f32 %v1328, %v1484
        %v1486 = vand.u32 %v1485, 4294901760
        %v1487 = vsub.f32 %v1485, %v1486
        %v1488 = vand.u32 %v1487, 4294901760
        %1489 = vmatpush1.msra.mxu0 %v1488
        %1490 = vmatprep.subr.mxu0 0.0
        %v1491 = vand.u32 %v1329, 4294901760
        %v1492 = vsub.f32 %v1329, %v1491
        %v1493 = vand.u32 %v1492, 4294901760
        %v1494 = vsub.f32 %v1492, %v1493
        %v1495 = vand.u32 %v1494, 4294901760
        %1496 = vmatpush1.msra.mxu0 %v1495
        %1497 = vmatprep.subr.mxu0 0.0
        %v1498 = vand.u32 %v1330, 4294901760
        %v1499 = vsub.f32 %v1330, %v1498
        %v1500 = vand.u32 %v1499, 4294901760
        %v1501 = vsub.f32 %v1499, %v1500
        %v1502 = vand.u32 %v1501, 4294901760
        %1503 = vmatpush1.msra.mxu0 %v1502
        %1504 = vmatprep.subr.mxu0 0.0
        %v1505 = vand.u32 %v1331, 4294901760
        %v1506 = vsub.f32 %v1331, %v1505
        %v1507 = vand.u32 %v1506, 4294901760
        %v1508 = vsub.f32 %v1506, %v1507
        %v1509 = vand.u32 %v1508, 4294901760
        %1510 = vmatpush1.msra.mxu0 %v1509
        %1511 = vmatprep.subr.mxu0 0.0
        %v1512 = vand.u32 %v1332, 4294901760
        %v1513 = vsub.f32 %v1332, %v1512
        %v1514 = vand.u32 %v1513, 4294901760
        %v1515 = vsub.f32 %v1513, %v1514
        %v1516 = vand.u32 %v1515, 4294901760
        %1517 = vmatpush1.msra.mxu0 %v1516
        %1518 = vmatprep.subr.mxu0 0.0
        %v1519 = vand.u32 %v1333, 4294901760
        %v1520 = vsub.f32 %v1333, %v1519
        %v1521 = vand.u32 %v1520, 4294901760
        %v1522 = vsub.f32 %v1520, %v1521
        %v1523 = vand.u32 %v1522, 4294901760
        %1524 = vmatpush1.msra.mxu0 %v1523
        %1525 = vmatprep.subr.mxu0 0.0
        %v1526 = vand.u32 %v1334, 4294901760
        %v1527 = vsub.f32 %v1334, %v1526
        %v1528 = vand.u32 %v1527, 4294901760
        %v1529 = vsub.f32 %v1527, %v1528
        %v1530 = vand.u32 %v1529, 4294901760
        %1531 = vmatpush1.msra.mxu0 %v1530
        %1532 = vmatprep.subr.mxu0 0.0
        %v1533 = vand.u32 %v1335, 4294901760
        %v1534 = vsub.f32 %v1335, %v1533
        %v1535 = vand.u32 %v1534, 4294901760
        %v1536 = vsub.f32 %v1534, %v1535
        %v1537 = vand.u32 %v1536, 4294901760
        %1538 = vmatpush1.msra.mxu0 %v1537
        %1539 = vmatprep.subr.mxu0 0.0
        %v1540 = vand.u32 %v1336, 4294901760
        %v1541 = vsub.f32 %v1336, %v1540
        %v1542 = vand.u32 %v1541, 4294901760
        %v1543 = vsub.f32 %v1541, %v1542
        %v1544 = vand.u32 %v1543, 4294901760
        %1545 = vmatpush1.msra.mxu0 %v1544
        %1546 = vmatprep.subr.mxu0 0.0
        %v1547 = vand.u32 %v1337, 4294901760
        %v1548 = vsub.f32 %v1337, %v1547
        %v1549 = vand.u32 %v1548, 4294901760
        %v1550 = vsub.f32 %v1548, %v1549
        %v1551 = vand.u32 %v1550, 4294901760
        %1552 = vmatpush1.msra.mxu0 %v1551
        %1553 = vmatprep.subr.mxu0 0.0
        %v1554 = vand.u32 %v1338, 4294901760
        %v1555 = vsub.f32 %v1338, %v1554
        %v1556 = vand.u32 %v1555, 4294901760
        %v1557 = vsub.f32 %v1555, %v1556
        %v1558 = vand.u32 %v1557, 4294901760
        %1559 = vmatpush1.msra.mxu0 %v1558
        %1560 = vmatprep.subr.mxu0 0.0
        %v1561 = vand.u32 %v1339, 4294901760
        %v1562 = vsub.f32 %v1339, %v1561
        %v1563 = vand.u32 %v1562, 4294901760
        %v1564 = vsub.f32 %v1562, %v1563
        %v1565 = vand.u32 %v1564, 4294901760
        %1566 = vmatpush1.msra.mxu0 %v1565
        %1567 = vmatprep.subr.mxu0 0.0
        %v1568 = vand.u32 %v1340, 4294901760
        %v1569 = vsub.f32 %v1340, %v1568
        %v1570 = vand.u32 %v1569, 4294901760
        %v1571 = vsub.f32 %v1569, %v1570
        %v1572 = vand.u32 %v1571, 4294901760
        %1573 = vmatpush1.msra.mxu0 %v1572
        %1574 = vmatprep.subr.mxu0 0.0
        %1575 = vmatpush1.msra.mxu0 0.0
        %1576 = vmatprep.subr.mxu0 0.0
        %1577 = vmatpush1.msra.mxu0 0.0
        %1578 = vmatprep.subr.mxu0 0.0
        %1579 = vmatpush1.msra.mxu0 0.0
        %1580 = vmatprep.subr.mxu0 0.0
        %1581 = vmatpush1.msra.mxu0 0.0
        %1582 = vmatprep.subr.mxu0 0.0
        %1583 = vmatpush1.msra.mxu0 0.0
        %1584 = vmatprep.subr.mxu0 0.0
        %1585 = vmatpush1.msra.mxu0 0.0
        %1586 = vmatprep.subr.mxu0 0.0
        %1587 = vmatpush1.msra.mxu0 0.0
        %1588 = vmatprep.subr.mxu0 0.0
        %1589 = vmatpush1.msra.mxu0 0.0
        %1590 = vmatprep.subr.mxu0 0.0
        %1591 = vmatpush1.msra.mxu0 0.0
        %1592 = vmatprep.subr.mxu0 0.0
        %1593 = vmatpush1.msra.mxu0 0.0
        %1594 = vmatprep.subr.mxu0 0.0
        %1595 = vmatpush1.msra.mxu0 0.0
        %1596 = vmatprep.subr.mxu0 0.0
        %1597 = vmatpush1.msra.mxu0 0.0
        %1598 = vmatprep.subr.mxu0 0.0
        %1599 = vmatpush1.msra.mxu0 0.0
        %1600 = vmatprep.subr.mxu0 0.0
        %1601 = vmatpush1.msra.mxu0 0.0
        %1602 = vmatprep.subr.mxu0 0.0
        %1603 = vmatpush1.msra.mxu0 0.0
        %1604 = vmatprep.subr.mxu0 0.0
        %1605 = vmatpush1.msra.mxu0 0.0
        %1606 = vmatprep.mubr.f32.mxu0 0.0
        %v1607 = vand.u32 %v528, 4294901760
        %1608 = vmatmul.mubr.f32.gmra.mrb[0].mxu0 %v1607
        %v1609 = vpop.f32.mrb[0].mxu0
        %v1610 = vadd.f32 %v1429, %v1609
        %v1611 = vpop.f32.mrb[0].mxu0
        %1612 = vmatprep.mubr.f32.mxu0 0.0
        %v1613 = vand.u32 %v529, 4294901760
        %1614 = vmatmul.mubr.f32.gmra.mrb[0].mxu0 %v1613
        %v1615 = vpop.f32.mrb[0].mxu0
        %v1616 = vadd.f32 %v1439, %v1615
        %v1617 = vpop.f32.mrb[0].mxu0
        %1618 = vmatprep.mubr.f32.mxu0 0.0
        %v1619 = vand.u32 %v530, 4294901760
        %1620 = vmatmul.mubr.f32.gmra.mrb[0].mxu0 %v1619
        %v1621 = vpop.f32.mrb[0].mxu0
        %v1622 = vadd.f32 %v1449, %v1621
        %v1623 = vpop.f32.mrb[0].mxu0
        %1624 = vmatprep.mubr.f32.mxu0 0.0
        %v1625 = vand.u32 %v531, 4294901760
        %1626 = vmatmul.mubr.f32.gmra.mrb[0].mxu0 %v1625
        %v1627 = vpop.f32.mrb[0].mxu0
        %v1628 = vadd.f32 %v1459, %v1627
        %v1629 = vpop.f32.mrb[0].mxu0
        %1630 = vdwg.mxu0
        %1631 = vmatprep.subr.mxu0 0.0
        %v1632 = vand.u32 %v1325, 4294901760
        %v1633 = vsub.f32 %v1325, %v1632
        %1634 = vmatpush1.msra.mxu0 %v1633
        %1635 = vmatprep.subr.mxu0 0.0
        %v1636 = vand.u32 %v1326, 4294901760
        %v1637 = vsub.f32 %v1326, %v1636
        %1638 = vmatpush1.msra.mxu0 %v1637
        %1639 = vmatprep.subr.mxu0 0.0
        %v1640 = vand.u32 %v1327, 4294901760
        %v1641 = vsub.f32 %v1327, %v1640
        %1642 = vmatpush1.msra.mxu0 %v1641
        %1643 = vmatprep.subr.mxu0 0.0
        %v1644 = vand.u32 %v1328, 4294901760
        %v1645 = vsub.f32 %v1328, %v1644
        %1646 = vmatpush1.msra.mxu0 %v1645
        %1647 = vmatprep.subr.mxu0 0.0
        %v1648 = vand.u32 %v1329, 4294901760
        %v1649 = vsub.f32 %v1329, %v1648
        %1650 = vmatpush1.msra.mxu0 %v1649
        %1651 = vmatprep.subr.mxu0 0.0
        %v1652 = vand.u32 %v1330, 4294901760
        %v1653 = vsub.f32 %v1330, %v1652
        %1654 = vmatpush1.msra.mxu0 %v1653
        %1655 = vmatprep.subr.mxu0 0.0
        %v1656 = vand.u32 %v1331, 4294901760
        %v1657 = vsub.f32 %v1331, %v1656
        %1658 = vmatpush1.msra.mxu0 %v1657
        %1659 = vmatprep.subr.mxu0 0.0
        %v1660 = vand.u32 %v1332, 4294901760
        %v1661 = vsub.f32 %v1332, %v1660
        %1662 = vmatpush1.msra.mxu0 %v1661
        %1663 = vmatprep.subr.mxu0 0.0
        %v1664 = vand.u32 %v1333, 4294901760
        %v1665 = vsub.f32 %v1333, %v1664
        %1666 = vmatpush1.msra.mxu0 %v1665
        %1667 = vmatprep.subr.mxu0 0.0
        %v1668 = vand.u32 %v1334, 4294901760
        %v1669 = vsub.f32 %v1334, %v1668
        %1670 = vmatpush1.msra.mxu0 %v1669
        %1671 = vmatprep.subr.mxu0 0.0
        %v1672 = vand.u32 %v1335, 4294901760
        %v1673 = vsub.f32 %v1335, %v1672
        %1674 = vmatpush1.msra.mxu0 %v1673
        %1675 = vmatprep.subr.mxu0 0.0
        %v1676 = vand.u32 %v1336, 4294901760
        %v1677 = vsub.f32 %v1336, %v1676
        %1678 = vmatpush1.msra.mxu0 %v1677
        %1679 = vmatprep.subr.mxu0 0.0
        %v1680 = vand.u32 %v1337, 4294901760
        %v1681 = vsub.f32 %v1337, %v1680
        %1682 = vmatpush1.msra.mxu0 %v1681
        %1683 = vmatprep.subr.mxu0 0.0
        %v1684 = vand.u32 %v1338, 4294901760
        %v1685 = vsub.f32 %v1338, %v1684
        %1686 = vmatpush1.msra.mxu0 %v1685
        %1687 = vmatprep.subr.mxu0 0.0
        %v1688 = vand.u32 %v1339, 4294901760
        %v1689 = vsub.f32 %v1339, %v1688
        %1690 = vmatpush1.msra.mxu0 %v1689
        %1691 = vmatprep.subr.mxu0 0.0
        %v1692 = vand.u32 %v1340, 4294901760
        %v1693 = vsub.f32 %v1340, %v1692
        %1694 = vmatpush1.msra.mxu0 %v1693
        %1695 = vmatprep.subr.mxu0 0.0
        %1696 = vmatpush1.msra.mxu0 0.0
        %1697 = vmatprep.subr.mxu0 0.0
        %1698 = vmatpush1.msra.mxu0 0.0
        %1699 = vmatprep.subr.mxu0 0.0
        %1700 = vmatpush1.msra.mxu0 0.0
        %1701 = vmatprep.subr.mxu0 0.0
        %1702 = vmatpush1.msra.mxu0 0.0
        %1703 = vmatprep.subr.mxu0 0.0
        %1704 = vmatpush1.msra.mxu0 0.0
        %1705 = vmatprep.subr.mxu0 0.0
        %1706 = vmatpush1.msra.mxu0 0.0
        %1707 = vmatprep.subr.mxu0 0.0
        %1708 = vmatpush1.msra.mxu0 0.0
        %1709 = vmatprep.subr.mxu0 0.0
        %1710 = vmatpush1.msra.mxu0 0.0
        %1711 = vmatprep.subr.mxu0 0.0
        %1712 = vmatpush1.msra.mxu0 0.0
        %1713 = vmatprep.subr.mxu0 0.0
        %1714 = vmatpush1.msra.mxu0 0.0
        %1715 = vmatprep.subr.mxu0 0.0
        %1716 = vmatpush1.msra.mxu0 0.0
        %1717 = vmatprep.subr.mxu0 0.0
        %1718 = vmatpush1.msra.mxu0 0.0
        %1719 = vmatprep.subr.mxu0 0.0
        %1720 = vmatpush1.msra.mxu0 0.0
        %1721 = vmatprep.subr.mxu0 0.0
        %1722 = vmatpush1.msra.mxu0 0.0
        %1723 = vmatprep.subr.mxu0 0.0
        %1724 = vmatpush1.msra.mxu0 0.0
        %1725 = vmatprep.subr.mxu0 0.0
        %1726 = vmatpush1.msra.mxu0 0.0
        %1727 = vmatprep.mubr.f32.mxu0 0.0
        %v1728 = vand.u32 %v528, 4294901760
        %v1729 = vsub.f32 %v528, %v1728
        %1730 = vmatmul.mubr.f32.gmra.mrb[0].mxu0 %v1729
        %v1731 = vpop.f32.mrb[0].mxu0
        %v1732 = vadd.f32 %v1610, %v1731
        %v1733 = vpop.f32.mrb[0].mxu0
        %1734 = vmatprep.mubr.f32.mxu0 0.0
        %v1735 = vand.u32 %v529, 4294901760
        %v1736 = vsub.f32 %v529, %v1735
        %1737 = vmatmul.mubr.f32.gmra.mrb[0].mxu0 %v1736
        %v1738 = vpop.f32.mrb[0].mxu0
        %v1739 = vadd.f32 %v1616, %v1738
        %v1740 = vpop.f32.mrb[0].mxu0
        %1741 = vmatprep.mubr.f32.mxu0 0.0
        %v1742 = vand.u32 %v530, 4294901760
        %v1743 = vsub.f32 %v530, %v1742
        %1744 = vmatmul.mubr.f32.gmra.mrb[0].mxu0 %v1743
        %v1745 = vpop.f32.mrb[0].mxu0
        %v1746 = vadd.f32 %v1622, %v1745
        %v1747 = vpop.f32.mrb[0].mxu0
        %1748 = vmatprep.mubr.f32.mxu0 0.0
        %v1749 = vand.u32 %v531, 4294901760
        %v1750 = vsub.f32 %v531, %v1749
        %1751 = vmatmul.mubr.f32.gmra.mrb[0].mxu0 %v1750
        %v1752 = vpop.f32.mrb[0].mxu0
        %v1753 = vadd.f32 %v1628, %v1752
        %v1754 = vpop.f32.mrb[0].mxu0
        %1755 = vdwg.mxu0
        %1756 = vmatprep.subr.mxu0 0.0
        %v1757 = vand.u32 %v1325, 4294901760
        %1758 = vmatpush1.msra.mxu0 %v1757
        %1759 = vmatprep.subr.mxu0 0.0
        %v1760 = vand.u32 %v1326, 4294901760
        %1761 = vmatpush1.msra.mxu0 %v1760
        %1762 = vmatprep.subr.mxu0 0.0
        %v1763 = vand.u32 %v1327, 4294901760
        %1764 = vmatpush1.msra.mxu0 %v1763
        %1765 = vmatprep.subr.mxu0 0.0
        %v1766 = vand.u32 %v1328, 4294901760
        %1767 = vmatpush1.msra.mxu0 %v1766
        %1768 = vmatprep.subr.mxu0 0.0
        %v1769 = vand.u32 %v1329, 4294901760
        %1770 = vmatpush1.msra.mxu0 %v1769
        %1771 = vmatprep.subr.mxu0 0.0
        %v1772 = vand.u32 %v1330, 4294901760
        %1773 = vmatpush1.msra.mxu0 %v1772
        %1774 = vmatprep.subr.mxu0 0.0
        %v1775 = vand.u32 %v1331, 4294901760
        %1776 = vmatpush1.msra.mxu0 %v1775
        %1777 = vmatprep.subr.mxu0 0.0
        %v1778 = vand.u32 %v1332, 4294901760
        %1779 = vmatpush1.msra.mxu0 %v1778
        %1780 = vmatprep.subr.mxu0 0.0
        %v1781 = vand.u32 %v1333, 4294901760
        %1782 = vmatpush1.msra.mxu0 %v1781
        %1783 = vmatprep.subr.mxu0 0.0
        %v1784 = vand.u32 %v1334, 4294901760
        %1785 = vmatpush1.msra.mxu0 %v1784
        %1786 = vmatprep.subr.mxu0 0.0
        %v1787 = vand.u32 %v1335, 4294901760
        %1788 = vmatpush1.msra.mxu0 %v1787
        %1789 = vmatprep.subr.mxu0 0.0
        %v1790 = vand.u32 %v1336, 4294901760
        %1791 = vmatpush1.msra.mxu0 %v1790
        %1792 = vmatprep.subr.mxu0 0.0
        %v1793 = vand.u32 %v1337, 4294901760
        %1794 = vmatpush1.msra.mxu0 %v1793
        %1795 = vmatprep.subr.mxu0 0.0
        %v1796 = vand.u32 %v1338, 4294901760
        %1797 = vmatpush1.msra.mxu0 %v1796
        %1798 = vmatprep.subr.mxu0 0.0
        %v1799 = vand.u32 %v1339, 4294901760
        %1800 = vmatpush1.msra.mxu0 %v1799
        %1801 = vmatprep.subr.mxu0 0.0
        %v1802 = vand.u32 %v1340, 4294901760
        %1803 = vmatpush1.msra.mxu0 %v1802
        %1804 = vmatprep.subr.mxu0 0.0
        %1805 = vmatpush1.msra.mxu0 0.0
        %1806 = vmatprep.subr.mxu0 0.0
        %1807 = vmatpush1.msra.mxu0 0.0
        %1808 = vmatprep.subr.mxu0 0.0
        %1809 = vmatpush1.msra.mxu0 0.0
        %1810 = vmatprep.subr.mxu0 0.0
        %1811 = vmatpush1.msra.mxu0 0.0
        %1812 = vmatprep.subr.mxu0 0.0
        %1813 = vmatpush1.msra.mxu0 0.0
        %1814 = vmatprep.subr.mxu0 0.0
        %1815 = vmatpush1.msra.mxu0 0.0
        %1816 = vmatprep.subr.mxu0 0.0
        %1817 = vmatpush1.msra.mxu0 0.0
        %1818 = vmatprep.subr.mxu0 0.0
        %1819 = vmatpush1.msra.mxu0 0.0
        %1820 = vmatprep.subr.mxu0 0.0
        %1821 = vmatpush1.msra.mxu0 0.0
        %1822 = vmatprep.subr.mxu0 0.0
        %1823 = vmatpush1.msra.mxu0 0.0
        %1824 = vmatprep.subr.mxu0 0.0
        %1825 = vmatpush1.msra.mxu0 0.0
        %1826 = vmatprep.subr.mxu0 0.0
        %1827 = vmatpush1.msra.mxu0 0.0
        %1828 = vmatprep.subr.mxu0 0.0
        %1829 = vmatpush1.msra.mxu0 0.0
        %1830 = vmatprep.subr.mxu0 0.0
        %1831 = vmatpush1.msra.mxu0 0.0
        %1832 = vmatprep.subr.mxu0 0.0
        %1833 = vmatpush1.msra.mxu0 0.0
        %1834 = vmatprep.subr.mxu0 0.0
        %1835 = vmatpush1.msra.mxu0 0.0
        %1836 = vmatprep.mubr.f32.mxu0 0.0
        %v1837 = vand.u32 %v528, 4294901760
        %v1838 = vsub.f32 %v528, %v1837
        %v1839 = vand.u32 %v1838, 4294901760
        %1840 = vmatmul.mubr.f32.gmra.mrb[0].mxu0 %v1839
        %v1841 = vpop.f32.mrb[0].mxu0
        %v1842 = vadd.f32 %v1732, %v1841
        %v1843 = vpop.f32.mrb[0].mxu0
        %1844 = vmatprep.mubr.f32.mxu0 0.0
        %v1845 = vand.u32 %v529, 4294901760
        %v1846 = vsub.f32 %v529, %v1845
        %v1847 = vand.u32 %v1846, 4294901760
        %1848 = vmatmul.mubr.f32.gmra.mrb[0].mxu0 %v1847
        %v1849 = vpop.f32.mrb[0].mxu0
        %v1850 = vadd.f32 %v1739, %v1849
        %v1851 = vpop.f32.mrb[0].mxu0
        %1852 = vmatprep.mubr.f32.mxu0 0.0
        %v1853 = vand.u32 %v530, 4294901760
        %v1854 = vsub.f32 %v530, %v1853
        %v1855 = vand.u32 %v1854, 4294901760
        %1856 = vmatmul.mubr.f32.gmra.mrb[0].mxu0 %v1855
        %v1857 = vpop.f32.mrb[0].mxu0
        %v1858 = vadd.f32 %v1746, %v1857
        %v1859 = vpop.f32.mrb[0].mxu0
        %1860 = vmatprep.mubr.f32.mxu0 0.0
        %v1861 = vand.u32 %v531, 4294901760
        %v1862 = vsub.f32 %v531, %v1861
        %v1863 = vand.u32 %v1862, 4294901760
        %1864 = vmatmul.mubr.f32.gmra.mrb[0].mxu0 %v1863
        %v1865 = vpop.f32.mrb[0].mxu0
        %v1866 = vadd.f32 %v1753, %v1865
        %v1867 = vpop.f32.mrb[0].mxu0
        %1868 = vdwg.mxu0
        %1869 = vmatprep.subr.mxu0 0.0
        %v1870 = vand.u32 %v1325, 4294901760
        %v1871 = vsub.f32 %v1325, %v1870
        %v1872 = vand.u32 %v1871, 4294901760
        %1873 = vmatpush1.msra.mxu0 %v1872
        %1874 = vmatprep.subr.mxu0 0.0
        %v1875 = vand.u32 %v1326, 4294901760
        %v1876 = vsub.f32 %v1326, %v1875
        %v1877 = vand.u32 %v1876, 4294901760
        %1878 = vmatpush1.msra.mxu0 %v1877
        %1879 = vmatprep.subr.mxu0 0.0
        %v1880 = vand.u32 %v1327, 4294901760
        %v1881 = vsub.f32 %v1327, %v1880
        %v1882 = vand.u32 %v1881, 4294901760
        %1883 = vmatpush1.msra.mxu0 %v1882
        %1884 = vmatprep.subr.mxu0 0.0
        %v1885 = vand.u32 %v1328, 4294901760
        %v1886 = vsub.f32 %v1328, %v1885
        %v1887 = vand.u32 %v1886, 4294901760
        %1888 = vmatpush1.msra.mxu0 %v1887
        %1889 = vmatprep.subr.mxu0 0.0
        %v1890 = vand.u32 %v1329, 4294901760
        %v1891 = vsub.f32 %v1329, %v1890
        %v1892 = vand.u32 %v1891, 4294901760
        %1893 = vmatpush1.msra.mxu0 %v1892
        %1894 = vmatprep.subr.mxu0 0.0
        %v1895 = vand.u32 %v1330, 4294901760
        %v1896 = vsub.f32 %v1330, %v1895
        %v1897 = vand.u32 %v1896, 4294901760
        %1898 = vmatpush1.msra.mxu0 %v1897
        %1899 = vmatprep.subr.mxu0 0.0
        %v1900 = vand.u32 %v1331, 4294901760
        %v1901 = vsub.f32 %v1331, %v1900
        %v1902 = vand.u32 %v1901, 4294901760
        %1903 = vmatpush1.msra.mxu0 %v1902
        %1904 = vmatprep.subr.mxu0 0.0
        %v1905 = vand.u32 %v1332, 4294901760
        %v1906 = vsub.f32 %v1332, %v1905
        %v1907 = vand.u32 %v1906, 4294901760
        %1908 = vmatpush1.msra.mxu0 %v1907
        %1909 = vmatprep.subr.mxu0 0.0
        %v1910 = vand.u32 %v1333, 4294901760
        %v1911 = vsub.f32 %v1333, %v1910
        %v1912 = vand.u32 %v1911, 4294901760
        %1913 = vmatpush1.msra.mxu0 %v1912
        %1914 = vmatprep.subr.mxu0 0.0
        %v1915 = vand.u32 %v1334, 4294901760
        %v1916 = vsub.f32 %v1334, %v1915
        %v1917 = vand.u32 %v1916, 4294901760
        %1918 = vmatpush1.msra.mxu0 %v1917
        %1919 = vmatprep.subr.mxu0 0.0
        %v1920 = vand.u32 %v1335, 4294901760
        %v1921 = vsub.f32 %v1335, %v1920
        %v1922 = vand.u32 %v1921, 4294901760
        %1923 = vmatpush1.msra.mxu0 %v1922
        %1924 = vmatprep.subr.mxu0 0.0
        %v1925 = vand.u32 %v1336, 4294901760
        %v1926 = vsub.f32 %v1336, %v1925
        %v1927 = vand.u32 %v1926, 4294901760
        %1928 = vmatpush1.msra.mxu0 %v1927
        %1929 = vmatprep.subr.mxu0 0.0
        %v1930 = vand.u32 %v1337, 4294901760
        %v1931 = vsub.f32 %v1337, %v1930
        %v1932 = vand.u32 %v1931, 4294901760
        %1933 = vmatpush1.msra.mxu0 %v1932
        %1934 = vmatprep.subr.mxu0 0.0
        %v1935 = vand.u32 %v1338, 4294901760
        %v1936 = vsub.f32 %v1338, %v1935
        %v1937 = vand.u32 %v1936, 4294901760
        %1938 = vmatpush1.msra.mxu0 %v1937
        %1939 = vmatprep.subr.mxu0 0.0
        %v1940 = vand.u32 %v1339, 4294901760
        %v1941 = vsub.f32 %v1339, %v1940
        %v1942 = vand.u32 %v1941, 4294901760
        %1943 = vmatpush1.msra.mxu0 %v1942
        %1944 = vmatprep.subr.mxu0 0.0
        %v1945 = vand.u32 %v1340, 4294901760
        %v1946 = vsub.f32 %v1340, %v1945
        %v1947 = vand.u32 %v1946, 4294901760
        %1948 = vmatpush1.msra.mxu0 %v1947
        %1949 = vmatprep.subr.mxu0 0.0
        %1950 = vmatpush1.msra.mxu0 0.0
        %1951 = vmatprep.subr.mxu0 0.0
        %1952 = vmatpush1.msra.mxu0 0.0
        %1953 = vmatprep.subr.mxu0 0.0
        %1954 = vmatpush1.msra.mxu0 0.0
        %1955 = vmatprep.subr.mxu0 0.0
        %1956 = vmatpush1.msra.mxu0 0.0
        %1957 = vmatprep.subr.mxu0 0.0
        %1958 = vmatpush1.msra.mxu0 0.0
        %1959 = vmatprep.subr.mxu0 0.0
        %1960 = vmatpush1.msra.mxu0 0.0
        %1961 = vmatprep.subr.mxu0 0.0
        %1962 = vmatpush1.msra.mxu0 0.0
        %1963 = vmatprep.subr.mxu0 0.0
        %1964 = vmatpush1.msra.mxu0 0.0
        %1965 = vmatprep.subr.mxu0 0.0
        %1966 = vmatpush1.msra.mxu0 0.0
        %1967 = vmatprep.subr.mxu0 0.0
        %1968 = vmatpush1.msra.mxu0 0.0
        %1969 = vmatprep.subr.mxu0 0.0
        %1970 = vmatpush1.msra.mxu0 0.0
        %1971 = vmatprep.subr.mxu0 0.0
        %1972 = vmatpush1.msra.mxu0 0.0
        %1973 = vmatprep.subr.mxu0 0.0
        %1974 = vmatpush1.msra.mxu0 0.0
        %1975 = vmatprep.subr.mxu0 0.0
        %1976 = vmatpush1.msra.mxu0 0.0
        %1977 = vmatprep.subr.mxu0 0.0
        %1978 = vmatpush1.msra.mxu0 0.0
        %1979 = vmatprep.subr.mxu0 0.0
        %1980 = vmatpush1.msra.mxu0 0.0
        %1981 = vmatprep.mubr.f32.mxu0 0.0
        %v1982 = vand.u32 %v528, 4294901760
        %1983 = vmatmul.mubr.f32.gmra.mrb[0].mxu0 %v1982
        %v1984 = vpop.f32.mrb[0].mxu0
        %v1985 = vadd.f32 %v1842, %v1984
        %v1986 = vpop.f32.mrb[0].mxu0
        %1987 = vmatprep.mubr.f32.mxu0 0.0
        %v1988 = vand.u32 %v529, 4294901760
        %1989 = vmatmul.mubr.f32.gmra.mrb[0].mxu0 %v1988
        %v1990 = vpop.f32.mrb[0].mxu0
        %v1991 = vadd.f32 %v1850, %v1990
        %v1992 = vpop.f32.mrb[0].mxu0
        %1993 = vmatprep.mubr.f32.mxu0 0.0
        %v1994 = vand.u32 %v530, 4294901760
        %1995 = vmatmul.mubr.f32.gmra.mrb[0].mxu0 %v1994
        %v1996 = vpop.f32.mrb[0].mxu0
        %v1997 = vadd.f32 %v1858, %v1996
        %v1998 = vpop.f32.mrb[0].mxu0
        %1999 = vmatprep.mubr.f32.mxu0 0.0
        %v2000 = vand.u32 %v531, 4294901760
        %2001 = vmatmul.mubr.f32.gmra.mrb[0].mxu0 %v2000
        %v2002 = vpop.f32.mrb[0].mxu0
        %v2003 = vadd.f32 %v1866, %v2002
        %v2004 = vpop.f32.mrb[0].mxu0
        %2005 = vdwg.mxu0
        %2006 = vmatprep.subr.mxu0 0.0
        %v2007 = vand.u32 %v1325, 4294901760
        %2008 = vmatpush1.msra.mxu0 %v2007
        %2009 = vmatprep.subr.mxu0 0.0
        %v2010 = vand.u32 %v1326, 4294901760
        %2011 = vmatpush1.msra.mxu0 %v2010
        %2012 = vmatprep.subr.mxu0 0.0
        %v2013 = vand.u32 %v1327, 4294901760
        %2014 = vmatpush1.msra.mxu0 %v2013
        %2015 = vmatprep.subr.mxu0 0.0
        %v2016 = vand.u32 %v1328, 4294901760
        %2017 = vmatpush1.msra.mxu0 %v2016
        %2018 = vmatprep.subr.mxu0 0.0
        %v2019 = vand.u32 %v1329, 4294901760
        %2020 = vmatpush1.msra.mxu0 %v2019
        %2021 = vmatprep.subr.mxu0 0.0
        %v2022 = vand.u32 %v1330, 4294901760
        %2023 = vmatpush1.msra.mxu0 %v2022
        %2024 = vmatprep.subr.mxu0 0.0
        %v2025 = vand.u32 %v1331, 4294901760
        %2026 = vmatpush1.msra.mxu0 %v2025
        %2027 = vmatprep.subr.mxu0 0.0
        %v2028 = vand.u32 %v1332, 4294901760
        %2029 = vmatpush1.msra.mxu0 %v2028
        %2030 = vmatprep.subr.mxu0 0.0
        %v2031 = vand.u32 %v1333, 4294901760
        %2032 = vmatpush1.msra.mxu0 %v2031
        %2033 = vmatprep.subr.mxu0 0.0
        %v2034 = vand.u32 %v1334, 4294901760
        %2035 = vmatpush1.msra.mxu0 %v2034
        %2036 = vmatprep.subr.mxu0 0.0
        %v2037 = vand.u32 %v1335, 4294901760
        %2038 = vmatpush1.msra.mxu0 %v2037
        %2039 = vmatprep.subr.mxu0 0.0
        %v2040 = vand.u32 %v1336, 4294901760
        %2041 = vmatpush1.msra.mxu0 %v2040
        %2042 = vmatprep.subr.mxu0 0.0
        %v2043 = vand.u32 %v1337, 4294901760
        %2044 = vmatpush1.msra.mxu0 %v2043
        %2045 = vmatprep.subr.mxu0 0.0
        %v2046 = vand.u32 %v1338, 4294901760
        %2047 = vmatpush1.msra.mxu0 %v2046
        %2048 = vmatprep.subr.mxu0 0.0
        %v2049 = vand.u32 %v1339, 4294901760
        %2050 = vmatpush1.msra.mxu0 %v2049
        %2051 = vmatprep.subr.mxu0 0.0
        %v2052 = vand.u32 %v1340, 4294901760
        %2053 = vmatpush1.msra.mxu0 %v2052
        %2054 = vmatprep.subr.mxu0 0.0
        %2055 = vmatpush1.msra.mxu0 0.0
        %2056 = vmatprep.subr.mxu0 0.0
        %2057 = vmatpush1.msra.mxu0 0.0
        %2058 = vmatprep.subr.mxu0 0.0
        %2059 = vmatpush1.msra.mxu0 0.0
        %2060 = vmatprep.subr.mxu0 0.0
        %2061 = vmatpush1.msra.mxu0 0.0
        %2062 = vmatprep.subr.mxu0 0.0
        %2063 = vmatpush1.msra.mxu0 0.0
        %2064 = vmatprep.subr.mxu0 0.0
        %2065 = vmatpush1.msra.mxu0 0.0
        %2066 = vmatprep.subr.mxu0 0.0
        %2067 = vmatpush1.msra.mxu0 0.0
        %2068 = vmatprep.subr.mxu0 0.0
        %2069 = vmatpush1.msra.mxu0 0.0
        %2070 = vmatprep.subr.mxu0 0.0
        %2071 = vmatpush1.msra.mxu0 0.0
        %2072 = vmatprep.subr.mxu0 0.0
        %2073 = vmatpush1.msra.mxu0 0.0
        %2074 = vmatprep.subr.mxu0 0.0
        %2075 = vmatpush1.msra.mxu0 0.0
        %2076 = vmatprep.subr.mxu0 0.0
        %2077 = vmatpush1.msra.mxu0 0.0
        %2078 = vmatprep.subr.mxu0 0.0
        %2079 = vmatpush1.msra.mxu0 0.0
        %2080 = vmatprep.subr.mxu0 0.0
        %2081 = vmatpush1.msra.mxu0 0.0
        %2082 = vmatprep.subr.mxu0 0.0
        %2083 = vmatpush1.msra.mxu0 0.0
        %2084 = vmatprep.subr.mxu0 0.0
        %2085 = vmatpush1.msra.mxu0 0.0
        %2086 = vmatprep.mubr.f32.mxu0 0.0
        %v2087 = vand.u32 %v528, 4294901760
        %2088 = vmatmul.mubr.f32.gmra.mrb[0].mxu0 %v2087
        %v2089 = vpop.f32.mrb[0].mxu0
        %v2090 = vadd.f32 %v1985, %v2089
        %v2091 = vpop.f32.mrb[0].mxu0
        %2092 = vmatprep.mubr.f32.mxu0 0.0
        %v2093 = vand.u32 %v529, 4294901760
        %2094 = vmatmul.mubr.f32.gmra.mrb[0].mxu0 %v2093
        %v2095 = vpop.f32.mrb[0].mxu0
        %v2096 = vadd.f32 %v1991, %v2095
        %v2097 = vpop.f32.mrb[0].mxu0
        %2098 = vmatprep.mubr.f32.mxu0 0.0
        %v2099 = vand.u32 %v530, 4294901760
        %2100 = vmatmul.mubr.f32.gmra.mrb[0].mxu0 %v2099
        %v2101 = vpop.f32.mrb[0].mxu0
        %v2102 = vadd.f32 %v1997, %v2101
        %v2103 = vpop.f32.mrb[0].mxu0
        %2104 = vmatprep.mubr.f32.mxu0 0.0
        %v2105 = vand.u32 %v531, 4294901760
        %2106 = vmatmul.mubr.f32.gmra.mrb[0].mxu0 %v2105
        %v2107 = vpop.f32.mrb[0].mxu0
        %v2108 = vadd.f32 %v2003, %v2107
        %v2109 = vpop.f32.mrb[0].mxu0
        %2110 = vdwg.mxu0
        %v2111 = vpack.c.bf16 %v1310, %v1304
        %v2112 = vpack.c.bf16 %v1322, %v1316
        %2113 = vst [vmem:[#allocation2] sm:$0xff] %v2111
        %2114 = vst [vmem:[#allocation2 + $0x8] sm:$0xff] %v2112
        %v2115 = vpack.c.bf16 %v2096, %v2090
        %v2116 = vpack.c.bf16 %v2108, %v2102
        %2117 = vst [vmem:[#allocation3] sm:$0xff] %v2115
        %2118 = vst [vmem:[#allocation3 + $0x8] sm:$0xff] %v2116
        %2119 = vst [vmem:[#allocation4] sm:$0xff] 0.0
        %2120 = vst [vmem:[#allocation4 + $0x8] sm:$0xff] 0.0
        %2121 = vst [vmem:[#allocation4 + $0x10] sm:$0xff] 0.0
        %2122 = vst [vmem:[#allocation4 + $0x18] sm:$0xff] 0.0
      $region88: #{gnn_forward.1} parent=83 // pred_fallthru
        _
      %p2123 = scmp.eq.s32.totalorder %s31, 1
      %p2124 = pnand %p2123, %p523
      %p2125 = pneg %p2124
      // Predicated region
      $region89: #{gnn_forward.1} parent=83 // pred_check
        _
      $region90: #{gnn_forward.1} parent=83 // pred_check_branch
        %2127 = sbr.rel (%p2124) target = $region92
      $region91: #{gnn_forward.1} parent=83 // pred_region
        %2128 = vst [vmem:[#allocation4] sm:$0xff] 0.0
        %2129 = vst [vmem:[#allocation4 + $0x8] sm:$0xff] 0.0
        %2130 = vst [vmem:[#allocation4 + $0x10] sm:$0xff] 0.0
        %2131 = vst [vmem:[#allocation4 + $0x18] sm:$0xff] 0.0
      $region92: #{gnn_forward.1} parent=83 // pred_fallthru
        _
      %v2132 = vld [vmem:[%s519] sm:$0xff]
      %v2133 = vld [vmem:[%s519 + $0x8] sm:$0xff]
      %v2134 = vld [vmem:[%s519 + $0x10] sm:$0xff]
      %v2135 = vld [vmem:[%s519 + $0x18] sm:$0xff]
      %v2136 = vld [vmem:[%s519 + $0x20] sm:$0xff]
      %v2137 = vld [vmem:[%s519 + $0x28] sm:$0xff]
      %v2138 = vld [vmem:[%s519 + $0x30] sm:$0xff]
      %v2139 = vld [vmem:[%s519 + $0x38] sm:$0xff]
      %v2140 = vld [vmem:[%s519 + $0x40] sm:$0xff]
      %v2141 = vld [vmem:[%s519 + $0x48] sm:$0xff]
      %v2142 = vld [vmem:[%s519 + $0x50] sm:$0xff]
      %v2143 = vld [vmem:[%s519 + $0x58] sm:$0xff]
      %v2144 = vld [vmem:[%s519 + $0x60] sm:$0xff]
      %v2145 = vld [vmem:[%s519 + $0x68] sm:$0xff]
      %v2146 = vld [vmem:[%s519 + $0x70] sm:$0xff]
      %v2147 = vld [vmem:[%s519 + $0x78] sm:$0xff]
      %v2148 = vld [vmem:[%s519 + $0x80] sm:$0xff]
      %v2149 = vld [vmem:[%s519 + $0x88] sm:$0xff]
      %v2150 = vld [vmem:[%s519 + $0x90] sm:$0xff]
      %v2151 = vld [vmem:[%s519 + $0x98] sm:$0xff]
      %v2152 = vld [vmem:[%s519 + $0xa0] sm:$0xff]
      %v2153 = vld [vmem:[%s519 + $0xa8] sm:$0xff]
      %v2154 = vld [vmem:[%s519 + $0xb0] sm:$0xff]
      %v2155 = vld [vmem:[%s519 + $0xb8] sm:$0xff]
      %v2156 = vld [vmem:[%s519 + $0xc0] sm:$0xff]
      %v2157 = vld [vmem:[%s519 + $0xc8] sm:$0xff]
      %v2158 = vld [vmem:[%s519 + $0xd0] sm:$0xff]
      %v2159 = vld [vmem:[%s519 + $0xd8] sm:$0xff]
      %v2160 = vld [vmem:[%s519 + $0xe0] sm:$0xff]
      %v2161 = vld [vmem:[%s519 + $0xe8] sm:$0xff]
      %v2162 = vld [vmem:[%s519 + $0xf0] sm:$0xff]
      %v2163 = vld [vmem:[%s519 + $0xf8] sm:$0xff]
      %v2164 = vlaneseq
      %v2165 = vand.u32 %v2164, 127
      %2166 = vset.pattern.permute.xlu0 0
      %2167 = vperm.xlu0 %2166, %v2132
      %v2168 = vpop.permute.xlu0 %2167
      %2169 = vset.pattern.permute.xlu0 0
      %2170 = vperm.xlu0 %2169, %v2133
      %v2171 = vpop.permute.xlu0 %2170
      %2172 = vset.pattern.permute.xlu0 0
      %2173 = vperm.xlu0 %2172, %v2134
      %v2174 = vpop.permute.xlu0 %2173
      %2175 = vset.pattern.permute.xlu0 0
      %2176 = vperm.xlu0 %2175, %v2135
      %v2177 = vpop.permute.xlu0 %2176
      %2178 = vset.pattern.permute.xlu0 0
      %2179 = vperm.xlu0 %2178, %v2136
      %v2180 = vpop.permute.xlu0 %2179
      %2181 = vset.pattern.permute.xlu0 0
      %2182 = vperm.xlu0 %2181, %v2137
      %v2183 = vpop.permute.xlu0 %2182
      %2184 = vset.pattern.permute.xlu0 0
      %2185 = vperm.xlu0 %2184, %v2138
      %v2186 = vpop.permute.xlu0 %2185
      %2187 = vset.pattern.permute.xlu0 0
      %2188 = vperm.xlu0 %2187, %v2139
      %v2189 = vpop.permute.xlu0 %2188
      %2190 = vset.pattern.permute.xlu0 0
      %2191 = vperm.xlu0 %2190, %v2140
      %v2192 = vpop.permute.xlu0 %2191
      %2193 = vset.pattern.permute.xlu0 0
      %2194 = vperm.xlu0 %2193, %v2141
      %v2195 = vpop.permute.xlu0 %2194
      %2196 = vset.pattern.permute.xlu0 0
      %2197 = vperm.xlu0 %2196, %v2142
      %v2198 = vpop.permute.xlu0 %2197
      %2199 = vset.pattern.permute.xlu0 0
      %2200 = vperm.xlu0 %2199, %v2143
      %v2201 = vpop.permute.xlu0 %2200
      %2202 = vset.pattern.permute.xlu0 0
      %2203 = vperm.xlu0 %2202, %v2144
      %v2204 = vpop.permute.xlu0 %2203
      %2205 = vset.pattern.permute.xlu0 0
      %2206 = vperm.xlu0 %2205, %v2145
      %v2207 = vpop.permute.xlu0 %2206
      %2208 = vset.pattern.permute.xlu0 0
      %2209 = vperm.xlu0 %2208, %v2146
      %v2210 = vpop.permute.xlu0 %2209
      %2211 = vset.pattern.permute.xlu0 0
      %2212 = vperm.xlu0 %2211, %v2147
      %v2213 = vpop.permute.xlu0 %2212
      %2214 = vset.pattern.permute.xlu0 0
      %2215 = vperm.xlu0 %2214, %v2148
      %v2216 = vpop.permute.xlu0 %2215
      %2217 = vset.pattern.permute.xlu0 0
      %2218 = vperm.xlu0 %2217, %v2149
      %v2219 = vpop.permute.xlu0 %2218
      %2220 = vset.pattern.permute.xlu0 0
      %2221 = vperm.xlu0 %2220, %v2150
      %v2222 = vpop.permute.xlu0 %2221
      %2223 = vset.pattern.permute.xlu0 0
      %2224 = vperm.xlu0 %2223, %v2151
      %v2225 = vpop.permute.xlu0 %2224
      %2226 = vset.pattern.permute.xlu0 0
      %2227 = vperm.xlu0 %2226, %v2152
      %v2228 = vpop.permute.xlu0 %2227
      %2229 = vset.pattern.permute.xlu0 0
      %2230 = vperm.xlu0 %2229, %v2153
      %v2231 = vpop.permute.xlu0 %2230
      %2232 = vset.pattern.permute.xlu0 0
      %2233 = vperm.xlu0 %2232, %v2154
      %v2234 = vpop.permute.xlu0 %2233
      %2235 = vset.pattern.permute.xlu0 0
      %2236 = vperm.xlu0 %2235, %v2155
      %v2237 = vpop.permute.xlu0 %2236
      %2238 = vset.pattern.permute.xlu0 0
      %2239 = vperm.xlu0 %2238, %v2156
      %v2240 = vpop.permute.xlu0 %2239
      %2241 = vset.pattern.permute.xlu0 0
      %2242 = vperm.xlu0 %2241, %v2157
      %v2243 = vpop.permute.xlu0 %2242
      %2244 = vset.pattern.permute.xlu0 0
      %2245 = vperm.xlu0 %2244, %v2158
      %v2246 = vpop.permute.xlu0 %2245
      %2247 = vset.pattern.permute.xlu0 0
      %2248 = vperm.xlu0 %2247, %v2159
      %v2249 = vpop.permute.xlu0 %2248
      %2250 = vset.pattern.permute.xlu0 0
      %2251 = vperm.xlu0 %2250, %v2160
      %v2252 = vpop.permute.xlu0 %2251
      %2253 = vset.pattern.permute.xlu0 0
      %2254 = vperm.xlu0 %2253, %v2161
      %v2255 = vpop.permute.xlu0 %2254
      %2256 = vset.pattern.permute.xlu0 0
      %2257 = vperm.xlu0 %2256, %v2162
      %v2258 = vpop.permute.xlu0 %2257
      %2259 = vset.pattern.permute.xlu0 0
      %2260 = vperm.xlu0 %2259, %v2163
      %v2261 = vpop.permute.xlu0 %2260
      %vm2262 = vcmp.eq.s32.totalorder %v2165, %v2168
      %vm2263 = vcmp.eq.s32.totalorder %v2165, %v2171
      %vm2264 = vcmp.eq.s32.totalorder %v2165, %v2174
      %vm2265 = vcmp.eq.s32.totalorder %v2165, %v2177
      %vm2266 = vcmp.eq.s32.totalorder %v2165, %v2180
      %vm2267 = vcmp.eq.s32.totalorder %v2165, %v2183
      %vm2268 = vcmp.eq.s32.totalorder %v2165, %v2186
      %vm2269 = vcmp.eq.s32.totalorder %v2165, %v2189
      %vm2270 = vcmp.eq.s32.totalorder %v2165, %v2192
      %vm2271 = vcmp.eq.s32.totalorder %v2165, %v2195
      %vm2272 = vcmp.eq.s32.totalorder %v2165, %v2198
      %vm2273 = vcmp.eq.s32.totalorder %v2165, %v2201
      %vm2274 = vcmp.eq.s32.totalorder %v2165, %v2204
      %vm2275 = vcmp.eq.s32.totalorder %v2165, %v2207
      %vm2276 = vcmp.eq.s32.totalorder %v2165, %v2210
      %vm2277 = vcmp.eq.s32.totalorder %v2165, %v2213
      %vm2278 = vcmp.eq.s32.totalorder %v2165, %v2216
      %vm2279 = vcmp.eq.s32.totalorder %v2165, %v2219
      %vm2280 = vcmp.eq.s32.totalorder %v2165, %v2222
      %vm2281 = vcmp.eq.s32.totalorder %v2165, %v2225
      %vm2282 = vcmp.eq.s32.totalorder %v2165, %v2228
      %vm2283 = vcmp.eq.s32.totalorder %v2165, %v2231
      %vm2284 = vcmp.eq.s32.totalorder %v2165, %v2234
      %vm2285 = vcmp.eq.s32.totalorder %v2165, %v2237
      %vm2286 = vcmp.eq.s32.totalorder %v2165, %v2240
      %vm2287 = vcmp.eq.s32.totalorder %v2165, %v2243
      %vm2288 = vcmp.eq.s32.totalorder %v2165, %v2246
      %vm2289 = vcmp.eq.s32.totalorder %v2165, %v2249
      %vm2290 = vcmp.eq.s32.totalorder %v2165, %v2252
      %vm2291 = vcmp.eq.s32.totalorder %v2165, %v2255
      %vm2292 = vcmp.eq.s32.totalorder %v2165, %v2258
      %vm2293 = vcmp.eq.s32.totalorder %v2165, %v2261
      %v2294 = vsel %vm2262, 1, 0
      %v2295 = vsel %vm2263, 1, 0
      %v2296 = vsel %vm2264, 1, 0
      %v2297 = vsel %vm2265, 1, 0
      %v2298 = vsel %vm2266, 1, 0
      %v2299 = vsel %vm2267, 1, 0
      %v2300 = vsel %vm2268, 1, 0
      %v2301 = vsel %vm2269, 1, 0
      %v2302 = vsel %vm2270, 1, 0
      %v2303 = vsel %vm2271, 1, 0
      %v2304 = vsel %vm2272, 1, 0
      %v2305 = vsel %vm2273, 1, 0
      %v2306 = vsel %vm2274, 1, 0
      %v2307 = vsel %vm2275, 1, 0
      %v2308 = vsel %vm2276, 1, 0
      %v2309 = vsel %vm2277, 1, 0
      %v2310 = vsel %vm2278, 1, 0
      %v2311 = vsel %vm2279, 1, 0
      %v2312 = vsel %vm2280, 1, 0
      %v2313 = vsel %vm2281, 1, 0
      %v2314 = vsel %vm2282, 1, 0
      %v2315 = vsel %vm2283, 1, 0
      %v2316 = vsel %vm2284, 1, 0
      %v2317 = vsel %vm2285, 1, 0
      %v2318 = vsel %vm2286, 1, 0
      %v2319 = vsel %vm2287, 1, 0
      %v2320 = vsel %vm2288, 1, 0
      %v2321 = vsel %vm2289, 1, 0
      %v2322 = vsel %vm2290, 1, 0
      %v2323 = vsel %vm2291, 1, 0
      %v2324 = vsel %vm2292, 1, 0
      %v2325 = vsel %vm2293, 1, 0
      %v2326 = vcvt.s32.f32 %v2294
      %v2327 = vcvt.s32.f32 %v2295
      %v2328 = vcvt.s32.f32 %v2296
      %v2329 = vcvt.s32.f32 %v2297
      %v2330 = vcvt.s32.f32 %v2298
      %v2331 = vcvt.s32.f32 %v2299
      %v2332 = vcvt.s32.f32 %v2300
      %v2333 = vcvt.s32.f32 %v2301
      %v2334 = vcvt.s32.f32 %v2302
      %v2335 = vcvt.s32.f32 %v2303
      %v2336 = vcvt.s32.f32 %v2304
      %v2337 = vcvt.s32.f32 %v2305
      %v2338 = vcvt.s32.f32 %v2306
      %v2339 = vcvt.s32.f32 %v2307
      %v2340 = vcvt.s32.f32 %v2308
      %v2341 = vcvt.s32.f32 %v2309
      %v2342 = vcvt.s32.f32 %v2310
      %v2343 = vcvt.s32.f32 %v2311
      %v2344 = vcvt.s32.f32 %v2312
      %v2345 = vcvt.s32.f32 %v2313
      %v2346 = vcvt.s32.f32 %v2314
      %v2347 = vcvt.s32.f32 %v2315
      %v2348 = vcvt.s32.f32 %v2316
      %v2349 = vcvt.s32.f32 %v2317
      %v2350 = vcvt.s32.f32 %v2318
      %v2351 = vcvt.s32.f32 %v2319
      %v2352 = vcvt.s32.f32 %v2320
      %v2353 = vcvt.s32.f32 %v2321
      %v2354 = vcvt.s32.f32 %v2322
      %v2355 = vcvt.s32.f32 %v2323
      %v2356 = vcvt.s32.f32 %v2324
      %v2357 = vcvt.s32.f32 %v2325
      %v2358 = vpack.c.bf16 %v2327, %v2326
      %v2359 = vpack.c.bf16 %v2329, %v2328
      %v2360 = vpack.c.bf16 %v2331, %v2330
      %v2361 = vpack.c.bf16 %v2333, %v2332
      %v2362 = vpack.c.bf16 %v2335, %v2334
      %v2363 = vpack.c.bf16 %v2337, %v2336
      %v2364 = vpack.c.bf16 %v2339, %v2338
      %v2365 = vpack.c.bf16 %v2341, %v2340
      %v2366 = vpack.c.bf16 %v2343, %v2342
      %v2367 = vpack.c.bf16 %v2345, %v2344
      %v2368 = vpack.c.bf16 %v2347, %v2346
      %v2369 = vpack.c.bf16 %v2349, %v2348
      %v2370 = vpack.c.bf16 %v2351, %v2350
      %v2371 = vpack.c.bf16 %v2353, %v2352
      %v2372 = vpack.c.bf16 %v2355, %v2354
      %v2373 = vpack.c.bf16 %v2357, %v2356
      %2374 = vset.pattern.permute.xlu0 1
      %2375 = vperm.xlu0 %2374, %v2132
      %v2376 = vpop.permute.xlu0 %2375
      %2377 = vset.pattern.permute.xlu0 1
      %2378 = vperm.xlu0 %2377, %v2133
      %v2379 = vpop.permute.xlu0 %2378
      %2380 = vset.pattern.permute.xlu0 1
      %2381 = vperm.xlu0 %2380, %v2134
      %v2382 = vpop.permute.xlu0 %2381
      %2383 = vset.pattern.permute.xlu0 1
      %2384 = vperm.xlu0 %2383, %v2135
      %v2385 = vpop.permute.xlu0 %2384
      %2386 = vset.pattern.permute.xlu0 1
      %2387 = vperm.xlu0 %2386, %v2136
      %v2388 = vpop.permute.xlu0 %2387
      %2389 = vset.pattern.permute.xlu0 1
      %2390 = vperm.xlu0 %2389, %v2137
      %v2391 = vpop.permute.xlu0 %2390
      %2392 = vset.pattern.permute.xlu0 1
      %2393 = vperm.xlu0 %2392, %v2138
      %v2394 = vpop.permute.xlu0 %2393
      %2395 = vset.pattern.permute.xlu0 1
      %2396 = vperm.xlu0 %2395, %v2139
      %v2397 = vpop.permute.xlu0 %2396
      %2398 = vset.pattern.permute.xlu0 1
      %2399 = vperm.xlu0 %2398, %v2140
      %v2400 = vpop.permute.xlu0 %2399
      %2401 = vset.pattern.permute.xlu0 1
      %2402 = vperm.xlu0 %2401, %v2141
      %v2403 = vpop.permute.xlu0 %2402
      %2404 = vset.pattern.permute.xlu0 1
      %2405 = vperm.xlu0 %2404, %v2142
      %v2406 = vpop.permute.xlu0 %2405
      %2407 = vset.pattern.permute.xlu0 1
      %2408 = vperm.xlu0 %2407, %v2143
      %v2409 = vpop.permute.xlu0 %2408
      %2410 = vset.pattern.permute.xlu0 1
      %2411 = vperm.xlu0 %2410, %v2144
      %v2412 = vpop.permute.xlu0 %2411
      %2413 = vset.pattern.permute.xlu0 1
      %2414 = vperm.xlu0 %2413, %v2145
      %v2415 = vpop.permute.xlu0 %2414
      %2416 = vset.pattern.permute.xlu0 1
      %2417 = vperm.xlu0 %2416, %v2146
      %v2418 = vpop.permute.xlu0 %2417
      %2419 = vset.pattern.permute.xlu0 1
      %2420 = vperm.xlu0 %2419, %v2147
      %v2421 = vpop.permute.xlu0 %2420
      %2422 = vset.pattern.permute.xlu0 1
      %2423 = vperm.xlu0 %2422, %v2148
      %v2424 = vpop.permute.xlu0 %2423
      %2425 = vset.pattern.permute.xlu0 1
      %2426 = vperm.xlu0 %2425, %v2149
      %v2427 = vpop.permute.xlu0 %2426
      %2428 = vset.pattern.permute.xlu0 1
      %2429 = vperm.xlu0 %2428, %v2150
      %v2430 = vpop.permute.xlu0 %2429
      %2431 = vset.pattern.permute.xlu0 1
      %2432 = vperm.xlu0 %2431, %v2151
      %v2433 = vpop.permute.xlu0 %2432
      %2434 = vset.pattern.permute.xlu0 1
      %2435 = vperm.xlu0 %2434, %v2152
      %v2436 = vpop.permute.xlu0 %2435
      %2437 = vset.pattern.permute.xlu0 1
      %2438 = vperm.xlu0 %2437, %v2153
      %v2439 = vpop.permute.xlu0 %2438
      %2440 = vset.pattern.permute.xlu0 1
      %2441 = vperm.xlu0 %2440, %v2154
      %v2442 = vpop.permute.xlu0 %2441
      %2443 = vset.pattern.permute.xlu0 1
      %2444 = vperm.xlu0 %2443, %v2155
      %v2445 = vpop.permute.xlu0 %2444
      %2446 = vset.pattern.permute.xlu0 1
      %2447 = vperm.xlu0 %2446, %v2156
      %v2448 = vpop.permute.xlu0 %2447
      %2449 = vset.pattern.permute.xlu0 1
      %2450 = vperm.xlu0 %2449, %v2157
      %v2451 = vpop.permute.xlu0 %2450
      %2452 = vset.pattern.permute.xlu0 1
      %2453 = vperm.xlu0 %2452, %v2158
      %v2454 = vpop.permute.xlu0 %2453
      %2455 = vset.pattern.permute.xlu0 1
      %2456 = vperm.xlu0 %2455, %v2159
      %v2457 = vpop.permute.xlu0 %2456
      %2458 = vset.pattern.permute.xlu0 1
      %2459 = vperm.xlu0 %2458, %v2160
      %v2460 = vpop.permute.xlu0 %2459
      %2461 = vset.pattern.permute.xlu0 1
      %2462 = vperm.xlu0 %2461, %v2161
      %v2463 = vpop.permute.xlu0 %2462
      %2464 = vset.pattern.permute.xlu0 1
      %2465 = vperm.xlu0 %2464, %v2162
      %v2466 = vpop.permute.xlu0 %2465
      %2467 = vset.pattern.permute.xlu0 1
      %2468 = vperm.xlu0 %2467, %v2163
      %v2469 = vpop.permute.xlu0 %2468
      %vm2470 = vcmp.eq.s32.totalorder %v2165, %v2376
      %vm2471 = vcmp.eq.s32.totalorder %v2165, %v2379
      %vm2472 = vcmp.eq.s32.totalorder %v2165, %v2382
      %vm2473 = vcmp.eq.s32.totalorder %v2165, %v2385
      %vm2474 = vcmp.eq.s32.totalorder %v2165, %v2388
      %vm2475 = vcmp.eq.s32.totalorder %v2165, %v2391
      %vm2476 = vcmp.eq.s32.totalorder %v2165, %v2394
      %vm2477 = vcmp.eq.s32.totalorder %v2165, %v2397
      %vm2478 = vcmp.eq.s32.totalorder %v2165, %v2400
      %vm2479 = vcmp.eq.s32.totalorder %v2165, %v2403
      %vm2480 = vcmp.eq.s32.totalorder %v2165, %v2406
      %vm2481 = vcmp.eq.s32.totalorder %v2165, %v2409
      %vm2482 = vcmp.eq.s32.totalorder %v2165, %v2412
      %vm2483 = vcmp.eq.s32.totalorder %v2165, %v2415
      %vm2484 = vcmp.eq.s32.totalorder %v2165, %v2418
      %vm2485 = vcmp.eq.s32.totalorder %v2165, %v2421
      %vm2486 = vcmp.eq.s32.totalorder %v2165, %v2424
      %vm2487 = vcmp.eq.s32.totalorder %v2165, %v2427
      %vm2488 = vcmp.eq.s32.totalorder %v2165, %v2430
      %vm2489 = vcmp.eq.s32.totalorder %v2165, %v2433
      %vm2490 = vcmp.eq.s32.totalorder %v2165, %v2436
      %vm2491 = vcmp.eq.s32.totalorder %v2165, %v2439
      %vm2492 = vcmp.eq.s32.totalorder %v2165, %v2442
      %vm2493 = vcmp.eq.s32.totalorder %v2165, %v2445
      %vm2494 = vcmp.eq.s32.totalorder %v2165, %v2448
      %vm2495 = vcmp.eq.s32.totalorder %v2165, %v2451
      %vm2496 = vcmp.eq.s32.totalorder %v2165, %v2454
      %vm2497 = vcmp.eq.s32.totalorder %v2165, %v2457
      %vm2498 = vcmp.eq.s32.totalorder %v2165, %v2460
      %vm2499 = vcmp.eq.s32.totalorder %v2165, %v2463
      %vm2500 = vcmp.eq.s32.totalorder %v2165, %v2466
      %vm2501 = vcmp.eq.s32.totalorder %v2165, %v2469
      %v2502 = vsel %vm2470, 1, 0
      %v2503 = vsel %vm2471, 1, 0
      %v2504 = vsel %vm2472, 1, 0
      %v2505 = vsel %vm2473, 1, 0
      %v2506 = vsel %vm2474, 1, 0
      %v2507 = vsel %vm2475, 1, 0
      %v2508 = vsel %vm2476, 1, 0
      %v2509 = vsel %vm2477, 1, 0
      %v2510 = vsel %vm2478, 1, 0
      %v2511 = vsel %vm2479, 1, 0
      %v2512 = vsel %vm2480, 1, 0
      %v2513 = vsel %vm2481, 1, 0
      %v2514 = vsel %vm2482, 1, 0
      %v2515 = vsel %vm2483, 1, 0
      %v2516 = vsel %vm2484, 1, 0
      %v2517 = vsel %vm2485, 1, 0
      %v2518 = vsel %vm2486, 1, 0
      %v2519 = vsel %vm2487, 1, 0
      %v2520 = vsel %vm2488, 1, 0
      %v2521 = vsel %vm2489, 1, 0
      %v2522 = vsel %vm2490, 1, 0
      %v2523 = vsel %vm2491, 1, 0
      %v2524 = vsel %vm2492, 1, 0
      %v2525 = vsel %vm2493, 1, 0
      %v2526 = vsel %vm2494, 1, 0
      %v2527 = vsel %vm2495, 1, 0
      %v2528 = vsel %vm2496, 1, 0
      %v2529 = vsel %vm2497, 1, 0
      %v2530 = vsel %vm2498, 1, 0
      %v2531 = vsel %vm2499, 1, 0
      %v2532 = vsel %vm2500, 1, 0
      %v2533 = vsel %vm2501, 1, 0
      %v2534 = vcvt.s32.f32 %v2502
      %v2535 = vcvt.s32.f32 %v2503
      %v2536 = vcvt.s32.f32 %v2504
      %v2537 = vcvt.s32.f32 %v2505
      %v2538 = vcvt.s32.f32 %v2506
      %v2539 = vcvt.s32.f32 %v2507
      %v2540 = vcvt.s32.f32 %v2508
      %v2541 = vcvt.s32.f32 %v2509
      %v2542 = vcvt.s32.f32 %v2510
      %v2543 = vcvt.s32.f32 %v2511
      %v2544 = vcvt.s32.f32 %v2512
      %v2545 = vcvt.s32.f32 %v2513
      %v2546 = vcvt.s32.f32 %v2514
      %v2547 = vcvt.s32.f32 %v2515
      %v2548 = vcvt.s32.f32 %v2516
      %v2549 = vcvt.s32.f32 %v2517
      %v2550 = vcvt.s32.f32 %v2518
      %v2551 = vcvt.s32.f32 %v2519
      %v2552 = vcvt.s32.f32 %v2520
      %v2553 = vcvt.s32.f32 %v2521
      %v2554 = vcvt.s32.f32 %v2522
      %v2555 = vcvt.s32.f32 %v2523
      %v2556 = vcvt.s32.f32 %v2524
      %v2557 = vcvt.s32.f32 %v2525
      %v2558 = vcvt.s32.f32 %v2526
      %v2559 = vcvt.s32.f32 %v2527
      %v2560 = vcvt.s32.f32 %v2528
      %v2561 = vcvt.s32.f32 %v2529
      %v2562 = vcvt.s32.f32 %v2530
      %v2563 = vcvt.s32.f32 %v2531
      %v2564 = vcvt.s32.f32 %v2532
      %v2565 = vcvt.s32.f32 %v2533
      %v2566 = vpack.c.bf16 %v2535, %v2534
      %v2567 = vpack.c.bf16 %v2537, %v2536
      %v2568 = vpack.c.bf16 %v2539, %v2538
      %v2569 = vpack.c.bf16 %v2541, %v2540
      %v2570 = vpack.c.bf16 %v2543, %v2542
      %v2571 = vpack.c.bf16 %v2545, %v2544
      %v2572 = vpack.c.bf16 %v2547, %v2546
      %v2573 = vpack.c.bf16 %v2549, %v2548
      %v2574 = vpack.c.bf16 %v2551, %v2550
      %v2575 = vpack.c.bf16 %v2553, %v2552
      %v2576 = vpack.c.bf16 %v2555, %v2554
      %v2577 = vpack.c.bf16 %v2557, %v2556
      %v2578 = vpack.c.bf16 %v2559, %v2558
      %v2579 = vpack.c.bf16 %v2561, %v2560
      %v2580 = vpack.c.bf16 %v2563, %v2562
      %v2581 = vpack.c.bf16 %v2565, %v2564
      %v2582 = vld [vmem:[#allocation2] sm:$0xff]
      %v2583 = vld [vmem:[#allocation2 + $0x8] sm:$0xff]
      %v2584 = vld [vmem:[#allocation3] sm:$0xff]
      %v2585 = vld [vmem:[#allocation3 + $0x8] sm:$0xff]
      %vm2586 = vcmask 261120
      %v2588 = vsel %vm2586, %v2566, 0
      %v2591 = vsel %vm2586, %v2567, 0
      %v2594 = vsel %vm2586, %v2568, 0
      %v2597 = vsel %vm2586, %v2569, 0
      %v2600 = vsel %vm2586, %v2570, 0
      %v2603 = vsel %vm2586, %v2571, 0
      %v2606 = vsel %vm2586, %v2572, 0
      %v2609 = vsel %vm2586, %v2573, 0
      %v2612 = vsel %vm2586, %v2574, 0
      %v2615 = vsel %vm2586, %v2575, 0
      %v2618 = vsel %vm2586, %v2576, 0
      %v2621 = vsel %vm2586, %v2577, 0
      %v2624 = vsel %vm2586, %v2578, 0
      %v2627 = vsel %vm2586, %v2579, 0
      %v2630 = vsel %vm2586, %v2580, 0
      %v2633 = vsel %vm2586, %v2581, 0
      %2635 = vmatprep.subr.bf16.mxu0 0
      %2636 = vmatpush1.bf16.msra.mxu0 %v2584
      %2637 = vmatprep.subr.bf16.mxu0 0
      %2638 = vmatpush1.bf16.msra.mxu0 %v2585
      %2639 = vmatprep.subr.bf16.mxu0 0
      %2640 = vmatpush1.bf16.msra.mxu0 0
      %2641 = vmatprep.subr.bf16.mxu0 0
      %2642 = vmatpush1.bf16.msra.mxu0 0
      %2643 = vmatprep.subr.bf16.mxu0 0
      %2644 = vmatpush1.bf16.msra.mxu0 0
      %2645 = vmatprep.subr.bf16.mxu0 0
      %2646 = vmatpush1.bf16.msra.mxu0 0
      %2647 = vmatprep.subr.bf16.mxu0 0
      %2648 = vmatpush1.bf16.msra.mxu0 0
      %2649 = vmatprep.subr.bf16.mxu0 0
      %2650 = vmatpush1.bf16.msra.mxu0 0
      %2651 = vmatprep.subr.bf16.mxu0 0
      %2652 = vmatpush1.bf16.msra.mxu0 0
      %2653 = vmatprep.subr.bf16.mxu0 0
      %2654 = vmatpush1.bf16.msra.mxu0 0
      %2655 = vmatprep.subr.bf16.mxu0 0
      %2656 = vmatpush1.bf16.msra.mxu0 0
      %2657 = vmatprep.subr.bf16.mxu0 0
      %2658 = vmatpush1.bf16.msra.mxu0 0
      %2659 = vmatprep.subr.bf16.mxu0 0
      %2660 = vmatpush1.bf16.msra.mxu0 0
      %2661 = vmatprep.subr.bf16.mxu0 0
      %2662 = vmatpush1.bf16.msra.mxu0 0
      %2663 = vmatprep.subr.bf16.mxu0 0
      %2664 = vmatpush1.bf16.msra.mxu0 0
      %2665 = vmatprep.subr.bf16.mxu0 0
      %2666 = vmatpush1.bf16.msra.mxu0 0
      %2667 = vmatprep.mubr.bf16.mxu0 0
      %2668 = vmatmul.mubr.bf16.gmra.mrb[0].mxu0 %v2588
      %v2669 = vpop.f32.mrb[0].mxu0
      %v2670 = vadd.f32 0.0, %v2669
      %v2671 = vpop.f32.mrb[0].mxu0
      %v2672 = vpop.f32.mrb[0].mxu0
      %v2673 = vadd.f32 0.0, %v2672
      %v2674 = vpop.f32.mrb[0].mxu0
      %2675 = vmatprep.mubr.bf16.mxu0 0
      %2676 = vmatmul.mubr.bf16.gmra.mrb[0].mxu0 %v2591
      %v2677 = vpop.f32.mrb[0].mxu0
      %v2678 = vadd.f32 0.0, %v2677
      %v2679 = vpop.f32.mrb[0].mxu0
      %v2680 = vpop.f32.mrb[0].mxu0
      %v2681 = vadd.f32 0.0, %v2680
      %v2682 = vpop.f32.mrb[0].mxu0
      %2683 = vmatprep.mubr.bf16.mxu0 0
      %2684 = vmatmul.mubr.bf16.gmra.mrb[0].mxu0 %v2594
      %v2685 = vpop.f32.mrb[0].mxu0
      %v2686 = vadd.f32 0.0, %v2685
      %v2687 = vpop.f32.mrb[0].mxu0
      %v2688 = vpop.f32.mrb[0].mxu0
      %v2689 = vadd.f32 0.0, %v2688
      %v2690 = vpop.f32.mrb[0].mxu0
      %2691 = vmatprep.mubr.bf16.mxu0 0
      %2692 = vmatmul.mubr.bf16.gmra.mrb[0].mxu0 %v2597
      %v2693 = vpop.f32.mrb[0].mxu0
      %v2694 = vadd.f32 0.0, %v2693
      %v2695 = vpop.f32.mrb[0].mxu0
      %v2696 = vpop.f32.mrb[0].mxu0
      %v2697 = vadd.f32 0.0, %v2696
      %v2698 = vpop.f32.mrb[0].mxu0
      %2699 = vmatprep.mubr.bf16.mxu0 0
      %2700 = vmatmul.mubr.bf16.gmra.mrb[0].mxu0 %v2600
      %v2701 = vpop.f32.mrb[0].mxu0
      %v2702 = vadd.f32 0.0, %v2701
      %v2703 = vpop.f32.mrb[0].mxu0
      %v2704 = vpop.f32.mrb[0].mxu0
      %v2705 = vadd.f32 0.0, %v2704
      %v2706 = vpop.f32.mrb[0].mxu0
      %2707 = vmatprep.mubr.bf16.mxu0 0
      %2708 = vmatmul.mubr.bf16.gmra.mrb[0].mxu0 %v2603
      %v2709 = vpop.f32.mrb[0].mxu0
      %v2710 = vadd.f32 0.0, %v2709
      %v2711 = vpop.f32.mrb[0].mxu0
      %v2712 = vpop.f32.mrb[0].mxu0
      %v2713 = vadd.f32 0.0, %v2712
      %v2714 = vpop.f32.mrb[0].mxu0
      %2715 = vmatprep.mubr.bf16.mxu0 0
      %2716 = vmatmul.mubr.bf16.gmra.mrb[0].mxu0 %v2606
      %v2717 = vpop.f32.mrb[0].mxu0
      %v2718 = vadd.f32 0.0, %v2717
      %v2719 = vpop.f32.mrb[0].mxu0
      %v2720 = vpop.f32.mrb[0].mxu0
      %v2721 = vadd.f32 0.0, %v2720
      %v2722 = vpop.f32.mrb[0].mxu0
      %2723 = vmatprep.mubr.bf16.mxu0 0
      %2724 = vmatmul.mubr.bf16.gmra.mrb[0].mxu0 %v2609
      %v2725 = vpop.f32.mrb[0].mxu0
      %v2726 = vadd.f32 0.0, %v2725
      %v2727 = vpop.f32.mrb[0].mxu0
      %v2728 = vpop.f32.mrb[0].mxu0
      %v2729 = vadd.f32 0.0, %v2728
      %v2730 = vpop.f32.mrb[0].mxu0
      %2731 = vmatprep.mubr.bf16.mxu0 0
      %2732 = vmatmul.mubr.bf16.gmra.mrb[0].mxu0 %v2612
      %v2733 = vpop.f32.mrb[0].mxu0
      %v2734 = vadd.f32 0.0, %v2733
      %v2735 = vpop.f32.mrb[0].mxu0
      %v2736 = vpop.f32.mrb[0].mxu0
      %v2737 = vadd.f32 0.0, %v2736
      %v2738 = vpop.f32.mrb[0].mxu0
      %2739 = vmatprep.mubr.bf16.mxu0 0
      %2740 = vmatmul.mubr.bf16.gmra.mrb[0].mxu0 %v2615
      %v2741 = vpop.f32.mrb[0].mxu0
      %v2742 = vadd.f32 0.0, %v2741
      %v2743 = vpop.f32.mrb[0].mxu0
      %v2744 = vpop.f32.mrb[0].mxu0
      %v2745 = vadd.f32 0.0, %v2744
      %v2746 = vpop.f32.mrb[0].mxu0
      %2747 = vmatprep.mubr.bf16.mxu0 0
      %2748 = vmatmul.mubr.bf16.gmra.mrb[0].mxu0 %v2618
      %v2749 = vpop.f32.mrb[0].mxu0
      %v2750 = vadd.f32 0.0, %v2749
      %v2751 = vpop.f32.mrb[0].mxu0
      %v2752 = vpop.f32.mrb[0].mxu0
      %v2753 = vadd.f32 0.0, %v2752
      %v2754 = vpop.f32.mrb[0].mxu0
      %2755 = vmatprep.mubr.bf16.mxu0 0
      %2756 = vmatmul.mubr.bf16.gmra.mrb[0].mxu0 %v2621
      %v2757 = vpop.f32.mrb[0].mxu0
      %v2758 = vadd.f32 0.0, %v2757
      %v2759 = vpop.f32.mrb[0].mxu0
      %v2760 = vpop.f32.mrb[0].mxu0
      %v2761 = vadd.f32 0.0, %v2760
      %v2762 = vpop.f32.mrb[0].mxu0
      %2763 = vmatprep.mubr.bf16.mxu0 0
      %2764 = vmatmul.mubr.bf16.gmra.mrb[0].mxu0 %v2624
      %v2765 = vpop.f32.mrb[0].mxu0
      %v2766 = vadd.f32 0.0, %v2765
      %v2767 = vpop.f32.mrb[0].mxu0
      %v2768 = vpop.f32.mrb[0].mxu0
      %v2769 = vadd.f32 0.0, %v2768
      %v2770 = vpop.f32.mrb[0].mxu0
      %2771 = vmatprep.mubr.bf16.mxu0 0
      %2772 = vmatmul.mubr.bf16.gmra.mrb[0].mxu0 %v2627
      %v2773 = vpop.f32.mrb[0].mxu0
      %v2774 = vadd.f32 0.0, %v2773
      %v2775 = vpop.f32.mrb[0].mxu0
      %v2776 = vpop.f32.mrb[0].mxu0
      %v2777 = vadd.f32 0.0, %v2776
      %v2778 = vpop.f32.mrb[0].mxu0
      %2779 = vmatprep.mubr.bf16.mxu0 0
      %2780 = vmatmul.mubr.bf16.gmra.mrb[0].mxu0 %v2630
      %v2781 = vpop.f32.mrb[0].mxu0
      %v2782 = vadd.f32 0.0, %v2781
      %v2783 = vpop.f32.mrb[0].mxu0
      %v2784 = vpop.f32.mrb[0].mxu0
      %v2785 = vadd.f32 0.0, %v2784
      %v2786 = vpop.f32.mrb[0].mxu0
      %2787 = vmatprep.mubr.bf16.mxu0 0
      %2788 = vmatmul.mubr.bf16.gmra.mrb[0].mxu0 %v2633
      %v2789 = vpop.f32.mrb[0].mxu0
      %v2790 = vadd.f32 0.0, %v2789
      %v2791 = vpop.f32.mrb[0].mxu0
      %v2792 = vpop.f32.mrb[0].mxu0
      %v2793 = vadd.f32 0.0, %v2792
      %v2794 = vpop.f32.mrb[0].mxu0
      %2795 = vdwg.mxu0
      %v2797 = vsel %vm2586, %v2358, 0
      %v2800 = vsel %vm2586, %v2359, 0
      %v2803 = vsel %vm2586, %v2360, 0
      %v2806 = vsel %vm2586, %v2361, 0
      %v2809 = vsel %vm2586, %v2362, 0
      %v2812 = vsel %vm2586, %v2363, 0
      %v2815 = vsel %vm2586, %v2364, 0
      %v2818 = vsel %vm2586, %v2365, 0
      %v2821 = vsel %vm2586, %v2366, 0
      %v2824 = vsel %vm2586, %v2367, 0
      %v2827 = vsel %vm2586, %v2368, 0
      %v2830 = vsel %vm2586, %v2369, 0
      %v2833 = vsel %vm2586, %v2370, 0
      %v2836 = vsel %vm2586, %v2371, 0
      %v2839 = vsel %vm2586, %v2372, 0
      %v2842 = vsel %vm2586, %v2373, 0
      %2844 = vmatprep.subr.bf16.mxu0 0
      %2845 = vmatpush1.bf16.msra.mxu0 %v2582
      %2846 = vmatprep.subr.bf16.mxu0 0
      %2847 = vmatpush1.bf16.msra.mxu0 %v2583
      %2848 = vmatprep.subr.bf16.mxu0 0
      %2849 = vmatpush1.bf16.msra.mxu0 0
      %2850 = vmatprep.subr.bf16.mxu0 0
      %2851 = vmatpush1.bf16.msra.mxu0 0
      %2852 = vmatprep.subr.bf16.mxu0 0
      %2853 = vmatpush1.bf16.msra.mxu0 0
      %2854 = vmatprep.subr.bf16.mxu0 0
      %2855 = vmatpush1.bf16.msra.mxu0 0
      %2856 = vmatprep.subr.bf16.mxu0 0
      %2857 = vmatpush1.bf16.msra.mxu0 0
      %2858 = vmatprep.subr.bf16.mxu0 0
      %2859 = vmatpush1.bf16.msra.mxu0 0
      %2860 = vmatprep.subr.bf16.mxu0 0
      %2861 = vmatpush1.bf16.msra.mxu0 0
      %2862 = vmatprep.subr.bf16.mxu0 0
      %2863 = vmatpush1.bf16.msra.mxu0 0
      %2864 = vmatprep.subr.bf16.mxu0 0
      %2865 = vmatpush1.bf16.msra.mxu0 0
      %2866 = vmatprep.subr.bf16.mxu0 0
      %2867 = vmatpush1.bf16.msra.mxu0 0
      %2868 = vmatprep.subr.bf16.mxu0 0
      %2869 = vmatpush1.bf16.msra.mxu0 0
      %2870 = vmatprep.subr.bf16.mxu0 0
      %2871 = vmatpush1.bf16.msra.mxu0 0
      %2872 = vmatprep.subr.bf16.mxu0 0
      %2873 = vmatpush1.bf16.msra.mxu0 0
      %2874 = vmatprep.subr.bf16.mxu0 0
      %2875 = vmatpush1.bf16.msra.mxu0 0
      %2876 = vmatprep.mubr.bf16.mxu0 0
      %2877 = vmatmul.mubr.bf16.gmra.mrb[0].mxu0 %v2797
      %v2878 = vpop.f32.mrb[0].mxu0
      %v2879 = vadd.f32 %v2670, %v2878
      %v2880 = vpop.f32.mrb[0].mxu0
      %v2881 = vpop.f32.mrb[0].mxu0
      %v2882 = vadd.f32 %v2673, %v2881
      %v2883 = vpop.f32.mrb[0].mxu0
      %2884 = vmatprep.mubr.bf16.mxu0 0
      %2885 = vmatmul.mubr.bf16.gmra.mrb[0].mxu0 %v2800
      %v2886 = vpop.f32.mrb[0].mxu0
      %v2887 = vadd.f32 %v2678, %v2886
      %v2888 = vpop.f32.mrb[0].mxu0
      %v2889 = vpop.f32.mrb[0].mxu0
      %v2890 = vadd.f32 %v2681, %v2889
      %v2891 = vpop.f32.mrb[0].mxu0
      %2892 = vmatprep.mubr.bf16.mxu0 0
      %2893 = vmatmul.mubr.bf16.gmra.mrb[0].mxu0 %v2803
      %v2894 = vpop.f32.mrb[0].mxu0
      %v2895 = vadd.f32 %v2686, %v2894
      %v2896 = vpop.f32.mrb[0].mxu0
      %v2897 = vpop.f32.mrb[0].mxu0
      %v2898 = vadd.f32 %v2689, %v2897
      %v2899 = vpop.f32.mrb[0].mxu0
      %2900 = vmatprep.mubr.bf16.mxu0 0
      %2901 = vmatmul.mubr.bf16.gmra.mrb[0].mxu0 %v2806
      %v2902 = vpop.f32.mrb[0].mxu0
      %v2903 = vadd.f32 %v2694, %v2902
      %v2904 = vpop.f32.mrb[0].mxu0
      %v2905 = vpop.f32.mrb[0].mxu0
      %v2906 = vadd.f32 %v2697, %v2905
      %v2907 = vpop.f32.mrb[0].mxu0
      %2908 = vmatprep.mubr.bf16.mxu0 0
      %2909 = vmatmul.mubr.bf16.gmra.mrb[0].mxu0 %v2809
      %v2910 = vpop.f32.mrb[0].mxu0
      %v2911 = vadd.f32 %v2702, %v2910
      %v2912 = vpop.f32.mrb[0].mxu0
      %v2913 = vpop.f32.mrb[0].mxu0
      %v2914 = vadd.f32 %v2705, %v2913
      %v2915 = vpop.f32.mrb[0].mxu0
      %2916 = vmatprep.mubr.bf16.mxu0 0
      %2917 = vmatmul.mubr.bf16.gmra.mrb[0].mxu0 %v2812
      %v2918 = vpop.f32.mrb[0].mxu0
      %v2919 = vadd.f32 %v2710, %v2918
      %v2920 = vpop.f32.mrb[0].mxu0
      %v2921 = vpop.f32.mrb[0].mxu0
      %v2922 = vadd.f32 %v2713, %v2921
      %v2923 = vpop.f32.mrb[0].mxu0
      %2924 = vmatprep.mubr.bf16.mxu0 0
      %2925 = vmatmul.mubr.bf16.gmra.mrb[0].mxu0 %v2815
      %v2926 = vpop.f32.mrb[0].mxu0
      %v2927 = vadd.f32 %v2718, %v2926
      %v2928 = vpop.f32.mrb[0].mxu0
      %v2929 = vpop.f32.mrb[0].mxu0
      %v2930 = vadd.f32 %v2721, %v2929
      %v2931 = vpop.f32.mrb[0].mxu0
      %2932 = vmatprep.mubr.bf16.mxu0 0
      %2933 = vmatmul.mubr.bf16.gmra.mrb[0].mxu0 %v2818
      %v2934 = vpop.f32.mrb[0].mxu0
      %v2935 = vadd.f32 %v2726, %v2934
      %v2936 = vpop.f32.mrb[0].mxu0
      %v2937 = vpop.f32.mrb[0].mxu0
      %v2938 = vadd.f32 %v2729, %v2937
      %v2939 = vpop.f32.mrb[0].mxu0
      %2940 = vmatprep.mubr.bf16.mxu0 0
      %2941 = vmatmul.mubr.bf16.gmra.mrb[0].mxu0 %v2821
      %v2942 = vpop.f32.mrb[0].mxu0
      %v2943 = vadd.f32 %v2734, %v2942
      %v2944 = vpop.f32.mrb[0].mxu0
      %v2945 = vpop.f32.mrb[0].mxu0
      %v2946 = vadd.f32 %v2737, %v2945
      %v2947 = vpop.f32.mrb[0].mxu0
      %2948 = vmatprep.mubr.bf16.mxu0 0
      %2949 = vmatmul.mubr.bf16.gmra.mrb[0].mxu0 %v2824
      %v2950 = vpop.f32.mrb[0].mxu0
      %v2951 = vadd.f32 %v2742, %v2950
      %v2952 = vpop.f32.mrb[0].mxu0
      %v2953 = vpop.f32.mrb[0].mxu0
      %v2954 = vadd.f32 %v2745, %v2953
      %v2955 = vpop.f32.mrb[0].mxu0
      %2956 = vmatprep.mubr.bf16.mxu0 0
      %2957 = vmatmul.mubr.bf16.gmra.mrb[0].mxu0 %v2827
      %v2958 = vpop.f32.mrb[0].mxu0
      %v2959 = vadd.f32 %v2750, %v2958
      %v2960 = vpop.f32.mrb[0].mxu0
      %v2961 = vpop.f32.mrb[0].mxu0
      %v2962 = vadd.f32 %v2753, %v2961
      %v2963 = vpop.f32.mrb[0].mxu0
      %2964 = vmatprep.mubr.bf16.mxu0 0
      %2965 = vmatmul.mubr.bf16.gmra.mrb[0].mxu0 %v2830
      %v2966 = vpop.f32.mrb[0].mxu0
      %v2967 = vadd.f32 %v2758, %v2966
      %v2968 = vpop.f32.mrb[0].mxu0
      %v2969 = vpop.f32.mrb[0].mxu0
      %v2970 = vadd.f32 %v2761, %v2969
      %v2971 = vpop.f32.mrb[0].mxu0
      %2972 = vmatprep.mubr.bf16.mxu0 0
      %2973 = vmatmul.mubr.bf16.gmra.mrb[0].mxu0 %v2833
      %v2974 = vpop.f32.mrb[0].mxu0
      %v2975 = vadd.f32 %v2766, %v2974
      %v2976 = vpop.f32.mrb[0].mxu0
      %v2977 = vpop.f32.mrb[0].mxu0
      %v2978 = vadd.f32 %v2769, %v2977
      %v2979 = vpop.f32.mrb[0].mxu0
      %2980 = vmatprep.mubr.bf16.mxu0 0
      %2981 = vmatmul.mubr.bf16.gmra.mrb[0].mxu0 %v2836
      %v2982 = vpop.f32.mrb[0].mxu0
      %v2983 = vadd.f32 %v2774, %v2982
      %v2984 = vpop.f32.mrb[0].mxu0
      %v2985 = vpop.f32.mrb[0].mxu0
      %v2986 = vadd.f32 %v2777, %v2985
      %v2987 = vpop.f32.mrb[0].mxu0
      %2988 = vmatprep.mubr.bf16.mxu0 0
      %2989 = vmatmul.mubr.bf16.gmra.mrb[0].mxu0 %v2839
      %v2990 = vpop.f32.mrb[0].mxu0
      %v2991 = vadd.f32 %v2782, %v2990
      %v2992 = vpop.f32.mrb[0].mxu0
      %v2993 = vpop.f32.mrb[0].mxu0
      %v2994 = vadd.f32 %v2785, %v2993
      %v2995 = vpop.f32.mrb[0].mxu0
      %2996 = vmatprep.mubr.bf16.mxu0 0
      %2997 = vmatmul.mubr.bf16.gmra.mrb[0].mxu0 %v2842
      %v2998 = vpop.f32.mrb[0].mxu0
      %v2999 = vadd.f32 %v2790, %v2998
      %v3000 = vpop.f32.mrb[0].mxu0
      %v3001 = vpop.f32.mrb[0].mxu0
      %v3002 = vadd.f32 %v2793, %v3001
      %v3003 = vpop.f32.mrb[0].mxu0
      %3004 = vdwg.mxu0
      %v3005 = vmax.f32 %v2879, 0.0
      %v3006 = vmax.f32 %v2882, 0.0
      %v3007 = vmax.f32 %v2887, 0.0
      %v3008 = vmax.f32 %v2890, 0.0
      %v3009 = vmax.f32 %v2895, 0.0
      %v3010 = vmax.f32 %v2898, 0.0
      %v3011 = vmax.f32 %v2903, 0.0
      %v3012 = vmax.f32 %v2906, 0.0
      %v3013 = vmax.f32 %v2911, 0.0
      %v3014 = vmax.f32 %v2914, 0.0
      %v3015 = vmax.f32 %v2919, 0.0
      %v3016 = vmax.f32 %v2922, 0.0
      %v3017 = vmax.f32 %v2927, 0.0
      %v3018 = vmax.f32 %v2930, 0.0
      %v3019 = vmax.f32 %v2935, 0.0
      %v3020 = vmax.f32 %v2938, 0.0
      %v3021 = vmax.f32 %v2943, 0.0
      %v3022 = vmax.f32 %v2946, 0.0
      %v3023 = vmax.f32 %v2951, 0.0
      %v3024 = vmax.f32 %v2954, 0.0
      %v3025 = vmax.f32 %v2959, 0.0
      %v3026 = vmax.f32 %v2962, 0.0
      %v3027 = vmax.f32 %v2967, 0.0
      %v3028 = vmax.f32 %v2970, 0.0
      %v3029 = vmax.f32 %v2975, 0.0
      %v3030 = vmax.f32 %v2978, 0.0
      %v3031 = vmax.f32 %v2983, 0.0
      %v3032 = vmax.f32 %v2986, 0.0
      %v3033 = vmax.f32 %v2991, 0.0
      %v3034 = vmax.f32 %v2994, 0.0
      %v3035 = vmax.f32 %v2999, 0.0
      %v3036 = vmax.f32 %v3002, 0.0
      %v3037 = vpack.c.bf16 %v3006, %v3005
      %v3038 = vpack.c.bf16 %v3008, %v3007
      %v3039 = vpack.c.bf16 %v3010, %v3009
      %v3040 = vpack.c.bf16 %v3012, %v3011
      %v3041 = vpack.c.bf16 %v3014, %v3013
      %v3042 = vpack.c.bf16 %v3016, %v3015
      %v3043 = vpack.c.bf16 %v3018, %v3017
      %v3044 = vpack.c.bf16 %v3020, %v3019
      %v3045 = vpack.c.bf16 %v3022, %v3021
      %v3046 = vpack.c.bf16 %v3024, %v3023
      %v3047 = vpack.c.bf16 %v3026, %v3025
      %v3048 = vpack.c.bf16 %v3028, %v3027
      %v3049 = vpack.c.bf16 %v3030, %v3029
      %v3050 = vpack.c.bf16 %v3032, %v3031
      %v3051 = vpack.c.bf16 %v3034, %v3033
      %v3052 = vpack.c.bf16 %v3036, %v3035
      %v3053 = vld [vmem:[#allocation4] sm:$0xff]
      %v3054 = vld [vmem:[#allocation4 + $0x8] sm:$0xff]
      %v3055 = vld [vmem:[#allocation4 + $0x10] sm:$0xff]
      %v3056 = vld [vmem:[#allocation4 + $0x18] sm:$0xff]
      %3057 = vxpose.xlu0.c.b16.start [1/8] %v2358, 128
      %3058 = vxpose.xlu0.c.b16.cont [2/8] %v2359, 128
      %3059 = vxpose.xlu0.c.b16.cont [3/8] %v2360, 128
      %3060 = vxpose.xlu0.c.b16.cont [4/8] %v2361, 128
      %3061 = vxpose.xlu0.c.b16.cont [5/8] %v2362, 128
      %3062 = vxpose.xlu0.c.b16.cont [6/8] %v2363, 128
      %3063 = vxpose.xlu0.c.b16.cont [7/8] %v2364, 128
      %3064 = vxpose.xlu0.c.b16.end [8/8] %v2365, 128
      %v3065 = vpop.trf.xlu0
      %v3066 = vpop.trf.xlu0
      %v3067 = vpop.trf.xlu0
      %v3068 = vpop.trf.xlu0
      %v3069 = vpop.trf.xlu0
      %v3070 = vpop.trf.xlu0
      %v3071 = vpop.trf.xlu0
      %v3072 = vpop.trf.xlu0
      %3073 = vxpose.xlu0.c.b16.start [1/8] %v2366, 128
      %3074 = vxpose.xlu0.c.b16.cont [2/8] %v2367, 128
      %3075 = vxpose.xlu0.c.b16.cont [3/8] %v2368, 128
      %3076 = vxpose.xlu0.c.b16.cont [4/8] %v2369, 128
      %3077 = vxpose.xlu0.c.b16.cont [5/8] %v2370, 128
      %3078 = vxpose.xlu0.c.b16.cont [6/8] %v2371, 128
      %3079 = vxpose.xlu0.c.b16.cont [7/8] %v2372, 128
      %3080 = vxpose.xlu0.c.b16.end [8/8] %v2373, 128
      %v3081 = vpop.trf.xlu0
      %v3082 = vpop.trf.xlu0
      %v3083 = vpop.trf.xlu0
      %v3084 = vpop.trf.xlu0
      %v3085 = vpop.trf.xlu0
      %v3086 = vpop.trf.xlu0
      %v3087 = vpop.trf.xlu0
      %v3088 = vpop.trf.xlu0
      %3089 = vmatprep.subr.bf16.mxu0 0
      %3090 = vmatpush1.bf16.msra.mxu0 %v3037
      %3091 = vmatprep.subr.bf16.mxu0 0
      %3092 = vmatpush1.bf16.msra.mxu0 %v3038
      %3093 = vmatprep.subr.bf16.mxu0 0
      %3094 = vmatpush1.bf16.msra.mxu0 %v3039
      %3095 = vmatprep.subr.bf16.mxu0 0
      %3096 = vmatpush1.bf16.msra.mxu0 %v3040
      %3097 = vmatprep.subr.bf16.mxu0 0
      %3098 = vmatpush1.bf16.msra.mxu0 %v3041
      %3099 = vmatprep.subr.bf16.mxu0 0
      %3100 = vmatpush1.bf16.msra.mxu0 %v3042
      %3101 = vmatprep.subr.bf16.mxu0 0
      %3102 = vmatpush1.bf16.msra.mxu0 %v3043
      %3103 = vmatprep.subr.bf16.mxu0 0
      %3104 = vmatpush1.bf16.msra.mxu0 %v3044
      %3105 = vmatprep.subr.bf16.mxu0 0
      %3106 = vmatpush1.bf16.msra.mxu0 %v3045
      %3107 = vmatprep.subr.bf16.mxu0 0
      %3108 = vmatpush1.bf16.msra.mxu0 %v3046
      %3109 = vmatprep.subr.bf16.mxu0 0
      %3110 = vmatpush1.bf16.msra.mxu0 %v3047
      %3111 = vmatprep.subr.bf16.mxu0 0
      %3112 = vmatpush1.bf16.msra.mxu0 %v3048
      %3113 = vmatprep.subr.bf16.mxu0 0
      %3114 = vmatpush1.bf16.msra.mxu0 %v3049
      %3115 = vmatprep.subr.bf16.mxu0 0
      %3116 = vmatpush1.bf16.msra.mxu0 %v3050
      %3117 = vmatprep.subr.bf16.mxu0 0
      %3118 = vmatpush1.bf16.msra.mxu0 %v3051
      %3119 = vmatprep.subr.bf16.mxu0 0
      %3120 = vmatpush1.bf16.msra.mxu0 %v3052
      %3121 = vmatprep.mubr.bf16.mxu0 %v3081
      %3122 = vmatmul.mubr.bf16.gmra.mrb[0].mxu0 %v3065
      %v3123 = vpop.f32.mrb[0].mxu0
      %v3124 = vadd.f32 0.0, %v3123
      %v3125 = vpop.f32.mrb[0].mxu0
      %v3126 = vpop.f32.mrb[0].mxu0
      %v3127 = vadd.f32 0.0, %v3126
      %v3128 = vpop.f32.mrb[0].mxu0
      %3129 = vmatprep.mubr.bf16.mxu0 %v3082
      %3130 = vmatmul.mubr.bf16.gmra.mrb[0].mxu0 %v3066
      %v3131 = vpop.f32.mrb[0].mxu0
      %v3132 = vadd.f32 0.0, %v3131
      %v3133 = vpop.f32.mrb[0].mxu0
      %v3134 = vpop.f32.mrb[0].mxu0
      %v3135 = vadd.f32 0.0, %v3134
      %v3136 = vpop.f32.mrb[0].mxu0
      %3137 = vdwg.mxu0
      %v3138 = vadd.f32 %v3053, %v3124
      %v3139 = vadd.f32 %v3054, %v3127
      %v3140 = vadd.f32 %v3055, %v3132
      %v3141 = vadd.f32 %v3056, %v3135
      %3142 = vst [vmem:[#allocation4] sm:$0xff] %v3138
      %3143 = vst [vmem:[#allocation4 + $0x8] sm:$0xff] %v3139
      %3144 = vst [vmem:[#allocation4 + $0x10] sm:$0xff] %v3140
      %3145 = vst [vmem:[#allocation4 + $0x18] sm:$0xff] %v3141
      %p3146 = scmp.eq.s32.totalorder %s32, 1
      %p3147 = pnand %p522, %p3146
      %p3148 = pneg %p3147
      // Predicated region
      $region93: #{gnn_forward.1} parent=83 // pred_check
        _
      $region94: #{gnn_forward.1} parent=83 // pred_check_branch
        %3150 = sbr.rel (%p3147) target = $region96
      $region95: #{gnn_forward.1} parent=83 // pred_region
        %v3151 = vld [vmem:[#allocation4] sm:$0xff]
        %v3152 = vld [vmem:[#allocation4 + $0x8] sm:$0xff]
        %v3153 = vld [vmem:[#allocation4 + $0x10] sm:$0xff]
        %v3154 = vld [vmem:[#allocation4 + $0x18] sm:$0xff]
        %v3155 = vld [vmem:[%s2] sm:$0xff]
        %v3156 = vld [vmem:[%s2 + $0x8] sm:$0xff]
        %v3157 = vld [vmem:[%s2 + $0x10] sm:$0xff]
        %v3158 = vld [vmem:[%s2 + $0x18] sm:$0xff]
        %3160 = vset.pattern.permute.xlu0 0
        %3161 = vperm.xlu0 %3160, %v3155
        %v3162 = vpop.permute.xlu0 %3161
        %3165 = vset.pattern.permute.xlu0 0
        %3166 = vperm.xlu0 %3165, %v3156
        %v3167 = vpop.permute.xlu0 %3166
        %3170 = vset.pattern.permute.xlu0 0
        %3171 = vperm.xlu0 %3170, %v3157
        %v3172 = vpop.permute.xlu0 %3171
        %3175 = vset.pattern.permute.xlu0 0
        %3176 = vperm.xlu0 %3175, %v3158
        %v3177 = vpop.permute.xlu0 %3176
        %v3179 = vmul.f32 %v3151, %v3162
        %v3180 = vmul.f32 %v3152, %v3167
        %v3181 = vmul.f32 %v3153, %v3172
        %v3182 = vmul.f32 %v3154, %v3177
        %v3183 = vld [vmem:[%s7] sm:$0xff]
        %v3184 = vld [vmem:[%s7 + $0x8] sm:$0xff]
        %v3185 = vld [vmem:[%s7 + $0x10] sm:$0xff]
        %v3186 = vld [vmem:[%s7 + $0x18] sm:$0xff]
        %v3187 = vld [vmem:[%s7 + $0x20] sm:$0xff]
        %v3188 = vld [vmem:[%s7 + $0x28] sm:$0xff]
        %v3189 = vld [vmem:[%s7 + $0x30] sm:$0xff]
        %v3190 = vld [vmem:[%s7 + $0x38] sm:$0xff]
        %v3191 = vld [vmem:[%s7 + $0x40] sm:$0xff]
        %v3192 = vld [vmem:[%s7 + $0x48] sm:$0xff]
        %v3193 = vld [vmem:[%s7 + $0x50] sm:$0xff]
        %v3194 = vld [vmem:[%s7 + $0x58] sm:$0xff]
        %v3195 = vld [vmem:[%s7 + $0x60] sm:$0xff]
        %v3196 = vld [vmem:[%s7 + $0x68] sm:$0xff]
        %v3197 = vld [vmem:[%s7 + $0x70] sm:$0xff]
        %v3198 = vld [vmem:[%s7 + $0x78] sm:$0xff]
        %v3199 = vld [vmem:[%s8] sm:$0x1]
        %v3201 = vlaneseq
        %v3202 = vshrl.u32 %v3201, 7
        %v3203 = vsub.s32 0, %v3202
        %v3204 = vrot.slane %v3199, %v3203
        %3206 = vmatprep.subr.mxu0 0.0
        %v3207 = vand.u32 %v3183, 4294901760
        %3208 = vmatpush1.msra.mxu0 %v3207
        %3209 = vmatprep.subr.mxu0 0.0
        %v3210 = vand.u32 %v3184, 4294901760
        %3211 = vmatpush1.msra.mxu0 %v3210
        %3212 = vmatprep.subr.mxu0 0.0
        %v3213 = vand.u32 %v3185, 4294901760
        %3214 = vmatpush1.msra.mxu0 %v3213
        %3215 = vmatprep.subr.mxu0 0.0
        %v3216 = vand.u32 %v3186, 4294901760
        %3217 = vmatpush1.msra.mxu0 %v3216
        %3218 = vmatprep.subr.mxu0 0.0
        %v3219 = vand.u32 %v3187, 4294901760
        %3220 = vmatpush1.msra.mxu0 %v3219
        %3221 = vmatprep.subr.mxu0 0.0
        %v3222 = vand.u32 %v3188, 4294901760
        %3223 = vmatpush1.msra.mxu0 %v3222
        %3224 = vmatprep.subr.mxu0 0.0
        %v3225 = vand.u32 %v3189, 4294901760
        %3226 = vmatpush1.msra.mxu0 %v3225
        %3227 = vmatprep.subr.mxu0 0.0
        %v3228 = vand.u32 %v3190, 4294901760
        %3229 = vmatpush1.msra.mxu0 %v3228
        %3230 = vmatprep.subr.mxu0 0.0
        %v3231 = vand.u32 %v3191, 4294901760
        %3232 = vmatpush1.msra.mxu0 %v3231
        %3233 = vmatprep.subr.mxu0 0.0
        %v3234 = vand.u32 %v3192, 4294901760
        %3235 = vmatpush1.msra.mxu0 %v3234
        %3236 = vmatprep.subr.mxu0 0.0
        %v3237 = vand.u32 %v3193, 4294901760
        %3238 = vmatpush1.msra.mxu0 %v3237
        %3239 = vmatprep.subr.mxu0 0.0
        %v3240 = vand.u32 %v3194, 4294901760
        %3241 = vmatpush1.msra.mxu0 %v3240
        %3242 = vmatprep.subr.mxu0 0.0
        %v3243 = vand.u32 %v3195, 4294901760
        %3244 = vmatpush1.msra.mxu0 %v3243
        %3245 = vmatprep.subr.mxu0 0.0
        %v3246 = vand.u32 %v3196, 4294901760
        %3247 = vmatpush1.msra.mxu0 %v3246
        %3248 = vmatprep.subr.mxu0 0.0
        %v3249 = vand.u32 %v3197, 4294901760
        %3250 = vmatpush1.msra.mxu0 %v3249
        %3251 = vmatprep.subr.mxu0 0.0
        %v3252 = vand.u32 %v3198, 4294901760
        %3253 = vmatpush1.msra.mxu0 %v3252
        %3254 = vmatprep.subr.mxu0 0.0
        %3255 = vmatpush1.msra.mxu0 0.0
        %3256 = vmatprep.subr.mxu0 0.0
        %3257 = vmatpush1.msra.mxu0 0.0
        %3258 = vmatprep.subr.mxu0 0.0
        %3259 = vmatpush1.msra.mxu0 0.0
        %3260 = vmatprep.subr.mxu0 0.0
        %3261 = vmatpush1.msra.mxu0 0.0
        %3262 = vmatprep.subr.mxu0 0.0
        %3263 = vmatpush1.msra.mxu0 0.0
        %3264 = vmatprep.subr.mxu0 0.0
        %3265 = vmatpush1.msra.mxu0 0.0
        %3266 = vmatprep.subr.mxu0 0.0
        %3267 = vmatpush1.msra.mxu0 0.0
        %3268 = vmatprep.subr.mxu0 0.0
        %3269 = vmatpush1.msra.mxu0 0.0
        %3270 = vmatprep.subr.mxu0 0.0
        %3271 = vmatpush1.msra.mxu0 0.0
        %3272 = vmatprep.subr.mxu0 0.0
        %3273 = vmatpush1.msra.mxu0 0.0
        %3274 = vmatprep.subr.mxu0 0.0
        %3275 = vmatpush1.msra.mxu0 0.0
        %3276 = vmatprep.subr.mxu0 0.0
        %3277 = vmatpush1.msra.mxu0 0.0
        %3278 = vmatprep.subr.mxu0 0.0
        %3279 = vmatpush1.msra.mxu0 0.0
        %3280 = vmatprep.subr.mxu0 0.0
        %3281 = vmatpush1.msra.mxu0 0.0
        %3282 = vmatprep.subr.mxu0 0.0
        %3283 = vmatpush1.msra.mxu0 0.0
        %3284 = vmatprep.subr.mxu0 0.0
        %3285 = vmatpush1.msra.mxu0 0.0
        %3286 = vmatprep.mubr.f32.mxu0 0.0
        %v3287 = vand.u32 %v3179, 4294901760
        %v3288 = vsub.f32 %v3179, %v3287
        %v3289 = vand.u32 %v3288, 4294901760
        %v3290 = vsub.f32 %v3288, %v3289
        %v3291 = vand.u32 %v3290, 4294901760
        %3292 = vmatmul.mubr.f32.gmra.mrb[0].mxu0 %v3291
        %v3293 = vpop.f32.mrb[0].mxu0
        %v3294 = vadd.f32 %v3204, %v3293
        %v3295 = vpop.f32.mrb[0].mxu0
        %3296 = vmatprep.mubr.f32.mxu0 0.0
        %v3297 = vand.u32 %v3180, 4294901760
        %v3298 = vsub.f32 %v3180, %v3297
        %v3299 = vand.u32 %v3298, 4294901760
        %v3300 = vsub.f32 %v3298, %v3299
        %v3301 = vand.u32 %v3300, 4294901760
        %3302 = vmatmul.mubr.f32.gmra.mrb[0].mxu0 %v3301
        %v3303 = vpop.f32.mrb[0].mxu0
        %v3304 = vadd.f32 %v3204, %v3303
        %v3305 = vpop.f32.mrb[0].mxu0
        %3306 = vmatprep.mubr.f32.mxu0 0.0
        %v3307 = vand.u32 %v3181, 4294901760
        %v3308 = vsub.f32 %v3181, %v3307
        %v3309 = vand.u32 %v3308, 4294901760
        %v3310 = vsub.f32 %v3308, %v3309
        %v3311 = vand.u32 %v3310, 4294901760
        %3312 = vmatmul.mubr.f32.gmra.mrb[0].mxu0 %v3311
        %v3313 = vpop.f32.mrb[0].mxu0
        %v3314 = vadd.f32 %v3204, %v3313
        %v3315 = vpop.f32.mrb[0].mxu0
        %3316 = vmatprep.mubr.f32.mxu0 0.0
        %v3317 = vand.u32 %v3182, 4294901760
        %v3318 = vsub.f32 %v3182, %v3317
        %v3319 = vand.u32 %v3318, 4294901760
        %v3320 = vsub.f32 %v3318, %v3319
        %v3321 = vand.u32 %v3320, 4294901760
        %3322 = vmatmul.mubr.f32.gmra.mrb[0].mxu0 %v3321
        %v3323 = vpop.f32.mrb[0].mxu0
        %v3324 = vadd.f32 %v3204, %v3323
        %v3325 = vpop.f32.mrb[0].mxu0
        %3326 = vdwg.mxu0
        %3327 = vmatprep.subr.mxu0 0.0
        %v3328 = vand.u32 %v3183, 4294901760
        %v3329 = vsub.f32 %v3183, %v3328
        %v3330 = vand.u32 %v3329, 4294901760
        %v3331 = vsub.f32 %v3329, %v3330
        %v3332 = vand.u32 %v3331, 4294901760
        %3333 = vmatpush1.msra.mxu0 %v3332
        %3334 = vmatprep.subr.mxu0 0.0
        %v3335 = vand.u32 %v3184, 4294901760
        %v3336 = vsub.f32 %v3184, %v3335
        %v3337 = vand.u32 %v3336, 4294901760
        %v3338 = vsub.f32 %v3336, %v3337
        %v3339 = vand.u32 %v3338, 4294901760
        %3340 = vmatpush1.msra.mxu0 %v3339
        %3341 = vmatprep.subr.mxu0 0.0
        %v3342 = vand.u32 %v3185, 4294901760
        %v3343 = vsub.f32 %v3185, %v3342
        %v3344 = vand.u32 %v3343, 4294901760
        %v3345 = vsub.f32 %v3343, %v3344
        %v3346 = vand.u32 %v3345, 4294901760
        %3347 = vmatpush1.msra.mxu0 %v3346
        %3348 = vmatprep.subr.mxu0 0.0
        %v3349 = vand.u32 %v3186, 4294901760
        %v3350 = vsub.f32 %v3186, %v3349
        %v3351 = vand.u32 %v3350, 4294901760
        %v3352 = vsub.f32 %v3350, %v3351
        %v3353 = vand.u32 %v3352, 4294901760
        %3354 = vmatpush1.msra.mxu0 %v3353
        %3355 = vmatprep.subr.mxu0 0.0
        %v3356 = vand.u32 %v3187, 4294901760
        %v3357 = vsub.f32 %v3187, %v3356
        %v3358 = vand.u32 %v3357, 4294901760
        %v3359 = vsub.f32 %v3357, %v3358
        %v3360 = vand.u32 %v3359, 4294901760
        %3361 = vmatpush1.msra.mxu0 %v3360
        %3362 = vmatprep.subr.mxu0 0.0
        %v3363 = vand.u32 %v3188, 4294901760
        %v3364 = vsub.f32 %v3188, %v3363
        %v3365 = vand.u32 %v3364, 4294901760
        %v3366 = vsub.f32 %v3364, %v3365
        %v3367 = vand.u32 %v3366, 4294901760
        %3368 = vmatpush1.msra.mxu0 %v3367
        %3369 = vmatprep.subr.mxu0 0.0
        %v3370 = vand.u32 %v3189, 4294901760
        %v3371 = vsub.f32 %v3189, %v3370
        %v3372 = vand.u32 %v3371, 4294901760
        %v3373 = vsub.f32 %v3371, %v3372
        %v3374 = vand.u32 %v3373, 4294901760
        %3375 = vmatpush1.msra.mxu0 %v3374
        %3376 = vmatprep.subr.mxu0 0.0
        %v3377 = vand.u32 %v3190, 4294901760
        %v3378 = vsub.f32 %v3190, %v3377
        %v3379 = vand.u32 %v3378, 4294901760
        %v3380 = vsub.f32 %v3378, %v3379
        %v3381 = vand.u32 %v3380, 4294901760
        %3382 = vmatpush1.msra.mxu0 %v3381
        %3383 = vmatprep.subr.mxu0 0.0
        %v3384 = vand.u32 %v3191, 4294901760
        %v3385 = vsub.f32 %v3191, %v3384
        %v3386 = vand.u32 %v3385, 4294901760
        %v3387 = vsub.f32 %v3385, %v3386
        %v3388 = vand.u32 %v3387, 4294901760
        %3389 = vmatpush1.msra.mxu0 %v3388
        %3390 = vmatprep.subr.mxu0 0.0
        %v3391 = vand.u32 %v3192, 4294901760
        %v3392 = vsub.f32 %v3192, %v3391
        %v3393 = vand.u32 %v3392, 4294901760
        %v3394 = vsub.f32 %v3392, %v3393
        %v3395 = vand.u32 %v3394, 4294901760
        %3396 = vmatpush1.msra.mxu0 %v3395
        %3397 = vmatprep.subr.mxu0 0.0
        %v3398 = vand.u32 %v3193, 4294901760
        %v3399 = vsub.f32 %v3193, %v3398
        %v3400 = vand.u32 %v3399, 4294901760
        %v3401 = vsub.f32 %v3399, %v3400
        %v3402 = vand.u32 %v3401, 4294901760
        %3403 = vmatpush1.msra.mxu0 %v3402
        %3404 = vmatprep.subr.mxu0 0.0
        %v3405 = vand.u32 %v3194, 4294901760
        %v3406 = vsub.f32 %v3194, %v3405
        %v3407 = vand.u32 %v3406, 4294901760
        %v3408 = vsub.f32 %v3406, %v3407
        %v3409 = vand.u32 %v3408, 4294901760
        %3410 = vmatpush1.msra.mxu0 %v3409
        %3411 = vmatprep.subr.mxu0 0.0
        %v3412 = vand.u32 %v3195, 4294901760
        %v3413 = vsub.f32 %v3195, %v3412
        %v3414 = vand.u32 %v3413, 4294901760
        %v3415 = vsub.f32 %v3413, %v3414
        %v3416 = vand.u32 %v3415, 4294901760
        %3417 = vmatpush1.msra.mxu0 %v3416
        %3418 = vmatprep.subr.mxu0 0.0
        %v3419 = vand.u32 %v3196, 4294901760
        %v3420 = vsub.f32 %v3196, %v3419
        %v3421 = vand.u32 %v3420, 4294901760
        %v3422 = vsub.f32 %v3420, %v3421
        %v3423 = vand.u32 %v3422, 4294901760
        %3424 = vmatpush1.msra.mxu0 %v3423
        %3425 = vmatprep.subr.mxu0 0.0
        %v3426 = vand.u32 %v3197, 4294901760
        %v3427 = vsub.f32 %v3197, %v3426
        %v3428 = vand.u32 %v3427, 4294901760
        %v3429 = vsub.f32 %v3427, %v3428
        %v3430 = vand.u32 %v3429, 4294901760
        %3431 = vmatpush1.msra.mxu0 %v3430
        %3432 = vmatprep.subr.mxu0 0.0
        %v3433 = vand.u32 %v3198, 4294901760
        %v3434 = vsub.f32 %v3198, %v3433
        %v3435 = vand.u32 %v3434, 4294901760
        %v3436 = vsub.f32 %v3434, %v3435
        %v3437 = vand.u32 %v3436, 4294901760
        %3438 = vmatpush1.msra.mxu0 %v3437
        %3439 = vmatprep.subr.mxu0 0.0
        %3440 = vmatpush1.msra.mxu0 0.0
        %3441 = vmatprep.subr.mxu0 0.0
        %3442 = vmatpush1.msra.mxu0 0.0
        %3443 = vmatprep.subr.mxu0 0.0
        %3444 = vmatpush1.msra.mxu0 0.0
        %3445 = vmatprep.subr.mxu0 0.0
        %3446 = vmatpush1.msra.mxu0 0.0
        %3447 = vmatprep.subr.mxu0 0.0
        %3448 = vmatpush1.msra.mxu0 0.0
        %3449 = vmatprep.subr.mxu0 0.0
        %3450 = vmatpush1.msra.mxu0 0.0
        %3451 = vmatprep.subr.mxu0 0.0
        %3452 = vmatpush1.msra.mxu0 0.0
        %3453 = vmatprep.subr.mxu0 0.0
        %3454 = vmatpush1.msra.mxu0 0.0
        %3455 = vmatprep.subr.mxu0 0.0
        %3456 = vmatpush1.msra.mxu0 0.0
        %3457 = vmatprep.subr.mxu0 0.0
        %3458 = vmatpush1.msra.mxu0 0.0
        %3459 = vmatprep.subr.mxu0 0.0
        %3460 = vmatpush1.msra.mxu0 0.0
        %3461 = vmatprep.subr.mxu0 0.0
        %3462 = vmatpush1.msra.mxu0 0.0
        %3463 = vmatprep.subr.mxu0 0.0
        %3464 = vmatpush1.msra.mxu0 0.0
        %3465 = vmatprep.subr.mxu0 0.0
        %3466 = vmatpush1.msra.mxu0 0.0
        %3467 = vmatprep.subr.mxu0 0.0
        %3468 = vmatpush1.msra.mxu0 0.0
        %3469 = vmatprep.subr.mxu0 0.0
        %3470 = vmatpush1.msra.mxu0 0.0
        %3471 = vmatprep.mubr.f32.mxu0 0.0
        %v3472 = vand.u32 %v3179, 4294901760
        %3473 = vmatmul.mubr.f32.gmra.mrb[0].mxu0 %v3472
        %v3474 = vpop.f32.mrb[0].mxu0
        %v3475 = vadd.f32 %v3294, %v3474
        %v3476 = vpop.f32.mrb[0].mxu0
        %3477 = vmatprep.mubr.f32.mxu0 0.0
        %v3478 = vand.u32 %v3180, 4294901760
        %3479 = vmatmul.mubr.f32.gmra.mrb[0].mxu0 %v3478
        %v3480 = vpop.f32.mrb[0].mxu0
        %v3481 = vadd.f32 %v3304, %v3480
        %v3482 = vpop.f32.mrb[0].mxu0
        %3483 = vmatprep.mubr.f32.mxu0 0.0
        %v3484 = vand.u32 %v3181, 4294901760
        %3485 = vmatmul.mubr.f32.gmra.mrb[0].mxu0 %v3484
        %v3486 = vpop.f32.mrb[0].mxu0
        %v3487 = vadd.f32 %v3314, %v3486
        %v3488 = vpop.f32.mrb[0].mxu0
        %3489 = vmatprep.mubr.f32.mxu0 0.0
        %v3490 = vand.u32 %v3182, 4294901760
        %3491 = vmatmul.mubr.f32.gmra.mrb[0].mxu0 %v3490
        %v3492 = vpop.f32.mrb[0].mxu0
        %v3493 = vadd.f32 %v3324, %v3492
        %v3494 = vpop.f32.mrb[0].mxu0
        %3495 = vdwg.mxu0
        %3496 = vmatprep.subr.mxu0 0.0
        %v3497 = vand.u32 %v3183, 4294901760
        %v3498 = vsub.f32 %v3183, %v3497
        %3499 = vmatpush1.msra.mxu0 %v3498
        %3500 = vmatprep.subr.mxu0 0.0
        %v3501 = vand.u32 %v3184, 4294901760
        %v3502 = vsub.f32 %v3184, %v3501
        %3503 = vmatpush1.msra.mxu0 %v3502
        %3504 = vmatprep.subr.mxu0 0.0
        %v3505 = vand.u32 %v3185, 4294901760
        %v3506 = vsub.f32 %v3185, %v3505
        %3507 = vmatpush1.msra.mxu0 %v3506
        %3508 = vmatprep.subr.mxu0 0.0
        %v3509 = vand.u32 %v3186, 4294901760
        %v3510 = vsub.f32 %v3186, %v3509
        %3511 = vmatpush1.msra.mxu0 %v3510
        %3512 = vmatprep.subr.mxu0 0.0
        %v3513 = vand.u32 %v3187, 4294901760
        %v3514 = vsub.f32 %v3187, %v3513
        %3515 = vmatpush1.msra.mxu0 %v3514
        %3516 = vmatprep.subr.mxu0 0.0
        %v3517 = vand.u32 %v3188, 4294901760
        %v3518 = vsub.f32 %v3188, %v3517
        %3519 = vmatpush1.msra.mxu0 %v3518
        %3520 = vmatprep.subr.mxu0 0.0
        %v3521 = vand.u32 %v3189, 4294901760
        %v3522 = vsub.f32 %v3189, %v3521
        %3523 = vmatpush1.msra.mxu0 %v3522
        %3524 = vmatprep.subr.mxu0 0.0
        %v3525 = vand.u32 %v3190, 4294901760
        %v3526 = vsub.f32 %v3190, %v3525
        %3527 = vmatpush1.msra.mxu0 %v3526
        %3528 = vmatprep.subr.mxu0 0.0
        %v3529 = vand.u32 %v3191, 4294901760
        %v3530 = vsub.f32 %v3191, %v3529
        %3531 = vmatpush1.msra.mxu0 %v3530
        %3532 = vmatprep.subr.mxu0 0.0
        %v3533 = vand.u32 %v3192, 4294901760
        %v3534 = vsub.f32 %v3192, %v3533
        %3535 = vmatpush1.msra.mxu0 %v3534
        %3536 = vmatprep.subr.mxu0 0.0
        %v3537 = vand.u32 %v3193, 4294901760
        %v3538 = vsub.f32 %v3193, %v3537
        %3539 = vmatpush1.msra.mxu0 %v3538
        %3540 = vmatprep.subr.mxu0 0.0
        %v3541 = vand.u32 %v3194, 4294901760
        %v3542 = vsub.f32 %v3194, %v3541
        %3543 = vmatpush1.msra.mxu0 %v3542
        %3544 = vmatprep.subr.mxu0 0.0
        %v3545 = vand.u32 %v3195, 4294901760
        %v3546 = vsub.f32 %v3195, %v3545
        %3547 = vmatpush1.msra.mxu0 %v3546
        %3548 = vmatprep.subr.mxu0 0.0
        %v3549 = vand.u32 %v3196, 4294901760
        %v3550 = vsub.f32 %v3196, %v3549
        %3551 = vmatpush1.msra.mxu0 %v3550
        %3552 = vmatprep.subr.mxu0 0.0
        %v3553 = vand.u32 %v3197, 4294901760
        %v3554 = vsub.f32 %v3197, %v3553
        %3555 = vmatpush1.msra.mxu0 %v3554
        %3556 = vmatprep.subr.mxu0 0.0
        %v3557 = vand.u32 %v3198, 4294901760
        %v3558 = vsub.f32 %v3198, %v3557
        %3559 = vmatpush1.msra.mxu0 %v3558
        %3560 = vmatprep.subr.mxu0 0.0
        %3561 = vmatpush1.msra.mxu0 0.0
        %3562 = vmatprep.subr.mxu0 0.0
        %3563 = vmatpush1.msra.mxu0 0.0
        %3564 = vmatprep.subr.mxu0 0.0
        %3565 = vmatpush1.msra.mxu0 0.0
        %3566 = vmatprep.subr.mxu0 0.0
        %3567 = vmatpush1.msra.mxu0 0.0
        %3568 = vmatprep.subr.mxu0 0.0
        %3569 = vmatpush1.msra.mxu0 0.0
        %3570 = vmatprep.subr.mxu0 0.0
        %3571 = vmatpush1.msra.mxu0 0.0
        %3572 = vmatprep.subr.mxu0 0.0
        %3573 = vmatpush1.msra.mxu0 0.0
        %3574 = vmatprep.subr.mxu0 0.0
        %3575 = vmatpush1.msra.mxu0 0.0
        %3576 = vmatprep.subr.mxu0 0.0
        %3577 = vmatpush1.msra.mxu0 0.0
        %3578 = vmatprep.subr.mxu0 0.0
        %3579 = vmatpush1.msra.mxu0 0.0
        %3580 = vmatprep.subr.mxu0 0.0
        %3581 = vmatpush1.msra.mxu0 0.0
        %3582 = vmatprep.subr.mxu0 0.0
        %3583 = vmatpush1.msra.mxu0 0.0
        %3584 = vmatprep.subr.mxu0 0.0
        %3585 = vmatpush1.msra.mxu0 0.0
        %3586 = vmatprep.subr.mxu0 0.0
        %3587 = vmatpush1.msra.mxu0 0.0
        %3588 = vmatprep.subr.mxu0 0.0
        %3589 = vmatpush1.msra.mxu0 0.0
        %3590 = vmatprep.subr.mxu0 0.0
        %3591 = vmatpush1.msra.mxu0 0.0
        %3592 = vmatprep.mubr.f32.mxu0 0.0
        %v3593 = vand.u32 %v3179, 4294901760
        %v3594 = vsub.f32 %v3179, %v3593
        %3595 = vmatmul.mubr.f32.gmra.mrb[0].mxu0 %v3594
        %v3596 = vpop.f32.mrb[0].mxu0
        %v3597 = vadd.f32 %v3475, %v3596
        %v3598 = vpop.f32.mrb[0].mxu0
        %3599 = vmatprep.mubr.f32.mxu0 0.0
        %v3600 = vand.u32 %v3180, 4294901760
        %v3601 = vsub.f32 %v3180, %v3600
        %3602 = vmatmul.mubr.f32.gmra.mrb[0].mxu0 %v3601
        %v3603 = vpop.f32.mrb[0].mxu0
        %v3604 = vadd.f32 %v3481, %v3603
        %v3605 = vpop.f32.mrb[0].mxu0
        %3606 = vmatprep.mubr.f32.mxu0 0.0
        %v3607 = vand.u32 %v3181, 4294901760
        %v3608 = vsub.f32 %v3181, %v3607
        %3609 = vmatmul.mubr.f32.gmra.mrb[0].mxu0 %v3608
        %v3610 = vpop.f32.mrb[0].mxu0
        %v3611 = vadd.f32 %v3487, %v3610
        %v3612 = vpop.f32.mrb[0].mxu0
        %3613 = vmatprep.mubr.f32.mxu0 0.0
        %v3614 = vand.u32 %v3182, 4294901760
        %v3615 = vsub.f32 %v3182, %v3614
        %3616 = vmatmul.mubr.f32.gmra.mrb[0].mxu0 %v3615
        %v3617 = vpop.f32.mrb[0].mxu0
        %v3618 = vadd.f32 %v3493, %v3617
        %v3619 = vpop.f32.mrb[0].mxu0
        %3620 = vdwg.mxu0
        %3621 = vmatprep.subr.mxu0 0.0
        %v3622 = vand.u32 %v3183, 4294901760
        %3623 = vmatpush1.msra.mxu0 %v3622
        %3624 = vmatprep.subr.mxu0 0.0
        %v3625 = vand.u32 %v3184, 4294901760
        %3626 = vmatpush1.msra.mxu0 %v3625
        %3627 = vmatprep.subr.mxu0 0.0
        %v3628 = vand.u32 %v3185, 4294901760
        %3629 = vmatpush1.msra.mxu0 %v3628
        %3630 = vmatprep.subr.mxu0 0.0
        %v3631 = vand.u32 %v3186, 4294901760
        %3632 = vmatpush1.msra.mxu0 %v3631
        %3633 = vmatprep.subr.mxu0 0.0
        %v3634 = vand.u32 %v3187, 4294901760
        %3635 = vmatpush1.msra.mxu0 %v3634
        %3636 = vmatprep.subr.mxu0 0.0
        %v3637 = vand.u32 %v3188, 4294901760
        %3638 = vmatpush1.msra.mxu0 %v3637
        %3639 = vmatprep.subr.mxu0 0.0
        %v3640 = vand.u32 %v3189, 4294901760
        %3641 = vmatpush1.msra.mxu0 %v3640
        %3642 = vmatprep.subr.mxu0 0.0
        %v3643 = vand.u32 %v3190, 4294901760
        %3644 = vmatpush1.msra.mxu0 %v3643
        %3645 = vmatprep.subr.mxu0 0.0
        %v3646 = vand.u32 %v3191, 4294901760
        %3647 = vmatpush1.msra.mxu0 %v3646
        %3648 = vmatprep.subr.mxu0 0.0
        %v3649 = vand.u32 %v3192, 4294901760
        %3650 = vmatpush1.msra.mxu0 %v3649
        %3651 = vmatprep.subr.mxu0 0.0
        %v3652 = vand.u32 %v3193, 4294901760
        %3653 = vmatpush1.msra.mxu0 %v3652
        %3654 = vmatprep.subr.mxu0 0.0
        %v3655 = vand.u32 %v3194, 4294901760
        %3656 = vmatpush1.msra.mxu0 %v3655
        %3657 = vmatprep.subr.mxu0 0.0
        %v3658 = vand.u32 %v3195, 4294901760
        %3659 = vmatpush1.msra.mxu0 %v3658
        %3660 = vmatprep.subr.mxu0 0.0
        %v3661 = vand.u32 %v3196, 4294901760
        %3662 = vmatpush1.msra.mxu0 %v3661
        %3663 = vmatprep.subr.mxu0 0.0
        %v3664 = vand.u32 %v3197, 4294901760
        %3665 = vmatpush1.msra.mxu0 %v3664
        %3666 = vmatprep.subr.mxu0 0.0
        %v3667 = vand.u32 %v3198, 4294901760
        %3668 = vmatpush1.msra.mxu0 %v3667
        %3669 = vmatprep.subr.mxu0 0.0
        %3670 = vmatpush1.msra.mxu0 0.0
        %3671 = vmatprep.subr.mxu0 0.0
        %3672 = vmatpush1.msra.mxu0 0.0
        %3673 = vmatprep.subr.mxu0 0.0
        %3674 = vmatpush1.msra.mxu0 0.0
        %3675 = vmatprep.subr.mxu0 0.0
        %3676 = vmatpush1.msra.mxu0 0.0
        %3677 = vmatprep.subr.mxu0 0.0
        %3678 = vmatpush1.msra.mxu0 0.0
        %3679 = vmatprep.subr.mxu0 0.0
        %3680 = vmatpush1.msra.mxu0 0.0
        %3681 = vmatprep.subr.mxu0 0.0
        %3682 = vmatpush1.msra.mxu0 0.0
        %3683 = vmatprep.subr.mxu0 0.0
        %3684 = vmatpush1.msra.mxu0 0.0
        %3685 = vmatprep.subr.mxu0 0.0
        %3686 = vmatpush1.msra.mxu0 0.0
        %3687 = vmatprep.subr.mxu0 0.0
        %3688 = vmatpush1.msra.mxu0 0.0
        %3689 = vmatprep.subr.mxu0 0.0
        %3690 = vmatpush1.msra.mxu0 0.0
        %3691 = vmatprep.subr.mxu0 0.0
        %3692 = vmatpush1.msra.mxu0 0.0
        %3693 = vmatprep.subr.mxu0 0.0
        %3694 = vmatpush1.msra.mxu0 0.0
        %3695 = vmatprep.subr.mxu0 0.0
        %3696 = vmatpush1.msra.mxu0 0.0
        %3697 = vmatprep.subr.mxu0 0.0
        %3698 = vmatpush1.msra.mxu0 0.0
        %3699 = vmatprep.subr.mxu0 0.0
        %3700 = vmatpush1.msra.mxu0 0.0
        %3701 = vmatprep.mubr.f32.mxu0 0.0
        %v3702 = vand.u32 %v3179, 4294901760
        %v3703 = vsub.f32 %v3179, %v3702
        %v3704 = vand.u32 %v3703, 4294901760
        %3705 = vmatmul.mubr.f32.gmra.mrb[0].mxu0 %v3704
        %v3706 = vpop.f32.mrb[0].mxu0
        %v3707 = vadd.f32 %v3597, %v3706
        %v3708 = vpop.f32.mrb[0].mxu0
        %3709 = vmatprep.mubr.f32.mxu0 0.0
        %v3710 = vand.u32 %v3180, 4294901760
        %v3711 = vsub.f32 %v3180, %v3710
        %v3712 = vand.u32 %v3711, 4294901760
        %3713 = vmatmul.mubr.f32.gmra.mrb[0].mxu0 %v3712
        %v3714 = vpop.f32.mrb[0].mxu0
        %v3715 = vadd.f32 %v3604, %v3714
        %v3716 = vpop.f32.mrb[0].mxu0
        %3717 = vmatprep.mubr.f32.mxu0 0.0
        %v3718 = vand.u32 %v3181, 4294901760
        %v3719 = vsub.f32 %v3181, %v3718
        %v3720 = vand.u32 %v3719, 4294901760
        %3721 = vmatmul.mubr.f32.gmra.mrb[0].mxu0 %v3720
        %v3722 = vpop.f32.mrb[0].mxu0
        %v3723 = vadd.f32 %v3611, %v3722
        %v3724 = vpop.f32.mrb[0].mxu0
        %3725 = vmatprep.mubr.f32.mxu0 0.0
        %v3726 = vand.u32 %v3182, 4294901760
        %v3727 = vsub.f32 %v3182, %v3726
        %v3728 = vand.u32 %v3727, 4294901760
        %3729 = vmatmul.mubr.f32.gmra.mrb[0].mxu0 %v3728
        %v3730 = vpop.f32.mrb[0].mxu0
        %v3731 = vadd.f32 %v3618, %v3730
        %v3732 = vpop.f32.mrb[0].mxu0
        %3733 = vdwg.mxu0
        %3734 = vmatprep.subr.mxu0 0.0
        %v3735 = vand.u32 %v3183, 4294901760
        %v3736 = vsub.f32 %v3183, %v3735
        %v3737 = vand.u32 %v3736, 4294901760
        %3738 = vmatpush1.msra.mxu0 %v3737
        %3739 = vmatprep.subr.mxu0 0.0
        %v3740 = vand.u32 %v3184, 4294901760
        %v3741 = vsub.f32 %v3184, %v3740
        %v3742 = vand.u32 %v3741, 4294901760
        %3743 = vmatpush1.msra.mxu0 %v3742
        %3744 = vmatprep.subr.mxu0 0.0
        %v3745 = vand.u32 %v3185, 4294901760
        %v3746 = vsub.f32 %v3185, %v3745
        %v3747 = vand.u32 %v3746, 4294901760
        %3748 = vmatpush1.msra.mxu0 %v3747
        %3749 = vmatprep.subr.mxu0 0.0
        %v3750 = vand.u32 %v3186, 4294901760
        %v3751 = vsub.f32 %v3186, %v3750
        %v3752 = vand.u32 %v3751, 4294901760
        %3753 = vmatpush1.msra.mxu0 %v3752
        %3754 = vmatprep.subr.mxu0 0.0
        %v3755 = vand.u32 %v3187, 4294901760
        %v3756 = vsub.f32 %v3187, %v3755
        %v3757 = vand.u32 %v3756, 4294901760
        %3758 = vmatpush1.msra.mxu0 %v3757
        %3759 = vmatprep.subr.mxu0 0.0
        %v3760 = vand.u32 %v3188, 4294901760
        %v3761 = vsub.f32 %v3188, %v3760
        %v3762 = vand.u32 %v3761, 4294901760
        %3763 = vmatpush1.msra.mxu0 %v3762
        %3764 = vmatprep.subr.mxu0 0.0
        %v3765 = vand.u32 %v3189, 4294901760
        %v3766 = vsub.f32 %v3189, %v3765
        %v3767 = vand.u32 %v3766, 4294901760
        %3768 = vmatpush1.msra.mxu0 %v3767
        %3769 = vmatprep.subr.mxu0 0.0
        %v3770 = vand.u32 %v3190, 4294901760
        %v3771 = vsub.f32 %v3190, %v3770
        %v3772 = vand.u32 %v3771, 4294901760
        %3773 = vmatpush1.msra.mxu0 %v3772
        %3774 = vmatprep.subr.mxu0 0.0
        %v3775 = vand.u32 %v3191, 4294901760
        %v3776 = vsub.f32 %v3191, %v3775
        %v3777 = vand.u32 %v3776, 4294901760
        %3778 = vmatpush1.msra.mxu0 %v3777
        %3779 = vmatprep.subr.mxu0 0.0
        %v3780 = vand.u32 %v3192, 4294901760
        %v3781 = vsub.f32 %v3192, %v3780
        %v3782 = vand.u32 %v3781, 4294901760
        %3783 = vmatpush1.msra.mxu0 %v3782
        %3784 = vmatprep.subr.mxu0 0.0
        %v3785 = vand.u32 %v3193, 4294901760
        %v3786 = vsub.f32 %v3193, %v3785
        %v3787 = vand.u32 %v3786, 4294901760
        %3788 = vmatpush1.msra.mxu0 %v3787
        %3789 = vmatprep.subr.mxu0 0.0
        %v3790 = vand.u32 %v3194, 4294901760
        %v3791 = vsub.f32 %v3194, %v3790
        %v3792 = vand.u32 %v3791, 4294901760
        %3793 = vmatpush1.msra.mxu0 %v3792
        %3794 = vmatprep.subr.mxu0 0.0
        %v3795 = vand.u32 %v3195, 4294901760
        %v3796 = vsub.f32 %v3195, %v3795
        %v3797 = vand.u32 %v3796, 4294901760
        %3798 = vmatpush1.msra.mxu0 %v3797
        %3799 = vmatprep.subr.mxu0 0.0
        %v3800 = vand.u32 %v3196, 4294901760
        %v3801 = vsub.f32 %v3196, %v3800
        %v3802 = vand.u32 %v3801, 4294901760
        %3803 = vmatpush1.msra.mxu0 %v3802
        %3804 = vmatprep.subr.mxu0 0.0
        %v3805 = vand.u32 %v3197, 4294901760
        %v3806 = vsub.f32 %v3197, %v3805
        %v3807 = vand.u32 %v3806, 4294901760
        %3808 = vmatpush1.msra.mxu0 %v3807
        %3809 = vmatprep.subr.mxu0 0.0
        %v3810 = vand.u32 %v3198, 4294901760
        %v3811 = vsub.f32 %v3198, %v3810
        %v3812 = vand.u32 %v3811, 4294901760
        %3813 = vmatpush1.msra.mxu0 %v3812
        %3814 = vmatprep.subr.mxu0 0.0
        %3815 = vmatpush1.msra.mxu0 0.0
        %3816 = vmatprep.subr.mxu0 0.0
        %3817 = vmatpush1.msra.mxu0 0.0
        %3818 = vmatprep.subr.mxu0 0.0
        %3819 = vmatpush1.msra.mxu0 0.0
        %3820 = vmatprep.subr.mxu0 0.0
        %3821 = vmatpush1.msra.mxu0 0.0
        %3822 = vmatprep.subr.mxu0 0.0
        %3823 = vmatpush1.msra.mxu0 0.0
        %3824 = vmatprep.subr.mxu0 0.0
        %3825 = vmatpush1.msra.mxu0 0.0
        %3826 = vmatprep.subr.mxu0 0.0
        %3827 = vmatpush1.msra.mxu0 0.0
        %3828 = vmatprep.subr.mxu0 0.0
        %3829 = vmatpush1.msra.mxu0 0.0
        %3830 = vmatprep.subr.mxu0 0.0
        %3831 = vmatpush1.msra.mxu0 0.0
        %3832 = vmatprep.subr.mxu0 0.0
        %3833 = vmatpush1.msra.mxu0 0.0
        %3834 = vmatprep.subr.mxu0 0.0
        %3835 = vmatpush1.msra.mxu0 0.0
        %3836 = vmatprep.subr.mxu0 0.0
        %3837 = vmatpush1.msra.mxu0 0.0
        %3838 = vmatprep.subr.mxu0 0.0
        %3839 = vmatpush1.msra.mxu0 0.0
        %3840 = vmatprep.subr.mxu0 0.0
        %3841 = vmatpush1.msra.mxu0 0.0
        %3842 = vmatprep.subr.mxu0 0.0
        %3843 = vmatpush1.msra.mxu0 0.0
        %3844 = vmatprep.subr.mxu0 0.0
        %3845 = vmatpush1.msra.mxu0 0.0
        %3846 = vmatprep.mubr.f32.mxu0 0.0
        %v3847 = vand.u32 %v3179, 4294901760
        %3848 = vmatmul.mubr.f32.gmra.mrb[0].mxu0 %v3847
        %v3849 = vpop.f32.mrb[0].mxu0
        %v3850 = vadd.f32 %v3707, %v3849
        %v3851 = vpop.f32.mrb[0].mxu0
        %3852 = vmatprep.mubr.f32.mxu0 0.0
        %v3853 = vand.u32 %v3180, 4294901760
        %3854 = vmatmul.mubr.f32.gmra.mrb[0].mxu0 %v3853
        %v3855 = vpop.f32.mrb[0].mxu0
        %v3856 = vadd.f32 %v3715, %v3855
        %v3857 = vpop.f32.mrb[0].mxu0
        %3858 = vmatprep.mubr.f32.mxu0 0.0
        %v3859 = vand.u32 %v3181, 4294901760
        %3860 = vmatmul.mubr.f32.gmra.mrb[0].mxu0 %v3859
        %v3861 = vpop.f32.mrb[0].mxu0
        %v3862 = vadd.f32 %v3723, %v3861
        %v3863 = vpop.f32.mrb[0].mxu0
        %3864 = vmatprep.mubr.f32.mxu0 0.0
        %v3865 = vand.u32 %v3182, 4294901760
        %3866 = vmatmul.mubr.f32.gmra.mrb[0].mxu0 %v3865
        %v3867 = vpop.f32.mrb[0].mxu0
        %v3868 = vadd.f32 %v3731, %v3867
        %v3869 = vpop.f32.mrb[0].mxu0
        %3870 = vdwg.mxu0
        %3871 = vmatprep.subr.mxu0 0.0
        %v3872 = vand.u32 %v3183, 4294901760
        %3873 = vmatpush1.msra.mxu0 %v3872
        %3874 = vmatprep.subr.mxu0 0.0
        %v3875 = vand.u32 %v3184, 4294901760
        %3876 = vmatpush1.msra.mxu0 %v3875
        %3877 = vmatprep.subr.mxu0 0.0
        %v3878 = vand.u32 %v3185, 4294901760
        %3879 = vmatpush1.msra.mxu0 %v3878
        %3880 = vmatprep.subr.mxu0 0.0
        %v3881 = vand.u32 %v3186, 4294901760
        %3882 = vmatpush1.msra.mxu0 %v3881
        %3883 = vmatprep.subr.mxu0 0.0
        %v3884 = vand.u32 %v3187, 4294901760
        %3885 = vmatpush1.msra.mxu0 %v3884
        %3886 = vmatprep.subr.mxu0 0.0
        %v3887 = vand.u32 %v3188, 4294901760
        %3888 = vmatpush1.msra.mxu0 %v3887
        %3889 = vmatprep.subr.mxu0 0.0
        %v3890 = vand.u32 %v3189, 4294901760
        %3891 = vmatpush1.msra.mxu0 %v3890
        %3892 = vmatprep.subr.mxu0 0.0
        %v3893 = vand.u32 %v3190, 4294901760
        %3894 = vmatpush1.msra.mxu0 %v3893
        %3895 = vmatprep.subr.mxu0 0.0
        %v3896 = vand.u32 %v3191, 4294901760
        %3897 = vmatpush1.msra.mxu0 %v3896
        %3898 = vmatprep.subr.mxu0 0.0
        %v3899 = vand.u32 %v3192, 4294901760
        %3900 = vmatpush1.msra.mxu0 %v3899
        %3901 = vmatprep.subr.mxu0 0.0
        %v3902 = vand.u32 %v3193, 4294901760
        %3903 = vmatpush1.msra.mxu0 %v3902
        %3904 = vmatprep.subr.mxu0 0.0
        %v3905 = vand.u32 %v3194, 4294901760
        %3906 = vmatpush1.msra.mxu0 %v3905
        %3907 = vmatprep.subr.mxu0 0.0
        %v3908 = vand.u32 %v3195, 4294901760
        %3909 = vmatpush1.msra.mxu0 %v3908
        %3910 = vmatprep.subr.mxu0 0.0
        %v3911 = vand.u32 %v3196, 4294901760
        %3912 = vmatpush1.msra.mxu0 %v3911
        %3913 = vmatprep.subr.mxu0 0.0
        %v3914 = vand.u32 %v3197, 4294901760
        %3915 = vmatpush1.msra.mxu0 %v3914
        %3916 = vmatprep.subr.mxu0 0.0
        %v3917 = vand.u32 %v3198, 4294901760
        %3918 = vmatpush1.msra.mxu0 %v3917
        %3919 = vmatprep.subr.mxu0 0.0
        %3920 = vmatpush1.msra.mxu0 0.0
        %3921 = vmatprep.subr.mxu0 0.0
        %3922 = vmatpush1.msra.mxu0 0.0
        %3923 = vmatprep.subr.mxu0 0.0
        %3924 = vmatpush1.msra.mxu0 0.0
        %3925 = vmatprep.subr.mxu0 0.0
        %3926 = vmatpush1.msra.mxu0 0.0
        %3927 = vmatprep.subr.mxu0 0.0
        %3928 = vmatpush1.msra.mxu0 0.0
        %3929 = vmatprep.subr.mxu0 0.0
        %3930 = vmatpush1.msra.mxu0 0.0
        %3931 = vmatprep.subr.mxu0 0.0
        %3932 = vmatpush1.msra.mxu0 0.0
        %3933 = vmatprep.subr.mxu0 0.0
        %3934 = vmatpush1.msra.mxu0 0.0
        %3935 = vmatprep.subr.mxu0 0.0
        %3936 = vmatpush1.msra.mxu0 0.0
        %3937 = vmatprep.subr.mxu0 0.0
        %3938 = vmatpush1.msra.mxu0 0.0
        %3939 = vmatprep.subr.mxu0 0.0
        %3940 = vmatpush1.msra.mxu0 0.0
        %3941 = vmatprep.subr.mxu0 0.0
        %3942 = vmatpush1.msra.mxu0 0.0
        %3943 = vmatprep.subr.mxu0 0.0
        %3944 = vmatpush1.msra.mxu0 0.0
        %3945 = vmatprep.subr.mxu0 0.0
        %3946 = vmatpush1.msra.mxu0 0.0
        %3947 = vmatprep.subr.mxu0 0.0
        %3948 = vmatpush1.msra.mxu0 0.0
        %3949 = vmatprep.subr.mxu0 0.0
        %3950 = vmatpush1.msra.mxu0 0.0
        %3951 = vmatprep.mubr.f32.mxu0 0.0
        %v3952 = vand.u32 %v3179, 4294901760
        %3953 = vmatmul.mubr.f32.gmra.mrb[0].mxu0 %v3952
        %v3954 = vpop.f32.mrb[0].mxu0
        %v3955 = vadd.f32 %v3850, %v3954
        %v3956 = vpop.f32.mrb[0].mxu0
        %3957 = vmatprep.mubr.f32.mxu0 0.0
        %v3958 = vand.u32 %v3180, 4294901760
        %3959 = vmatmul.mubr.f32.gmra.mrb[0].mxu0 %v3958
        %v3960 = vpop.f32.mrb[0].mxu0
        %v3961 = vadd.f32 %v3856, %v3960
        %v3962 = vpop.f32.mrb[0].mxu0
        %3963 = vmatprep.mubr.f32.mxu0 0.0
        %v3964 = vand.u32 %v3181, 4294901760
        %3965 = vmatmul.mubr.f32.gmra.mrb[0].mxu0 %v3964
        %v3966 = vpop.f32.mrb[0].mxu0
        %v3967 = vadd.f32 %v3862, %v3966
        %v3968 = vpop.f32.mrb[0].mxu0
        %3969 = vmatprep.mubr.f32.mxu0 0.0
        %v3970 = vand.u32 %v3182, 4294901760
        %3971 = vmatmul.mubr.f32.gmra.mrb[0].mxu0 %v3970
        %v3972 = vpop.f32.mrb[0].mxu0
        %v3973 = vadd.f32 %v3868, %v3972
        %v3974 = vpop.f32.mrb[0].mxu0
        %3975 = vdwg.mxu0
        %v3976 = vld [vmem:[%s3] sm:$0xff]
        %v3977 = vld [vmem:[%s3 + $0x8] sm:$0xff]
        %v3978 = vld [vmem:[%s3 + $0x10] sm:$0xff]
        %v3979 = vld [vmem:[%s3 + $0x18] sm:$0xff]
        %3981 = vset.pattern.permute.xlu0 0
        %3982 = vperm.xlu0 %3981, %v3976
        %v3983 = vpop.permute.xlu0 %3982
        %3986 = vset.pattern.permute.xlu0 0
        %3987 = vperm.xlu0 %3986, %v3977
        %v3988 = vpop.permute.xlu0 %3987
        %3991 = vset.pattern.permute.xlu0 0
        %3992 = vperm.xlu0 %3991, %v3978
        %v3993 = vpop.permute.xlu0 %3992
        %3996 = vset.pattern.permute.xlu0 0
        %3997 = vperm.xlu0 %3996, %v3979
        %v3998 = vpop.permute.xlu0 %3997
        %v4000 = vmul.f32 %v3955, %v3983
        %v4001 = vmul.f32 %v3961, %v3988
        %v4002 = vmul.f32 %v3967, %v3993
        %v4003 = vmul.f32 %v3973, %v3998
        %v4004 = vmax.f32 %v4000, 0.0
        %v4005 = vmax.f32 %v4001, 0.0
        %v4006 = vmax.f32 %v4002, 0.0
        %v4007 = vmax.f32 %v4003, 0.0
        %v4008 = vld [vmem:[%s9] sm:$0xff]
        %v4009 = vld [vmem:[%s9 + $0x8] sm:$0xff]
        %v4010 = vld [vmem:[%s9 + $0x10] sm:$0xff]
        %v4011 = vld [vmem:[%s9 + $0x18] sm:$0xff]
        %v4012 = vld [vmem:[%s9 + $0x20] sm:$0xff]
        %v4013 = vld [vmem:[%s9 + $0x28] sm:$0xff]
        %v4014 = vld [vmem:[%s9 + $0x30] sm:$0xff]
        %v4015 = vld [vmem:[%s9 + $0x38] sm:$0xff]
        %v4016 = vld [vmem:[%s9 + $0x40] sm:$0xff]
        %v4017 = vld [vmem:[%s9 + $0x48] sm:$0xff]
        %v4018 = vld [vmem:[%s9 + $0x50] sm:$0xff]
        %v4019 = vld [vmem:[%s9 + $0x58] sm:$0xff]
        %v4020 = vld [vmem:[%s9 + $0x60] sm:$0xff]
        %v4021 = vld [vmem:[%s9 + $0x68] sm:$0xff]
        %v4022 = vld [vmem:[%s9 + $0x70] sm:$0xff]
        %v4023 = vld [vmem:[%s9 + $0x78] sm:$0xff]
        %v4024 = vld [vmem:[%s11] sm:$0x1]
        %v4026 = vlaneseq
        %v4027 = vshrl.u32 %v4026, 7
        %v4028 = vsub.s32 0, %v4027
        %v4029 = vrot.slane %v4024, %v4028
        %4031 = vmatprep.subr.mxu0 0.0
        %v4032 = vand.u32 %v4008, 4294901760
        %4033 = vmatpush1.msra.mxu0 %v4032
        %4034 = vmatprep.subr.mxu0 0.0
        %v4035 = vand.u32 %v4009, 4294901760
        %4036 = vmatpush1.msra.mxu0 %v4035
        %4037 = vmatprep.subr.mxu0 0.0
        %v4038 = vand.u32 %v4010, 4294901760
        %4039 = vmatpush1.msra.mxu0 %v4038
        %4040 = vmatprep.subr.mxu0 0.0
        %v4041 = vand.u32 %v4011, 4294901760
        %4042 = vmatpush1.msra.mxu0 %v4041
        %4043 = vmatprep.subr.mxu0 0.0
        %v4044 = vand.u32 %v4012, 4294901760
        %4045 = vmatpush1.msra.mxu0 %v4044
        %4046 = vmatprep.subr.mxu0 0.0
        %v4047 = vand.u32 %v4013, 4294901760
        %4048 = vmatpush1.msra.mxu0 %v4047
        %4049 = vmatprep.subr.mxu0 0.0
        %v4050 = vand.u32 %v4014, 4294901760
        %4051 = vmatpush1.msra.mxu0 %v4050
        %4052 = vmatprep.subr.mxu0 0.0
        %v4053 = vand.u32 %v4015, 4294901760
        %4054 = vmatpush1.msra.mxu0 %v4053
        %4055 = vmatprep.subr.mxu0 0.0
        %v4056 = vand.u32 %v4016, 4294901760
        %4057 = vmatpush1.msra.mxu0 %v4056
        %4058 = vmatprep.subr.mxu0 0.0
        %v4059 = vand.u32 %v4017, 4294901760
        %4060 = vmatpush1.msra.mxu0 %v4059
        %4061 = vmatprep.subr.mxu0 0.0
        %v4062 = vand.u32 %v4018, 4294901760
        %4063 = vmatpush1.msra.mxu0 %v4062
        %4064 = vmatprep.subr.mxu0 0.0
        %v4065 = vand.u32 %v4019, 4294901760
        %4066 = vmatpush1.msra.mxu0 %v4065
        %4067 = vmatprep.subr.mxu0 0.0
        %v4068 = vand.u32 %v4020, 4294901760
        %4069 = vmatpush1.msra.mxu0 %v4068
        %4070 = vmatprep.subr.mxu0 0.0
        %v4071 = vand.u32 %v4021, 4294901760
        %4072 = vmatpush1.msra.mxu0 %v4071
        %4073 = vmatprep.subr.mxu0 0.0
        %v4074 = vand.u32 %v4022, 4294901760
        %4075 = vmatpush1.msra.mxu0 %v4074
        %4076 = vmatprep.subr.mxu0 0.0
        %v4077 = vand.u32 %v4023, 4294901760
        %4078 = vmatpush1.msra.mxu0 %v4077
        %4079 = vmatprep.subr.mxu0 0.0
        %4080 = vmatpush1.msra.mxu0 0.0
        %4081 = vmatprep.subr.mxu0 0.0
        %4082 = vmatpush1.msra.mxu0 0.0
        %4083 = vmatprep.subr.mxu0 0.0
        %4084 = vmatpush1.msra.mxu0 0.0
        %4085 = vmatprep.subr.mxu0 0.0
        %4086 = vmatpush1.msra.mxu0 0.0
        %4087 = vmatprep.subr.mxu0 0.0
        %4088 = vmatpush1.msra.mxu0 0.0
        %4089 = vmatprep.subr.mxu0 0.0
        %4090 = vmatpush1.msra.mxu0 0.0
        %4091 = vmatprep.subr.mxu0 0.0
        %4092 = vmatpush1.msra.mxu0 0.0
        %4093 = vmatprep.subr.mxu0 0.0
        %4094 = vmatpush1.msra.mxu0 0.0
        %4095 = vmatprep.subr.mxu0 0.0
        %4096 = vmatpush1.msra.mxu0 0.0
        %4097 = vmatprep.subr.mxu0 0.0
        %4098 = vmatpush1.msra.mxu0 0.0
        %4099 = vmatprep.subr.mxu0 0.0
        %4100 = vmatpush1.msra.mxu0 0.0
        %4101 = vmatprep.subr.mxu0 0.0
        %4102 = vmatpush1.msra.mxu0 0.0
        %4103 = vmatprep.subr.mxu0 0.0
        %4104 = vmatpush1.msra.mxu0 0.0
        %4105 = vmatprep.subr.mxu0 0.0
        %4106 = vmatpush1.msra.mxu0 0.0
        %4107 = vmatprep.subr.mxu0 0.0
        %4108 = vmatpush1.msra.mxu0 0.0
        %4109 = vmatprep.subr.mxu0 0.0
        %4110 = vmatpush1.msra.mxu0 0.0
        %4111 = vmatprep.mubr.f32.mxu0 0.0
        %v4112 = vand.u32 %v4004, 4294901760
        %v4113 = vsub.f32 %v4004, %v4112
        %v4114 = vand.u32 %v4113, 4294901760
        %v4115 = vsub.f32 %v4113, %v4114
        %v4116 = vand.u32 %v4115, 4294901760
        %4117 = vmatmul.mubr.f32.gmra.mrb[0].mxu0 %v4116
        %v4118 = vpop.f32.mrb[0].mxu0
        %v4119 = vadd.f32 %v4029, %v4118
        %v4120 = vpop.f32.mrb[0].mxu0
        %4121 = vmatprep.mubr.f32.mxu0 0.0
        %v4122 = vand.u32 %v4005, 4294901760
        %v4123 = vsub.f32 %v4005, %v4122
        %v4124 = vand.u32 %v4123, 4294901760
        %v4125 = vsub.f32 %v4123, %v4124
        %v4126 = vand.u32 %v4125, 4294901760
        %4127 = vmatmul.mubr.f32.gmra.mrb[0].mxu0 %v4126
        %v4128 = vpop.f32.mrb[0].mxu0
        %v4129 = vadd.f32 %v4029, %v4128
        %v4130 = vpop.f32.mrb[0].mxu0
        %4131 = vmatprep.mubr.f32.mxu0 0.0
        %v4132 = vand.u32 %v4006, 4294901760
        %v4133 = vsub.f32 %v4006, %v4132
        %v4134 = vand.u32 %v4133, 4294901760
        %v4135 = vsub.f32 %v4133, %v4134
        %v4136 = vand.u32 %v4135, 4294901760
        %4137 = vmatmul.mubr.f32.gmra.mrb[0].mxu0 %v4136
        %v4138 = vpop.f32.mrb[0].mxu0
        %v4139 = vadd.f32 %v4029, %v4138
        %v4140 = vpop.f32.mrb[0].mxu0
        %4141 = vmatprep.mubr.f32.mxu0 0.0
        %v4142 = vand.u32 %v4007, 4294901760
        %v4143 = vsub.f32 %v4007, %v4142
        %v4144 = vand.u32 %v4143, 4294901760
        %v4145 = vsub.f32 %v4143, %v4144
        %v4146 = vand.u32 %v4145, 4294901760
        %4147 = vmatmul.mubr.f32.gmra.mrb[0].mxu0 %v4146
        %v4148 = vpop.f32.mrb[0].mxu0
        %v4149 = vadd.f32 %v4029, %v4148
        %v4150 = vpop.f32.mrb[0].mxu0
        %4151 = vdwg.mxu0
        %4152 = vmatprep.subr.mxu0 0.0
        %v4153 = vand.u32 %v4008, 4294901760
        %v4154 = vsub.f32 %v4008, %v4153
        %v4155 = vand.u32 %v4154, 4294901760
        %v4156 = vsub.f32 %v4154, %v4155
        %v4157 = vand.u32 %v4156, 4294901760
        %4158 = vmatpush1.msra.mxu0 %v4157
        %4159 = vmatprep.subr.mxu0 0.0
        %v4160 = vand.u32 %v4009, 4294901760
        %v4161 = vsub.f32 %v4009, %v4160
        %v4162 = vand.u32 %v4161, 4294901760
        %v4163 = vsub.f32 %v4161, %v4162
        %v4164 = vand.u32 %v4163, 4294901760
        %4165 = vmatpush1.msra.mxu0 %v4164
        %4166 = vmatprep.subr.mxu0 0.0
        %v4167 = vand.u32 %v4010, 4294901760
        %v4168 = vsub.f32 %v4010, %v4167
        %v4169 = vand.u32 %v4168, 4294901760
        %v4170 = vsub.f32 %v4168, %v4169
        %v4171 = vand.u32 %v4170, 4294901760
        %4172 = vmatpush1.msra.mxu0 %v4171
        %4173 = vmatprep.subr.mxu0 0.0
        %v4174 = vand.u32 %v4011, 4294901760
        %v4175 = vsub.f32 %v4011, %v4174
        %v4176 = vand.u32 %v4175, 4294901760
        %v4177 = vsub.f32 %v4175, %v4176
        %v4178 = vand.u32 %v4177, 4294901760
        %4179 = vmatpush1.msra.mxu0 %v4178
        %4180 = vmatprep.subr.mxu0 0.0
        %v4181 = vand.u32 %v4012, 4294901760
        %v4182 = vsub.f32 %v4012, %v4181
        %v4183 = vand.u32 %v4182, 4294901760
        %v4184 = vsub.f32 %v4182, %v4183
        %v4185 = vand.u32 %v4184, 4294901760
        %4186 = vmatpush1.msra.mxu0 %v4185
        %4187 = vmatprep.subr.mxu0 0.0
        %v4188 = vand.u32 %v4013, 4294901760
        %v4189 = vsub.f32 %v4013, %v4188
        %v4190 = vand.u32 %v4189, 4294901760
        %v4191 = vsub.f32 %v4189, %v4190
        %v4192 = vand.u32 %v4191, 4294901760
        %4193 = vmatpush1.msra.mxu0 %v4192
        %4194 = vmatprep.subr.mxu0 0.0
        %v4195 = vand.u32 %v4014, 4294901760
        %v4196 = vsub.f32 %v4014, %v4195
        %v4197 = vand.u32 %v4196, 4294901760
        %v4198 = vsub.f32 %v4196, %v4197
        %v4199 = vand.u32 %v4198, 4294901760
        %4200 = vmatpush1.msra.mxu0 %v4199
        %4201 = vmatprep.subr.mxu0 0.0
        %v4202 = vand.u32 %v4015, 4294901760
        %v4203 = vsub.f32 %v4015, %v4202
        %v4204 = vand.u32 %v4203, 4294901760
        %v4205 = vsub.f32 %v4203, %v4204
        %v4206 = vand.u32 %v4205, 4294901760
        %4207 = vmatpush1.msra.mxu0 %v4206
        %4208 = vmatprep.subr.mxu0 0.0
        %v4209 = vand.u32 %v4016, 4294901760
        %v4210 = vsub.f32 %v4016, %v4209
        %v4211 = vand.u32 %v4210, 4294901760
        %v4212 = vsub.f32 %v4210, %v4211
        %v4213 = vand.u32 %v4212, 4294901760
        %4214 = vmatpush1.msra.mxu0 %v4213
        %4215 = vmatprep.subr.mxu0 0.0
        %v4216 = vand.u32 %v4017, 4294901760
        %v4217 = vsub.f32 %v4017, %v4216
        %v4218 = vand.u32 %v4217, 4294901760
        %v4219 = vsub.f32 %v4217, %v4218
        %v4220 = vand.u32 %v4219, 4294901760
        %4221 = vmatpush1.msra.mxu0 %v4220
        %4222 = vmatprep.subr.mxu0 0.0
        %v4223 = vand.u32 %v4018, 4294901760
        %v4224 = vsub.f32 %v4018, %v4223
        %v4225 = vand.u32 %v4224, 4294901760
        %v4226 = vsub.f32 %v4224, %v4225
        %v4227 = vand.u32 %v4226, 4294901760
        %4228 = vmatpush1.msra.mxu0 %v4227
        %4229 = vmatprep.subr.mxu0 0.0
        %v4230 = vand.u32 %v4019, 4294901760
        %v4231 = vsub.f32 %v4019, %v4230
        %v4232 = vand.u32 %v4231, 4294901760
        %v4233 = vsub.f32 %v4231, %v4232
        %v4234 = vand.u32 %v4233, 4294901760
        %4235 = vmatpush1.msra.mxu0 %v4234
        %4236 = vmatprep.subr.mxu0 0.0
        %v4237 = vand.u32 %v4020, 4294901760
        %v4238 = vsub.f32 %v4020, %v4237
        %v4239 = vand.u32 %v4238, 4294901760
        %v4240 = vsub.f32 %v4238, %v4239
        %v4241 = vand.u32 %v4240, 4294901760
        %4242 = vmatpush1.msra.mxu0 %v4241
        %4243 = vmatprep.subr.mxu0 0.0
        %v4244 = vand.u32 %v4021, 4294901760
        %v4245 = vsub.f32 %v4021, %v4244
        %v4246 = vand.u32 %v4245, 4294901760
        %v4247 = vsub.f32 %v4245, %v4246
        %v4248 = vand.u32 %v4247, 4294901760
        %4249 = vmatpush1.msra.mxu0 %v4248
        %4250 = vmatprep.subr.mxu0 0.0
        %v4251 = vand.u32 %v4022, 4294901760
        %v4252 = vsub.f32 %v4022, %v4251
        %v4253 = vand.u32 %v4252, 4294901760
        %v4254 = vsub.f32 %v4252, %v4253
        %v4255 = vand.u32 %v4254, 4294901760
        %4256 = vmatpush1.msra.mxu0 %v4255
        %4257 = vmatprep.subr.mxu0 0.0
        %v4258 = vand.u32 %v4023, 4294901760
        %v4259 = vsub.f32 %v4023, %v4258
        %v4260 = vand.u32 %v4259, 4294901760
        %v4261 = vsub.f32 %v4259, %v4260
        %v4262 = vand.u32 %v4261, 4294901760
        %4263 = vmatpush1.msra.mxu0 %v4262
        %4264 = vmatprep.subr.mxu0 0.0
        %4265 = vmatpush1.msra.mxu0 0.0
        %4266 = vmatprep.subr.mxu0 0.0
        %4267 = vmatpush1.msra.mxu0 0.0
        %4268 = vmatprep.subr.mxu0 0.0
        %4269 = vmatpush1.msra.mxu0 0.0
        %4270 = vmatprep.subr.mxu0 0.0
        %4271 = vmatpush1.msra.mxu0 0.0
        %4272 = vmatprep.subr.mxu0 0.0
        %4273 = vmatpush1.msra.mxu0 0.0
        %4274 = vmatprep.subr.mxu0 0.0
        %4275 = vmatpush1.msra.mxu0 0.0
        %4276 = vmatprep.subr.mxu0 0.0
        %4277 = vmatpush1.msra.mxu0 0.0
        %4278 = vmatprep.subr.mxu0 0.0
        %4279 = vmatpush1.msra.mxu0 0.0
        %4280 = vmatprep.subr.mxu0 0.0
        %4281 = vmatpush1.msra.mxu0 0.0
        %4282 = vmatprep.subr.mxu0 0.0
        %4283 = vmatpush1.msra.mxu0 0.0
        %4284 = vmatprep.subr.mxu0 0.0
        %4285 = vmatpush1.msra.mxu0 0.0
        %4286 = vmatprep.subr.mxu0 0.0
        %4287 = vmatpush1.msra.mxu0 0.0
        %4288 = vmatprep.subr.mxu0 0.0
        %4289 = vmatpush1.msra.mxu0 0.0
        %4290 = vmatprep.subr.mxu0 0.0
        %4291 = vmatpush1.msra.mxu0 0.0
        %4292 = vmatprep.subr.mxu0 0.0
        %4293 = vmatpush1.msra.mxu0 0.0
        %4294 = vmatprep.subr.mxu0 0.0
        %4295 = vmatpush1.msra.mxu0 0.0
        %4296 = vmatprep.mubr.f32.mxu0 0.0
        %v4297 = vand.u32 %v4004, 4294901760
        %4298 = vmatmul.mubr.f32.gmra.mrb[0].mxu0 %v4297
        %v4299 = vpop.f32.mrb[0].mxu0
        %v4300 = vadd.f32 %v4119, %v4299
        %v4301 = vpop.f32.mrb[0].mxu0
        %4302 = vmatprep.mubr.f32.mxu0 0.0
        %v4303 = vand.u32 %v4005, 4294901760
        %4304 = vmatmul.mubr.f32.gmra.mrb[0].mxu0 %v4303
        %v4305 = vpop.f32.mrb[0].mxu0
        %v4306 = vadd.f32 %v4129, %v4305
        %v4307 = vpop.f32.mrb[0].mxu0
        %4308 = vmatprep.mubr.f32.mxu0 0.0
        %v4309 = vand.u32 %v4006, 4294901760
        %4310 = vmatmul.mubr.f32.gmra.mrb[0].mxu0 %v4309
        %v4311 = vpop.f32.mrb[0].mxu0
        %v4312 = vadd.f32 %v4139, %v4311
        %v4313 = vpop.f32.mrb[0].mxu0
        %4314 = vmatprep.mubr.f32.mxu0 0.0
        %v4315 = vand.u32 %v4007, 4294901760
        %4316 = vmatmul.mubr.f32.gmra.mrb[0].mxu0 %v4315
        %v4317 = vpop.f32.mrb[0].mxu0
        %v4318 = vadd.f32 %v4149, %v4317
        %v4319 = vpop.f32.mrb[0].mxu0
        %4320 = vdwg.mxu0
        %4321 = vmatprep.subr.mxu0 0.0
        %v4322 = vand.u32 %v4008, 4294901760
        %v4323 = vsub.f32 %v4008, %v4322
        %4324 = vmatpush1.msra.mxu0 %v4323
        %4325 = vmatprep.subr.mxu0 0.0
        %v4326 = vand.u32 %v4009, 4294901760
        %v4327 = vsub.f32 %v4009, %v4326
        %4328 = vmatpush1.msra.mxu0 %v4327
        %4329 = vmatprep.subr.mxu0 0.0
        %v4330 = vand.u32 %v4010, 4294901760
        %v4331 = vsub.f32 %v4010, %v4330
        %4332 = vmatpush1.msra.mxu0 %v4331
        %4333 = vmatprep.subr.mxu0 0.0
        %v4334 = vand.u32 %v4011, 4294901760
        %v4335 = vsub.f32 %v4011, %v4334
        %4336 = vmatpush1.msra.mxu0 %v4335
        %4337 = vmatprep.subr.mxu0 0.0
        %v4338 = vand.u32 %v4012, 4294901760
        %v4339 = vsub.f32 %v4012, %v4338
        %4340 = vmatpush1.msra.mxu0 %v4339
        %4341 = vmatprep.subr.mxu0 0.0
        %v4342 = vand.u32 %v4013, 4294901760
        %v4343 = vsub.f32 %v4013, %v4342
        %4344 = vmatpush1.msra.mxu0 %v4343
        %4345 = vmatprep.subr.mxu0 0.0
        %v4346 = vand.u32 %v4014, 4294901760
        %v4347 = vsub.f32 %v4014, %v4346
        %4348 = vmatpush1.msra.mxu0 %v4347
        %4349 = vmatprep.subr.mxu0 0.0
        %v4350 = vand.u32 %v4015, 4294901760
        %v4351 = vsub.f32 %v4015, %v4350
        %4352 = vmatpush1.msra.mxu0 %v4351
        %4353 = vmatprep.subr.mxu0 0.0
        %v4354 = vand.u32 %v4016, 4294901760
        %v4355 = vsub.f32 %v4016, %v4354
        %4356 = vmatpush1.msra.mxu0 %v4355
        %4357 = vmatprep.subr.mxu0 0.0
        %v4358 = vand.u32 %v4017, 4294901760
        %v4359 = vsub.f32 %v4017, %v4358
        %4360 = vmatpush1.msra.mxu0 %v4359
        %4361 = vmatprep.subr.mxu0 0.0
        %v4362 = vand.u32 %v4018, 4294901760
        %v4363 = vsub.f32 %v4018, %v4362
        %4364 = vmatpush1.msra.mxu0 %v4363
        %4365 = vmatprep.subr.mxu0 0.0
        %v4366 = vand.u32 %v4019, 4294901760
        %v4367 = vsub.f32 %v4019, %v4366
        %4368 = vmatpush1.msra.mxu0 %v4367
        %4369 = vmatprep.subr.mxu0 0.0
        %v4370 = vand.u32 %v4020, 4294901760
        %v4371 = vsub.f32 %v4020, %v4370
        %4372 = vmatpush1.msra.mxu0 %v4371
        %4373 = vmatprep.subr.mxu0 0.0
        %v4374 = vand.u32 %v4021, 4294901760
        %v4375 = vsub.f32 %v4021, %v4374
        %4376 = vmatpush1.msra.mxu0 %v4375
        %4377 = vmatprep.subr.mxu0 0.0
        %v4378 = vand.u32 %v4022, 4294901760
        %v4379 = vsub.f32 %v4022, %v4378
        %4380 = vmatpush1.msra.mxu0 %v4379
        %4381 = vmatprep.subr.mxu0 0.0
        %v4382 = vand.u32 %v4023, 4294901760
        %v4383 = vsub.f32 %v4023, %v4382
        %4384 = vmatpush1.msra.mxu0 %v4383
        %4385 = vmatprep.subr.mxu0 0.0
        %4386 = vmatpush1.msra.mxu0 0.0
        %4387 = vmatprep.subr.mxu0 0.0
        %4388 = vmatpush1.msra.mxu0 0.0
        %4389 = vmatprep.subr.mxu0 0.0
        %4390 = vmatpush1.msra.mxu0 0.0
        %4391 = vmatprep.subr.mxu0 0.0
        %4392 = vmatpush1.msra.mxu0 0.0
        %4393 = vmatprep.subr.mxu0 0.0
        %4394 = vmatpush1.msra.mxu0 0.0
        %4395 = vmatprep.subr.mxu0 0.0
        %4396 = vmatpush1.msra.mxu0 0.0
        %4397 = vmatprep.subr.mxu0 0.0
        %4398 = vmatpush1.msra.mxu0 0.0
        %4399 = vmatprep.subr.mxu0 0.0
        %4400 = vmatpush1.msra.mxu0 0.0
        %4401 = vmatprep.subr.mxu0 0.0
        %4402 = vmatpush1.msra.mxu0 0.0
        %4403 = vmatprep.subr.mxu0 0.0
        %4404 = vmatpush1.msra.mxu0 0.0
        %4405 = vmatprep.subr.mxu0 0.0
        %4406 = vmatpush1.msra.mxu0 0.0
        %4407 = vmatprep.subr.mxu0 0.0
        %4408 = vmatpush1.msra.mxu0 0.0
        %4409 = vmatprep.subr.mxu0 0.0
        %4410 = vmatpush1.msra.mxu0 0.0
        %4411 = vmatprep.subr.mxu0 0.0
        %4412 = vmatpush1.msra.mxu0 0.0
        %4413 = vmatprep.subr.mxu0 0.0
        %4414 = vmatpush1.msra.mxu0 0.0
        %4415 = vmatprep.subr.mxu0 0.0
        %4416 = vmatpush1.msra.mxu0 0.0
        %4417 = vmatprep.mubr.f32.mxu0 0.0
        %v4418 = vand.u32 %v4004, 4294901760
        %v4419 = vsub.f32 %v4004, %v4418
        %4420 = vmatmul.mubr.f32.gmra.mrb[0].mxu0 %v4419
        %v4421 = vpop.f32.mrb[0].mxu0
        %v4422 = vadd.f32 %v4300, %v4421
        %v4423 = vpop.f32.mrb[0].mxu0
        %4424 = vmatprep.mubr.f32.mxu0 0.0
        %v4425 = vand.u32 %v4005, 4294901760
        %v4426 = vsub.f32 %v4005, %v4425
        %4427 = vmatmul.mubr.f32.gmra.mrb[0].mxu0 %v4426
        %v4428 = vpop.f32.mrb[0].mxu0
        %v4429 = vadd.f32 %v4306, %v4428
        %v4430 = vpop.f32.mrb[0].mxu0
        %4431 = vmatprep.mubr.f32.mxu0 0.0
        %v4432 = vand.u32 %v4006, 4294901760
        %v4433 = vsub.f32 %v4006, %v4432
        %4434 = vmatmul.mubr.f32.gmra.mrb[0].mxu0 %v4433
        %v4435 = vpop.f32.mrb[0].mxu0
        %v4436 = vadd.f32 %v4312, %v4435
        %v4437 = vpop.f32.mrb[0].mxu0
        %4438 = vmatprep.mubr.f32.mxu0 0.0
        %v4439 = vand.u32 %v4007, 4294901760
        %v4440 = vsub.f32 %v4007, %v4439
        %4441 = vmatmul.mubr.f32.gmra.mrb[0].mxu0 %v4440
        %v4442 = vpop.f32.mrb[0].mxu0
        %v4443 = vadd.f32 %v4318, %v4442
        %v4444 = vpop.f32.mrb[0].mxu0
        %4445 = vdwg.mxu0
        %4446 = vmatprep.subr.mxu0 0.0
        %v4447 = vand.u32 %v4008, 4294901760
        %4448 = vmatpush1.msra.mxu0 %v4447
        %4449 = vmatprep.subr.mxu0 0.0
        %v4450 = vand.u32 %v4009, 4294901760
        %4451 = vmatpush1.msra.mxu0 %v4450
        %4452 = vmatprep.subr.mxu0 0.0
        %v4453 = vand.u32 %v4010, 4294901760
        %4454 = vmatpush1.msra.mxu0 %v4453
        %4455 = vmatprep.subr.mxu0 0.0
        %v4456 = vand.u32 %v4011, 4294901760
        %4457 = vmatpush1.msra.mxu0 %v4456
        %4458 = vmatprep.subr.mxu0 0.0
        %v4459 = vand.u32 %v4012, 4294901760
        %4460 = vmatpush1.msra.mxu0 %v4459
        %4461 = vmatprep.subr.mxu0 0.0
        %v4462 = vand.u32 %v4013, 4294901760
        %4463 = vmatpush1.msra.mxu0 %v4462
        %4464 = vmatprep.subr.mxu0 0.0
        %v4465 = vand.u32 %v4014, 4294901760
        %4466 = vmatpush1.msra.mxu0 %v4465
        %4467 = vmatprep.subr.mxu0 0.0
        %v4468 = vand.u32 %v4015, 4294901760
        %4469 = vmatpush1.msra.mxu0 %v4468
        %4470 = vmatprep.subr.mxu0 0.0
        %v4471 = vand.u32 %v4016, 4294901760
        %4472 = vmatpush1.msra.mxu0 %v4471
        %4473 = vmatprep.subr.mxu0 0.0
        %v4474 = vand.u32 %v4017, 4294901760
        %4475 = vmatpush1.msra.mxu0 %v4474
        %4476 = vmatprep.subr.mxu0 0.0
        %v4477 = vand.u32 %v4018, 4294901760
        %4478 = vmatpush1.msra.mxu0 %v4477
        %4479 = vmatprep.subr.mxu0 0.0
        %v4480 = vand.u32 %v4019, 4294901760
        %4481 = vmatpush1.msra.mxu0 %v4480
        %4482 = vmatprep.subr.mxu0 0.0
        %v4483 = vand.u32 %v4020, 4294901760
        %4484 = vmatpush1.msra.mxu0 %v4483
        %4485 = vmatprep.subr.mxu0 0.0
        %v4486 = vand.u32 %v4021, 4294901760
        %4487 = vmatpush1.msra.mxu0 %v4486
        %4488 = vmatprep.subr.mxu0 0.0
        %v4489 = vand.u32 %v4022, 4294901760
        %4490 = vmatpush1.msra.mxu0 %v4489
        %4491 = vmatprep.subr.mxu0 0.0
        %v4492 = vand.u32 %v4023, 4294901760
        %4493 = vmatpush1.msra.mxu0 %v4492
        %4494 = vmatprep.subr.mxu0 0.0
        %4495 = vmatpush1.msra.mxu0 0.0
        %4496 = vmatprep.subr.mxu0 0.0
        %4497 = vmatpush1.msra.mxu0 0.0
        %4498 = vmatprep.subr.mxu0 0.0
        %4499 = vmatpush1.msra.mxu0 0.0
        %4500 = vmatprep.subr.mxu0 0.0
        %4501 = vmatpush1.msra.mxu0 0.0
        %4502 = vmatprep.subr.mxu0 0.0
        %4503 = vmatpush1.msra.mxu0 0.0
        %4504 = vmatprep.subr.mxu0 0.0
        %4505 = vmatpush1.msra.mxu0 0.0
        %4506 = vmatprep.subr.mxu0 0.0
        %4507 = vmatpush1.msra.mxu0 0.0
        %4508 = vmatprep.subr.mxu0 0.0
        %4509 = vmatpush1.msra.mxu0 0.0
        %4510 = vmatprep.subr.mxu0 0.0
        %4511 = vmatpush1.msra.mxu0 0.0
        %4512 = vmatprep.subr.mxu0 0.0
        %4513 = vmatpush1.msra.mxu0 0.0
        %4514 = vmatprep.subr.mxu0 0.0
        %4515 = vmatpush1.msra.mxu0 0.0
        %4516 = vmatprep.subr.mxu0 0.0
        %4517 = vmatpush1.msra.mxu0 0.0
        %4518 = vmatprep.subr.mxu0 0.0
        %4519 = vmatpush1.msra.mxu0 0.0
        %4520 = vmatprep.subr.mxu0 0.0
        %4521 = vmatpush1.msra.mxu0 0.0
        %4522 = vmatprep.subr.mxu0 0.0
        %4523 = vmatpush1.msra.mxu0 0.0
        %4524 = vmatprep.subr.mxu0 0.0
        %4525 = vmatpush1.msra.mxu0 0.0
        %4526 = vmatprep.mubr.f32.mxu0 0.0
        %v4527 = vand.u32 %v4004, 4294901760
        %v4528 = vsub.f32 %v4004, %v4527
        %v4529 = vand.u32 %v4528, 4294901760
        %4530 = vmatmul.mubr.f32.gmra.mrb[0].mxu0 %v4529
        %v4531 = vpop.f32.mrb[0].mxu0
        %v4532 = vadd.f32 %v4422, %v4531
        %v4533 = vpop.f32.mrb[0].mxu0
        %4534 = vmatprep.mubr.f32.mxu0 0.0
        %v4535 = vand.u32 %v4005, 4294901760
        %v4536 = vsub.f32 %v4005, %v4535
        %v4537 = vand.u32 %v4536, 4294901760
        %4538 = vmatmul.mubr.f32.gmra.mrb[0].mxu0 %v4537
        %v4539 = vpop.f32.mrb[0].mxu0
        %v4540 = vadd.f32 %v4429, %v4539
        %v4541 = vpop.f32.mrb[0].mxu0
        %4542 = vmatprep.mubr.f32.mxu0 0.0
        %v4543 = vand.u32 %v4006, 4294901760
        %v4544 = vsub.f32 %v4006, %v4543
        %v4545 = vand.u32 %v4544, 4294901760
        %4546 = vmatmul.mubr.f32.gmra.mrb[0].mxu0 %v4545
        %v4547 = vpop.f32.mrb[0].mxu0
        %v4548 = vadd.f32 %v4436, %v4547
        %v4549 = vpop.f32.mrb[0].mxu0
        %4550 = vmatprep.mubr.f32.mxu0 0.0
        %v4551 = vand.u32 %v4007, 4294901760
        %v4552 = vsub.f32 %v4007, %v4551
        %v4553 = vand.u32 %v4552, 4294901760
        %4554 = vmatmul.mubr.f32.gmra.mrb[0].mxu0 %v4553
        %v4555 = vpop.f32.mrb[0].mxu0
        %v4556 = vadd.f32 %v4443, %v4555
        %v4557 = vpop.f32.mrb[0].mxu0
        %4558 = vdwg.mxu0
        %4559 = vmatprep.subr.mxu0 0.0
        %v4560 = vand.u32 %v4008, 4294901760
        %v4561 = vsub.f32 %v4008, %v4560
        %v4562 = vand.u32 %v4561, 4294901760
        %4563 = vmatpush1.msra.mxu0 %v4562
        %4564 = vmatprep.subr.mxu0 0.0
        %v4565 = vand.u32 %v4009, 4294901760
        %v4566 = vsub.f32 %v4009, %v4565
        %v4567 = vand.u32 %v4566, 4294901760
        %4568 = vmatpush1.msra.mxu0 %v4567
        %4569 = vmatprep.subr.mxu0 0.0
        %v4570 = vand.u32 %v4010, 4294901760
        %v4571 = vsub.f32 %v4010, %v4570
        %v4572 = vand.u32 %v4571, 4294901760
        %4573 = vmatpush1.msra.mxu0 %v4572
        %4574 = vmatprep.subr.mxu0 0.0
        %v4575 = vand.u32 %v4011, 4294901760
        %v4576 = vsub.f32 %v4011, %v4575
        %v4577 = vand.u32 %v4576, 4294901760
        %4578 = vmatpush1.msra.mxu0 %v4577
        %4579 = vmatprep.subr.mxu0 0.0
        %v4580 = vand.u32 %v4012, 4294901760
        %v4581 = vsub.f32 %v4012, %v4580
        %v4582 = vand.u32 %v4581, 4294901760
        %4583 = vmatpush1.msra.mxu0 %v4582
        %4584 = vmatprep.subr.mxu0 0.0
        %v4585 = vand.u32 %v4013, 4294901760
        %v4586 = vsub.f32 %v4013, %v4585
        %v4587 = vand.u32 %v4586, 4294901760
        %4588 = vmatpush1.msra.mxu0 %v4587
        %4589 = vmatprep.subr.mxu0 0.0
        %v4590 = vand.u32 %v4014, 4294901760
        %v4591 = vsub.f32 %v4014, %v4590
        %v4592 = vand.u32 %v4591, 4294901760
        %4593 = vmatpush1.msra.mxu0 %v4592
        %4594 = vmatprep.subr.mxu0 0.0
        %v4595 = vand.u32 %v4015, 4294901760
        %v4596 = vsub.f32 %v4015, %v4595
        %v4597 = vand.u32 %v4596, 4294901760
        %4598 = vmatpush1.msra.mxu0 %v4597
        %4599 = vmatprep.subr.mxu0 0.0
        %v4600 = vand.u32 %v4016, 4294901760
        %v4601 = vsub.f32 %v4016, %v4600
        %v4602 = vand.u32 %v4601, 4294901760
        %4603 = vmatpush1.msra.mxu0 %v4602
        %4604 = vmatprep.subr.mxu0 0.0
        %v4605 = vand.u32 %v4017, 4294901760
        %v4606 = vsub.f32 %v4017, %v4605
        %v4607 = vand.u32 %v4606, 4294901760
        %4608 = vmatpush1.msra.mxu0 %v4607
        %4609 = vmatprep.subr.mxu0 0.0
        %v4610 = vand.u32 %v4018, 4294901760
        %v4611 = vsub.f32 %v4018, %v4610
        %v4612 = vand.u32 %v4611, 4294901760
        %4613 = vmatpush1.msra.mxu0 %v4612
        %4614 = vmatprep.subr.mxu0 0.0
        %v4615 = vand.u32 %v4019, 4294901760
        %v4616 = vsub.f32 %v4019, %v4615
        %v4617 = vand.u32 %v4616, 4294901760
        %4618 = vmatpush1.msra.mxu0 %v4617
        %4619 = vmatprep.subr.mxu0 0.0
        %v4620 = vand.u32 %v4020, 4294901760
        %v4621 = vsub.f32 %v4020, %v4620
        %v4622 = vand.u32 %v4621, 4294901760
        %4623 = vmatpush1.msra.mxu0 %v4622
        %4624 = vmatprep.subr.mxu0 0.0
        %v4625 = vand.u32 %v4021, 4294901760
        %v4626 = vsub.f32 %v4021, %v4625
        %v4627 = vand.u32 %v4626, 4294901760
        %4628 = vmatpush1.msra.mxu0 %v4627
        %4629 = vmatprep.subr.mxu0 0.0
        %v4630 = vand.u32 %v4022, 4294901760
        %v4631 = vsub.f32 %v4022, %v4630
        %v4632 = vand.u32 %v4631, 4294901760
        %4633 = vmatpush1.msra.mxu0 %v4632
        %4634 = vmatprep.subr.mxu0 0.0
        %v4635 = vand.u32 %v4023, 4294901760
        %v4636 = vsub.f32 %v4023, %v4635
        %v4637 = vand.u32 %v4636, 4294901760
        %4638 = vmatpush1.msra.mxu0 %v4637
        %4639 = vmatprep.subr.mxu0 0.0
        %4640 = vmatpush1.msra.mxu0 0.0
        %4641 = vmatprep.subr.mxu0 0.0
        %4642 = vmatpush1.msra.mxu0 0.0
        %4643 = vmatprep.subr.mxu0 0.0
        %4644 = vmatpush1.msra.mxu0 0.0
        %4645 = vmatprep.subr.mxu0 0.0
        %4646 = vmatpush1.msra.mxu0 0.0
        %4647 = vmatprep.subr.mxu0 0.0
        %4648 = vmatpush1.msra.mxu0 0.0
        %4649 = vmatprep.subr.mxu0 0.0
        %4650 = vmatpush1.msra.mxu0 0.0
        %4651 = vmatprep.subr.mxu0 0.0
        %4652 = vmatpush1.msra.mxu0 0.0
        %4653 = vmatprep.subr.mxu0 0.0
        %4654 = vmatpush1.msra.mxu0 0.0
        %4655 = vmatprep.subr.mxu0 0.0
        %4656 = vmatpush1.msra.mxu0 0.0
        %4657 = vmatprep.subr.mxu0 0.0
        %4658 = vmatpush1.msra.mxu0 0.0
        %4659 = vmatprep.subr.mxu0 0.0
        %4660 = vmatpush1.msra.mxu0 0.0
        %4661 = vmatprep.subr.mxu0 0.0
        %4662 = vmatpush1.msra.mxu0 0.0
        %4663 = vmatprep.subr.mxu0 0.0
        %4664 = vmatpush1.msra.mxu0 0.0
        %4665 = vmatprep.subr.mxu0 0.0
        %4666 = vmatpush1.msra.mxu0 0.0
        %4667 = vmatprep.subr.mxu0 0.0
        %4668 = vmatpush1.msra.mxu0 0.0
        %4669 = vmatprep.subr.mxu0 0.0
        %4670 = vmatpush1.msra.mxu0 0.0
        %4671 = vmatprep.mubr.f32.mxu0 0.0
        %v4672 = vand.u32 %v4004, 4294901760
        %4673 = vmatmul.mubr.f32.gmra.mrb[0].mxu0 %v4672
        %v4674 = vpop.f32.mrb[0].mxu0
        %v4675 = vadd.f32 %v4532, %v4674
        %v4676 = vpop.f32.mrb[0].mxu0
        %4677 = vmatprep.mubr.f32.mxu0 0.0
        %v4678 = vand.u32 %v4005, 4294901760
        %4679 = vmatmul.mubr.f32.gmra.mrb[0].mxu0 %v4678
        %v4680 = vpop.f32.mrb[0].mxu0
        %v4681 = vadd.f32 %v4540, %v4680
        %v4682 = vpop.f32.mrb[0].mxu0
        %4683 = vmatprep.mubr.f32.mxu0 0.0
        %v4684 = vand.u32 %v4006, 4294901760
        %4685 = vmatmul.mubr.f32.gmra.mrb[0].mxu0 %v4684
        %v4686 = vpop.f32.mrb[0].mxu0
        %v4687 = vadd.f32 %v4548, %v4686
        %v4688 = vpop.f32.mrb[0].mxu0
        %4689 = vmatprep.mubr.f32.mxu0 0.0
        %v4690 = vand.u32 %v4007, 4294901760
        %4691 = vmatmul.mubr.f32.gmra.mrb[0].mxu0 %v4690
        %v4692 = vpop.f32.mrb[0].mxu0
        %v4693 = vadd.f32 %v4556, %v4692
        %v4694 = vpop.f32.mrb[0].mxu0
        %4695 = vdwg.mxu0
        %4696 = vmatprep.subr.mxu0 0.0
        %v4697 = vand.u32 %v4008, 4294901760
        %4698 = vmatpush1.msra.mxu0 %v4697
        %4699 = vmatprep.subr.mxu0 0.0
        %v4700 = vand.u32 %v4009, 4294901760
        %4701 = vmatpush1.msra.mxu0 %v4700
        %4702 = vmatprep.subr.mxu0 0.0
        %v4703 = vand.u32 %v4010, 4294901760
        %4704 = vmatpush1.msra.mxu0 %v4703
        %4705 = vmatprep.subr.mxu0 0.0
        %v4706 = vand.u32 %v4011, 4294901760
        %4707 = vmatpush1.msra.mxu0 %v4706
        %4708 = vmatprep.subr.mxu0 0.0
        %v4709 = vand.u32 %v4012, 4294901760
        %4710 = vmatpush1.msra.mxu0 %v4709
        %4711 = vmatprep.subr.mxu0 0.0
        %v4712 = vand.u32 %v4013, 4294901760
        %4713 = vmatpush1.msra.mxu0 %v4712
        %4714 = vmatprep.subr.mxu0 0.0
        %v4715 = vand.u32 %v4014, 4294901760
        %4716 = vmatpush1.msra.mxu0 %v4715
        %4717 = vmatprep.subr.mxu0 0.0
        %v4718 = vand.u32 %v4015, 4294901760
        %4719 = vmatpush1.msra.mxu0 %v4718
        %4720 = vmatprep.subr.mxu0 0.0
        %v4721 = vand.u32 %v4016, 4294901760
        %4722 = vmatpush1.msra.mxu0 %v4721
        %4723 = vmatprep.subr.mxu0 0.0
        %v4724 = vand.u32 %v4017, 4294901760
        %4725 = vmatpush1.msra.mxu0 %v4724
        %4726 = vmatprep.subr.mxu0 0.0
        %v4727 = vand.u32 %v4018, 4294901760
        %4728 = vmatpush1.msra.mxu0 %v4727
        %4729 = vmatprep.subr.mxu0 0.0
        %v4730 = vand.u32 %v4019, 4294901760
        %4731 = vmatpush1.msra.mxu0 %v4730
        %4732 = vmatprep.subr.mxu0 0.0
        %v4733 = vand.u32 %v4020, 4294901760
        %4734 = vmatpush1.msra.mxu0 %v4733
        %4735 = vmatprep.subr.mxu0 0.0
        %v4736 = vand.u32 %v4021, 4294901760
        %4737 = vmatpush1.msra.mxu0 %v4736
        %4738 = vmatprep.subr.mxu0 0.0
        %v4739 = vand.u32 %v4022, 4294901760
        %4740 = vmatpush1.msra.mxu0 %v4739
        %4741 = vmatprep.subr.mxu0 0.0
        %v4742 = vand.u32 %v4023, 4294901760
        %4743 = vmatpush1.msra.mxu0 %v4742
        %4744 = vmatprep.subr.mxu0 0.0
        %4745 = vmatpush1.msra.mxu0 0.0
        %4746 = vmatprep.subr.mxu0 0.0
        %4747 = vmatpush1.msra.mxu0 0.0
        %4748 = vmatprep.subr.mxu0 0.0
        %4749 = vmatpush1.msra.mxu0 0.0
        %4750 = vmatprep.subr.mxu0 0.0
        %4751 = vmatpush1.msra.mxu0 0.0
        %4752 = vmatprep.subr.mxu0 0.0
        %4753 = vmatpush1.msra.mxu0 0.0
        %4754 = vmatprep.subr.mxu0 0.0
        %4755 = vmatpush1.msra.mxu0 0.0
        %4756 = vmatprep.subr.mxu0 0.0
        %4757 = vmatpush1.msra.mxu0 0.0
        %4758 = vmatprep.subr.mxu0 0.0
        %4759 = vmatpush1.msra.mxu0 0.0
        %4760 = vmatprep.subr.mxu0 0.0
        %4761 = vmatpush1.msra.mxu0 0.0
        %4762 = vmatprep.subr.mxu0 0.0
        %4763 = vmatpush1.msra.mxu0 0.0
        %4764 = vmatprep.subr.mxu0 0.0
        %4765 = vmatpush1.msra.mxu0 0.0
        %4766 = vmatprep.subr.mxu0 0.0
        %4767 = vmatpush1.msra.mxu0 0.0
        %4768 = vmatprep.subr.mxu0 0.0
        %4769 = vmatpush1.msra.mxu0 0.0
        %4770 = vmatprep.subr.mxu0 0.0
        %4771 = vmatpush1.msra.mxu0 0.0
        %4772 = vmatprep.subr.mxu0 0.0
        %4773 = vmatpush1.msra.mxu0 0.0
        %4774 = vmatprep.subr.mxu0 0.0
        %4775 = vmatpush1.msra.mxu0 0.0
        %4776 = vmatprep.mubr.f32.mxu0 0.0
        %v4777 = vand.u32 %v4004, 4294901760
        %4778 = vmatmul.mubr.f32.gmra.mrb[0].mxu0 %v4777
        %v4779 = vpop.f32.mrb[0].mxu0
        %v4780 = vadd.f32 %v4675, %v4779
        %v4781 = vpop.f32.mrb[0].mxu0
        %4782 = vmatprep.mubr.f32.mxu0 0.0
        %v4783 = vand.u32 %v4005, 4294901760
        %4784 = vmatmul.mubr.f32.gmra.mrb[0].mxu0 %v4783
        %v4785 = vpop.f32.mrb[0].mxu0
        %v4786 = vadd.f32 %v4681, %v4785
        %v4787 = vpop.f32.mrb[0].mxu0
        %4788 = vmatprep.mubr.f32.mxu0 0.0
        %v4789 = vand.u32 %v4006, 4294901760
        %4790 = vmatmul.mubr.f32.gmra.mrb[0].mxu0 %v4789
        %v4791 = vpop.f32.mrb[0].mxu0
        %v4792 = vadd.f32 %v4687, %v4791
        %v4793 = vpop.f32.mrb[0].mxu0
        %4794 = vmatprep.mubr.f32.mxu0 0.0
        %v4795 = vand.u32 %v4007, 4294901760
        %4796 = vmatmul.mubr.f32.gmra.mrb[0].mxu0 %v4795
        %v4797 = vpop.f32.mrb[0].mxu0
        %v4798 = vadd.f32 %v4693, %v4797
        %v4799 = vpop.f32.mrb[0].mxu0
        %4800 = vdwg.mxu0
        %v4801 = vld [vmem:[%s10] sm:$0xff]
        %v4802 = vld [vmem:[%s10 + $0x8] sm:$0xff]
        %v4803 = vld [vmem:[%s10 + $0x10] sm:$0xff]
        %v4804 = vld [vmem:[%s10 + $0x18] sm:$0xff]
        %v4805 = vld [vmem:[%s10 + $0x20] sm:$0xff]
        %v4806 = vld [vmem:[%s10 + $0x28] sm:$0xff]
        %v4807 = vld [vmem:[%s10 + $0x30] sm:$0xff]
        %v4808 = vld [vmem:[%s10 + $0x38] sm:$0xff]
        %v4809 = vld [vmem:[%s10 + $0x40] sm:$0xff]
        %v4810 = vld [vmem:[%s10 + $0x48] sm:$0xff]
        %v4811 = vld [vmem:[%s10 + $0x50] sm:$0xff]
        %v4812 = vld [vmem:[%s10 + $0x58] sm:$0xff]
        %v4813 = vld [vmem:[%s10 + $0x60] sm:$0xff]
        %v4814 = vld [vmem:[%s10 + $0x68] sm:$0xff]
        %v4815 = vld [vmem:[%s10 + $0x70] sm:$0xff]
        %v4816 = vld [vmem:[%s10 + $0x78] sm:$0xff]
        %4817 = vmatprep.subr.mxu0 0.0
        %v4818 = vand.u32 %v4801, 4294901760
        %4819 = vmatpush1.msra.mxu0 %v4818
        %4820 = vmatprep.subr.mxu0 0.0
        %v4821 = vand.u32 %v4802, 4294901760
        %4822 = vmatpush1.msra.mxu0 %v4821
        %4823 = vmatprep.subr.mxu0 0.0
        %v4824 = vand.u32 %v4803, 4294901760
        %4825 = vmatpush1.msra.mxu0 %v4824
        %4826 = vmatprep.subr.mxu0 0.0
        %v4827 = vand.u32 %v4804, 4294901760
        %4828 = vmatpush1.msra.mxu0 %v4827
        %4829 = vmatprep.subr.mxu0 0.0
        %v4830 = vand.u32 %v4805, 4294901760
        %4831 = vmatpush1.msra.mxu0 %v4830
        %4832 = vmatprep.subr.mxu0 0.0
        %v4833 = vand.u32 %v4806, 4294901760
        %4834 = vmatpush1.msra.mxu0 %v4833
        %4835 = vmatprep.subr.mxu0 0.0
        %v4836 = vand.u32 %v4807, 4294901760
        %4837 = vmatpush1.msra.mxu0 %v4836
        %4838 = vmatprep.subr.mxu0 0.0
        %v4839 = vand.u32 %v4808, 4294901760
        %4840 = vmatpush1.msra.mxu0 %v4839
        %4841 = vmatprep.subr.mxu0 0.0
        %v4842 = vand.u32 %v4809, 4294901760
        %4843 = vmatpush1.msra.mxu0 %v4842
        %4844 = vmatprep.subr.mxu0 0.0
        %v4845 = vand.u32 %v4810, 4294901760
        %4846 = vmatpush1.msra.mxu0 %v4845
        %4847 = vmatprep.subr.mxu0 0.0
        %v4848 = vand.u32 %v4811, 4294901760
        %4849 = vmatpush1.msra.mxu0 %v4848
        %4850 = vmatprep.subr.mxu0 0.0
        %v4851 = vand.u32 %v4812, 4294901760
        %4852 = vmatpush1.msra.mxu0 %v4851
        %4853 = vmatprep.subr.mxu0 0.0
        %v4854 = vand.u32 %v4813, 4294901760
        %4855 = vmatpush1.msra.mxu0 %v4854
        %4856 = vmatprep.subr.mxu0 0.0
        %v4857 = vand.u32 %v4814, 4294901760
        %4858 = vmatpush1.msra.mxu0 %v4857
        %4859 = vmatprep.subr.mxu0 0.0
        %v4860 = vand.u32 %v4815, 4294901760
        %4861 = vmatpush1.msra.mxu0 %v4860
        %4862 = vmatprep.subr.mxu0 0.0
        %v4863 = vand.u32 %v4816, 4294901760
        %4864 = vmatpush1.msra.mxu0 %v4863
        %4865 = vmatprep.subr.mxu0 0.0
        %4866 = vmatpush1.msra.mxu0 0.0
        %4867 = vmatprep.subr.mxu0 0.0
        %4868 = vmatpush1.msra.mxu0 0.0
        %4869 = vmatprep.subr.mxu0 0.0
        %4870 = vmatpush1.msra.mxu0 0.0
        %4871 = vmatprep.subr.mxu0 0.0
        %4872 = vmatpush1.msra.mxu0 0.0
        %4873 = vmatprep.subr.mxu0 0.0
        %4874 = vmatpush1.msra.mxu0 0.0
        %4875 = vmatprep.subr.mxu0 0.0
        %4876 = vmatpush1.msra.mxu0 0.0
        %4877 = vmatprep.subr.mxu0 0.0
        %4878 = vmatpush1.msra.mxu0 0.0
        %4879 = vmatprep.subr.mxu0 0.0
        %4880 = vmatpush1.msra.mxu0 0.0
        %4881 = vmatprep.subr.mxu0 0.0
        %4882 = vmatpush1.msra.mxu0 0.0
        %4883 = vmatprep.subr.mxu0 0.0
        %4884 = vmatpush1.msra.mxu0 0.0
        %4885 = vmatprep.subr.mxu0 0.0
        %4886 = vmatpush1.msra.mxu0 0.0
        %4887 = vmatprep.subr.mxu0 0.0
        %4888 = vmatpush1.msra.mxu0 0.0
        %4889 = vmatprep.subr.mxu0 0.0
        %4890 = vmatpush1.msra.mxu0 0.0
        %4891 = vmatprep.subr.mxu0 0.0
        %4892 = vmatpush1.msra.mxu0 0.0
        %4893 = vmatprep.subr.mxu0 0.0
        %4894 = vmatpush1.msra.mxu0 0.0
        %4895 = vmatprep.subr.mxu0 0.0
        %4896 = vmatpush1.msra.mxu0 0.0
        %4897 = vmatprep.mubr.f32.mxu0 0.0
        %v4898 = vand.u32 %v4004, 4294901760
        %v4899 = vsub.f32 %v4004, %v4898
        %v4900 = vand.u32 %v4899, 4294901760
        %v4901 = vsub.f32 %v4899, %v4900
        %v4902 = vand.u32 %v4901, 4294901760
        %4903 = vmatmul.mubr.f32.gmra.mrb[0].mxu0 %v4902
        %v4904 = vpop.f32.mrb[0].mxu0
        %v4905 = vadd.f32 0.0, %v4904
        %v4906 = vpop.f32.mrb[0].mxu0
        %4907 = vmatprep.mubr.f32.mxu0 0.0
        %v4908 = vand.u32 %v4005, 4294901760
        %v4909 = vsub.f32 %v4005, %v4908
        %v4910 = vand.u32 %v4909, 4294901760
        %v4911 = vsub.f32 %v4909, %v4910
        %v4912 = vand.u32 %v4911, 4294901760
        %4913 = vmatmul.mubr.f32.gmra.mrb[0].mxu0 %v4912
        %v4914 = vpop.f32.mrb[0].mxu0
        %v4915 = vadd.f32 0.0, %v4914
        %v4916 = vpop.f32.mrb[0].mxu0
        %4917 = vmatprep.mubr.f32.mxu0 0.0
        %v4918 = vand.u32 %v4006, 4294901760
        %v4919 = vsub.f32 %v4006, %v4918
        %v4920 = vand.u32 %v4919, 4294901760
        %v4921 = vsub.f32 %v4919, %v4920
        %v4922 = vand.u32 %v4921, 4294901760
        %4923 = vmatmul.mubr.f32.gmra.mrb[0].mxu0 %v4922
        %v4924 = vpop.f32.mrb[0].mxu0
        %v4925 = vadd.f32 0.0, %v4924
        %v4926 = vpop.f32.mrb[0].mxu0
        %4927 = vmatprep.mubr.f32.mxu0 0.0
        %v4928 = vand.u32 %v4007, 4294901760
        %v4929 = vsub.f32 %v4007, %v4928
        %v4930 = vand.u32 %v4929, 4294901760
        %v4931 = vsub.f32 %v4929, %v4930
        %v4932 = vand.u32 %v4931, 4294901760
        %4933 = vmatmul.mubr.f32.gmra.mrb[0].mxu0 %v4932
        %v4934 = vpop.f32.mrb[0].mxu0
        %v4935 = vadd.f32 0.0, %v4934
        %v4936 = vpop.f32.mrb[0].mxu0
        %4937 = vdwg.mxu0
        %4938 = vmatprep.subr.mxu0 0.0
        %v4939 = vand.u32 %v4801, 4294901760
        %v4940 = vsub.f32 %v4801, %v4939
        %v4941 = vand.u32 %v4940, 4294901760
        %v4942 = vsub.f32 %v4940, %v4941
        %v4943 = vand.u32 %v4942, 4294901760
        %4944 = vmatpush1.msra.mxu0 %v4943
        %4945 = vmatprep.subr.mxu0 0.0
        %v4946 = vand.u32 %v4802, 4294901760
        %v4947 = vsub.f32 %v4802, %v4946
        %v4948 = vand.u32 %v4947, 4294901760
        %v4949 = vsub.f32 %v4947, %v4948
        %v4950 = vand.u32 %v4949, 4294901760
        %4951 = vmatpush1.msra.mxu0 %v4950
        %4952 = vmatprep.subr.mxu0 0.0
        %v4953 = vand.u32 %v4803, 4294901760
        %v4954 = vsub.f32 %v4803, %v4953
        %v4955 = vand.u32 %v4954, 4294901760
        %v4956 = vsub.f32 %v4954, %v4955
        %v4957 = vand.u32 %v4956, 4294901760
        %4958 = vmatpush1.msra.mxu0 %v4957
        %4959 = vmatprep.subr.mxu0 0.0
        %v4960 = vand.u32 %v4804, 4294901760
        %v4961 = vsub.f32 %v4804, %v4960
        %v4962 = vand.u32 %v4961, 4294901760
        %v4963 = vsub.f32 %v4961, %v4962
        %v4964 = vand.u32 %v4963, 4294901760
        %4965 = vmatpush1.msra.mxu0 %v4964
        %4966 = vmatprep.subr.mxu0 0.0
        %v4967 = vand.u32 %v4805, 4294901760
        %v4968 = vsub.f32 %v4805, %v4967
        %v4969 = vand.u32 %v4968, 4294901760
        %v4970 = vsub.f32 %v4968, %v4969
        %v4971 = vand.u32 %v4970, 4294901760
        %4972 = vmatpush1.msra.mxu0 %v4971
        %4973 = vmatprep.subr.mxu0 0.0
        %v4974 = vand.u32 %v4806, 4294901760
        %v4975 = vsub.f32 %v4806, %v4974
        %v4976 = vand.u32 %v4975, 4294901760
        %v4977 = vsub.f32 %v4975, %v4976
        %v4978 = vand.u32 %v4977, 4294901760
        %4979 = vmatpush1.msra.mxu0 %v4978
        %4980 = vmatprep.subr.mxu0 0.0
        %v4981 = vand.u32 %v4807, 4294901760
        %v4982 = vsub.f32 %v4807, %v4981
        %v4983 = vand.u32 %v4982, 4294901760
        %v4984 = vsub.f32 %v4982, %v4983
        %v4985 = vand.u32 %v4984, 4294901760
        %4986 = vmatpush1.msra.mxu0 %v4985
        %4987 = vmatprep.subr.mxu0 0.0
        %v4988 = vand.u32 %v4808, 4294901760
        %v4989 = vsub.f32 %v4808, %v4988
        %v4990 = vand.u32 %v4989, 4294901760
        %v4991 = vsub.f32 %v4989, %v4990
        %v4992 = vand.u32 %v4991, 4294901760
        %4993 = vmatpush1.msra.mxu0 %v4992
        %4994 = vmatprep.subr.mxu0 0.0
        %v4995 = vand.u32 %v4809, 4294901760
        %v4996 = vsub.f32 %v4809, %v4995
        %v4997 = vand.u32 %v4996, 4294901760
        %v4998 = vsub.f32 %v4996, %v4997
        %v4999 = vand.u32 %v4998, 4294901760
        %5000 = vmatpush1.msra.mxu0 %v4999
        %5001 = vmatprep.subr.mxu0 0.0
        %v5002 = vand.u32 %v4810, 4294901760
        %v5003 = vsub.f32 %v4810, %v5002
        %v5004 = vand.u32 %v5003, 4294901760
        %v5005 = vsub.f32 %v5003, %v5004
        %v5006 = vand.u32 %v5005, 4294901760
        %5007 = vmatpush1.msra.mxu0 %v5006
        %5008 = vmatprep.subr.mxu0 0.0
        %v5009 = vand.u32 %v4811, 4294901760
        %v5010 = vsub.f32 %v4811, %v5009
        %v5011 = vand.u32 %v5010, 4294901760
        %v5012 = vsub.f32 %v5010, %v5011
        %v5013 = vand.u32 %v5012, 4294901760
        %5014 = vmatpush1.msra.mxu0 %v5013
        %5015 = vmatprep.subr.mxu0 0.0
        %v5016 = vand.u32 %v4812, 4294901760
        %v5017 = vsub.f32 %v4812, %v5016
        %v5018 = vand.u32 %v5017, 4294901760
        %v5019 = vsub.f32 %v5017, %v5018
        %v5020 = vand.u32 %v5019, 4294901760
        %5021 = vmatpush1.msra.mxu0 %v5020
        %5022 = vmatprep.subr.mxu0 0.0
        %v5023 = vand.u32 %v4813, 4294901760
        %v5024 = vsub.f32 %v4813, %v5023
        %v5025 = vand.u32 %v5024, 4294901760
        %v5026 = vsub.f32 %v5024, %v5025
        %v5027 = vand.u32 %v5026, 4294901760
        %5028 = vmatpush1.msra.mxu0 %v5027
        %5029 = vmatprep.subr.mxu0 0.0
        %v5030 = vand.u32 %v4814, 4294901760
        %v5031 = vsub.f32 %v4814, %v5030
        %v5032 = vand.u32 %v5031, 4294901760
        %v5033 = vsub.f32 %v5031, %v5032
        %v5034 = vand.u32 %v5033, 4294901760
        %5035 = vmatpush1.msra.mxu0 %v5034
        %5036 = vmatprep.subr.mxu0 0.0
        %v5037 = vand.u32 %v4815, 4294901760
        %v5038 = vsub.f32 %v4815, %v5037
        %v5039 = vand.u32 %v5038, 4294901760
        %v5040 = vsub.f32 %v5038, %v5039
        %v5041 = vand.u32 %v5040, 4294901760
        %5042 = vmatpush1.msra.mxu0 %v5041
        %5043 = vmatprep.subr.mxu0 0.0
        %v5044 = vand.u32 %v4816, 4294901760
        %v5045 = vsub.f32 %v4816, %v5044
        %v5046 = vand.u32 %v5045, 4294901760
        %v5047 = vsub.f32 %v5045, %v5046
        %v5048 = vand.u32 %v5047, 4294901760
        %5049 = vmatpush1.msra.mxu0 %v5048
        %5050 = vmatprep.subr.mxu0 0.0
        %5051 = vmatpush1.msra.mxu0 0.0
        %5052 = vmatprep.subr.mxu0 0.0
        %5053 = vmatpush1.msra.mxu0 0.0
        %5054 = vmatprep.subr.mxu0 0.0
        %5055 = vmatpush1.msra.mxu0 0.0
        %5056 = vmatprep.subr.mxu0 0.0
        %5057 = vmatpush1.msra.mxu0 0.0
        %5058 = vmatprep.subr.mxu0 0.0
        %5059 = vmatpush1.msra.mxu0 0.0
        %5060 = vmatprep.subr.mxu0 0.0
        %5061 = vmatpush1.msra.mxu0 0.0
        %5062 = vmatprep.subr.mxu0 0.0
        %5063 = vmatpush1.msra.mxu0 0.0
        %5064 = vmatprep.subr.mxu0 0.0
        %5065 = vmatpush1.msra.mxu0 0.0
        %5066 = vmatprep.subr.mxu0 0.0
        %5067 = vmatpush1.msra.mxu0 0.0
        %5068 = vmatprep.subr.mxu0 0.0
        %5069 = vmatpush1.msra.mxu0 0.0
        %5070 = vmatprep.subr.mxu0 0.0
        %5071 = vmatpush1.msra.mxu0 0.0
        %5072 = vmatprep.subr.mxu0 0.0
        %5073 = vmatpush1.msra.mxu0 0.0
        %5074 = vmatprep.subr.mxu0 0.0
        %5075 = vmatpush1.msra.mxu0 0.0
        %5076 = vmatprep.subr.mxu0 0.0
        %5077 = vmatpush1.msra.mxu0 0.0
        %5078 = vmatprep.subr.mxu0 0.0
        %5079 = vmatpush1.msra.mxu0 0.0
        %5080 = vmatprep.subr.mxu0 0.0
        %5081 = vmatpush1.msra.mxu0 0.0
        %5082 = vmatprep.mubr.f32.mxu0 0.0
        %v5083 = vand.u32 %v4004, 4294901760
        %5084 = vmatmul.mubr.f32.gmra.mrb[0].mxu0 %v5083
        %v5085 = vpop.f32.mrb[0].mxu0
        %v5086 = vadd.f32 %v4905, %v5085
        %v5087 = vpop.f32.mrb[0].mxu0
        %5088 = vmatprep.mubr.f32.mxu0 0.0
        %v5089 = vand.u32 %v4005, 4294901760
        %5090 = vmatmul.mubr.f32.gmra.mrb[0].mxu0 %v5089
        %v5091 = vpop.f32.mrb[0].mxu0
        %v5092 = vadd.f32 %v4915, %v5091
        %v5093 = vpop.f32.mrb[0].mxu0
        %5094 = vmatprep.mubr.f32.mxu0 0.0
        %v5095 = vand.u32 %v4006, 4294901760
        %5096 = vmatmul.mubr.f32.gmra.mrb[0].mxu0 %v5095
        %v5097 = vpop.f32.mrb[0].mxu0
        %v5098 = vadd.f32 %v4925, %v5097
        %v5099 = vpop.f32.mrb[0].mxu0
        %5100 = vmatprep.mubr.f32.mxu0 0.0
        %v5101 = vand.u32 %v4007, 4294901760
        %5102 = vmatmul.mubr.f32.gmra.mrb[0].mxu0 %v5101
        %v5103 = vpop.f32.mrb[0].mxu0
        %v5104 = vadd.f32 %v4935, %v5103
        %v5105 = vpop.f32.mrb[0].mxu0
        %5106 = vdwg.mxu0
        %5107 = vmatprep.subr.mxu0 0.0
        %v5108 = vand.u32 %v4801, 4294901760
        %v5109 = vsub.f32 %v4801, %v5108
        %5110 = vmatpush1.msra.mxu0 %v5109
        %5111 = vmatprep.subr.mxu0 0.0
        %v5112 = vand.u32 %v4802, 4294901760
        %v5113 = vsub.f32 %v4802, %v5112
        %5114 = vmatpush1.msra.mxu0 %v5113
        %5115 = vmatprep.subr.mxu0 0.0
        %v5116 = vand.u32 %v4803, 4294901760
        %v5117 = vsub.f32 %v4803, %v5116
        %5118 = vmatpush1.msra.mxu0 %v5117
        %5119 = vmatprep.subr.mxu0 0.0
        %v5120 = vand.u32 %v4804, 4294901760
        %v5121 = vsub.f32 %v4804, %v5120
        %5122 = vmatpush1.msra.mxu0 %v5121
        %5123 = vmatprep.subr.mxu0 0.0
        %v5124 = vand.u32 %v4805, 4294901760
        %v5125 = vsub.f32 %v4805, %v5124
        %5126 = vmatpush1.msra.mxu0 %v5125
        %5127 = vmatprep.subr.mxu0 0.0
        %v5128 = vand.u32 %v4806, 4294901760
        %v5129 = vsub.f32 %v4806, %v5128
        %5130 = vmatpush1.msra.mxu0 %v5129
        %5131 = vmatprep.subr.mxu0 0.0
        %v5132 = vand.u32 %v4807, 4294901760
        %v5133 = vsub.f32 %v4807, %v5132
        %5134 = vmatpush1.msra.mxu0 %v5133
        %5135 = vmatprep.subr.mxu0 0.0
        %v5136 = vand.u32 %v4808, 4294901760
        %v5137 = vsub.f32 %v4808, %v5136
        %5138 = vmatpush1.msra.mxu0 %v5137
        %5139 = vmatprep.subr.mxu0 0.0
        %v5140 = vand.u32 %v4809, 4294901760
        %v5141 = vsub.f32 %v4809, %v5140
        %5142 = vmatpush1.msra.mxu0 %v5141
        %5143 = vmatprep.subr.mxu0 0.0
        %v5144 = vand.u32 %v4810, 4294901760
        %v5145 = vsub.f32 %v4810, %v5144
        %5146 = vmatpush1.msra.mxu0 %v5145
        %5147 = vmatprep.subr.mxu0 0.0
        %v5148 = vand.u32 %v4811, 4294901760
        %v5149 = vsub.f32 %v4811, %v5148
        %5150 = vmatpush1.msra.mxu0 %v5149
        %5151 = vmatprep.subr.mxu0 0.0
        %v5152 = vand.u32 %v4812, 4294901760
        %v5153 = vsub.f32 %v4812, %v5152
        %5154 = vmatpush1.msra.mxu0 %v5153
        %5155 = vmatprep.subr.mxu0 0.0
        %v5156 = vand.u32 %v4813, 4294901760
        %v5157 = vsub.f32 %v4813, %v5156
        %5158 = vmatpush1.msra.mxu0 %v5157
        %5159 = vmatprep.subr.mxu0 0.0
        %v5160 = vand.u32 %v4814, 4294901760
        %v5161 = vsub.f32 %v4814, %v5160
        %5162 = vmatpush1.msra.mxu0 %v5161
        %5163 = vmatprep.subr.mxu0 0.0
        %v5164 = vand.u32 %v4815, 4294901760
        %v5165 = vsub.f32 %v4815, %v5164
        %5166 = vmatpush1.msra.mxu0 %v5165
        %5167 = vmatprep.subr.mxu0 0.0
        %v5168 = vand.u32 %v4816, 4294901760
        %v5169 = vsub.f32 %v4816, %v5168
        %5170 = vmatpush1.msra.mxu0 %v5169
        %5171 = vmatprep.subr.mxu0 0.0
        %5172 = vmatpush1.msra.mxu0 0.0
        %5173 = vmatprep.subr.mxu0 0.0
        %5174 = vmatpush1.msra.mxu0 0.0
        %5175 = vmatprep.subr.mxu0 0.0
        %5176 = vmatpush1.msra.mxu0 0.0
        %5177 = vmatprep.subr.mxu0 0.0
        %5178 = vmatpush1.msra.mxu0 0.0
        %5179 = vmatprep.subr.mxu0 0.0
        %5180 = vmatpush1.msra.mxu0 0.0
        %5181 = vmatprep.subr.mxu0 0.0
        %5182 = vmatpush1.msra.mxu0 0.0
        %5183 = vmatprep.subr.mxu0 0.0
        %5184 = vmatpush1.msra.mxu0 0.0
        %5185 = vmatprep.subr.mxu0 0.0
        %5186 = vmatpush1.msra.mxu0 0.0
        %5187 = vmatprep.subr.mxu0 0.0
        %5188 = vmatpush1.msra.mxu0 0.0
        %5189 = vmatprep.subr.mxu0 0.0
        %5190 = vmatpush1.msra.mxu0 0.0
        %5191 = vmatprep.subr.mxu0 0.0
        %5192 = vmatpush1.msra.mxu0 0.0
        %5193 = vmatprep.subr.mxu0 0.0
        %5194 = vmatpush1.msra.mxu0 0.0
        %5195 = vmatprep.subr.mxu0 0.0
        %5196 = vmatpush1.msra.mxu0 0.0
        %5197 = vmatprep.subr.mxu0 0.0
        %5198 = vmatpush1.msra.mxu0 0.0
        %5199 = vmatprep.subr.mxu0 0.0
        %5200 = vmatpush1.msra.mxu0 0.0
        %5201 = vmatprep.subr.mxu0 0.0
        %5202 = vmatpush1.msra.mxu0 0.0
        %5203 = vmatprep.mubr.f32.mxu0 0.0
        %v5204 = vand.u32 %v4004, 4294901760
        %v5205 = vsub.f32 %v4004, %v5204
        %5206 = vmatmul.mubr.f32.gmra.mrb[0].mxu0 %v5205
        %v5207 = vpop.f32.mrb[0].mxu0
        %v5208 = vadd.f32 %v5086, %v5207
        %v5209 = vpop.f32.mrb[0].mxu0
        %5210 = vmatprep.mubr.f32.mxu0 0.0
        %v5211 = vand.u32 %v4005, 4294901760
        %v5212 = vsub.f32 %v4005, %v5211
        %5213 = vmatmul.mubr.f32.gmra.mrb[0].mxu0 %v5212
        %v5214 = vpop.f32.mrb[0].mxu0
        %v5215 = vadd.f32 %v5092, %v5214
        %v5216 = vpop.f32.mrb[0].mxu0
        %5217 = vmatprep.mubr.f32.mxu0 0.0
        %v5218 = vand.u32 %v4006, 4294901760
        %v5219 = vsub.f32 %v4006, %v5218
        %5220 = vmatmul.mubr.f32.gmra.mrb[0].mxu0 %v5219
        %v5221 = vpop.f32.mrb[0].mxu0
        %v5222 = vadd.f32 %v5098, %v5221
        %v5223 = vpop.f32.mrb[0].mxu0
        %5224 = vmatprep.mubr.f32.mxu0 0.0
        %v5225 = vand.u32 %v4007, 4294901760
        %v5226 = vsub.f32 %v4007, %v5225
        %5227 = vmatmul.mubr.f32.gmra.mrb[0].mxu0 %v5226
        %v5228 = vpop.f32.mrb[0].mxu0
        %v5229 = vadd.f32 %v5104, %v5228
        %v5230 = vpop.f32.mrb[0].mxu0
        %5231 = vdwg.mxu0
        %5232 = vmatprep.subr.mxu0 0.0
        %v5233 = vand.u32 %v4801, 4294901760
        %5234 = vmatpush1.msra.mxu0 %v5233
        %5235 = vmatprep.subr.mxu0 0.0
        %v5236 = vand.u32 %v4802, 4294901760
        %5237 = vmatpush1.msra.mxu0 %v5236
        %5238 = vmatprep.subr.mxu0 0.0
        %v5239 = vand.u32 %v4803, 4294901760
        %5240 = vmatpush1.msra.mxu0 %v5239
        %5241 = vmatprep.subr.mxu0 0.0
        %v5242 = vand.u32 %v4804, 4294901760
        %5243 = vmatpush1.msra.mxu0 %v5242
        %5244 = vmatprep.subr.mxu0 0.0
        %v5245 = vand.u32 %v4805, 4294901760
        %5246 = vmatpush1.msra.mxu0 %v5245
        %5247 = vmatprep.subr.mxu0 0.0
        %v5248 = vand.u32 %v4806, 4294901760
        %5249 = vmatpush1.msra.mxu0 %v5248
        %5250 = vmatprep.subr.mxu0 0.0
        %v5251 = vand.u32 %v4807, 4294901760
        %5252 = vmatpush1.msra.mxu0 %v5251
        %5253 = vmatprep.subr.mxu0 0.0
        %v5254 = vand.u32 %v4808, 4294901760
        %5255 = vmatpush1.msra.mxu0 %v5254
        %5256 = vmatprep.subr.mxu0 0.0
        %v5257 = vand.u32 %v4809, 4294901760
        %5258 = vmatpush1.msra.mxu0 %v5257
        %5259 = vmatprep.subr.mxu0 0.0
        %v5260 = vand.u32 %v4810, 4294901760
        %5261 = vmatpush1.msra.mxu0 %v5260
        %5262 = vmatprep.subr.mxu0 0.0
        %v5263 = vand.u32 %v4811, 4294901760
        %5264 = vmatpush1.msra.mxu0 %v5263
        %5265 = vmatprep.subr.mxu0 0.0
        %v5266 = vand.u32 %v4812, 4294901760
        %5267 = vmatpush1.msra.mxu0 %v5266
        %5268 = vmatprep.subr.mxu0 0.0
        %v5269 = vand.u32 %v4813, 4294901760
        %5270 = vmatpush1.msra.mxu0 %v5269
        %5271 = vmatprep.subr.mxu0 0.0
        %v5272 = vand.u32 %v4814, 4294901760
        %5273 = vmatpush1.msra.mxu0 %v5272
        %5274 = vmatprep.subr.mxu0 0.0
        %v5275 = vand.u32 %v4815, 4294901760
        %5276 = vmatpush1.msra.mxu0 %v5275
        %5277 = vmatprep.subr.mxu0 0.0
        %v5278 = vand.u32 %v4816, 4294901760
        %5279 = vmatpush1.msra.mxu0 %v5278
        %5280 = vmatprep.subr.mxu0 0.0
        %5281 = vmatpush1.msra.mxu0 0.0
        %5282 = vmatprep.subr.mxu0 0.0
        %5283 = vmatpush1.msra.mxu0 0.0
        %5284 = vmatprep.subr.mxu0 0.0
        %5285 = vmatpush1.msra.mxu0 0.0
        %5286 = vmatprep.subr.mxu0 0.0
        %5287 = vmatpush1.msra.mxu0 0.0
        %5288 = vmatprep.subr.mxu0 0.0
        %5289 = vmatpush1.msra.mxu0 0.0
        %5290 = vmatprep.subr.mxu0 0.0
        %5291 = vmatpush1.msra.mxu0 0.0
        %5292 = vmatprep.subr.mxu0 0.0
        %5293 = vmatpush1.msra.mxu0 0.0
        %5294 = vmatprep.subr.mxu0 0.0
        %5295 = vmatpush1.msra.mxu0 0.0
        %5296 = vmatprep.subr.mxu0 0.0
        %5297 = vmatpush1.msra.mxu0 0.0
        %5298 = vmatprep.subr.mxu0 0.0
        %5299 = vmatpush1.msra.mxu0 0.0
        %5300 = vmatprep.subr.mxu0 0.0
        %5301 = vmatpush1.msra.mxu0 0.0
        %5302 = vmatprep.subr.mxu0 0.0
        %5303 = vmatpush1.msra.mxu0 0.0
        %5304 = vmatprep.subr.mxu0 0.0
        %5305 = vmatpush1.msra.mxu0 0.0
        %5306 = vmatprep.subr.mxu0 0.0
        %5307 = vmatpush1.msra.mxu0 0.0
        %5308 = vmatprep.subr.mxu0 0.0
        %5309 = vmatpush1.msra.mxu0 0.0
        %5310 = vmatprep.subr.mxu0 0.0
        %5311 = vmatpush1.msra.mxu0 0.0
        %5312 = vmatprep.mubr.f32.mxu0 0.0
        %v5313 = vand.u32 %v4004, 4294901760
        %v5314 = vsub.f32 %v4004, %v5313
        %v5315 = vand.u32 %v5314, 4294901760
        %5316 = vmatmul.mubr.f32.gmra.mrb[0].mxu0 %v5315
        %v5317 = vpop.f32.mrb[0].mxu0
        %v5318 = vadd.f32 %v5208, %v5317
        %v5319 = vpop.f32.mrb[0].mxu0
        %5320 = vmatprep.mubr.f32.mxu0 0.0
        %v5321 = vand.u32 %v4005, 4294901760
        %v5322 = vsub.f32 %v4005, %v5321
        %v5323 = vand.u32 %v5322, 4294901760
        %5324 = vmatmul.mubr.f32.gmra.mrb[0].mxu0 %v5323
        %v5325 = vpop.f32.mrb[0].mxu0
        %v5326 = vadd.f32 %v5215, %v5325
        %v5327 = vpop.f32.mrb[0].mxu0
        %5328 = vmatprep.mubr.f32.mxu0 0.0
        %v5329 = vand.u32 %v4006, 4294901760
        %v5330 = vsub.f32 %v4006, %v5329
        %v5331 = vand.u32 %v5330, 4294901760
        %5332 = vmatmul.mubr.f32.gmra.mrb[0].mxu0 %v5331
        %v5333 = vpop.f32.mrb[0].mxu0
        %v5334 = vadd.f32 %v5222, %v5333
        %v5335 = vpop.f32.mrb[0].mxu0
        %5336 = vmatprep.mubr.f32.mxu0 0.0
        %v5337 = vand.u32 %v4007, 4294901760
        %v5338 = vsub.f32 %v4007, %v5337
        %v5339 = vand.u32 %v5338, 4294901760
        %5340 = vmatmul.mubr.f32.gmra.mrb[0].mxu0 %v5339
        %v5341 = vpop.f32.mrb[0].mxu0
        %v5342 = vadd.f32 %v5229, %v5341
        %v5343 = vpop.f32.mrb[0].mxu0
        %5344 = vdwg.mxu0
        %5345 = vmatprep.subr.mxu0 0.0
        %v5346 = vand.u32 %v4801, 4294901760
        %v5347 = vsub.f32 %v4801, %v5346
        %v5348 = vand.u32 %v5347, 4294901760
        %5349 = vmatpush1.msra.mxu0 %v5348
        %5350 = vmatprep.subr.mxu0 0.0
        %v5351 = vand.u32 %v4802, 4294901760
        %v5352 = vsub.f32 %v4802, %v5351
        %v5353 = vand.u32 %v5352, 4294901760
        %5354 = vmatpush1.msra.mxu0 %v5353
        %5355 = vmatprep.subr.mxu0 0.0
        %v5356 = vand.u32 %v4803, 4294901760
        %v5357 = vsub.f32 %v4803, %v5356
        %v5358 = vand.u32 %v5357, 4294901760
        %5359 = vmatpush1.msra.mxu0 %v5358
        %5360 = vmatprep.subr.mxu0 0.0
        %v5361 = vand.u32 %v4804, 4294901760
        %v5362 = vsub.f32 %v4804, %v5361
        %v5363 = vand.u32 %v5362, 4294901760
        %5364 = vmatpush1.msra.mxu0 %v5363
        %5365 = vmatprep.subr.mxu0 0.0
        %v5366 = vand.u32 %v4805, 4294901760
        %v5367 = vsub.f32 %v4805, %v5366
        %v5368 = vand.u32 %v5367, 4294901760
        %5369 = vmatpush1.msra.mxu0 %v5368
        %5370 = vmatprep.subr.mxu0 0.0
        %v5371 = vand.u32 %v4806, 4294901760
        %v5372 = vsub.f32 %v4806, %v5371
        %v5373 = vand.u32 %v5372, 4294901760
        %5374 = vmatpush1.msra.mxu0 %v5373
        %5375 = vmatprep.subr.mxu0 0.0
        %v5376 = vand.u32 %v4807, 4294901760
        %v5377 = vsub.f32 %v4807, %v5376
        %v5378 = vand.u32 %v5377, 4294901760
        %5379 = vmatpush1.msra.mxu0 %v5378
        %5380 = vmatprep.subr.mxu0 0.0
        %v5381 = vand.u32 %v4808, 4294901760
        %v5382 = vsub.f32 %v4808, %v5381
        %v5383 = vand.u32 %v5382, 4294901760
        %5384 = vmatpush1.msra.mxu0 %v5383
        %5385 = vmatprep.subr.mxu0 0.0
        %v5386 = vand.u32 %v4809, 4294901760
        %v5387 = vsub.f32 %v4809, %v5386
        %v5388 = vand.u32 %v5387, 4294901760
        %5389 = vmatpush1.msra.mxu0 %v5388
        %5390 = vmatprep.subr.mxu0 0.0
        %v5391 = vand.u32 %v4810, 4294901760
        %v5392 = vsub.f32 %v4810, %v5391
        %v5393 = vand.u32 %v5392, 4294901760
        %5394 = vmatpush1.msra.mxu0 %v5393
        %5395 = vmatprep.subr.mxu0 0.0
        %v5396 = vand.u32 %v4811, 4294901760
        %v5397 = vsub.f32 %v4811, %v5396
        %v5398 = vand.u32 %v5397, 4294901760
        %5399 = vmatpush1.msra.mxu0 %v5398
        %5400 = vmatprep.subr.mxu0 0.0
        %v5401 = vand.u32 %v4812, 4294901760
        %v5402 = vsub.f32 %v4812, %v5401
        %v5403 = vand.u32 %v5402, 4294901760
        %5404 = vmatpush1.msra.mxu0 %v5403
        %5405 = vmatprep.subr.mxu0 0.0
        %v5406 = vand.u32 %v4813, 4294901760
        %v5407 = vsub.f32 %v4813, %v5406
        %v5408 = vand.u32 %v5407, 4294901760
        %5409 = vmatpush1.msra.mxu0 %v5408
        %5410 = vmatprep.subr.mxu0 0.0
        %v5411 = vand.u32 %v4814, 4294901760
        %v5412 = vsub.f32 %v4814, %v5411
        %v5413 = vand.u32 %v5412, 4294901760
        %5414 = vmatpush1.msra.mxu0 %v5413
        %5415 = vmatprep.subr.mxu0 0.0
        %v5416 = vand.u32 %v4815, 4294901760
        %v5417 = vsub.f32 %v4815, %v5416
        %v5418 = vand.u32 %v5417, 4294901760
        %5419 = vmatpush1.msra.mxu0 %v5418
        %5420 = vmatprep.subr.mxu0 0.0
        %v5421 = vand.u32 %v4816, 4294901760
        %v5422 = vsub.f32 %v4816, %v5421
        %v5423 = vand.u32 %v5422, 4294901760
        %5424 = vmatpush1.msra.mxu0 %v5423
        %5425 = vmatprep.subr.mxu0 0.0
        %5426 = vmatpush1.msra.mxu0 0.0
        %5427 = vmatprep.subr.mxu0 0.0
        %5428 = vmatpush1.msra.mxu0 0.0
        %5429 = vmatprep.subr.mxu0 0.0
        %5430 = vmatpush1.msra.mxu0 0.0
        %5431 = vmatprep.subr.mxu0 0.0
        %5432 = vmatpush1.msra.mxu0 0.0
        %5433 = vmatprep.subr.mxu0 0.0
        %5434 = vmatpush1.msra.mxu0 0.0
        %5435 = vmatprep.subr.mxu0 0.0
        %5436 = vmatpush1.msra.mxu0 0.0
        %5437 = vmatprep.subr.mxu0 0.0
        %5438 = vmatpush1.msra.mxu0 0.0
        %5439 = vmatprep.subr.mxu0 0.0
        %5440 = vmatpush1.msra.mxu0 0.0
        %5441 = vmatprep.subr.mxu0 0.0
        %5442 = vmatpush1.msra.mxu0 0.0
        %5443 = vmatprep.subr.mxu0 0.0
        %5444 = vmatpush1.msra.mxu0 0.0
        %5445 = vmatprep.subr.mxu0 0.0
        %5446 = vmatpush1.msra.mxu0 0.0
        %5447 = vmatprep.subr.mxu0 0.0
        %5448 = vmatpush1.msra.mxu0 0.0
        %5449 = vmatprep.subr.mxu0 0.0
        %5450 = vmatpush1.msra.mxu0 0.0
        %5451 = vmatprep.subr.mxu0 0.0
        %5452 = vmatpush1.msra.mxu0 0.0
        %5453 = vmatprep.subr.mxu0 0.0
        %5454 = vmatpush1.msra.mxu0 0.0
        %5455 = vmatprep.subr.mxu0 0.0
        %5456 = vmatpush1.msra.mxu0 0.0
        %5457 = vmatprep.mubr.f32.mxu0 0.0
        %v5458 = vand.u32 %v4004, 4294901760
        %5459 = vmatmul.mubr.f32.gmra.mrb[0].mxu0 %v5458
        %v5460 = vpop.f32.mrb[0].mxu0
        %v5461 = vadd.f32 %v5318, %v5460
        %v5462 = vpop.f32.mrb[0].mxu0
        %5463 = vmatprep.mubr.f32.mxu0 0.0
        %v5464 = vand.u32 %v4005, 4294901760
        %5465 = vmatmul.mubr.f32.gmra.mrb[0].mxu0 %v5464
        %v5466 = vpop.f32.mrb[0].mxu0
        %v5467 = vadd.f32 %v5326, %v5466
        %v5468 = vpop.f32.mrb[0].mxu0
        %5469 = vmatprep.mubr.f32.mxu0 0.0
        %v5470 = vand.u32 %v4006, 4294901760
        %5471 = vmatmul.mubr.f32.gmra.mrb[0].mxu0 %v5470
        %v5472 = vpop.f32.mrb[0].mxu0
        %v5473 = vadd.f32 %v5334, %v5472
        %v5474 = vpop.f32.mrb[0].mxu0
        %5475 = vmatprep.mubr.f32.mxu0 0.0
        %v5476 = vand.u32 %v4007, 4294901760
        %5477 = vmatmul.mubr.f32.gmra.mrb[0].mxu0 %v5476
        %v5478 = vpop.f32.mrb[0].mxu0
        %v5479 = vadd.f32 %v5342, %v5478
        %v5480 = vpop.f32.mrb[0].mxu0
        %5481 = vdwg.mxu0
        %5482 = vmatprep.subr.mxu0 0.0
        %v5483 = vand.u32 %v4801, 4294901760
        %5484 = vmatpush1.msra.mxu0 %v5483
        %5485 = vmatprep.subr.mxu0 0.0
        %v5486 = vand.u32 %v4802, 4294901760
        %5487 = vmatpush1.msra.mxu0 %v5486
        %5488 = vmatprep.subr.mxu0 0.0
        %v5489 = vand.u32 %v4803, 4294901760
        %5490 = vmatpush1.msra.mxu0 %v5489
        %5491 = vmatprep.subr.mxu0 0.0
        %v5492 = vand.u32 %v4804, 4294901760
        %5493 = vmatpush1.msra.mxu0 %v5492
        %5494 = vmatprep.subr.mxu0 0.0
        %v5495 = vand.u32 %v4805, 4294901760
        %5496 = vmatpush1.msra.mxu0 %v5495
        %5497 = vmatprep.subr.mxu0 0.0
        %v5498 = vand.u32 %v4806, 4294901760
        %5499 = vmatpush1.msra.mxu0 %v5498
        %5500 = vmatprep.subr.mxu0 0.0
        %v5501 = vand.u32 %v4807, 4294901760
        %5502 = vmatpush1.msra.mxu0 %v5501
        %5503 = vmatprep.subr.mxu0 0.0
        %v5504 = vand.u32 %v4808, 4294901760
        %5505 = vmatpush1.msra.mxu0 %v5504
        %5506 = vmatprep.subr.mxu0 0.0
        %v5507 = vand.u32 %v4809, 4294901760
        %5508 = vmatpush1.msra.mxu0 %v5507
        %5509 = vmatprep.subr.mxu0 0.0
        %v5510 = vand.u32 %v4810, 4294901760
        %5511 = vmatpush1.msra.mxu0 %v5510
        %5512 = vmatprep.subr.mxu0 0.0
        %v5513 = vand.u32 %v4811, 4294901760
        %5514 = vmatpush1.msra.mxu0 %v5513
        %5515 = vmatprep.subr.mxu0 0.0
        %v5516 = vand.u32 %v4812, 4294901760
        %5517 = vmatpush1.msra.mxu0 %v5516
        %5518 = vmatprep.subr.mxu0 0.0
        %v5519 = vand.u32 %v4813, 4294901760
        %5520 = vmatpush1.msra.mxu0 %v5519
        %5521 = vmatprep.subr.mxu0 0.0
        %v5522 = vand.u32 %v4814, 4294901760
        %5523 = vmatpush1.msra.mxu0 %v5522
        %5524 = vmatprep.subr.mxu0 0.0
        %v5525 = vand.u32 %v4815, 4294901760
        %5526 = vmatpush1.msra.mxu0 %v5525
        %5527 = vmatprep.subr.mxu0 0.0
        %v5528 = vand.u32 %v4816, 4294901760
        %5529 = vmatpush1.msra.mxu0 %v5528
        %5530 = vmatprep.subr.mxu0 0.0
        %5531 = vmatpush1.msra.mxu0 0.0
        %5532 = vmatprep.subr.mxu0 0.0
        %5533 = vmatpush1.msra.mxu0 0.0
        %5534 = vmatprep.subr.mxu0 0.0
        %5535 = vmatpush1.msra.mxu0 0.0
        %5536 = vmatprep.subr.mxu0 0.0
        %5537 = vmatpush1.msra.mxu0 0.0
        %5538 = vmatprep.subr.mxu0 0.0
        %5539 = vmatpush1.msra.mxu0 0.0
        %5540 = vmatprep.subr.mxu0 0.0
        %5541 = vmatpush1.msra.mxu0 0.0
        %5542 = vmatprep.subr.mxu0 0.0
        %5543 = vmatpush1.msra.mxu0 0.0
        %5544 = vmatprep.subr.mxu0 0.0
        %5545 = vmatpush1.msra.mxu0 0.0
        %5546 = vmatprep.subr.mxu0 0.0
        %5547 = vmatpush1.msra.mxu0 0.0
        %5548 = vmatprep.subr.mxu0 0.0
        %5549 = vmatpush1.msra.mxu0 0.0
        %5550 = vmatprep.subr.mxu0 0.0
        %5551 = vmatpush1.msra.mxu0 0.0
        %5552 = vmatprep.subr.mxu0 0.0
        %5553 = vmatpush1.msra.mxu0 0.0
        %5554 = vmatprep.subr.mxu0 0.0
        %5555 = vmatpush1.msra.mxu0 0.0
        %5556 = vmatprep.subr.mxu0 0.0
        %5557 = vmatpush1.msra.mxu0 0.0
        %5558 = vmatprep.subr.mxu0 0.0
        %5559 = vmatpush1.msra.mxu0 0.0
        %5560 = vmatprep.subr.mxu0 0.0
        %5561 = vmatpush1.msra.mxu0 0.0
        %5562 = vmatprep.mubr.f32.mxu0 0.0
        %v5563 = vand.u32 %v4004, 4294901760
        %5564 = vmatmul.mubr.f32.gmra.mrb[0].mxu0 %v5563
        %v5565 = vpop.f32.mrb[0].mxu0
        %v5566 = vadd.f32 %v5461, %v5565
        %v5567 = vpop.f32.mrb[0].mxu0
        %5568 = vmatprep.mubr.f32.mxu0 0.0
        %v5569 = vand.u32 %v4005, 4294901760
        %5570 = vmatmul.mubr.f32.gmra.mrb[0].mxu0 %v5569
        %v5571 = vpop.f32.mrb[0].mxu0
        %v5572 = vadd.f32 %v5467, %v5571
        %v5573 = vpop.f32.mrb[0].mxu0
        %5574 = vmatprep.mubr.f32.mxu0 0.0
        %v5575 = vand.u32 %v4006, 4294901760
        %5576 = vmatmul.mubr.f32.gmra.mrb[0].mxu0 %v5575
        %v5577 = vpop.f32.mrb[0].mxu0
        %v5578 = vadd.f32 %v5473, %v5577
        %v5579 = vpop.f32.mrb[0].mxu0
        %5580 = vmatprep.mubr.f32.mxu0 0.0
        %v5581 = vand.u32 %v4007, 4294901760
        %5582 = vmatmul.mubr.f32.gmra.mrb[0].mxu0 %v5581
        %v5583 = vpop.f32.mrb[0].mxu0
        %v5584 = vadd.f32 %v5479, %v5583
        %v5585 = vpop.f32.mrb[0].mxu0
        %5586 = vdwg.mxu0
        %v5587 = vpack.c.bf16 %v4786, %v4780
        %v5588 = vpack.c.bf16 %v4798, %v4792
        %5589 = vst [vmem:[#allocation2] sm:$0xff] %v5587
        %5590 = vst [vmem:[#allocation2 + $0x8] sm:$0xff] %v5588
        %v5591 = vpack.c.bf16 %v5572, %v5566
        %v5592 = vpack.c.bf16 %v5584, %v5578
        %5593 = vst [vmem:[#allocation3] sm:$0xff] %v5591
        %5594 = vst [vmem:[#allocation3 + $0x8] sm:$0xff] %v5592
      $region96: #{gnn_forward.1} parent=83 // pred_fallthru
        _
      %p5595 = pnand %p2123, %p3146
      %p5596 = pneg %p5595
      // Predicated region
      $region97: #{gnn_forward.1} parent=83 // pred_check
        _
      $region98: #{gnn_forward.1} parent=83 // pred_check_branch
        %5598 = sbr.rel (%p5595) target = $region100
      $region99: #{gnn_forward.1} parent=83 // pred_region
        %v5599 = vld [vmem:[#allocation4] sm:$0xff]
        %v5600 = vld [vmem:[#allocation4 + $0x8] sm:$0xff]
        %v5601 = vld [vmem:[#allocation4 + $0x10] sm:$0xff]
        %v5602 = vld [vmem:[#allocation4 + $0x18] sm:$0xff]
        %v5603 = vld [vmem:[%s2] sm:$0xff]
        %v5604 = vld [vmem:[%s2 + $0x8] sm:$0xff]
        %v5605 = vld [vmem:[%s2 + $0x10] sm:$0xff]
        %v5606 = vld [vmem:[%s2 + $0x18] sm:$0xff]
        %5608 = vset.pattern.permute.xlu0 0
        %5609 = vperm.xlu0 %5608, %v5603
        %v5610 = vpop.permute.xlu0 %5609
        %5613 = vset.pattern.permute.xlu0 0
        %5614 = vperm.xlu0 %5613, %v5604
        %v5615 = vpop.permute.xlu0 %5614
        %5618 = vset.pattern.permute.xlu0 0
        %5619 = vperm.xlu0 %5618, %v5605
        %v5620 = vpop.permute.xlu0 %5619
        %5623 = vset.pattern.permute.xlu0 0
        %5624 = vperm.xlu0 %5623, %v5606
        %v5625 = vpop.permute.xlu0 %5624
        %v5627 = vmul.f32 %v5599, %v5610
        %v5628 = vmul.f32 %v5600, %v5615
        %v5629 = vmul.f32 %v5601, %v5620
        %v5630 = vmul.f32 %v5602, %v5625
        %v5631 = vld [vmem:[%s12] sm:$0xff]
        %v5632 = vld [vmem:[%s12 + $0x8] sm:$0xff]
        %v5633 = vld [vmem:[%s12 + $0x10] sm:$0xff]
        %v5634 = vld [vmem:[%s12 + $0x18] sm:$0xff]
        %v5635 = vld [vmem:[%s12 + $0x20] sm:$0xff]
        %v5636 = vld [vmem:[%s12 + $0x28] sm:$0xff]
        %v5637 = vld [vmem:[%s12 + $0x30] sm:$0xff]
        %v5638 = vld [vmem:[%s12 + $0x38] sm:$0xff]
        %v5639 = vld [vmem:[%s12 + $0x40] sm:$0xff]
        %v5640 = vld [vmem:[%s12 + $0x48] sm:$0xff]
        %v5641 = vld [vmem:[%s12 + $0x50] sm:$0xff]
        %v5642 = vld [vmem:[%s12 + $0x58] sm:$0xff]
        %v5643 = vld [vmem:[%s12 + $0x60] sm:$0xff]
        %v5644 = vld [vmem:[%s12 + $0x68] sm:$0xff]
        %v5645 = vld [vmem:[%s12 + $0x70] sm:$0xff]
        %v5646 = vld [vmem:[%s12 + $0x78] sm:$0xff]
        %v5647 = vld [vmem:[%s13] sm:$0x1]
        %v5649 = vlaneseq
        %v5650 = vshrl.u32 %v5649, 7
        %v5651 = vsub.s32 0, %v5650
        %v5652 = vrot.slane %v5647, %v5651
        %5654 = vmatprep.subr.mxu0 0.0
        %v5655 = vand.u32 %v5631, 4294901760
        %5656 = vmatpush1.msra.mxu0 %v5655
        %5657 = vmatprep.subr.mxu0 0.0
        %v5658 = vand.u32 %v5632, 4294901760
        %5659 = vmatpush1.msra.mxu0 %v5658
        %5660 = vmatprep.subr.mxu0 0.0
        %v5661 = vand.u32 %v5633, 4294901760
        %5662 = vmatpush1.msra.mxu0 %v5661
        %5663 = vmatprep.subr.mxu0 0.0
        %v5664 = vand.u32 %v5634, 4294901760
        %5665 = vmatpush1.msra.mxu0 %v5664
        %5666 = vmatprep.subr.mxu0 0.0
        %v5667 = vand.u32 %v5635, 4294901760
        %5668 = vmatpush1.msra.mxu0 %v5667
        %5669 = vmatprep.subr.mxu0 0.0
        %v5670 = vand.u32 %v5636, 4294901760
        %5671 = vmatpush1.msra.mxu0 %v5670
        %5672 = vmatprep.subr.mxu0 0.0
        %v5673 = vand.u32 %v5637, 4294901760
        %5674 = vmatpush1.msra.mxu0 %v5673
        %5675 = vmatprep.subr.mxu0 0.0
        %v5676 = vand.u32 %v5638, 4294901760
        %5677 = vmatpush1.msra.mxu0 %v5676
        %5678 = vmatprep.subr.mxu0 0.0
        %v5679 = vand.u32 %v5639, 4294901760
        %5680 = vmatpush1.msra.mxu0 %v5679
        %5681 = vmatprep.subr.mxu0 0.0
        %v5682 = vand.u32 %v5640, 4294901760
        %5683 = vmatpush1.msra.mxu0 %v5682
        %5684 = vmatprep.subr.mxu0 0.0
        %v5685 = vand.u32 %v5641, 4294901760
        %5686 = vmatpush1.msra.mxu0 %v5685
        %5687 = vmatprep.subr.mxu0 0.0
        %v5688 = vand.u32 %v5642, 4294901760
        %5689 = vmatpush1.msra.mxu0 %v5688
        %5690 = vmatprep.subr.mxu0 0.0
        %v5691 = vand.u32 %v5643, 4294901760
        %5692 = vmatpush1.msra.mxu0 %v5691
        %5693 = vmatprep.subr.mxu0 0.0
        %v5694 = vand.u32 %v5644, 4294901760
        %5695 = vmatpush1.msra.mxu0 %v5694
        %5696 = vmatprep.subr.mxu0 0.0
        %v5697 = vand.u32 %v5645, 4294901760
        %5698 = vmatpush1.msra.mxu0 %v5697
        %5699 = vmatprep.subr.mxu0 0.0
        %v5700 = vand.u32 %v5646, 4294901760
        %5701 = vmatpush1.msra.mxu0 %v5700
        %5702 = vmatprep.subr.mxu0 0.0
        %5703 = vmatpush1.msra.mxu0 0.0
        %5704 = vmatprep.subr.mxu0 0.0
        %5705 = vmatpush1.msra.mxu0 0.0
        %5706 = vmatprep.subr.mxu0 0.0
        %5707 = vmatpush1.msra.mxu0 0.0
        %5708 = vmatprep.subr.mxu0 0.0
        %5709 = vmatpush1.msra.mxu0 0.0
        %5710 = vmatprep.subr.mxu0 0.0
        %5711 = vmatpush1.msra.mxu0 0.0
        %5712 = vmatprep.subr.mxu0 0.0
        %5713 = vmatpush1.msra.mxu0 0.0
        %5714 = vmatprep.subr.mxu0 0.0
        %5715 = vmatpush1.msra.mxu0 0.0
        %5716 = vmatprep.subr.mxu0 0.0
        %5717 = vmatpush1.msra.mxu0 0.0
        %5718 = vmatprep.subr.mxu0 0.0
        %5719 = vmatpush1.msra.mxu0 0.0
        %5720 = vmatprep.subr.mxu0 0.0
        %5721 = vmatpush1.msra.mxu0 0.0
        %5722 = vmatprep.subr.mxu0 0.0
        %5723 = vmatpush1.msra.mxu0 0.0
        %5724 = vmatprep.subr.mxu0 0.0
        %5725 = vmatpush1.msra.mxu0 0.0
        %5726 = vmatprep.subr.mxu0 0.0
        %5727 = vmatpush1.msra.mxu0 0.0
        %5728 = vmatprep.subr.mxu0 0.0
        %5729 = vmatpush1.msra.mxu0 0.0
        %5730 = vmatprep.subr.mxu0 0.0
        %5731 = vmatpush1.msra.mxu0 0.0
        %5732 = vmatprep.subr.mxu0 0.0
        %5733 = vmatpush1.msra.mxu0 0.0
        %5734 = vmatprep.mubr.f32.mxu0 0.0
        %v5735 = vand.u32 %v5627, 4294901760
        %v5736 = vsub.f32 %v5627, %v5735
        %v5737 = vand.u32 %v5736, 4294901760
        %v5738 = vsub.f32 %v5736, %v5737
        %v5739 = vand.u32 %v5738, 4294901760
        %5740 = vmatmul.mubr.f32.gmra.mrb[0].mxu0 %v5739
        %v5741 = vpop.f32.mrb[0].mxu0
        %v5742 = vadd.f32 %v5652, %v5741
        %v5743 = vpop.f32.mrb[0].mxu0
        %5744 = vmatprep.mubr.f32.mxu0 0.0
        %v5745 = vand.u32 %v5628, 4294901760
        %v5746 = vsub.f32 %v5628, %v5745
        %v5747 = vand.u32 %v5746, 4294901760
        %v5748 = vsub.f32 %v5746, %v5747
        %v5749 = vand.u32 %v5748, 4294901760
        %5750 = vmatmul.mubr.f32.gmra.mrb[0].mxu0 %v5749
        %v5751 = vpop.f32.mrb[0].mxu0
        %v5752 = vadd.f32 %v5652, %v5751
        %v5753 = vpop.f32.mrb[0].mxu0
        %5754 = vmatprep.mubr.f32.mxu0 0.0
        %v5755 = vand.u32 %v5629, 4294901760
        %v5756 = vsub.f32 %v5629, %v5755
        %v5757 = vand.u32 %v5756, 4294901760
        %v5758 = vsub.f32 %v5756, %v5757
        %v5759 = vand.u32 %v5758, 4294901760
        %5760 = vmatmul.mubr.f32.gmra.mrb[0].mxu0 %v5759
        %v5761 = vpop.f32.mrb[0].mxu0
        %v5762 = vadd.f32 %v5652, %v5761
        %v5763 = vpop.f32.mrb[0].mxu0
        %5764 = vmatprep.mubr.f32.mxu0 0.0
        %v5765 = vand.u32 %v5630, 4294901760
        %v5766 = vsub.f32 %v5630, %v5765
        %v5767 = vand.u32 %v5766, 4294901760
        %v5768 = vsub.f32 %v5766, %v5767
        %v5769 = vand.u32 %v5768, 4294901760
        %5770 = vmatmul.mubr.f32.gmra.mrb[0].mxu0 %v5769
        %v5771 = vpop.f32.mrb[0].mxu0
        %v5772 = vadd.f32 %v5652, %v5771
        %v5773 = vpop.f32.mrb[0].mxu0
        %5774 = vdwg.mxu0
        %5775 = vmatprep.subr.mxu0 0.0
        %v5776 = vand.u32 %v5631, 4294901760
        %v5777 = vsub.f32 %v5631, %v5776
        %v5778 = vand.u32 %v5777, 4294901760
        %v5779 = vsub.f32 %v5777, %v5778
        %v5780 = vand.u32 %v5779, 4294901760
        %5781 = vmatpush1.msra.mxu0 %v5780
        %5782 = vmatprep.subr.mxu0 0.0
        %v5783 = vand.u32 %v5632, 4294901760
        %v5784 = vsub.f32 %v5632, %v5783
        %v5785 = vand.u32 %v5784, 4294901760
        %v5786 = vsub.f32 %v5784, %v5785
        %v5787 = vand.u32 %v5786, 4294901760
        %5788 = vmatpush1.msra.mxu0 %v5787
        %5789 = vmatprep.subr.mxu0 0.0
        %v5790 = vand.u32 %v5633, 4294901760
        %v5791 = vsub.f32 %v5633, %v5790
        %v5792 = vand.u32 %v5791, 4294901760
        %v5793 = vsub.f32 %v5791, %v5792
        %v5794 = vand.u32 %v5793, 4294901760
        %5795 = vmatpush1.msra.mxu0 %v5794
        %5796 = vmatprep.subr.mxu0 0.0
        %v5797 = vand.u32 %v5634, 4294901760
        %v5798 = vsub.f32 %v5634, %v5797
        %v5799 = vand.u32 %v5798, 4294901760
        %v5800 = vsub.f32 %v5798, %v5799
        %v5801 = vand.u32 %v5800, 4294901760
        %5802 = vmatpush1.msra.mxu0 %v5801
        %5803 = vmatprep.subr.mxu0 0.0
        %v5804 = vand.u32 %v5635, 4294901760
        %v5805 = vsub.f32 %v5635, %v5804
        %v5806 = vand.u32 %v5805, 4294901760
        %v5807 = vsub.f32 %v5805, %v5806
        %v5808 = vand.u32 %v5807, 4294901760
        %5809 = vmatpush1.msra.mxu0 %v5808
        %5810 = vmatprep.subr.mxu0 0.0
        %v5811 = vand.u32 %v5636, 4294901760
        %v5812 = vsub.f32 %v5636, %v5811
        %v5813 = vand.u32 %v5812, 4294901760
        %v5814 = vsub.f32 %v5812, %v5813
        %v5815 = vand.u32 %v5814, 4294901760
        %5816 = vmatpush1.msra.mxu0 %v5815
        %5817 = vmatprep.subr.mxu0 0.0
        %v5818 = vand.u32 %v5637, 4294901760
        %v5819 = vsub.f32 %v5637, %v5818
        %v5820 = vand.u32 %v5819, 4294901760
        %v5821 = vsub.f32 %v5819, %v5820
        %v5822 = vand.u32 %v5821, 4294901760
        %5823 = vmatpush1.msra.mxu0 %v5822
        %5824 = vmatprep.subr.mxu0 0.0
        %v5825 = vand.u32 %v5638, 4294901760
        %v5826 = vsub.f32 %v5638, %v5825
        %v5827 = vand.u32 %v5826, 4294901760
        %v5828 = vsub.f32 %v5826, %v5827
        %v5829 = vand.u32 %v5828, 4294901760
        %5830 = vmatpush1.msra.mxu0 %v5829
        %5831 = vmatprep.subr.mxu0 0.0
        %v5832 = vand.u32 %v5639, 4294901760
        %v5833 = vsub.f32 %v5639, %v5832
        %v5834 = vand.u32 %v5833, 4294901760
        %v5835 = vsub.f32 %v5833, %v5834
        %v5836 = vand.u32 %v5835, 4294901760
        %5837 = vmatpush1.msra.mxu0 %v5836
        %5838 = vmatprep.subr.mxu0 0.0
        %v5839 = vand.u32 %v5640, 4294901760
        %v5840 = vsub.f32 %v5640, %v5839
        %v5841 = vand.u32 %v5840, 4294901760
        %v5842 = vsub.f32 %v5840, %v5841
        %v5843 = vand.u32 %v5842, 4294901760
        %5844 = vmatpush1.msra.mxu0 %v5843
        %5845 = vmatprep.subr.mxu0 0.0
        %v5846 = vand.u32 %v5641, 4294901760
        %v5847 = vsub.f32 %v5641, %v5846
        %v5848 = vand.u32 %v5847, 4294901760
        %v5849 = vsub.f32 %v5847, %v5848
        %v5850 = vand.u32 %v5849, 4294901760
        %5851 = vmatpush1.msra.mxu0 %v5850
        %5852 = vmatprep.subr.mxu0 0.0
        %v5853 = vand.u32 %v5642, 4294901760
        %v5854 = vsub.f32 %v5642, %v5853
        %v5855 = vand.u32 %v5854, 4294901760
        %v5856 = vsub.f32 %v5854, %v5855
        %v5857 = vand.u32 %v5856, 4294901760
        %5858 = vmatpush1.msra.mxu0 %v5857
        %5859 = vmatprep.subr.mxu0 0.0
        %v5860 = vand.u32 %v5643, 4294901760
        %v5861 = vsub.f32 %v5643, %v5860
        %v5862 = vand.u32 %v5861, 4294901760
        %v5863 = vsub.f32 %v5861, %v5862
        %v5864 = vand.u32 %v5863, 4294901760
        %5865 = vmatpush1.msra.mxu0 %v5864
        %5866 = vmatprep.subr.mxu0 0.0
        %v5867 = vand.u32 %v5644, 4294901760
        %v5868 = vsub.f32 %v5644, %v5867
        %v5869 = vand.u32 %v5868, 4294901760
        %v5870 = vsub.f32 %v5868, %v5869
        %v5871 = vand.u32 %v5870, 4294901760
        %5872 = vmatpush1.msra.mxu0 %v5871
        %5873 = vmatprep.subr.mxu0 0.0
        %v5874 = vand.u32 %v5645, 4294901760
        %v5875 = vsub.f32 %v5645, %v5874
        %v5876 = vand.u32 %v5875, 4294901760
        %v5877 = vsub.f32 %v5875, %v5876
        %v5878 = vand.u32 %v5877, 4294901760
        %5879 = vmatpush1.msra.mxu0 %v5878
        %5880 = vmatprep.subr.mxu0 0.0
        %v5881 = vand.u32 %v5646, 4294901760
        %v5882 = vsub.f32 %v5646, %v5881
        %v5883 = vand.u32 %v5882, 4294901760
        %v5884 = vsub.f32 %v5882, %v5883
        %v5885 = vand.u32 %v5884, 4294901760
        %5886 = vmatpush1.msra.mxu0 %v5885
        %5887 = vmatprep.subr.mxu0 0.0
        %5888 = vmatpush1.msra.mxu0 0.0
        %5889 = vmatprep.subr.mxu0 0.0
        %5890 = vmatpush1.msra.mxu0 0.0
        %5891 = vmatprep.subr.mxu0 0.0
        %5892 = vmatpush1.msra.mxu0 0.0
        %5893 = vmatprep.subr.mxu0 0.0
        %5894 = vmatpush1.msra.mxu0 0.0
        %5895 = vmatprep.subr.mxu0 0.0
        %5896 = vmatpush1.msra.mxu0 0.0
        %5897 = vmatprep.subr.mxu0 0.0
        %5898 = vmatpush1.msra.mxu0 0.0
        %5899 = vmatprep.subr.mxu0 0.0
        %5900 = vmatpush1.msra.mxu0 0.0
        %5901 = vmatprep.subr.mxu0 0.0
        %5902 = vmatpush1.msra.mxu0 0.0
        %5903 = vmatprep.subr.mxu0 0.0
        %5904 = vmatpush1.msra.mxu0 0.0
        %5905 = vmatprep.subr.mxu0 0.0
        %5906 = vmatpush1.msra.mxu0 0.0
        %5907 = vmatprep.subr.mxu0 0.0
        %5908 = vmatpush1.msra.mxu0 0.0
        %5909 = vmatprep.subr.mxu0 0.0
        %5910 = vmatpush1.msra.mxu0 0.0
        %5911 = vmatprep.subr.mxu0 0.0
        %5912 = vmatpush1.msra.mxu0 0.0
        %5913 = vmatprep.subr.mxu0 0.0
        %5914 = vmatpush1.msra.mxu0 0.0
        %5915 = vmatprep.subr.mxu0 0.0
        %5916 = vmatpush1.msra.mxu0 0.0
        %5917 = vmatprep.subr.mxu0 0.0
        %5918 = vmatpush1.msra.mxu0 0.0
        %5919 = vmatprep.mubr.f32.mxu0 0.0
        %v5920 = vand.u32 %v5627, 4294901760
        %5921 = vmatmul.mubr.f32.gmra.mrb[0].mxu0 %v5920
        %v5922 = vpop.f32.mrb[0].mxu0
        %v5923 = vadd.f32 %v5742, %v5922
        %v5924 = vpop.f32.mrb[0].mxu0
        %5925 = vmatprep.mubr.f32.mxu0 0.0
        %v5926 = vand.u32 %v5628, 4294901760
        %5927 = vmatmul.mubr.f32.gmra.mrb[0].mxu0 %v5926
        %v5928 = vpop.f32.mrb[0].mxu0
        %v5929 = vadd.f32 %v5752, %v5928
        %v5930 = vpop.f32.mrb[0].mxu0
        %5931 = vmatprep.mubr.f32.mxu0 0.0
        %v5932 = vand.u32 %v5629, 4294901760
        %5933 = vmatmul.mubr.f32.gmra.mrb[0].mxu0 %v5932
        %v5934 = vpop.f32.mrb[0].mxu0
        %v5935 = vadd.f32 %v5762, %v5934
        %v5936 = vpop.f32.mrb[0].mxu0
        %5937 = vmatprep.mubr.f32.mxu0 0.0
        %v5938 = vand.u32 %v5630, 4294901760
        %5939 = vmatmul.mubr.f32.gmra.mrb[0].mxu0 %v5938
        %v5940 = vpop.f32.mrb[0].mxu0
        %v5941 = vadd.f32 %v5772, %v5940
        %v5942 = vpop.f32.mrb[0].mxu0
        %5943 = vdwg.mxu0
        %5944 = vmatprep.subr.mxu0 0.0
        %v5945 = vand.u32 %v5631, 4294901760
        %v5946 = vsub.f32 %v5631, %v5945
        %5947 = vmatpush1.msra.mxu0 %v5946
        %5948 = vmatprep.subr.mxu0 0.0
        %v5949 = vand.u32 %v5632, 4294901760
        %v5950 = vsub.f32 %v5632, %v5949
        %5951 = vmatpush1.msra.mxu0 %v5950
        %5952 = vmatprep.subr.mxu0 0.0
        %v5953 = vand.u32 %v5633, 4294901760
        %v5954 = vsub.f32 %v5633, %v5953
        %5955 = vmatpush1.msra.mxu0 %v5954
        %5956 = vmatprep.subr.mxu0 0.0
        %v5957 = vand.u32 %v5634, 4294901760
        %v5958 = vsub.f32 %v5634, %v5957
        %5959 = vmatpush1.msra.mxu0 %v5958
        %5960 = vmatprep.subr.mxu0 0.0
        %v5961 = vand.u32 %v5635, 4294901760
        %v5962 = vsub.f32 %v5635, %v5961
        %5963 = vmatpush1.msra.mxu0 %v5962
        %5964 = vmatprep.subr.mxu0 0.0
        %v5965 = vand.u32 %v5636, 4294901760
        %v5966 = vsub.f32 %v5636, %v5965
        %5967 = vmatpush1.msra.mxu0 %v5966
        %5968 = vmatprep.subr.mxu0 0.0
        %v5969 = vand.u32 %v5637, 4294901760
        %v5970 = vsub.f32 %v5637, %v5969
        %5971 = vmatpush1.msra.mxu0 %v5970
        %5972 = vmatprep.subr.mxu0 0.0
        %v5973 = vand.u32 %v5638, 4294901760
        %v5974 = vsub.f32 %v5638, %v5973
        %5975 = vmatpush1.msra.mxu0 %v5974
        %5976 = vmatprep.subr.mxu0 0.0
        %v5977 = vand.u32 %v5639, 4294901760
        %v5978 = vsub.f32 %v5639, %v5977
        %5979 = vmatpush1.msra.mxu0 %v5978
        %5980 = vmatprep.subr.mxu0 0.0
        %v5981 = vand.u32 %v5640, 4294901760
        %v5982 = vsub.f32 %v5640, %v5981
        %5983 = vmatpush1.msra.mxu0 %v5982
        %5984 = vmatprep.subr.mxu0 0.0
        %v5985 = vand.u32 %v5641, 4294901760
        %v5986 = vsub.f32 %v5641, %v5985
        %5987 = vmatpush1.msra.mxu0 %v5986
        %5988 = vmatprep.subr.mxu0 0.0
        %v5989 = vand.u32 %v5642, 4294901760
        %v5990 = vsub.f32 %v5642, %v5989
        %5991 = vmatpush1.msra.mxu0 %v5990
        %5992 = vmatprep.subr.mxu0 0.0
        %v5993 = vand.u32 %v5643, 4294901760
        %v5994 = vsub.f32 %v5643, %v5993
        %5995 = vmatpush1.msra.mxu0 %v5994
        %5996 = vmatprep.subr.mxu0 0.0
        %v5997 = vand.u32 %v5644, 4294901760
        %v5998 = vsub.f32 %v5644, %v5997
        %5999 = vmatpush1.msra.mxu0 %v5998
        %6000 = vmatprep.subr.mxu0 0.0
        %v6001 = vand.u32 %v5645, 4294901760
        %v6002 = vsub.f32 %v5645, %v6001
        %6003 = vmatpush1.msra.mxu0 %v6002
        %6004 = vmatprep.subr.mxu0 0.0
        %v6005 = vand.u32 %v5646, 4294901760
        %v6006 = vsub.f32 %v5646, %v6005
        %6007 = vmatpush1.msra.mxu0 %v6006
        %6008 = vmatprep.subr.mxu0 0.0
        %6009 = vmatpush1.msra.mxu0 0.0
        %6010 = vmatprep.subr.mxu0 0.0
        %6011 = vmatpush1.msra.mxu0 0.0
        %6012 = vmatprep.subr.mxu0 0.0
        %6013 = vmatpush1.msra.mxu0 0.0
        %6014 = vmatprep.subr.mxu0 0.0
        %6015 = vmatpush1.msra.mxu0 0.0
        %6016 = vmatprep.subr.mxu0 0.0
        %6017 = vmatpush1.msra.mxu0 0.0
        %6018 = vmatprep.subr.mxu0 0.0
        %6019 = vmatpush1.msra.mxu0 0.0
        %6020 = vmatprep.subr.mxu0 0.0
        %6021 = vmatpush1.msra.mxu0 0.0
        %6022 = vmatprep.subr.mxu0 0.0
        %6023 = vmatpush1.msra.mxu0 0.0
        %6024 = vmatprep.subr.mxu0 0.0
        %6025 = vmatpush1.msra.mxu0 0.0
        %6026 = vmatprep.subr.mxu0 0.0
        %6027 = vmatpush1.msra.mxu0 0.0
        %6028 = vmatprep.subr.mxu0 0.0
        %6029 = vmatpush1.msra.mxu0 0.0
        %6030 = vmatprep.subr.mxu0 0.0
        %6031 = vmatpush1.msra.mxu0 0.0
        %6032 = vmatprep.subr.mxu0 0.0
        %6033 = vmatpush1.msra.mxu0 0.0
        %6034 = vmatprep.subr.mxu0 0.0
        %6035 = vmatpush1.msra.mxu0 0.0
        %6036 = vmatprep.subr.mxu0 0.0
        %6037 = vmatpush1.msra.mxu0 0.0
        %6038 = vmatprep.subr.mxu0 0.0
        %6039 = vmatpush1.msra.mxu0 0.0
        %6040 = vmatprep.mubr.f32.mxu0 0.0
        %v6041 = vand.u32 %v5627, 4294901760
        %v6042 = vsub.f32 %v5627, %v6041
        %6043 = vmatmul.mubr.f32.gmra.mrb[0].mxu0 %v6042
        %v6044 = vpop.f32.mrb[0].mxu0
        %v6045 = vadd.f32 %v5923, %v6044
        %v6046 = vpop.f32.mrb[0].mxu0
        %6047 = vmatprep.mubr.f32.mxu0 0.0
        %v6048 = vand.u32 %v5628, 4294901760
        %v6049 = vsub.f32 %v5628, %v6048
        %6050 = vmatmul.mubr.f32.gmra.mrb[0].mxu0 %v6049
        %v6051 = vpop.f32.mrb[0].mxu0
        %v6052 = vadd.f32 %v5929, %v6051
        %v6053 = vpop.f32.mrb[0].mxu0
        %6054 = vmatprep.mubr.f32.mxu0 0.0
        %v6055 = vand.u32 %v5629, 4294901760
        %v6056 = vsub.f32 %v5629, %v6055
        %6057 = vmatmul.mubr.f32.gmra.mrb[0].mxu0 %v6056
        %v6058 = vpop.f32.mrb[0].mxu0
        %v6059 = vadd.f32 %v5935, %v6058
        %v6060 = vpop.f32.mrb[0].mxu0
        %6061 = vmatprep.mubr.f32.mxu0 0.0
        %v6062 = vand.u32 %v5630, 4294901760
        %v6063 = vsub.f32 %v5630, %v6062
        %6064 = vmatmul.mubr.f32.gmra.mrb[0].mxu0 %v6063
        %v6065 = vpop.f32.mrb[0].mxu0
        %v6066 = vadd.f32 %v5941, %v6065
        %v6067 = vpop.f32.mrb[0].mxu0
        %6068 = vdwg.mxu0
        %6069 = vmatprep.subr.mxu0 0.0
        %v6070 = vand.u32 %v5631, 4294901760
        %6071 = vmatpush1.msra.mxu0 %v6070
        %6072 = vmatprep.subr.mxu0 0.0
        %v6073 = vand.u32 %v5632, 4294901760
        %6074 = vmatpush1.msra.mxu0 %v6073
        %6075 = vmatprep.subr.mxu0 0.0
        %v6076 = vand.u32 %v5633, 4294901760
        %6077 = vmatpush1.msra.mxu0 %v6076
        %6078 = vmatprep.subr.mxu0 0.0
        %v6079 = vand.u32 %v5634, 4294901760
        %6080 = vmatpush1.msra.mxu0 %v6079
        %6081 = vmatprep.subr.mxu0 0.0
        %v6082 = vand.u32 %v5635, 4294901760
        %6083 = vmatpush1.msra.mxu0 %v6082
        %6084 = vmatprep.subr.mxu0 0.0
        %v6085 = vand.u32 %v5636, 4294901760
        %6086 = vmatpush1.msra.mxu0 %v6085
        %6087 = vmatprep.subr.mxu0 0.0
        %v6088 = vand.u32 %v5637, 4294901760
        %6089 = vmatpush1.msra.mxu0 %v6088
        %6090 = vmatprep.subr.mxu0 0.0
        %v6091 = vand.u32 %v5638, 4294901760
        %6092 = vmatpush1.msra.mxu0 %v6091
        %6093 = vmatprep.subr.mxu0 0.0
        %v6094 = vand.u32 %v5639, 4294901760
        %6095 = vmatpush1.msra.mxu0 %v6094
        %6096 = vmatprep.subr.mxu0 0.0
        %v6097 = vand.u32 %v5640, 4294901760
        %6098 = vmatpush1.msra.mxu0 %v6097
        %6099 = vmatprep.subr.mxu0 0.0
        %v6100 = vand.u32 %v5641, 4294901760
        %6101 = vmatpush1.msra.mxu0 %v6100
        %6102 = vmatprep.subr.mxu0 0.0
        %v6103 = vand.u32 %v5642, 4294901760
        %6104 = vmatpush1.msra.mxu0 %v6103
        %6105 = vmatprep.subr.mxu0 0.0
        %v6106 = vand.u32 %v5643, 4294901760
        %6107 = vmatpush1.msra.mxu0 %v6106
        %6108 = vmatprep.subr.mxu0 0.0
        %v6109 = vand.u32 %v5644, 4294901760
        %6110 = vmatpush1.msra.mxu0 %v6109
        %6111 = vmatprep.subr.mxu0 0.0
        %v6112 = vand.u32 %v5645, 4294901760
        %6113 = vmatpush1.msra.mxu0 %v6112
        %6114 = vmatprep.subr.mxu0 0.0
        %v6115 = vand.u32 %v5646, 4294901760
        %6116 = vmatpush1.msra.mxu0 %v6115
        %6117 = vmatprep.subr.mxu0 0.0
        %6118 = vmatpush1.msra.mxu0 0.0
        %6119 = vmatprep.subr.mxu0 0.0
        %6120 = vmatpush1.msra.mxu0 0.0
        %6121 = vmatprep.subr.mxu0 0.0
        %6122 = vmatpush1.msra.mxu0 0.0
        %6123 = vmatprep.subr.mxu0 0.0
        %6124 = vmatpush1.msra.mxu0 0.0
        %6125 = vmatprep.subr.mxu0 0.0
        %6126 = vmatpush1.msra.mxu0 0.0
        %6127 = vmatprep.subr.mxu0 0.0
        %6128 = vmatpush1.msra.mxu0 0.0
        %6129 = vmatprep.subr.mxu0 0.0
        %6130 = vmatpush1.msra.mxu0 0.0
        %6131 = vmatprep.subr.mxu0 0.0
        %6132 = vmatpush1.msra.mxu0 0.0
        %6133 = vmatprep.subr.mxu0 0.0
        %6134 = vmatpush1.msra.mxu0 0.0
        %6135 = vmatprep.subr.mxu0 0.0
        %6136 = vmatpush1.msra.mxu0 0.0
        %6137 = vmatprep.subr.mxu0 0.0
        %6138 = vmatpush1.msra.mxu0 0.0
        %6139 = vmatprep.subr.mxu0 0.0
        %6140 = vmatpush1.msra.mxu0 0.0
        %6141 = vmatprep.subr.mxu0 0.0
        %6142 = vmatpush1.msra.mxu0 0.0
        %6143 = vmatprep.subr.mxu0 0.0
        %6144 = vmatpush1.msra.mxu0 0.0
        %6145 = vmatprep.subr.mxu0 0.0
        %6146 = vmatpush1.msra.mxu0 0.0
        %6147 = vmatprep.subr.mxu0 0.0
        %6148 = vmatpush1.msra.mxu0 0.0
        %6149 = vmatprep.mubr.f32.mxu0 0.0
        %v6150 = vand.u32 %v5627, 4294901760
        %v6151 = vsub.f32 %v5627, %v6150
        %v6152 = vand.u32 %v6151, 4294901760
        %6153 = vmatmul.mubr.f32.gmra.mrb[0].mxu0 %v6152
        %v6154 = vpop.f32.mrb[0].mxu0
        %v6155 = vadd.f32 %v6045, %v6154
        %v6156 = vpop.f32.mrb[0].mxu0
        %6157 = vmatprep.mubr.f32.mxu0 0.0
        %v6158 = vand.u32 %v5628, 4294901760
        %v6159 = vsub.f32 %v5628, %v6158
        %v6160 = vand.u32 %v6159, 4294901760
        %6161 = vmatmul.mubr.f32.gmra.mrb[0].mxu0 %v6160
        %v6162 = vpop.f32.mrb[0].mxu0
        %v6163 = vadd.f32 %v6052, %v6162
        %v6164 = vpop.f32.mrb[0].mxu0
        %6165 = vmatprep.mubr.f32.mxu0 0.0
        %v6166 = vand.u32 %v5629, 4294901760
        %v6167 = vsub.f32 %v5629, %v6166
        %v6168 = vand.u32 %v6167, 4294901760
        %6169 = vmatmul.mubr.f32.gmra.mrb[0].mxu0 %v6168
        %v6170 = vpop.f32.mrb[0].mxu0
        %v6171 = vadd.f32 %v6059, %v6170
        %v6172 = vpop.f32.mrb[0].mxu0
        %6173 = vmatprep.mubr.f32.mxu0 0.0
        %v6174 = vand.u32 %v5630, 4294901760
        %v6175 = vsub.f32 %v5630, %v6174
        %v6176 = vand.u32 %v6175, 4294901760
        %6177 = vmatmul.mubr.f32.gmra.mrb[0].mxu0 %v6176
        %v6178 = vpop.f32.mrb[0].mxu0
        %v6179 = vadd.f32 %v6066, %v6178
        %v6180 = vpop.f32.mrb[0].mxu0
        %6181 = vdwg.mxu0
        %6182 = vmatprep.subr.mxu0 0.0
        %v6183 = vand.u32 %v5631, 4294901760
        %v6184 = vsub.f32 %v5631, %v6183
        %v6185 = vand.u32 %v6184, 4294901760
        %6186 = vmatpush1.msra.mxu0 %v6185
        %6187 = vmatprep.subr.mxu0 0.0
        %v6188 = vand.u32 %v5632, 4294901760
        %v6189 = vsub.f32 %v5632, %v6188
        %v6190 = vand.u32 %v6189, 4294901760
        %6191 = vmatpush1.msra.mxu0 %v6190
        %6192 = vmatprep.subr.mxu0 0.0
        %v6193 = vand.u32 %v5633, 4294901760
        %v6194 = vsub.f32 %v5633, %v6193
        %v6195 = vand.u32 %v6194, 4294901760
        %6196 = vmatpush1.msra.mxu0 %v6195
        %6197 = vmatprep.subr.mxu0 0.0
        %v6198 = vand.u32 %v5634, 4294901760
        %v6199 = vsub.f32 %v5634, %v6198
        %v6200 = vand.u32 %v6199, 4294901760
        %6201 = vmatpush1.msra.mxu0 %v6200
        %6202 = vmatprep.subr.mxu0 0.0
        %v6203 = vand.u32 %v5635, 4294901760
        %v6204 = vsub.f32 %v5635, %v6203
        %v6205 = vand.u32 %v6204, 4294901760
        %6206 = vmatpush1.msra.mxu0 %v6205
        %6207 = vmatprep.subr.mxu0 0.0
        %v6208 = vand.u32 %v5636, 4294901760
        %v6209 = vsub.f32 %v5636, %v6208
        %v6210 = vand.u32 %v6209, 4294901760
        %6211 = vmatpush1.msra.mxu0 %v6210
        %6212 = vmatprep.subr.mxu0 0.0
        %v6213 = vand.u32 %v5637, 4294901760
        %v6214 = vsub.f32 %v5637, %v6213
        %v6215 = vand.u32 %v6214, 4294901760
        %6216 = vmatpush1.msra.mxu0 %v6215
        %6217 = vmatprep.subr.mxu0 0.0
        %v6218 = vand.u32 %v5638, 4294901760
        %v6219 = vsub.f32 %v5638, %v6218
        %v6220 = vand.u32 %v6219, 4294901760
        %6221 = vmatpush1.msra.mxu0 %v6220
        %6222 = vmatprep.subr.mxu0 0.0
        %v6223 = vand.u32 %v5639, 4294901760
        %v6224 = vsub.f32 %v5639, %v6223
        %v6225 = vand.u32 %v6224, 4294901760
        %6226 = vmatpush1.msra.mxu0 %v6225
        %6227 = vmatprep.subr.mxu0 0.0
        %v6228 = vand.u32 %v5640, 4294901760
        %v6229 = vsub.f32 %v5640, %v6228
        %v6230 = vand.u32 %v6229, 4294901760
        %6231 = vmatpush1.msra.mxu0 %v6230
        %6232 = vmatprep.subr.mxu0 0.0
        %v6233 = vand.u32 %v5641, 4294901760
        %v6234 = vsub.f32 %v5641, %v6233
        %v6235 = vand.u32 %v6234, 4294901760
        %6236 = vmatpush1.msra.mxu0 %v6235
        %6237 = vmatprep.subr.mxu0 0.0
        %v6238 = vand.u32 %v5642, 4294901760
        %v6239 = vsub.f32 %v5642, %v6238
        %v6240 = vand.u32 %v6239, 4294901760
        %6241 = vmatpush1.msra.mxu0 %v6240
        %6242 = vmatprep.subr.mxu0 0.0
        %v6243 = vand.u32 %v5643, 4294901760
        %v6244 = vsub.f32 %v5643, %v6243
        %v6245 = vand.u32 %v6244, 4294901760
        %6246 = vmatpush1.msra.mxu0 %v6245
        %6247 = vmatprep.subr.mxu0 0.0
        %v6248 = vand.u32 %v5644, 4294901760
        %v6249 = vsub.f32 %v5644, %v6248
        %v6250 = vand.u32 %v6249, 4294901760
        %6251 = vmatpush1.msra.mxu0 %v6250
        %6252 = vmatprep.subr.mxu0 0.0
        %v6253 = vand.u32 %v5645, 4294901760
        %v6254 = vsub.f32 %v5645, %v6253
        %v6255 = vand.u32 %v6254, 4294901760
        %6256 = vmatpush1.msra.mxu0 %v6255
        %6257 = vmatprep.subr.mxu0 0.0
        %v6258 = vand.u32 %v5646, 4294901760
        %v6259 = vsub.f32 %v5646, %v6258
        %v6260 = vand.u32 %v6259, 4294901760
        %6261 = vmatpush1.msra.mxu0 %v6260
        %6262 = vmatprep.subr.mxu0 0.0
        %6263 = vmatpush1.msra.mxu0 0.0
        %6264 = vmatprep.subr.mxu0 0.0
        %6265 = vmatpush1.msra.mxu0 0.0
        %6266 = vmatprep.subr.mxu0 0.0
        %6267 = vmatpush1.msra.mxu0 0.0
        %6268 = vmatprep.subr.mxu0 0.0
        %6269 = vmatpush1.msra.mxu0 0.0
        %6270 = vmatprep.subr.mxu0 0.0
        %6271 = vmatpush1.msra.mxu0 0.0
        %6272 = vmatprep.subr.mxu0 0.0
        %6273 = vmatpush1.msra.mxu0 0.0
        %6274 = vmatprep.subr.mxu0 0.0
        %6275 = vmatpush1.msra.mxu0 0.0
        %6276 = vmatprep.subr.mxu0 0.0
        %6277 = vmatpush1.msra.mxu0 0.0
        %6278 = vmatprep.subr.mxu0 0.0
        %6279 = vmatpush1.msra.mxu0 0.0
        %6280 = vmatprep.subr.mxu0 0.0
        %6281 = vmatpush1.msra.mxu0 0.0
        %6282 = vmatprep.subr.mxu0 0.0
        %6283 = vmatpush1.msra.mxu0 0.0
        %6284 = vmatprep.subr.mxu0 0.0
        %6285 = vmatpush1.msra.mxu0 0.0
        %6286 = vmatprep.subr.mxu0 0.0
        %6287 = vmatpush1.msra.mxu0 0.0
        %6288 = vmatprep.subr.mxu0 0.0
        %6289 = vmatpush1.msra.mxu0 0.0
        %6290 = vmatprep.subr.mxu0 0.0
        %6291 = vmatpush1.msra.mxu0 0.0
        %6292 = vmatprep.subr.mxu0 0.0
        %6293 = vmatpush1.msra.mxu0 0.0
        %6294 = vmatprep.mubr.f32.mxu0 0.0
        %v6295 = vand.u32 %v5627, 4294901760
        %6296 = vmatmul.mubr.f32.gmra.mrb[0].mxu0 %v6295
        %v6297 = vpop.f32.mrb[0].mxu0
        %v6298 = vadd.f32 %v6155, %v6297
        %v6299 = vpop.f32.mrb[0].mxu0
        %6300 = vmatprep.mubr.f32.mxu0 0.0
        %v6301 = vand.u32 %v5628, 4294901760
        %6302 = vmatmul.mubr.f32.gmra.mrb[0].mxu0 %v6301
        %v6303 = vpop.f32.mrb[0].mxu0
        %v6304 = vadd.f32 %v6163, %v6303
        %v6305 = vpop.f32.mrb[0].mxu0
        %6306 = vmatprep.mubr.f32.mxu0 0.0
        %v6307 = vand.u32 %v5629, 4294901760
        %6308 = vmatmul.mubr.f32.gmra.mrb[0].mxu0 %v6307
        %v6309 = vpop.f32.mrb[0].mxu0
        %v6310 = vadd.f32 %v6171, %v6309
        %v6311 = vpop.f32.mrb[0].mxu0
        %6312 = vmatprep.mubr.f32.mxu0 0.0
        %v6313 = vand.u32 %v5630, 4294901760
        %6314 = vmatmul.mubr.f32.gmra.mrb[0].mxu0 %v6313
        %v6315 = vpop.f32.mrb[0].mxu0
        %v6316 = vadd.f32 %v6179, %v6315
        %v6317 = vpop.f32.mrb[0].mxu0
        %6318 = vdwg.mxu0
        %6319 = vmatprep.subr.mxu0 0.0
        %v6320 = vand.u32 %v5631, 4294901760
        %6321 = vmatpush1.msra.mxu0 %v6320
        %6322 = vmatprep.subr.mxu0 0.0
        %v6323 = vand.u32 %v5632, 4294901760
        %6324 = vmatpush1.msra.mxu0 %v6323
        %6325 = vmatprep.subr.mxu0 0.0
        %v6326 = vand.u32 %v5633, 4294901760
        %6327 = vmatpush1.msra.mxu0 %v6326
        %6328 = vmatprep.subr.mxu0 0.0
        %v6329 = vand.u32 %v5634, 4294901760
        %6330 = vmatpush1.msra.mxu0 %v6329
        %6331 = vmatprep.subr.mxu0 0.0
        %v6332 = vand.u32 %v5635, 4294901760
        %6333 = vmatpush1.msra.mxu0 %v6332
        %6334 = vmatprep.subr.mxu0 0.0
        %v6335 = vand.u32 %v5636, 4294901760
        %6336 = vmatpush1.msra.mxu0 %v6335
        %6337 = vmatprep.subr.mxu0 0.0
        %v6338 = vand.u32 %v5637, 4294901760
        %6339 = vmatpush1.msra.mxu0 %v6338
        %6340 = vmatprep.subr.mxu0 0.0
        %v6341 = vand.u32 %v5638, 4294901760
        %6342 = vmatpush1.msra.mxu0 %v6341
        %6343 = vmatprep.subr.mxu0 0.0
        %v6344 = vand.u32 %v5639, 4294901760
        %6345 = vmatpush1.msra.mxu0 %v6344
        %6346 = vmatprep.subr.mxu0 0.0
        %v6347 = vand.u32 %v5640, 4294901760
        %6348 = vmatpush1.msra.mxu0 %v6347
        %6349 = vmatprep.subr.mxu0 0.0
        %v6350 = vand.u32 %v5641, 4294901760
        %6351 = vmatpush1.msra.mxu0 %v6350
        %6352 = vmatprep.subr.mxu0 0.0
        %v6353 = vand.u32 %v5642, 4294901760
        %6354 = vmatpush1.msra.mxu0 %v6353
        %6355 = vmatprep.subr.mxu0 0.0
        %v6356 = vand.u32 %v5643, 4294901760
        %6357 = vmatpush1.msra.mxu0 %v6356
        %6358 = vmatprep.subr.mxu0 0.0
        %v6359 = vand.u32 %v5644, 4294901760
        %6360 = vmatpush1.msra.mxu0 %v6359
        %6361 = vmatprep.subr.mxu0 0.0
        %v6362 = vand.u32 %v5645, 4294901760
        %6363 = vmatpush1.msra.mxu0 %v6362
        %6364 = vmatprep.subr.mxu0 0.0
        %v6365 = vand.u32 %v5646, 4294901760
        %6366 = vmatpush1.msra.mxu0 %v6365
        %6367 = vmatprep.subr.mxu0 0.0
        %6368 = vmatpush1.msra.mxu0 0.0
        %6369 = vmatprep.subr.mxu0 0.0
        %6370 = vmatpush1.msra.mxu0 0.0
        %6371 = vmatprep.subr.mxu0 0.0
        %6372 = vmatpush1.msra.mxu0 0.0
        %6373 = vmatprep.subr.mxu0 0.0
        %6374 = vmatpush1.msra.mxu0 0.0
        %6375 = vmatprep.subr.mxu0 0.0
        %6376 = vmatpush1.msra.mxu0 0.0
        %6377 = vmatprep.subr.mxu0 0.0
        %6378 = vmatpush1.msra.mxu0 0.0
        %6379 = vmatprep.subr.mxu0 0.0
        %6380 = vmatpush1.msra.mxu0 0.0
        %6381 = vmatprep.subr.mxu0 0.0
        %6382 = vmatpush1.msra.mxu0 0.0
        %6383 = vmatprep.subr.mxu0 0.0
        %6384 = vmatpush1.msra.mxu0 0.0
        %6385 = vmatprep.subr.mxu0 0.0
        %6386 = vmatpush1.msra.mxu0 0.0
        %6387 = vmatprep.subr.mxu0 0.0
        %6388 = vmatpush1.msra.mxu0 0.0
        %6389 = vmatprep.subr.mxu0 0.0
        %6390 = vmatpush1.msra.mxu0 0.0
        %6391 = vmatprep.subr.mxu0 0.0
        %6392 = vmatpush1.msra.mxu0 0.0
        %6393 = vmatprep.subr.mxu0 0.0
        %6394 = vmatpush1.msra.mxu0 0.0
        %6395 = vmatprep.subr.mxu0 0.0
        %6396 = vmatpush1.msra.mxu0 0.0
        %6397 = vmatprep.subr.mxu0 0.0
        %6398 = vmatpush1.msra.mxu0 0.0
        %6399 = vmatprep.mubr.f32.mxu0 0.0
        %v6400 = vand.u32 %v5627, 4294901760
        %6401 = vmatmul.mubr.f32.gmra.mrb[0].mxu0 %v6400
        %v6402 = vpop.f32.mrb[0].mxu0
        %v6403 = vadd.f32 %v6298, %v6402
        %v6404 = vpop.f32.mrb[0].mxu0
        %6405 = vmatprep.mubr.f32.mxu0 0.0
        %v6406 = vand.u32 %v5628, 4294901760
        %6407 = vmatmul.mubr.f32.gmra.mrb[0].mxu0 %v6406
        %v6408 = vpop.f32.mrb[0].mxu0
        %v6409 = vadd.f32 %v6304, %v6408
        %v6410 = vpop.f32.mrb[0].mxu0
        %6411 = vmatprep.mubr.f32.mxu0 0.0
        %v6412 = vand.u32 %v5629, 4294901760
        %6413 = vmatmul.mubr.f32.gmra.mrb[0].mxu0 %v6412
        %v6414 = vpop.f32.mrb[0].mxu0
        %v6415 = vadd.f32 %v6310, %v6414
        %v6416 = vpop.f32.mrb[0].mxu0
        %6417 = vmatprep.mubr.f32.mxu0 0.0
        %v6418 = vand.u32 %v5630, 4294901760
        %6419 = vmatmul.mubr.f32.gmra.mrb[0].mxu0 %v6418
        %v6420 = vpop.f32.mrb[0].mxu0
        %v6421 = vadd.f32 %v6316, %v6420
        %v6422 = vpop.f32.mrb[0].mxu0
        %6423 = vdwg.mxu0
        %v6424 = vld [vmem:[%s3] sm:$0xff]
        %v6425 = vld [vmem:[%s3 + $0x8] sm:$0xff]
        %v6426 = vld [vmem:[%s3 + $0x10] sm:$0xff]
        %v6427 = vld [vmem:[%s3 + $0x18] sm:$0xff]
        %6429 = vset.pattern.permute.xlu0 0
        %6430 = vperm.xlu0 %6429, %v6424
        %v6431 = vpop.permute.xlu0 %6430
        %6434 = vset.pattern.permute.xlu0 0
        %6435 = vperm.xlu0 %6434, %v6425
        %v6436 = vpop.permute.xlu0 %6435
        %6439 = vset.pattern.permute.xlu0 0
        %6440 = vperm.xlu0 %6439, %v6426
        %v6441 = vpop.permute.xlu0 %6440
        %6444 = vset.pattern.permute.xlu0 0
        %6445 = vperm.xlu0 %6444, %v6427
        %v6446 = vpop.permute.xlu0 %6445
        %v6448 = vmul.f32 %v6403, %v6431
        %v6449 = vmul.f32 %v6409, %v6436
        %v6450 = vmul.f32 %v6415, %v6441
        %v6451 = vmul.f32 %v6421, %v6446
        %v6452 = vmax.f32 %v6448, 0.0
        %v6453 = vmax.f32 %v6449, 0.0
        %v6454 = vmax.f32 %v6450, 0.0
        %v6455 = vmax.f32 %v6451, 0.0
        %v6456 = vld [vmem:[%s14] sm:$0xff]
        %v6457 = vld [vmem:[%s14 + $0x8] sm:$0xff]
        %v6458 = vld [vmem:[%s14 + $0x10] sm:$0xff]
        %v6459 = vld [vmem:[%s14 + $0x18] sm:$0xff]
        %v6460 = vld [vmem:[%s14 + $0x20] sm:$0xff]
        %v6461 = vld [vmem:[%s14 + $0x28] sm:$0xff]
        %v6462 = vld [vmem:[%s14 + $0x30] sm:$0xff]
        %v6463 = vld [vmem:[%s14 + $0x38] sm:$0xff]
        %v6464 = vld [vmem:[%s14 + $0x40] sm:$0xff]
        %v6465 = vld [vmem:[%s14 + $0x48] sm:$0xff]
        %v6466 = vld [vmem:[%s14 + $0x50] sm:$0xff]
        %v6467 = vld [vmem:[%s14 + $0x58] sm:$0xff]
        %v6468 = vld [vmem:[%s14 + $0x60] sm:$0xff]
        %v6469 = vld [vmem:[%s14 + $0x68] sm:$0xff]
        %v6470 = vld [vmem:[%s14 + $0x70] sm:$0xff]
        %v6471 = vld [vmem:[%s14 + $0x78] sm:$0xff]
        %v6472 = vld [vmem:[%s15] sm:$0x1]
        %v6474 = vlaneseq
        %v6475 = vshrl.u32 %v6474, 7
        %v6476 = vsub.s32 0, %v6475
        %v6477 = vrot.slane %v6472, %v6476
        %6479 = vmatprep.subr.mxu0 0.0
        %v6480 = vand.u32 %v6456, 4294901760
        %6481 = vmatpush1.msra.mxu0 %v6480
        %6482 = vmatprep.subr.mxu0 0.0
        %v6483 = vand.u32 %v6457, 4294901760
        %6484 = vmatpush1.msra.mxu0 %v6483
        %6485 = vmatprep.subr.mxu0 0.0
        %v6486 = vand.u32 %v6458, 4294901760
        %6487 = vmatpush1.msra.mxu0 %v6486
        %6488 = vmatprep.subr.mxu0 0.0
        %v6489 = vand.u32 %v6459, 4294901760
        %6490 = vmatpush1.msra.mxu0 %v6489
        %6491 = vmatprep.subr.mxu0 0.0
        %v6492 = vand.u32 %v6460, 4294901760
        %6493 = vmatpush1.msra.mxu0 %v6492
        %6494 = vmatprep.subr.mxu0 0.0
        %v6495 = vand.u32 %v6461, 4294901760
        %6496 = vmatpush1.msra.mxu0 %v6495
        %6497 = vmatprep.subr.mxu0 0.0
        %v6498 = vand.u32 %v6462, 4294901760
        %6499 = vmatpush1.msra.mxu0 %v6498
        %6500 = vmatprep.subr.mxu0 0.0
        %v6501 = vand.u32 %v6463, 4294901760
        %6502 = vmatpush1.msra.mxu0 %v6501
        %6503 = vmatprep.subr.mxu0 0.0
        %v6504 = vand.u32 %v6464, 4294901760
        %6505 = vmatpush1.msra.mxu0 %v6504
        %6506 = vmatprep.subr.mxu0 0.0
        %v6507 = vand.u32 %v6465, 4294901760
        %6508 = vmatpush1.msra.mxu0 %v6507
        %6509 = vmatprep.subr.mxu0 0.0
        %v6510 = vand.u32 %v6466, 4294901760
        %6511 = vmatpush1.msra.mxu0 %v6510
        %6512 = vmatprep.subr.mxu0 0.0
        %v6513 = vand.u32 %v6467, 4294901760
        %6514 = vmatpush1.msra.mxu0 %v6513
        %6515 = vmatprep.subr.mxu0 0.0
        %v6516 = vand.u32 %v6468, 4294901760
        %6517 = vmatpush1.msra.mxu0 %v6516
        %6518 = vmatprep.subr.mxu0 0.0
        %v6519 = vand.u32 %v6469, 4294901760
        %6520 = vmatpush1.msra.mxu0 %v6519
        %6521 = vmatprep.subr.mxu0 0.0
        %v6522 = vand.u32 %v6470, 4294901760
        %6523 = vmatpush1.msra.mxu0 %v6522
        %6524 = vmatprep.subr.mxu0 0.0
        %v6525 = vand.u32 %v6471, 4294901760
        %6526 = vmatpush1.msra.mxu0 %v6525
        %6527 = vmatprep.subr.mxu0 0.0
        %6528 = vmatpush1.msra.mxu0 0.0
        %6529 = vmatprep.subr.mxu0 0.0
        %6530 = vmatpush1.msra.mxu0 0.0
        %6531 = vmatprep.subr.mxu0 0.0
        %6532 = vmatpush1.msra.mxu0 0.0
        %6533 = vmatprep.subr.mxu0 0.0
        %6534 = vmatpush1.msra.mxu0 0.0
        %6535 = vmatprep.subr.mxu0 0.0
        %6536 = vmatpush1.msra.mxu0 0.0
        %6537 = vmatprep.subr.mxu0 0.0
        %6538 = vmatpush1.msra.mxu0 0.0
        %6539 = vmatprep.subr.mxu0 0.0
        %6540 = vmatpush1.msra.mxu0 0.0
        %6541 = vmatprep.subr.mxu0 0.0
        %6542 = vmatpush1.msra.mxu0 0.0
        %6543 = vmatprep.subr.mxu0 0.0
        %6544 = vmatpush1.msra.mxu0 0.0
        %6545 = vmatprep.subr.mxu0 0.0
        %6546 = vmatpush1.msra.mxu0 0.0
        %6547 = vmatprep.subr.mxu0 0.0
        %6548 = vmatpush1.msra.mxu0 0.0
        %6549 = vmatprep.subr.mxu0 0.0
        %6550 = vmatpush1.msra.mxu0 0.0
        %6551 = vmatprep.subr.mxu0 0.0
        %6552 = vmatpush1.msra.mxu0 0.0
        %6553 = vmatprep.subr.mxu0 0.0
        %6554 = vmatpush1.msra.mxu0 0.0
        %6555 = vmatprep.subr.mxu0 0.0
        %6556 = vmatpush1.msra.mxu0 0.0
        %6557 = vmatprep.subr.mxu0 0.0
        %6558 = vmatpush1.msra.mxu0 0.0
        %6559 = vmatprep.mubr.f32.mxu0 0.0
        %v6560 = vand.u32 %v6452, 4294901760
        %v6561 = vsub.f32 %v6452, %v6560
        %v6562 = vand.u32 %v6561, 4294901760
        %v6563 = vsub.f32 %v6561, %v6562
        %v6564 = vand.u32 %v6563, 4294901760
        %6565 = vmatmul.mubr.f32.gmra.mrb[0].mxu0 %v6564
        %v6566 = vpop.f32.mrb[0].mxu0
        %v6567 = vadd.f32 %v6477, %v6566
        %v6568 = vpop.f32.mrb[0].mxu0
        %6569 = vmatprep.mubr.f32.mxu0 0.0
        %v6570 = vand.u32 %v6453, 4294901760
        %v6571 = vsub.f32 %v6453, %v6570
        %v6572 = vand.u32 %v6571, 4294901760
        %v6573 = vsub.f32 %v6571, %v6572
        %v6574 = vand.u32 %v6573, 4294901760
        %6575 = vmatmul.mubr.f32.gmra.mrb[0].mxu0 %v6574
        %v6576 = vpop.f32.mrb[0].mxu0
        %v6577 = vadd.f32 %v6477, %v6576
        %v6578 = vpop.f32.mrb[0].mxu0
        %6579 = vmatprep.mubr.f32.mxu0 0.0
        %v6580 = vand.u32 %v6454, 4294901760
        %v6581 = vsub.f32 %v6454, %v6580
        %v6582 = vand.u32 %v6581, 4294901760
        %v6583 = vsub.f32 %v6581, %v6582
        %v6584 = vand.u32 %v6583, 4294901760
        %6585 = vmatmul.mubr.f32.gmra.mrb[0].mxu0 %v6584
        %v6586 = vpop.f32.mrb[0].mxu0
        %v6587 = vadd.f32 %v6477, %v6586
        %v6588 = vpop.f32.mrb[0].mxu0
        %6589 = vmatprep.mubr.f32.mxu0 0.0
        %v6590 = vand.u32 %v6455, 4294901760
        %v6591 = vsub.f32 %v6455, %v6590
        %v6592 = vand.u32 %v6591, 4294901760
        %v6593 = vsub.f32 %v6591, %v6592
        %v6594 = vand.u32 %v6593, 4294901760
        %6595 = vmatmul.mubr.f32.gmra.mrb[0].mxu0 %v6594
        %v6596 = vpop.f32.mrb[0].mxu0
        %v6597 = vadd.f32 %v6477, %v6596
        %v6598 = vpop.f32.mrb[0].mxu0
        %6599 = vdwg.mxu0
        %6600 = vmatprep.subr.mxu0 0.0
        %v6601 = vand.u32 %v6456, 4294901760
        %v6602 = vsub.f32 %v6456, %v6601
        %v6603 = vand.u32 %v6602, 4294901760
        %v6604 = vsub.f32 %v6602, %v6603
        %v6605 = vand.u32 %v6604, 4294901760
        %6606 = vmatpush1.msra.mxu0 %v6605
        %6607 = vmatprep.subr.mxu0 0.0
        %v6608 = vand.u32 %v6457, 4294901760
        %v6609 = vsub.f32 %v6457, %v6608
        %v6610 = vand.u32 %v6609, 4294901760
        %v6611 = vsub.f32 %v6609, %v6610
        %v6612 = vand.u32 %v6611, 4294901760
        %6613 = vmatpush1.msra.mxu0 %v6612
        %6614 = vmatprep.subr.mxu0 0.0
        %v6615 = vand.u32 %v6458, 4294901760
        %v6616 = vsub.f32 %v6458, %v6615
        %v6617 = vand.u32 %v6616, 4294901760
        %v6618 = vsub.f32 %v6616, %v6617
        %v6619 = vand.u32 %v6618, 4294901760
        %6620 = vmatpush1.msra.mxu0 %v6619
        %6621 = vmatprep.subr.mxu0 0.0
        %v6622 = vand.u32 %v6459, 4294901760
        %v6623 = vsub.f32 %v6459, %v6622
        %v6624 = vand.u32 %v6623, 4294901760
        %v6625 = vsub.f32 %v6623, %v6624
        %v6626 = vand.u32 %v6625, 4294901760
        %6627 = vmatpush1.msra.mxu0 %v6626
        %6628 = vmatprep.subr.mxu0 0.0
        %v6629 = vand.u32 %v6460, 4294901760
        %v6630 = vsub.f32 %v6460, %v6629
        %v6631 = vand.u32 %v6630, 4294901760
        %v6632 = vsub.f32 %v6630, %v6631
        %v6633 = vand.u32 %v6632, 4294901760
        %6634 = vmatpush1.msra.mxu0 %v6633
        %6635 = vmatprep.subr.mxu0 0.0
        %v6636 = vand.u32 %v6461, 4294901760
        %v6637 = vsub.f32 %v6461, %v6636
        %v6638 = vand.u32 %v6637, 4294901760
        %v6639 = vsub.f32 %v6637, %v6638
        %v6640 = vand.u32 %v6639, 4294901760
        %6641 = vmatpush1.msra.mxu0 %v6640
        %6642 = vmatprep.subr.mxu0 0.0
        %v6643 = vand.u32 %v6462, 4294901760
        %v6644 = vsub.f32 %v6462, %v6643
        %v6645 = vand.u32 %v6644, 4294901760
        %v6646 = vsub.f32 %v6644, %v6645
        %v6647 = vand.u32 %v6646, 4294901760
        %6648 = vmatpush1.msra.mxu0 %v6647
        %6649 = vmatprep.subr.mxu0 0.0
        %v6650 = vand.u32 %v6463, 4294901760
        %v6651 = vsub.f32 %v6463, %v6650
        %v6652 = vand.u32 %v6651, 4294901760
        %v6653 = vsub.f32 %v6651, %v6652
        %v6654 = vand.u32 %v6653, 4294901760
        %6655 = vmatpush1.msra.mxu0 %v6654
        %6656 = vmatprep.subr.mxu0 0.0
        %v6657 = vand.u32 %v6464, 4294901760
        %v6658 = vsub.f32 %v6464, %v6657
        %v6659 = vand.u32 %v6658, 4294901760
        %v6660 = vsub.f32 %v6658, %v6659
        %v6661 = vand.u32 %v6660, 4294901760
        %6662 = vmatpush1.msra.mxu0 %v6661
        %6663 = vmatprep.subr.mxu0 0.0
        %v6664 = vand.u32 %v6465, 4294901760
        %v6665 = vsub.f32 %v6465, %v6664
        %v6666 = vand.u32 %v6665, 4294901760
        %v6667 = vsub.f32 %v6665, %v6666
        %v6668 = vand.u32 %v6667, 4294901760
        %6669 = vmatpush1.msra.mxu0 %v6668
        %6670 = vmatprep.subr.mxu0 0.0
        %v6671 = vand.u32 %v6466, 4294901760
        %v6672 = vsub.f32 %v6466, %v6671
        %v6673 = vand.u32 %v6672, 4294901760
        %v6674 = vsub.f32 %v6672, %v6673
        %v6675 = vand.u32 %v6674, 4294901760
        %6676 = vmatpush1.msra.mxu0 %v6675
        %6677 = vmatprep.subr.mxu0 0.0
        %v6678 = vand.u32 %v6467, 4294901760
        %v6679 = vsub.f32 %v6467, %v6678
        %v6680 = vand.u32 %v6679, 4294901760
        %v6681 = vsub.f32 %v6679, %v6680
        %v6682 = vand.u32 %v6681, 4294901760
        %6683 = vmatpush1.msra.mxu0 %v6682
        %6684 = vmatprep.subr.mxu0 0.0
        %v6685 = vand.u32 %v6468, 4294901760
        %v6686 = vsub.f32 %v6468, %v6685
        %v6687 = vand.u32 %v6686, 4294901760
        %v6688 = vsub.f32 %v6686, %v6687
        %v6689 = vand.u32 %v6688, 4294901760
        %6690 = vmatpush1.msra.mxu0 %v6689
        %6691 = vmatprep.subr.mxu0 0.0
        %v6692 = vand.u32 %v6469, 4294901760
        %v6693 = vsub.f32 %v6469, %v6692
        %v6694 = vand.u32 %v6693, 4294901760
        %v6695 = vsub.f32 %v6693, %v6694
        %v6696 = vand.u32 %v6695, 4294901760
        %6697 = vmatpush1.msra.mxu0 %v6696
        %6698 = vmatprep.subr.mxu0 0.0
        %v6699 = vand.u32 %v6470, 4294901760
        %v6700 = vsub.f32 %v6470, %v6699
        %v6701 = vand.u32 %v6700, 4294901760
        %v6702 = vsub.f32 %v6700, %v6701
        %v6703 = vand.u32 %v6702, 4294901760
        %6704 = vmatpush1.msra.mxu0 %v6703
        %6705 = vmatprep.subr.mxu0 0.0
        %v6706 = vand.u32 %v6471, 4294901760
        %v6707 = vsub.f32 %v6471, %v6706
        %v6708 = vand.u32 %v6707, 4294901760
        %v6709 = vsub.f32 %v6707, %v6708
        %v6710 = vand.u32 %v6709, 4294901760
        %6711 = vmatpush1.msra.mxu0 %v6710
        %6712 = vmatprep.subr.mxu0 0.0
        %6713 = vmatpush1.msra.mxu0 0.0
        %6714 = vmatprep.subr.mxu0 0.0
        %6715 = vmatpush1.msra.mxu0 0.0
        %6716 = vmatprep.subr.mxu0 0.0
        %6717 = vmatpush1.msra.mxu0 0.0
        %6718 = vmatprep.subr.mxu0 0.0
        %6719 = vmatpush1.msra.mxu0 0.0
        %6720 = vmatprep.subr.mxu0 0.0
        %6721 = vmatpush1.msra.mxu0 0.0
        %6722 = vmatprep.subr.mxu0 0.0
        %6723 = vmatpush1.msra.mxu0 0.0
        %6724 = vmatprep.subr.mxu0 0.0
        %6725 = vmatpush1.msra.mxu0 0.0
        %6726 = vmatprep.subr.mxu0 0.0
        %6727 = vmatpush1.msra.mxu0 0.0
        %6728 = vmatprep.subr.mxu0 0.0
        %6729 = vmatpush1.msra.mxu0 0.0
        %6730 = vmatprep.subr.mxu0 0.0
        %6731 = vmatpush1.msra.mxu0 0.0
        %6732 = vmatprep.subr.mxu0 0.0
        %6733 = vmatpush1.msra.mxu0 0.0
        %6734 = vmatprep.subr.mxu0 0.0
        %6735 = vmatpush1.msra.mxu0 0.0
        %6736 = vmatprep.subr.mxu0 0.0
        %6737 = vmatpush1.msra.mxu0 0.0
        %6738 = vmatprep.subr.mxu0 0.0
        %6739 = vmatpush1.msra.mxu0 0.0
        %6740 = vmatprep.subr.mxu0 0.0
        %6741 = vmatpush1.msra.mxu0 0.0
        %6742 = vmatprep.subr.mxu0 0.0
        %6743 = vmatpush1.msra.mxu0 0.0
        %6744 = vmatprep.mubr.f32.mxu0 0.0
        %v6745 = vand.u32 %v6452, 4294901760
        %6746 = vmatmul.mubr.f32.gmra.mrb[0].mxu0 %v6745
        %v6747 = vpop.f32.mrb[0].mxu0
        %v6748 = vadd.f32 %v6567, %v6747
        %v6749 = vpop.f32.mrb[0].mxu0
        %6750 = vmatprep.mubr.f32.mxu0 0.0
        %v6751 = vand.u32 %v6453, 4294901760
        %6752 = vmatmul.mubr.f32.gmra.mrb[0].mxu0 %v6751
        %v6753 = vpop.f32.mrb[0].mxu0
        %v6754 = vadd.f32 %v6577, %v6753
        %v6755 = vpop.f32.mrb[0].mxu0
        %6756 = vmatprep.mubr.f32.mxu0 0.0
        %v6757 = vand.u32 %v6454, 4294901760
        %6758 = vmatmul.mubr.f32.gmra.mrb[0].mxu0 %v6757
        %v6759 = vpop.f32.mrb[0].mxu0
        %v6760 = vadd.f32 %v6587, %v6759
        %v6761 = vpop.f32.mrb[0].mxu0
        %6762 = vmatprep.mubr.f32.mxu0 0.0
        %v6763 = vand.u32 %v6455, 4294901760
        %6764 = vmatmul.mubr.f32.gmra.mrb[0].mxu0 %v6763
        %v6765 = vpop.f32.mrb[0].mxu0
        %v6766 = vadd.f32 %v6597, %v6765
        %v6767 = vpop.f32.mrb[0].mxu0
        %6768 = vdwg.mxu0
        %6769 = vmatprep.subr.mxu0 0.0
        %v6770 = vand.u32 %v6456, 4294901760
        %v6771 = vsub.f32 %v6456, %v6770
        %6772 = vmatpush1.msra.mxu0 %v6771
        %6773 = vmatprep.subr.mxu0 0.0
        %v6774 = vand.u32 %v6457, 4294901760
        %v6775 = vsub.f32 %v6457, %v6774
        %6776 = vmatpush1.msra.mxu0 %v6775
        %6777 = vmatprep.subr.mxu0 0.0
        %v6778 = vand.u32 %v6458, 4294901760
        %v6779 = vsub.f32 %v6458, %v6778
        %6780 = vmatpush1.msra.mxu0 %v6779
        %6781 = vmatprep.subr.mxu0 0.0
        %v6782 = vand.u32 %v6459, 4294901760
        %v6783 = vsub.f32 %v6459, %v6782
        %6784 = vmatpush1.msra.mxu0 %v6783
        %6785 = vmatprep.subr.mxu0 0.0
        %v6786 = vand.u32 %v6460, 4294901760
        %v6787 = vsub.f32 %v6460, %v6786
        %6788 = vmatpush1.msra.mxu0 %v6787
        %6789 = vmatprep.subr.mxu0 0.0
        %v6790 = vand.u32 %v6461, 4294901760
        %v6791 = vsub.f32 %v6461, %v6790
        %6792 = vmatpush1.msra.mxu0 %v6791
        %6793 = vmatprep.subr.mxu0 0.0
        %v6794 = vand.u32 %v6462, 4294901760
        %v6795 = vsub.f32 %v6462, %v6794
        %6796 = vmatpush1.msra.mxu0 %v6795
        %6797 = vmatprep.subr.mxu0 0.0
        %v6798 = vand.u32 %v6463, 4294901760
        %v6799 = vsub.f32 %v6463, %v6798
        %6800 = vmatpush1.msra.mxu0 %v6799
        %6801 = vmatprep.subr.mxu0 0.0
        %v6802 = vand.u32 %v6464, 4294901760
        %v6803 = vsub.f32 %v6464, %v6802
        %6804 = vmatpush1.msra.mxu0 %v6803
        %6805 = vmatprep.subr.mxu0 0.0
        %v6806 = vand.u32 %v6465, 4294901760
        %v6807 = vsub.f32 %v6465, %v6806
        %6808 = vmatpush1.msra.mxu0 %v6807
        %6809 = vmatprep.subr.mxu0 0.0
        %v6810 = vand.u32 %v6466, 4294901760
        %v6811 = vsub.f32 %v6466, %v6810
        %6812 = vmatpush1.msra.mxu0 %v6811
        %6813 = vmatprep.subr.mxu0 0.0
        %v6814 = vand.u32 %v6467, 4294901760
        %v6815 = vsub.f32 %v6467, %v6814
        %6816 = vmatpush1.msra.mxu0 %v6815
        %6817 = vmatprep.subr.mxu0 0.0
        %v6818 = vand.u32 %v6468, 4294901760
        %v6819 = vsub.f32 %v6468, %v6818
        %6820 = vmatpush1.msra.mxu0 %v6819
        %6821 = vmatprep.subr.mxu0 0.0
        %v6822 = vand.u32 %v6469, 4294901760
        %v6823 = vsub.f32 %v6469, %v6822
        %6824 = vmatpush1.msra.mxu0 %v6823
        %6825 = vmatprep.subr.mxu0 0.0
        %v6826 = vand.u32 %v6470, 4294901760
        %v6827 = vsub.f32 %v6470, %v6826
        %6828 = vmatpush1.msra.mxu0 %v6827
        %6829 = vmatprep.subr.mxu0 0.0
        %v6830 = vand.u32 %v6471, 4294901760
        %v6831 = vsub.f32 %v6471, %v6830
        %6832 = vmatpush1.msra.mxu0 %v6831
        %6833 = vmatprep.subr.mxu0 0.0
        %6834 = vmatpush1.msra.mxu0 0.0
        %6835 = vmatprep.subr.mxu0 0.0
        %6836 = vmatpush1.msra.mxu0 0.0
        %6837 = vmatprep.subr.mxu0 0.0
        %6838 = vmatpush1.msra.mxu0 0.0
        %6839 = vmatprep.subr.mxu0 0.0
        %6840 = vmatpush1.msra.mxu0 0.0
        %6841 = vmatprep.subr.mxu0 0.0
        %6842 = vmatpush1.msra.mxu0 0.0
        %6843 = vmatprep.subr.mxu0 0.0
        %6844 = vmatpush1.msra.mxu0 0.0
        %6845 = vmatprep.subr.mxu0 0.0
        %6846 = vmatpush1.msra.mxu0 0.0
        %6847 = vmatprep.subr.mxu0 0.0
        %6848 = vmatpush1.msra.mxu0 0.0
        %6849 = vmatprep.subr.mxu0 0.0
        %6850 = vmatpush1.msra.mxu0 0.0
        %6851 = vmatprep.subr.mxu0 0.0
        %6852 = vmatpush1.msra.mxu0 0.0
        %6853 = vmatprep.subr.mxu0 0.0
        %6854 = vmatpush1.msra.mxu0 0.0
        %6855 = vmatprep.subr.mxu0 0.0
        %6856 = vmatpush1.msra.mxu0 0.0
        %6857 = vmatprep.subr.mxu0 0.0
        %6858 = vmatpush1.msra.mxu0 0.0
        %6859 = vmatprep.subr.mxu0 0.0
        %6860 = vmatpush1.msra.mxu0 0.0
        %6861 = vmatprep.subr.mxu0 0.0
        %6862 = vmatpush1.msra.mxu0 0.0
        %6863 = vmatprep.subr.mxu0 0.0
        %6864 = vmatpush1.msra.mxu0 0.0
        %6865 = vmatprep.mubr.f32.mxu0 0.0
        %v6866 = vand.u32 %v6452, 4294901760
        %v6867 = vsub.f32 %v6452, %v6866
        %6868 = vmatmul.mubr.f32.gmra.mrb[0].mxu0 %v6867
        %v6869 = vpop.f32.mrb[0].mxu0
        %v6870 = vadd.f32 %v6748, %v6869
        %v6871 = vpop.f32.mrb[0].mxu0
        %6872 = vmatprep.mubr.f32.mxu0 0.0
        %v6873 = vand.u32 %v6453, 4294901760
        %v6874 = vsub.f32 %v6453, %v6873
        %6875 = vmatmul.mubr.f32.gmra.mrb[0].mxu0 %v6874
        %v6876 = vpop.f32.mrb[0].mxu0
        %v6877 = vadd.f32 %v6754, %v6876
        %v6878 = vpop.f32.mrb[0].mxu0
        %6879 = vmatprep.mubr.f32.mxu0 0.0
        %v6880 = vand.u32 %v6454, 4294901760
        %v6881 = vsub.f32 %v6454, %v6880
        %6882 = vmatmul.mubr.f32.gmra.mrb[0].mxu0 %v6881
        %v6883 = vpop.f32.mrb[0].mxu0
        %v6884 = vadd.f32 %v6760, %v6883
        %v6885 = vpop.f32.mrb[0].mxu0
        %6886 = vmatprep.mubr.f32.mxu0 0.0
        %v6887 = vand.u32 %v6455, 4294901760
        %v6888 = vsub.f32 %v6455, %v6887
        %6889 = vmatmul.mubr.f32.gmra.mrb[0].mxu0 %v6888
        %v6890 = vpop.f32.mrb[0].mxu0
        %v6891 = vadd.f32 %v6766, %v6890
        %v6892 = vpop.f32.mrb[0].mxu0
        %6893 = vdwg.mxu0
        %6894 = vmatprep.subr.mxu0 0.0
        %v6895 = vand.u32 %v6456, 4294901760
        %6896 = vmatpush1.msra.mxu0 %v6895
        %6897 = vmatprep.subr.mxu0 0.0
        %v6898 = vand.u32 %v6457, 4294901760
        %6899 = vmatpush1.msra.mxu0 %v6898
        %6900 = vmatprep.subr.mxu0 0.0
        %v6901 = vand.u32 %v6458, 4294901760
        %6902 = vmatpush1.msra.mxu0 %v6901
        %6903 = vmatprep.subr.mxu0 0.0
        %v6904 = vand.u32 %v6459, 4294901760
        %6905 = vmatpush1.msra.mxu0 %v6904
        %6906 = vmatprep.subr.mxu0 0.0
        %v6907 = vand.u32 %v6460, 4294901760
        %6908 = vmatpush1.msra.mxu0 %v6907
        %6909 = vmatprep.subr.mxu0 0.0
        %v6910 = vand.u32 %v6461, 4294901760
        %6911 = vmatpush1.msra.mxu0 %v6910
        %6912 = vmatprep.subr.mxu0 0.0
        %v6913 = vand.u32 %v6462, 4294901760
        %6914 = vmatpush1.msra.mxu0 %v6913
        %6915 = vmatprep.subr.mxu0 0.0
        %v6916 = vand.u32 %v6463, 4294901760
        %6917 = vmatpush1.msra.mxu0 %v6916
        %6918 = vmatprep.subr.mxu0 0.0
        %v6919 = vand.u32 %v6464, 4294901760
        %6920 = vmatpush1.msra.mxu0 %v6919
        %6921 = vmatprep.subr.mxu0 0.0
        %v6922 = vand.u32 %v6465, 4294901760
        %6923 = vmatpush1.msra.mxu0 %v6922
        %6924 = vmatprep.subr.mxu0 0.0
        %v6925 = vand.u32 %v6466, 4294901760
        %6926 = vmatpush1.msra.mxu0 %v6925
        %6927 = vmatprep.subr.mxu0 0.0
        %v6928 = vand.u32 %v6467, 4294901760
        %6929 = vmatpush1.msra.mxu0 %v6928
        %6930 = vmatprep.subr.mxu0 0.0
        %v6931 = vand.u32 %v6468, 4294901760
        %6932 = vmatpush1.msra.mxu0 %v6931
        %6933 = vmatprep.subr.mxu0 0.0
        %v6934 = vand.u32 %v6469, 4294901760
        %6935 = vmatpush1.msra.mxu0 %v6934
        %6936 = vmatprep.subr.mxu0 0.0
        %v6937 = vand.u32 %v6470, 4294901760
        %6938 = vmatpush1.msra.mxu0 %v6937
        %6939 = vmatprep.subr.mxu0 0.0
        %v6940 = vand.u32 %v6471, 4294901760
        %6941 = vmatpush1.msra.mxu0 %v6940
        %6942 = vmatprep.subr.mxu0 0.0
        %6943 = vmatpush1.msra.mxu0 0.0
        %6944 = vmatprep.subr.mxu0 0.0
        %6945 = vmatpush1.msra.mxu0 0.0
        %6946 = vmatprep.subr.mxu0 0.0
        %6947 = vmatpush1.msra.mxu0 0.0
        %6948 = vmatprep.subr.mxu0 0.0
        %6949 = vmatpush1.msra.mxu0 0.0
        %6950 = vmatprep.subr.mxu0 0.0
        %6951 = vmatpush1.msra.mxu0 0.0
        %6952 = vmatprep.subr.mxu0 0.0
        %6953 = vmatpush1.msra.mxu0 0.0
        %6954 = vmatprep.subr.mxu0 0.0
        %6955 = vmatpush1.msra.mxu0 0.0
        %6956 = vmatprep.subr.mxu0 0.0
        %6957 = vmatpush1.msra.mxu0 0.0
        %6958 = vmatprep.subr.mxu0 0.0
        %6959 = vmatpush1.msra.mxu0 0.0
        %6960 = vmatprep.subr.mxu0 0.0
        %6961 = vmatpush1.msra.mxu0 0.0
        %6962 = vmatprep.subr.mxu0 0.0
        %6963 = vmatpush1.msra.mxu0 0.0
        %6964 = vmatprep.subr.mxu0 0.0
        %6965 = vmatpush1.msra.mxu0 0.0
        %6966 = vmatprep.subr.mxu0 0.0
        %6967 = vmatpush1.msra.mxu0 0.0
        %6968 = vmatprep.subr.mxu0 0.0
        %6969 = vmatpush1.msra.mxu0 0.0
        %6970 = vmatprep.subr.mxu0 0.0
        %6971 = vmatpush1.msra.mxu0 0.0
        %6972 = vmatprep.subr.mxu0 0.0
        %6973 = vmatpush1.msra.mxu0 0.0
        %6974 = vmatprep.mubr.f32.mxu0 0.0
        %v6975 = vand.u32 %v6452, 4294901760
        %v6976 = vsub.f32 %v6452, %v6975
        %v6977 = vand.u32 %v6976, 4294901760
        %6978 = vmatmul.mubr.f32.gmra.mrb[0].mxu0 %v6977
        %v6979 = vpop.f32.mrb[0].mxu0
        %v6980 = vadd.f32 %v6870, %v6979
        %v6981 = vpop.f32.mrb[0].mxu0
        %6982 = vmatprep.mubr.f32.mxu0 0.0
        %v6983 = vand.u32 %v6453, 4294901760
        %v6984 = vsub.f32 %v6453, %v6983
        %v6985 = vand.u32 %v6984, 4294901760
        %6986 = vmatmul.mubr.f32.gmra.mrb[0].mxu0 %v6985
        %v6987 = vpop.f32.mrb[0].mxu0
        %v6988 = vadd.f32 %v6877, %v6987
        %v6989 = vpop.f32.mrb[0].mxu0
        %6990 = vmatprep.mubr.f32.mxu0 0.0
        %v6991 = vand.u32 %v6454, 4294901760
        %v6992 = vsub.f32 %v6454, %v6991
        %v6993 = vand.u32 %v6992, 4294901760
        %6994 = vmatmul.mubr.f32.gmra.mrb[0].mxu0 %v6993
        %v6995 = vpop.f32.mrb[0].mxu0
        %v6996 = vadd.f32 %v6884, %v6995
        %v6997 = vpop.f32.mrb[0].mxu0
        %6998 = vmatprep.mubr.f32.mxu0 0.0
        %v6999 = vand.u32 %v6455, 4294901760
        %v7000 = vsub.f32 %v6455, %v6999
        %v7001 = vand.u32 %v7000, 4294901760
        %7002 = vmatmul.mubr.f32.gmra.mrb[0].mxu0 %v7001
        %v7003 = vpop.f32.mrb[0].mxu0
        %v7004 = vadd.f32 %v6891, %v7003
        %v7005 = vpop.f32.mrb[0].mxu0
        %7006 = vdwg.mxu0
        %7007 = vmatprep.subr.mxu0 0.0
        %v7008 = vand.u32 %v6456, 4294901760
        %v7009 = vsub.f32 %v6456, %v7008
        %v7010 = vand.u32 %v7009, 4294901760
        %7011 = vmatpush1.msra.mxu0 %v7010
        %7012 = vmatprep.subr.mxu0 0.0
        %v7013 = vand.u32 %v6457, 4294901760
        %v7014 = vsub.f32 %v6457, %v7013
        %v7015 = vand.u32 %v7014, 4294901760
        %7016 = vmatpush1.msra.mxu0 %v7015
        %7017 = vmatprep.subr.mxu0 0.0
        %v7018 = vand.u32 %v6458, 4294901760
        %v7019 = vsub.f32 %v6458, %v7018
        %v7020 = vand.u32 %v7019, 4294901760
        %7021 = vmatpush1.msra.mxu0 %v7020
        %7022 = vmatprep.subr.mxu0 0.0
        %v7023 = vand.u32 %v6459, 4294901760
        %v7024 = vsub.f32 %v6459, %v7023
        %v7025 = vand.u32 %v7024, 4294901760
        %7026 = vmatpush1.msra.mxu0 %v7025
        %7027 = vmatprep.subr.mxu0 0.0
        %v7028 = vand.u32 %v6460, 4294901760
        %v7029 = vsub.f32 %v6460, %v7028
        %v7030 = vand.u32 %v7029, 4294901760
        %7031 = vmatpush1.msra.mxu0 %v7030
        %7032 = vmatprep.subr.mxu0 0.0
        %v7033 = vand.u32 %v6461, 4294901760
        %v7034 = vsub.f32 %v6461, %v7033
        %v7035 = vand.u32 %v7034, 4294901760
        %7036 = vmatpush1.msra.mxu0 %v7035
        %7037 = vmatprep.subr.mxu0 0.0
        %v7038 = vand.u32 %v6462, 4294901760
        %v7039 = vsub.f32 %v6462, %v7038
        %v7040 = vand.u32 %v7039, 4294901760
        %7041 = vmatpush1.msra.mxu0 %v7040
        %7042 = vmatprep.subr.mxu0 0.0
        %v7043 = vand.u32 %v6463, 4294901760
        %v7044 = vsub.f32 %v6463, %v7043
        %v7045 = vand.u32 %v7044, 4294901760
        %7046 = vmatpush1.msra.mxu0 %v7045
        %7047 = vmatprep.subr.mxu0 0.0
        %v7048 = vand.u32 %v6464, 4294901760
        %v7049 = vsub.f32 %v6464, %v7048
        %v7050 = vand.u32 %v7049, 4294901760
        %7051 = vmatpush1.msra.mxu0 %v7050
        %7052 = vmatprep.subr.mxu0 0.0
        %v7053 = vand.u32 %v6465, 4294901760
        %v7054 = vsub.f32 %v6465, %v7053
        %v7055 = vand.u32 %v7054, 4294901760
        %7056 = vmatpush1.msra.mxu0 %v7055
        %7057 = vmatprep.subr.mxu0 0.0
        %v7058 = vand.u32 %v6466, 4294901760
        %v7059 = vsub.f32 %v6466, %v7058
        %v7060 = vand.u32 %v7059, 4294901760
        %7061 = vmatpush1.msra.mxu0 %v7060
        %7062 = vmatprep.subr.mxu0 0.0
        %v7063 = vand.u32 %v6467, 4294901760
        %v7064 = vsub.f32 %v6467, %v7063
        %v7065 = vand.u32 %v7064, 4294901760
        %7066 = vmatpush1.msra.mxu0 %v7065
        %7067 = vmatprep.subr.mxu0 0.0
        %v7068 = vand.u32 %v6468, 4294901760
        %v7069 = vsub.f32 %v6468, %v7068
        %v7070 = vand.u32 %v7069, 4294901760
        %7071 = vmatpush1.msra.mxu0 %v7070
        %7072 = vmatprep.subr.mxu0 0.0
        %v7073 = vand.u32 %v6469, 4294901760
        %v7074 = vsub.f32 %v6469, %v7073
        %v7075 = vand.u32 %v7074, 4294901760
        %7076 = vmatpush1.msra.mxu0 %v7075
        %7077 = vmatprep.subr.mxu0 0.0
        %v7078 = vand.u32 %v6470, 4294901760
        %v7079 = vsub.f32 %v6470, %v7078
        %v7080 = vand.u32 %v7079, 4294901760
        %7081 = vmatpush1.msra.mxu0 %v7080
        %7082 = vmatprep.subr.mxu0 0.0
        %v7083 = vand.u32 %v6471, 4294901760
        %v7084 = vsub.f32 %v6471, %v7083
        %v7085 = vand.u32 %v7084, 4294901760
        %7086 = vmatpush1.msra.mxu0 %v7085
        %7087 = vmatprep.subr.mxu0 0.0
        %7088 = vmatpush1.msra.mxu0 0.0
        %7089 = vmatprep.subr.mxu0 0.0
        %7090 = vmatpush1.msra.mxu0 0.0
        %7091 = vmatprep.subr.mxu0 0.0
        %7092 = vmatpush1.msra.mxu0 0.0
        %7093 = vmatprep.subr.mxu0 0.0
        %7094 = vmatpush1.msra.mxu0 0.0
        %7095 = vmatprep.subr.mxu0 0.0
        %7096 = vmatpush1.msra.mxu0 0.0
        %7097 = vmatprep.subr.mxu0 0.0
        %7098 = vmatpush1.msra.mxu0 0.0
        %7099 = vmatprep.subr.mxu0 0.0
        %7100 = vmatpush1.msra.mxu0 0.0
        %7101 = vmatprep.subr.mxu0 0.0
        %7102 = vmatpush1.msra.mxu0 0.0
        %7103 = vmatprep.subr.mxu0 0.0
        %7104 = vmatpush1.msra.mxu0 0.0
        %7105 = vmatprep.subr.mxu0 0.0
        %7106 = vmatpush1.msra.mxu0 0.0
        %7107 = vmatprep.subr.mxu0 0.0
        %7108 = vmatpush1.msra.mxu0 0.0
        %7109 = vmatprep.subr.mxu0 0.0
        %7110 = vmatpush1.msra.mxu0 0.0
        %7111 = vmatprep.subr.mxu0 0.0
        %7112 = vmatpush1.msra.mxu0 0.0
        %7113 = vmatprep.subr.mxu0 0.0
        %7114 = vmatpush1.msra.mxu0 0.0
        %7115 = vmatprep.subr.mxu0 0.0
        %7116 = vmatpush1.msra.mxu0 0.0
        %7117 = vmatprep.subr.mxu0 0.0
        %7118 = vmatpush1.msra.mxu0 0.0
        %7119 = vmatprep.mubr.f32.mxu0 0.0
        %v7120 = vand.u32 %v6452, 4294901760
        %7121 = vmatmul.mubr.f32.gmra.mrb[0].mxu0 %v7120
        %v7122 = vpop.f32.mrb[0].mxu0
        %v7123 = vadd.f32 %v6980, %v7122
        %v7124 = vpop.f32.mrb[0].mxu0
        %7125 = vmatprep.mubr.f32.mxu0 0.0
        %v7126 = vand.u32 %v6453, 4294901760
        %7127 = vmatmul.mubr.f32.gmra.mrb[0].mxu0 %v7126
        %v7128 = vpop.f32.mrb[0].mxu0
        %v7129 = vadd.f32 %v6988, %v7128
        %v7130 = vpop.f32.mrb[0].mxu0
        %7131 = vmatprep.mubr.f32.mxu0 0.0
        %v7132 = vand.u32 %v6454, 4294901760
        %7133 = vmatmul.mubr.f32.gmra.mrb[0].mxu0 %v7132
        %v7134 = vpop.f32.mrb[0].mxu0
        %v7135 = vadd.f32 %v6996, %v7134
        %v7136 = vpop.f32.mrb[0].mxu0
        %7137 = vmatprep.mubr.f32.mxu0 0.0
        %v7138 = vand.u32 %v6455, 4294901760
        %7139 = vmatmul.mubr.f32.gmra.mrb[0].mxu0 %v7138
        %v7140 = vpop.f32.mrb[0].mxu0
        %v7141 = vadd.f32 %v7004, %v7140
        %v7142 = vpop.f32.mrb[0].mxu0
        %7143 = vdwg.mxu0
        %7144 = vmatprep.subr.mxu0 0.0
        %v7145 = vand.u32 %v6456, 4294901760
        %7146 = vmatpush1.msra.mxu0 %v7145
        %7147 = vmatprep.subr.mxu0 0.0
        %v7148 = vand.u32 %v6457, 4294901760
        %7149 = vmatpush1.msra.mxu0 %v7148
        %7150 = vmatprep.subr.mxu0 0.0
        %v7151 = vand.u32 %v6458, 4294901760
        %7152 = vmatpush1.msra.mxu0 %v7151
        %7153 = vmatprep.subr.mxu0 0.0
        %v7154 = vand.u32 %v6459, 4294901760
        %7155 = vmatpush1.msra.mxu0 %v7154
        %7156 = vmatprep.subr.mxu0 0.0
        %v7157 = vand.u32 %v6460, 4294901760
        %7158 = vmatpush1.msra.mxu0 %v7157
        %7159 = vmatprep.subr.mxu0 0.0
        %v7160 = vand.u32 %v6461, 4294901760
        %7161 = vmatpush1.msra.mxu0 %v7160
        %7162 = vmatprep.subr.mxu0 0.0
        %v7163 = vand.u32 %v6462, 4294901760
        %7164 = vmatpush1.msra.mxu0 %v7163
        %7165 = vmatprep.subr.mxu0 0.0
        %v7166 = vand.u32 %v6463, 4294901760
        %7167 = vmatpush1.msra.mxu0 %v7166
        %7168 = vmatprep.subr.mxu0 0.0
        %v7169 = vand.u32 %v6464, 4294901760
        %7170 = vmatpush1.msra.mxu0 %v7169
        %7171 = vmatprep.subr.mxu0 0.0
        %v7172 = vand.u32 %v6465, 4294901760
        %7173 = vmatpush1.msra.mxu0 %v7172
        %7174 = vmatprep.subr.mxu0 0.0
        %v7175 = vand.u32 %v6466, 4294901760
        %7176 = vmatpush1.msra.mxu0 %v7175
        %7177 = vmatprep.subr.mxu0 0.0
        %v7178 = vand.u32 %v6467, 4294901760
        %7179 = vmatpush1.msra.mxu0 %v7178
        %7180 = vmatprep.subr.mxu0 0.0
        %v7181 = vand.u32 %v6468, 4294901760
        %7182 = vmatpush1.msra.mxu0 %v7181
        %7183 = vmatprep.subr.mxu0 0.0
        %v7184 = vand.u32 %v6469, 4294901760
        %7185 = vmatpush1.msra.mxu0 %v7184
        %7186 = vmatprep.subr.mxu0 0.0
        %v7187 = vand.u32 %v6470, 4294901760
        %7188 = vmatpush1.msra.mxu0 %v7187
        %7189 = vmatprep.subr.mxu0 0.0
        %v7190 = vand.u32 %v6471, 4294901760
        %7191 = vmatpush1.msra.mxu0 %v7190
        %7192 = vmatprep.subr.mxu0 0.0
        %7193 = vmatpush1.msra.mxu0 0.0
        %7194 = vmatprep.subr.mxu0 0.0
        %7195 = vmatpush1.msra.mxu0 0.0
        %7196 = vmatprep.subr.mxu0 0.0
        %7197 = vmatpush1.msra.mxu0 0.0
        %7198 = vmatprep.subr.mxu0 0.0
        %7199 = vmatpush1.msra.mxu0 0.0
        %7200 = vmatprep.subr.mxu0 0.0
        %7201 = vmatpush1.msra.mxu0 0.0
        %7202 = vmatprep.subr.mxu0 0.0
        %7203 = vmatpush1.msra.mxu0 0.0
        %7204 = vmatprep.subr.mxu0 0.0
        %7205 = vmatpush1.msra.mxu0 0.0
        %7206 = vmatprep.subr.mxu0 0.0
        %7207 = vmatpush1.msra.mxu0 0.0
        %7208 = vmatprep.subr.mxu0 0.0
        %7209 = vmatpush1.msra.mxu0 0.0
        %7210 = vmatprep.subr.mxu0 0.0
        %7211 = vmatpush1.msra.mxu0 0.0
        %7212 = vmatprep.subr.mxu0 0.0
        %7213 = vmatpush1.msra.mxu0 0.0
        %7214 = vmatprep.subr.mxu0 0.0
        %7215 = vmatpush1.msra.mxu0 0.0
        %7216 = vmatprep.subr.mxu0 0.0
        %7217 = vmatpush1.msra.mxu0 0.0
        %7218 = vmatprep.subr.mxu0 0.0
        %7219 = vmatpush1.msra.mxu0 0.0
        %7220 = vmatprep.subr.mxu0 0.0
        %7221 = vmatpush1.msra.mxu0 0.0
        %7222 = vmatprep.subr.mxu0 0.0
        %7223 = vmatpush1.msra.mxu0 0.0
        %7224 = vmatprep.mubr.f32.mxu0 0.0
        %v7225 = vand.u32 %v6452, 4294901760
        %7226 = vmatmul.mubr.f32.gmra.mrb[0].mxu0 %v7225
        %v7227 = vpop.f32.mrb[0].mxu0
        %v7228 = vadd.f32 %v7123, %v7227
        %v7229 = vpop.f32.mrb[0].mxu0
        %7230 = vmatprep.mubr.f32.mxu0 0.0
        %v7231 = vand.u32 %v6453, 4294901760
        %7232 = vmatmul.mubr.f32.gmra.mrb[0].mxu0 %v7231
        %v7233 = vpop.f32.mrb[0].mxu0
        %v7234 = vadd.f32 %v7129, %v7233
        %v7235 = vpop.f32.mrb[0].mxu0
        %7236 = vmatprep.mubr.f32.mxu0 0.0
        %v7237 = vand.u32 %v6454, 4294901760
        %7238 = vmatmul.mubr.f32.gmra.mrb[0].mxu0 %v7237
        %v7239 = vpop.f32.mrb[0].mxu0
        %v7240 = vadd.f32 %v7135, %v7239
        %v7241 = vpop.f32.mrb[0].mxu0
        %7242 = vmatprep.mubr.f32.mxu0 0.0
        %v7243 = vand.u32 %v6455, 4294901760
        %7244 = vmatmul.mubr.f32.gmra.mrb[0].mxu0 %v7243
        %v7245 = vpop.f32.mrb[0].mxu0
        %v7246 = vadd.f32 %v7141, %v7245
        %v7247 = vpop.f32.mrb[0].mxu0
        %7248 = vdwg.mxu0
        %7249 = vst [vmem:[%s16] sm:$0xff] %v7228
        %7250 = vst [vmem:[%s16 + $0x8] sm:$0xff] %v7234
        %7251 = vst [vmem:[%s16 + $0x10] sm:$0xff] %v7240
        %7252 = vst [vmem:[%s16 + $0x18] sm:$0xff] %v7246
      $region100: #{gnn_forward.1} parent=83 // pred_fallthru
        _
      // Predicated region
      $region101: #{gnn_forward.1} parent=83 // pred_check
        %p7253 = pneg %p393
      $region102: #{gnn_forward.1} parent=83 // pred_check_branch
        %7255 = sbr.rel (%p7253) target = $region104
      $region103: #{gnn_forward.1} parent=83 // pred_region
        _
      $region104: #{gnn_forward.1} parent=83 // pred_fallthru
        _
      // Predicated region
      $region105: #{gnn_forward.1} parent=83 // pred_check
        %p7256 = pneg %p393
      $region106: #{gnn_forward.1} parent=83 // pred_check_branch
        %7258 = sbr.rel (%p7256) target = $region108
      $region107: #{gnn_forward.1} parent=83 // pred_region
        _
      $region108: #{gnn_forward.1} parent=83 // pred_fallthru
        _
    $region84: #{gnn_forward.1} parent=5 // pred_fallthru
      _
    %p7259 = scmp.le.s32.totalorder 2, %s22
    // Predicated region
    $region109: #{gnn_forward.1} parent=5 // pred_check
      %p7260 = pneg %p7259
    $region110: #{gnn_forward.1} parent=5 // pred_check_branch
      %7262 = sbr.rel (%p7260) target = $region112
    $region111: #{gnn_forward.1} parent=5 // pred_region
      %s7263 = ssub.s32 %s22, 2
    $region112: #{gnn_forward.1} parent=5 // pred_fallthru
      _
  $region6: #{gnn_forward.1} parent=0 // loop_footer
    %s26 = sadd.s32 1, %s22
  $region7: #{gnn_forward.1} parent=0 // loop_footer_branch
    %21 = sbr.rel target = $region3
  $region8: #{gnn_forward.1} parent=0 // loop_exit
    _

</llo_original>
